<compile_context>
chip_gen: v7x
topology: tpu7x:2x2x1
jax: 0.10.0
libtpu: 0.0.40
codegen_flags: <defaults>
</compile_context>

<pallas_src>
import functools

import jax
import jax.numpy as jnp
from jax.experimental import pallas as pl
from jax.experimental.pallas import tpu as pltpu


# --------------------------- fused VQ tile kernel ----------------------------

def _vq_tile_kernel(z_ref, iota_ref, cb_bf_ref, cbt_hi_ref, cbt_lo_ref,
                    esqh_ref, zq_ref, idx_ref, sse_ref,
                    *, n_e, tm, s_total, needs_mask):
    """One (batch, spatial-tile) block of the vector quantiser.

    z_ref    : [e_dim, TM] f32   activations (lane-dense slab of one batch)
    iota_ref : [n_e, 1]    i32   codebook row indices (constant)
    cb_bf    : [n_e, e_dim] bf16 codebook (distance matmul)
    cbt_hi/lo: [e_dim, n_e] bf16 hi/lo split of codebook^T (gather matmul)
    esqh     : [n_e, 1]    f32   0.5 * per-code squared norms
    zq_ref   : [e_dim, TM] f32   quantised activations
    idx_ref  : [1, TM]     i32   argmin codebook indices
    sse_ref  : [1, 128]    f32   partial sum of squared (z_q - z), broadcast
    """
    zt = z_ref[...]                                               # [e_dim, TM]
    iota_col = iota_ref[...]                                      # [n_e, 1]

    # score = 0.5*||e_n||^2 - <e_n, z_m>   (argmin-equivalent to sq. distance)
    dot = jnp.dot(cb_bf_ref[...], zt.astype(jnp.bfloat16),
                  preferred_element_type=jnp.float32)             # [n_e, TM]
    score = esqh_ref[...] - dot                                   # [n_e, TM]

    # argmin over the codebook axis (first occurrence, like torch.argmin).
    min1 = jnp.min(score, axis=0, keepdims=True)                  # [1, TM]
    idx = jnp.min(jnp.where(score == min1, iota_col, n_e),
                  axis=0, keepdims=True)                          # [1, TM] i32
    idx_ref[...] = idx

    # Codebook gather as a bf16 one-hot MXU matmul; hi/lo split keeps z_q
    # essentially f32-exact with only 2 bf16 passes.
    onehot = (iota_col == idx).astype(jnp.bfloat16)               # [n_e, TM]
    zq = (jnp.dot(cbt_hi_ref[...], onehot, preferred_element_type=jnp.float32)
          + jnp.dot(cbt_lo_ref[...], onehot, preferred_element_type=jnp.float32))
    zq_ref[...] = zq                                              # [e_dim, TM]

    # Partial SSE for the commitment/codebook loss; pad-mask only on the last
    # spatial tile (and only if padding exists at all).
    def _write_sse(masked):
        if masked:
            j = pl.program_id(1)
            col = j * tm + jax.lax.broadcasted_iota(jnp.int32, (1, tm), 1)
            diff = (zq - zt) * (col < s_total).astype(jnp.float32)
        else:
            diff = zq - zt
        sse = jnp.sum(diff * diff)
        sse_ref[...] = jnp.full((1, 128), sse, dtype=jnp.float32)

    if not needs_mask:
        _write_sse(False)
    else:
        j = pl.program_id(1)
        last = pl.num_programs(1) - 1

        @pl.when(j == last)
        def _():
            _write_sse(True)

        @pl.when(j != last)
        def _():
            _write_sse(False)


# ------------------------- codebook statistics kernel ------------------------

def _codebook_stats_kernel(cb_bf_ref, cbt_bf_ref, esq_col_ref, esq_row_ref,
                           iota_ref, dist_ref, var_ref, *, n_e):
    """cd = pairwise squared distances of the codebook; emits the two scalars
    mean(kthvalue(cd, 2, dim=0).values) and mean(var(cd, dim=1, unbiased))."""
    gram = jnp.dot(cb_bf_ref[...], cbt_bf_ref[...],
                   preferred_element_type=jnp.float32)            # [n_e, n_e]
    cd = esq_col_ref[...] + esq_row_ref[...] - 2.0 * gram         # [n_e, n_e]
    iota_col = iota_ref[...]                                      # [n_e, 1]

    # torch.kthvalue(cd, 2, 0): 2nd smallest over rows, per column.
    min1 = jnp.min(cd, axis=0, keepdims=True)                     # [1, n_e]
    first = jnp.min(jnp.where(cd == min1, iota_col, n_e),
                    axis=0, keepdims=True)                        # [1, n_e]
    cd_masked = jnp.where(iota_col == first, jnp.inf, cd)
    min2 = jnp.min(cd_masked, axis=0, keepdims=True)              # [1, n_e]
    dist_ref[...] = jnp.full((1, 128), jnp.mean(min2), dtype=jnp.float32)

    # torch.var(cd, 1) is unbiased (divisor n_e - 1).
    mu = jnp.mean(cd, axis=1, keepdims=True)                      # [n_e, 1]
    var_rows = jnp.sum((cd - mu) ** 2, axis=1, keepdims=True) / (n_e - 1)
    var_ref[...] = jnp.full((1, 128), jnp.mean(var_rows), dtype=jnp.float32)


# --------------------------------- wrapper -----------------------------------

@functools.partial(jax.jit,
                   static_argnames=("n_e", "e_dim", "beta", "legacy", "tm",
                                    "compute_codebook_stats"))
def vector_quantiser_forward(embedding, z, *, n_e, e_dim, beta=0.2,
                             legacy=False, tm=1024,
                             compute_codebook_stats=True):
    """VectorQuantiser.forward for quantise='spatial'.

    embedding: [n_e, e_dim] f32 codebook (assumed already initialized).
    z:         [b, e_dim, *spatial] f32 (channels-first, 2D or 3D spatial).
    Returns (z_q, loss, (min_encoding_indices, sampled_idx,
                         mean_cb_distance, mean_cb_variance)).
    """
    b = z.shape[0]
    spatial = z.shape[2:]
    s_total = 1
    for s in spatial:
        s_total *= int(s)
    m_total = b * s_total

    # Free reshape of the contiguous channels-first tensor; per-batch
    # [e_dim, S] slabs are already lane-dense -> no wrapper transpose.
    z3 = z.astype(jnp.float32).reshape(b, e_dim, s_total)

    tile = min(tm, pl.cdiv(s_total, 128) * 128)
    s_pad = pl.cdiv(s_total, tile) * tile
    n_s_tiles = s_pad // tile
    needs_mask = s_pad != s_total
    if needs_mask:
        z3 = jnp.pad(z3, ((0, 0), (0, 0), (0, s_pad - s_total)))

    # Tiny codebook-derived operands (computed once, resident across steps).
    cb = embedding.astype(jnp.float32)
    cb_bf = cb.astype(jnp.bfloat16)
    cb_t = jnp.transpose(cb)                               # [e_dim, n_e]
    cbt_hi = cb_t.astype(jnp.bfloat16)
    cbt_lo = (cb_t - cbt_hi.astype(jnp.float32)).astype(jnp.bfloat16)
    e_sq = jnp.sum(cb * cb, axis=1, keepdims=True)         # [n_e, 1]
    e_sq_half = 0.5 * e_sq
    e_sq_row = jnp.transpose(e_sq)                         # [1, n_e]
    iota_col = jnp.arange(n_e, dtype=jnp.int32).reshape(n_e, 1)

    zq3, idx_out, sse_out = pl.pallas_call(
        functools.partial(_vq_tile_kernel, n_e=n_e, tm=tile,
                          s_total=s_total, needs_mask=needs_mask),
        out_shape=(
            jax.ShapeDtypeStruct((b, e_dim, s_pad), jnp.float32),
            jax.ShapeDtypeStruct((b, 1, s_pad), jnp.int32),
            jax.ShapeDtypeStruct((b, 1, n_s_tiles * 128), jnp.float32),
        ),
        grid=(b, n_s_tiles),
        in_specs=[
            pl.BlockSpec((None, e_dim, tile), lambda bi, j: (bi, 0, j)),
            pl.BlockSpec((n_e, 1), lambda bi, j: (0, 0)),
            pl.BlockSpec((n_e, e_dim), lambda bi, j: (0, 0)),
            pl.BlockSpec((e_dim, n_e), lambda bi, j: (0, 0)),
            pl.BlockSpec((e_dim, n_e), lambda bi, j: (0, 0)),
            pl.BlockSpec((n_e, 1), lambda bi, j: (0, 0)),
        ],
        out_specs=(
            pl.BlockSpec((None, e_dim, tile), lambda bi, j: (bi, 0, j)),
            pl.BlockSpec((None, 1, tile), lambda bi, j: (bi, 0, j)),
            pl.BlockSpec((None, 1, 128), lambda bi, j: (bi, 0, j)),
        ),
        compiler_params=pltpu.CompilerParams(
            dimension_semantics=("parallel", "parallel"),
            vmem_limit_bytes=32 * 1024 * 1024),
    )(z3, iota_col, cb_bf, cbt_hi, cbt_lo, e_sq_half)

    min_encoding_indices = idx_out[:, 0, :s_total].reshape(-1)      # [M]
    z_q = zq3[:, :, :s_total].reshape(z.shape)                      # b c *spatial

    # Loss: forward value of beta*||sg(zq)-z||^2/N + ||zq-sg(z)||^2/N (or legacy).
    sse_total = jnp.sum(sse_out.reshape(b, n_s_tiles, 128)[..., 0])
    mse = sse_total / (m_total * e_dim)
    if not legacy:
        loss = beta * mse + mse
    else:
        loss = mse + beta * mse

    # Codebook statistics (single-step kernel; logging-only scalars).
    if compute_codebook_stats:
        dist_raw, var_raw = pl.pallas_call(
            functools.partial(_codebook_stats_kernel, n_e=n_e),
            out_shape=(
                jax.ShapeDtypeStruct((1, 128), jnp.float32),
                jax.ShapeDtypeStruct((1, 128), jnp.float32),
            ),
            grid=(1,),
            in_specs=[
                pl.BlockSpec((n_e, e_dim), lambda i: (0, 0)),
                pl.BlockSpec((e_dim, n_e), lambda i: (0, 0)),
                pl.BlockSpec((n_e, 1), lambda i: (0, 0)),
                pl.BlockSpec((1, n_e), lambda i: (0, 0)),
                pl.BlockSpec((n_e, 1), lambda i: (0, 0)),
            ],
            out_specs=(
                pl.BlockSpec((1, 128), lambda i: (0, 0)),
                pl.BlockSpec((1, 128), lambda i: (0, 0)),
            ),
            compiler_params=pltpu.CompilerParams(
                dimension_semantics=("arbitrary",)),
        )(cb_bf, cbt_hi, e_sq, e_sq_row, iota_col)
        mean_cb_distance = dist_raw[0, 0]
        mean_cb_variance = var_raw[0, 0]
    else:
        mean_cb_distance = jnp.float32(0.0)
        mean_cb_variance = jnp.float32(0.0)

    # sampled_idx exactly replicates the reference code's flat scatter:
    # zeros(M*n_e); sampled[min_idx] = 1; view(M, n_e).
    sampled_idx = jnp.zeros((m_total * n_e,), jnp.float32)
    sampled_idx = sampled_idx.at[min_encoding_indices].set(1.0)
    sampled_idx = sampled_idx.reshape(m_total, n_e)

    return z_q, loss, (min_encoding_indices, sampled_idx,
                       mean_cb_distance, mean_cb_variance)


# ----------------------------------- main ------------------------------------

if __name__ == "__main__":
    n_e, e_dim = 512, 64
    b, h, w, d = 2, 8, 8, 8
    beta = 0.2

    key = jax.random.PRNGKey(0)
    k_emb, k_z = jax.random.split(key)
    # nn.Embedding(n_e, e_dim) with uniform(-1/n_e, 1/n_e) init.
    embedding = jax.random.uniform(k_emb, (n_e, e_dim), jnp.float32,
                                   minval=-1.0 / n_e, maxval=1.0 / n_e)
    # z: [b, c, h, w, z] (dim='3D', quantise='spatial').
    z = jax.random.normal(k_z, (b, e_dim, h, w, d), jnp.float32)

    z_q, loss, (idx, sampled_idx, mean_cb_distance, mean_cb_variance) = \
        vector_quantiser_forward(embedding, z, n_e=n_e, e_dim=e_dim, beta=beta)
    jax.block_until_ready((z_q, loss, idx, sampled_idx,
                           mean_cb_distance, mean_cb_variance))

    M = b * h * w * d
    assert z_q.shape == z.shape, z_q.shape
    assert z_q.dtype == jnp.float32
    assert idx.shape == (M,), idx.shape
    assert idx.dtype == jnp.int32
    assert sampled_idx.shape == (M, n_e), sampled_idx.shape
    assert loss.shape == () and mean_cb_distance.shape == () \
        and mean_cb_variance.shape == ()
    print("KERNEL_OK")
</pallas_src>

<mosaic_0001>
module attributes {stable_mosaic.version = 11 : i64} {
  func.func @_codebook_stats_kernel(%arg0: i32, %arg1: memref<512x64xbf16, #tpu.memory_space<vmem>>, %arg2: memref<64x512xbf16, #tpu.memory_space<vmem>>, %arg3: memref<512x1xf32, #tpu.memory_space<vmem>>, %arg4: memref<1x512xf32, #tpu.memory_space<vmem>>, %arg5: memref<512x1xi32, #tpu.memory_space<vmem>>, %arg6: memref<1x128xf32, #tpu.memory_space<vmem>>, %arg7: memref<1x128xf32, #tpu.memory_space<vmem>>) attributes {dimension_semantics = [#tpu.dimension_semantics<arbitrary>], iteration_bounds = array<i64: 1>, scalar_prefetch = 0 : i64, scratch_operands = 0 : i64, tpu.core_type = #tpu.core_type<tc>, window_params = [{pipeline_mode = #tpu.pipeline_mode<synchronous>, transform_indices = @transform_0, window_bounds = array<i64: 512, 64>}, {pipeline_mode = #tpu.pipeline_mode<synchronous>, transform_indices = @transform_1, window_bounds = array<i64: 64, 512>}, {pipeline_mode = #tpu.pipeline_mode<synchronous>, transform_indices = @transform_2, window_bounds = array<i64: 512, 1>}, {pipeline_mode = #tpu.pipeline_mode<synchronous>, transform_indices = @transform_3, window_bounds = array<i64: 1, 512>}, {pipeline_mode = #tpu.pipeline_mode<synchronous>, transform_indices = @transform_4, window_bounds = array<i64: 512, 1>}, {pipeline_mode = #tpu.pipeline_mode<synchronous>, transform_indices = @transform_5, window_bounds = array<i64: 1, 128>}, {pipeline_mode = #tpu.pipeline_mode<synchronous>, transform_indices = @transform_6, window_bounds = array<i64: 1, 128>}]} {
    %c0 = arith.constant 0 : index
    %c0_0 = arith.constant 0 : index
    %0 = vector.load %arg1[%c0, %c0_0] : memref<512x64xbf16, #tpu.memory_space<vmem>>, vector<512x64xbf16>
    %c0_1 = arith.constant 0 : index
    %c0_2 = arith.constant 0 : index
    %1 = vector.load %arg2[%c0_1, %c0_2] : memref<64x512xbf16, #tpu.memory_space<vmem>>, vector<64x512xbf16>
    %cst = arith.constant dense<0.000000e+00> : vector<512x512xf32>
    %2 = tpu.matmul %0, %1, %cst {dimension_numbers = #tpu.dot_dimension_numbers<[1], [0], [0], [1], [0, 0, 1, 1], [], []>} : vector<512x64xbf16>, vector<64x512xbf16>, vector<512x512xf32> -> vector<512x512xf32>
    %c0_3 = arith.constant 0 : index
    %c0_4 = arith.constant 0 : index
    %3 = vector.load %arg3[%c0_3, %c0_4] : memref<512x1xf32, #tpu.memory_space<vmem>>, vector<512x1xf32>
    %c0_5 = arith.constant 0 : index
    %c0_6 = arith.constant 0 : index
    %4 = vector.load %arg4[%c0_5, %c0_6] : memref<1x512xf32, #tpu.memory_space<vmem>>, vector<1x512xf32>
    %5 = vector.broadcast %3 : vector<512x1xf32> to vector<512x512xf32>
    %6 = vector.broadcast %4 : vector<1x512xf32> to vector<512x512xf32>
    %7 = arith.addf %5, %6 : vector<512x512xf32>
    %cst_7 = arith.constant 2.000000e+00 : f32
    %8 = vector.broadcast %cst_7 : f32 to vector<512x512xf32>
    %9 = arith.mulf %8, %2 : vector<512x512xf32>
    %10 = arith.subf %7, %9 : vector<512x512xf32>
    %c0_8 = arith.constant 0 : index
    %c0_9 = arith.constant 0 : index
    %11 = vector.load %arg5[%c0_8, %c0_9] : memref<512x1xi32, #tpu.memory_space<vmem>>, vector<512x1xi32>
    %cst_10 = arith.constant dense<0x7F800000> : vector<512xf32>
    %12 = vector.multi_reduction <minimumf>, %10, %cst_10 [0] : vector<512x512xf32> to vector<512xf32>
    %13 = vector.shape_cast %12 : vector<512xf32> to vector<1x512xf32>
    %14 = vector.broadcast %13 : vector<1x512xf32> to vector<512x512xf32>
    %15 = arith.cmpf oeq, %10, %14 : vector<512x512xf32>
    %c512_i32 = arith.constant 512 : i32
    %16 = vector.shape_cast %11 : vector<512x1xi32> to vector<512x1xi32>
    %17 = vector.broadcast %16 : vector<512x1xi32> to vector<512x512xi32>
    %18 = vector.broadcast %c512_i32 : i32 to vector<512x512xi32>
    %19 = arith.select %15, %17, %18 : vector<512x512xi1>, vector<512x512xi32>
    %cst_11 = arith.constant dense<2147483647> : vector<512xi32>
    %20 = vector.multi_reduction <minsi>, %19, %cst_11 [0] : vector<512x512xi32> to vector<512xi32>
    %21 = vector.shape_cast %20 : vector<512xi32> to vector<1x512xi32>
    %22 = vector.broadcast %11 : vector<512x1xi32> to vector<512x512xi32>
    %23 = vector.broadcast %21 : vector<1x512xi32> to vector<512x512xi32>
    %24 = arith.cmpi eq, %22, %23 : vector<512x512xi32>
    %cst_12 = arith.constant 0x7F800000 : f32
    %25 = vector.broadcast %cst_12 : f32 to vector<512x512xf32>
    %26 = arith.select %24, %25, %10 : vector<512x512xi1>, vector<512x512xf32>
    %cst_13 = arith.constant dense<0x7F800000> : vector<512xf32>
    %27 = vector.multi_reduction <minimumf>, %26, %cst_13 [0] : vector<512x512xf32> to vector<512xf32>
    %28 = vector.shape_cast %27 : vector<512xf32> to vector<1x512xf32>
    %29 = vector.shape_cast %28 : vector<1x512xf32> to vector<1x1x512xf32>
    %cst_14 = arith.constant dense<0.000000e+00> : vector<1xf32>
    %30 = vector.multi_reduction <add>, %29, %cst_14 [1, 2] : vector<1x1x512xf32> to vector<1xf32>
    %31 = vector.shape_cast %30 : vector<1xf32> to vector<1x1x1xf32>
    %32 = vector.extract %31[0, 0, 0] : f32 from vector<1x1x1xf32>
    %cst_15 = arith.constant 5.120000e+02 : f32
    %33 = arith.divf %32, %cst_15 : f32
    %34 = vector.broadcast %33 : f32 to vector<1x128xf32>
    %c0_16 = arith.constant 0 : index
    %c0_17 = arith.constant 0 : index
    %35 = vector.load %arg6[%c0_16, %c0_17] : memref<1x128xf32, #tpu.memory_space<vmem>>, vector<1x128xf32>
    tpu.vector_store %arg6[%c0_16, %c0_17], %34 {strides = array<i32>} : memref<1x128xf32, #tpu.memory_space<vmem>>, vector<1x128xf32>,
    %cst_18 = arith.constant dense<0.000000e+00> : vector<512xf32>
    %36 = vector.multi_reduction <add>, %10, %cst_18 [1] : vector<512x512xf32> to vector<512xf32>
    %37 = vector.shape_cast %36 : vector<512xf32> to vector<512x1xf32>
    %cst_19 = arith.constant 5.120000e+02 : f32
    %38 = vector.broadcast %cst_19 : f32 to vector<512x1xf32>
    %39 = arith.divf %37, %38 : vector<512x1xf32>
    %40 = vector.broadcast %39 : vector<512x1xf32> to vector<512x512xf32>
    %41 = arith.subf %10, %40 : vector<512x512xf32>
    %42 = arith.mulf %41, %41 : vector<512x512xf32>
    %cst_20 = arith.constant dense<0.000000e+00> : vector<512xf32>
    %43 = vector.multi_reduction <add>, %42, %cst_20 [1] : vector<512x512xf32> to vector<512xf32>
    %44 = vector.shape_cast %43 : vector<512xf32> to vector<512x1xf32>
    %cst_21 = arith.constant 5.110000e+02 : f32
    %45 = vector.broadcast %cst_21 : f32 to vector<512x1xf32>
    %46 = arith.divf %44, %45 : vector<512x1xf32>
    %47 = vector.shape_cast %46 : vector<512x1xf32> to vector<1x512x1xf32>
    %cst_22 = arith.constant dense<0.000000e+00> : vector<1xf32>
    %48 = vector.multi_reduction <add>, %47, %cst_22 [1, 2] : vector<1x512x1xf32> to vector<1xf32>
    %49 = vector.shape_cast %48 : vector<1xf32> to vector<1x1x1xf32>
    %50 = vector.extract %49[0, 0, 0] : f32 from vector<1x1x1xf32>
    %cst_23 = arith.constant 5.120000e+02 : f32
    %51 = arith.divf %50, %cst_23 : f32
    %52 = vector.broadcast %51 : f32 to vector<1x128xf32>
    %c0_24 = arith.constant 0 : index
    %c0_25 = arith.constant 0 : index
    %53 = vector.load %arg7[%c0_24, %c0_25] : memref<1x128xf32, #tpu.memory_space<vmem>>, vector<1x128xf32>
    tpu.vector_store %arg7[%c0_24, %c0_25], %52 {strides = array<i32>} : memref<1x128xf32, #tpu.memory_space<vmem>>, vector<1x128xf32>,
    return
  }
  func.func @transform_0(%arg0: i32) -> (i32, i32) {
    %c0_i32 = arith.constant 0 : i32
    %c0_i32_0 = arith.constant 0 : i32
    %c0_i32_1 = arith.constant 0 : i32
    return %c0_i32, %c0_i32_0 : i32, i32
  }
  func.func @transform_1(%arg0: i32) -> (i32, i32) {
    %c0_i32 = arith.constant 0 : i32
    %c0_i32_0 = arith.constant 0 : i32
    %c0_i32_1 = arith.constant 0 : i32
    return %c0_i32, %c0_i32_0 : i32, i32
  }
  func.func @transform_2(%arg0: i32) -> (i32, i32) {
    %c0_i32 = arith.constant 0 : i32
    %c0_i32_0 = arith.constant 0 : i32
    %c0_i32_1 = arith.constant 0 : i32
    return %c0_i32, %c0_i32_0 : i32, i32
  }
  func.func @transform_3(%arg0: i32) -> (i32, i32) {
    %c0_i32 = arith.constant 0 : i32
    %c0_i32_0 = arith.constant 0 : i32
    %c0_i32_1 = arith.constant 0 : i32
    return %c0_i32, %c0_i32_0 : i32, i32
  }
  func.func @transform_4(%arg0: i32) -> (i32, i32) {
    %c0_i32 = arith.constant 0 : i32
    %c0_i32_0 = arith.constant 0 : i32
    %c0_i32_1 = arith.constant 0 : i32
    return %c0_i32, %c0_i32_0 : i32, i32
  }
  func.func @transform_5(%arg0: i32) -> (i32, i32) {
    %c0_i32 = arith.constant 0 : i32
    %c0_i32_0 = arith.constant 0 : i32
    %c0_i32_1 = arith.constant 0 : i32
    return %c0_i32, %c0_i32_0 : i32, i32
  }
  func.func @transform_6(%arg0: i32) -> (i32, i32) {
    %c0_i32 = arith.constant 0 : i32
    %c0_i32_0 = arith.constant 0 : i32
    %c0_i32_1 = arith.constant 0 : i32
    return %c0_i32, %c0_i32_0 : i32, i32
  }
}

module attributes {stable_mosaic.version = 11 : i64} {
  func.func @_vq_tile_kernel(%arg0: i32, %arg1: i32, %arg2: memref<1x64x512xf32, #tpu.memory_space<vmem>>, %arg3: memref<512x1xi32, #tpu.memory_space<vmem>>, %arg4: memref<512x64xbf16, #tpu.memory_space<vmem>>, %arg5: memref<64x512xbf16, #tpu.memory_space<vmem>>, %arg6: memref<64x512xbf16, #tpu.memory_space<vmem>>, %arg7: memref<512x1xf32, #tpu.memory_space<vmem>>, %arg8: memref<1x64x512xf32, #tpu.memory_space<vmem>>, %arg9: memref<1x1x512xi32, #tpu.memory_space<vmem>>, %arg10: memref<1x1x128xf32, #tpu.memory_space<vmem>>) attributes {dimension_semantics = [#tpu.dimension_semantics<parallel>, #tpu.dimension_semantics<parallel>], iteration_bounds = array<i64: 2, 1>, scalar_prefetch = 0 : i64, scratch_operands = 0 : i64, tpu.core_type = #tpu.core_type<tc>, window_params = [{transform_indices = @transform_0, window_bounds = array<i64: 1, 64, 512>}, {pipeline_mode = #tpu.pipeline_mode<synchronous>, transform_indices = @transform_1, window_bounds = array<i64: 512, 1>}, {pipeline_mode = #tpu.pipeline_mode<synchronous>, transform_indices = @transform_2, window_bounds = array<i64: 512, 64>}, {pipeline_mode = #tpu.pipeline_mode<synchronous>, transform_indices = @transform_3, window_bounds = array<i64: 64, 512>}, {pipeline_mode = #tpu.pipeline_mode<synchronous>, transform_indices = @transform_4, window_bounds = array<i64: 64, 512>}, {pipeline_mode = #tpu.pipeline_mode<synchronous>, transform_indices = @transform_5, window_bounds = array<i64: 512, 1>}, {transform_indices = @transform_6, window_bounds = array<i64: 1, 64, 512>}, {transform_indices = @transform_7, window_bounds = array<i64: 1, 1, 512>}, {transform_indices = @transform_8, window_bounds = array<i64: 1, 1, 128>}]} {
    %c0 = arith.constant 0 : index
    %c0_0 = arith.constant 0 : index
    %c0_1 = arith.constant 0 : index
    %0 = vector.load %arg2[%c0, %c0_0, %c0_1] : memref<1x64x512xf32, #tpu.memory_space<vmem>>, vector<1x64x512xf32>
    %1 = vector.shape_cast %0 : vector<1x64x512xf32> to vector<64x512xf32>
    %c0_2 = arith.constant 0 : index
    %c0_3 = arith.constant 0 : index
    %2 = vector.load %arg3[%c0_2, %c0_3] : memref<512x1xi32, #tpu.memory_space<vmem>>, vector<512x1xi32>
    %c0_4 = arith.constant 0 : index
    %c0_5 = arith.constant 0 : index
    %3 = vector.load %arg4[%c0_4, %c0_5] : memref<512x64xbf16, #tpu.memory_space<vmem>>, vector<512x64xbf16>
    %4 = arith.truncf %1 : vector<64x512xf32> to vector<64x512xbf16>
    %cst = arith.constant dense<0.000000e+00> : vector<512x512xf32>
    %5 = tpu.matmul %3, %4, %cst {dimension_numbers = #tpu.dot_dimension_numbers<[1], [0], [0], [1], [0, 0, 1, 1], [], []>} : vector<512x64xbf16>, vector<64x512xbf16>, vector<512x512xf32> -> vector<512x512xf32>
    %c0_6 = arith.constant 0 : index
    %c0_7 = arith.constant 0 : index
    %6 = vector.load %arg7[%c0_6, %c0_7] : memref<512x1xf32, #tpu.memory_space<vmem>>, vector<512x1xf32>
    %7 = vector.broadcast %6 : vector<512x1xf32> to vector<512x512xf32>
    %8 = arith.subf %7, %5 : vector<512x512xf32>
    %cst_8 = arith.constant dense<0x7F800000> : vector<512xf32>
    %9 = vector.multi_reduction <minimumf>, %8, %cst_8 [0] : vector<512x512xf32> to vector<512xf32>
    %10 = vector.shape_cast %9 : vector<512xf32> to vector<1x512xf32>
    %11 = vector.broadcast %10 : vector<1x512xf32> to vector<512x512xf32>
    %12 = arith.cmpf oeq, %8, %11 : vector<512x512xf32>
    %c512_i32 = arith.constant 512 : i32
    %13 = vector.shape_cast %2 : vector<512x1xi32> to vector<512x1xi32>
    %14 = vector.broadcast %13 : vector<512x1xi32> to vector<512x512xi32>
    %15 = vector.broadcast %c512_i32 : i32 to vector<512x512xi32>
    %16 = arith.select %12, %14, %15 : vector<512x512xi1>, vector<512x512xi32>
    %cst_9 = arith.constant dense<2147483647> : vector<512xi32>
    %17 = vector.multi_reduction <minsi>, %16, %cst_9 [0] : vector<512x512xi32> to vector<512xi32>
    %18 = vector.shape_cast %17 : vector<512xi32> to vector<1x512xi32>
    %c0_10 = arith.constant 0 : index
    %c0_11 = arith.constant 0 : index
    %c0_12 = arith.constant 0 : index
    %19 = vector.load %arg9[%c0_10, %c0_11, %c0_12] : memref<1x1x512xi32, #tpu.memory_space<vmem>>, vector<1x1x512xi32>
    %20 = vector.shape_cast %19 : vector<1x1x512xi32> to vector<1x512xi32>
    %21 = vector.shape_cast %18 : vector<1x512xi32> to vector<1x1x512xi32>
    tpu.vector_store %arg9[%c0_10, %c0_11, %c0_12], %21 {strides = array<i32>} : memref<1x1x512xi32, #tpu.memory_space<vmem>>, vector<1x1x512xi32>,
    %22 = vector.broadcast %2 : vector<512x1xi32> to vector<512x512xi32>
    %23 = vector.broadcast %18 : vector<1x512xi32> to vector<512x512xi32>
    %24 = arith.cmpi eq, %22, %23 : vector<512x512xi32>
    %25 = arith.extui %24 : vector<512x512xi1> to vector<512x512xi32>
    %26 = arith.sitofp %25 : vector<512x512xi32> to vector<512x512xf32>
    %27 = arith.truncf %26 : vector<512x512xf32> to vector<512x512xbf16>
    %c0_13 = arith.constant 0 : index
    %c0_14 = arith.constant 0 : index
    %28 = vector.load %arg5[%c0_13, %c0_14] : memref<64x512xbf16, #tpu.memory_space<vmem>>, vector<64x512xbf16>
    %cst_15 = arith.constant dense<0.000000e+00> : vector<64x512xf32>
    %29 = tpu.matmul %28, %27, %cst_15 {dimension_numbers = #tpu.dot_dimension_numbers<[1], [0], [0], [1], [0, 0, 1, 1], [], []>} : vector<64x512xbf16>, vector<512x512xbf16>, vector<64x512xf32> -> vector<64x512xf32>
    %c0_16 = arith.constant 0 : index
    %c0_17 = arith.constant 0 : index
    %30 = vector.load %arg6[%c0_16, %c0_17] : memref<64x512xbf16, #tpu.memory_space<vmem>>, vector<64x512xbf16>
    %cst_18 = arith.constant dense<0.000000e+00> : vector<64x512xf32>
    %31 = tpu.matmul %30, %27, %cst_18 {dimension_numbers = #tpu.dot_dimension_numbers<[1], [0], [0], [1], [0, 0, 1, 1], [], []>} : vector<64x512xbf16>, vector<512x512xbf16>, vector<64x512xf32> -> vector<64x512xf32>
    %32 = arith.addf %29, %31 : vector<64x512xf32>
    %c0_19 = arith.constant 0 : index
    %c0_20 = arith.constant 0 : index
    %c0_21 = arith.constant 0 : index
    %33 = vector.load %arg8[%c0_19, %c0_20, %c0_21] : memref<1x64x512xf32, #tpu.memory_space<vmem>>, vector<1x64x512xf32>
    %34 = vector.shape_cast %33 : vector<1x64x512xf32> to vector<64x512xf32>
    %35 = vector.shape_cast %32 : vector<64x512xf32> to vector<1x64x512xf32>
    tpu.vector_store %arg8[%c0_19, %c0_20, %c0_21], %35 {strides = array<i32>} : memref<1x64x512xf32, #tpu.memory_space<vmem>>, vector<1x64x512xf32>,
    %36 = arith.subf %32, %1 : vector<64x512xf32>
    %37 = arith.mulf %36, %36 : vector<64x512xf32>
    %38 = vector.shape_cast %37 : vector<64x512xf32> to vector<1x64x512xf32>
    %cst_22 = arith.constant dense<0.000000e+00> : vector<1xf32>
    %39 = vector.multi_reduction <add>, %38, %cst_22 [1, 2] : vector<1x64x512xf32> to vector<1xf32>
    %40 = vector.shape_cast %39 : vector<1xf32> to vector<1x1x1xf32>
    %41 = vector.extract %40[0, 0, 0] : f32 from vector<1x1x1xf32>
    %42 = vector.broadcast %41 : f32 to vector<1x128xf32>
    %c0_23 = arith.constant 0 : index
    %c0_24 = arith.constant 0 : index
    %c0_25 = arith.constant 0 : index
    %43 = vector.load %arg10[%c0_23, %c0_24, %c0_25] : memref<1x1x128xf32, #tpu.memory_space<vmem>>, vector<1x1x128xf32>
    %44 = vector.shape_cast %43 : vector<1x1x128xf32> to vector<1x128xf32>
    %45 = vector.shape_cast %42 : vector<1x128xf32> to vector<1x1x128xf32>
    tpu.vector_store %arg10[%c0_23, %c0_24, %c0_25], %45 {strides = array<i32>} : memref<1x1x128xf32, #tpu.memory_space<vmem>>, vector<1x1x128xf32>,
    return
  }
  func.func @transform_0(%arg0: i32, %arg1: i32) -> (i32, i32, i32) {
    %c0_i32 = arith.constant 0 : i32
    %c0_i32_0 = arith.constant 0 : i32
    return %arg0, %c0_i32, %arg1 : i32, i32, i32
  }
  func.func @transform_1(%arg0: i32, %arg1: i32) -> (i32, i32) {
    %c0_i32 = arith.constant 0 : i32
    %c0_i32_0 = arith.constant 0 : i32
    %c0_i32_1 = arith.constant 0 : i32
    return %c0_i32, %c0_i32_0 : i32, i32
  }
  func.func @transform_2(%arg0: i32, %arg1: i32) -> (i32, i32) {
    %c0_i32 = arith.constant 0 : i32
    %c0_i32_0 = arith.constant 0 : i32
    %c0_i32_1 = arith.constant 0 : i32
    return %c0_i32, %c0_i32_0 : i32, i32
  }
  func.func @transform_3(%arg0: i32, %arg1: i32) -> (i32, i32) {
    %c0_i32 = arith.constant 0 : i32
    %c0_i32_0 = arith.constant 0 : i32
    %c0_i32_1 = arith.constant 0 : i32
    return %c0_i32, %c0_i32_0 : i32, i32
  }
  func.func @transform_4(%arg0: i32, %arg1: i32) -> (i32, i32) {
    %c0_i32 = arith.constant 0 : i32
    %c0_i32_0 = arith.constant 0 : i32
    %c0_i32_1 = arith.constant 0 : i32
    return %c0_i32, %c0_i32_0 : i32, i32
  }
  func.func @transform_5(%arg0: i32, %arg1: i32) -> (i32, i32) {
    %c0_i32 = arith.constant 0 : i32
    %c0_i32_0 = arith.constant 0 : i32
    %c0_i32_1 = arith.constant 0 : i32
    return %c0_i32, %c0_i32_0 : i32, i32
  }
  func.func @transform_6(%arg0: i32, %arg1: i32) -> (i32, i32, i32) {
    %c0_i32 = arith.constant 0 : i32
    %c0_i32_0 = arith.constant 0 : i32
    return %arg0, %c0_i32, %arg1 : i32, i32, i32
  }
  func.func @transform_7(%arg0: i32, %arg1: i32) -> (i32, i32, i32) {
    %c0_i32 = arith.constant 0 : i32
    %c0_i32_0 = arith.constant 0 : i32
    return %arg0, %c0_i32, %arg1 : i32, i32, i32
  }
  func.func @transform_8(%arg0: i32, %arg1: i32) -> (i32, i32, i32) {
    %c0_i32 = arith.constant 0 : i32
    %c0_i32_0 = arith.constant 0 : i32
    return %arg0, %c0_i32, %arg1 : i32, i32, i32
  }
}

</mosaic_0001>

<llo_original>
// kernel: vector_quantiser_forward.2
$region0: #{vector_quantiser_forward.2}
  #allocation0 [shape = 'u32[]', space=smem, size = 0x4, offset = 0x4, fixed_abs, tag = 'smem constant byte address 0x4 - core index']
  #allocation1 [shape = 'u32[144,128]{1,0:T(1,128)}', space=vmem, size = 0x12000, scoped, tag = 'internal scratch']
  %s0 = inlined_call_operand.vmem [shape: f32[2,64,512], index: 0, kind: input, shape index: {}]
  %s1 = inlined_call_operand.vmem [shape: s32[512,1], index: 1, kind: input, shape index: {}]
  %s2 = inlined_call_operand.vmem [shape: bf16[512,64], index: 2, kind: input, shape index: {}]
  %s3 = inlined_call_operand.vmem [shape: bf16[64,512], index: 3, kind: input, shape index: {}]
  %s4 = inlined_call_operand.vmem [shape: bf16[64,512], index: 4, kind: input, shape index: {}]
  %s5 = inlined_call_operand.vmem [shape: f32[512,1], index: 5, kind: input, shape index: {}]
  %s6 = inlined_call_operand.vmem [shape: f32[2,64,512], index: 6, kind: output, shape index: {0}]
  %s7 = inlined_call_operand.vmem [shape: s32[2,1,512], index: 7, kind: output, shape index: {1}]
  %s8 = inlined_call_operand.vmem [shape: f32[2,1,128], index: 8, kind: output, shape index: {2}]
  %9 = xla_tuple %s6, %s7, %s8
  %s10 = sld [smem:[#allocation0]]
  $region73: #{vector_quantiser_forward.2} parent=0
    _
  %s12 = ssub.s32 1, %s10
  %s13 = scalar_select 0, %s12, %s10
  loop: start=0, step=1, limit=4
  $region2: #{vector_quantiser_forward.2} parent=0 // loop_pre_header
    _
  $region3: #{vector_quantiser_forward.2} parent=0 // loop_header
    %s15 = sphi 0, %s19
    %p16 = scmp.ge.s32.totalorder %s15, 4
    %s22 = sphi 0, %s34
    %s23 = sphi 0, %s30
    %s24 = sphi 0, %s22
    %s25 = sphi 0, %s23
    %s26 = sphi 0, %s24
    %s27 = sphi 0, %s25
    %s39 = sphi 0, %s41
    %s42 = sphi 0, %s39
    %s43 = sphi 0, %s42
    %s59 = sphi 0, %s43
    %s63 = sphi 0, %s63
    %s65 = sphi 0, %s63
    %s66 = sphi 0, %s65
    %s80 = sphi 0, %s66
    %s84 = sphi 0, %s84
    %s86 = sphi 0, %s84
    %s87 = sphi 0, %s86
    %s101 = sphi 0, %s87
    %s105 = sphi 0, %s105
    %s107 = sphi 0, %s105
    %s108 = sphi 0, %s107
    %s122 = sphi 0, %s108
    %s126 = sphi 0, %s126
    %s128 = sphi 0, %s126
    %s129 = sphi 0, %s128
    %s143 = sphi 0, %s129
    %s147 = sphi 0, %s147
    %s149 = sphi 0, %s147
    %s150 = sphi 0, %s149
    %s164 = sphi 0, %s150
    %s172 = sphi 0, %s174
    %s175 = sphi 0, %s172
    %s176 = sphi 0, %s175
    %s192 = sphi 0, %s176
    %s200 = sphi 0, %s202
    %s203 = sphi 0, %s200
    %s204 = sphi 0, %s203
    %s220 = sphi 0, %s204
    %s228 = sphi 0, %s230
    %s231 = sphi 0, %s228
    %s232 = sphi 0, %s231
    %s248 = sphi 0, %s232
  $region4: #{vector_quantiser_forward.2} parent=0 // loop_header_branch
    %18 = sbr.rel (%p16) target = $region8
  $region5: #{vector_quantiser_forward.2} parent=0 // loop_body
    %s20 = ssub.s32 %s15, 1
    %s21 = ssub.s32 %s15, 2
    %s28 = sadd.s32 1, %s23
    %p29 = scmp.ge.s32.totalorder %s28, 1
    %s30 = scalar_select %p29, 0, %s28
    %s31 = sadd.s32 1, %s22
    %s32 = scalar_select %p29, %s31, %s22
    %p33 = scmp.ge.s32.totalorder %s32, 2
    %s34 = scalar_select %p33, 0, %s32
    %s35 = ssub.s32 %s22, %s34
    %s36 = ssub.s32 %s23, %s30
    %s37 = sor.u32 %s35, %s36
    %p38 = scmp.eq.s32.totalorder %s37, 0
    %s40 = sadd.s32 %s39, 1
    %s41 = scalar_select %p38, %s39, %s40
    %p44 = pneg %p38
    %p45 = scmp.eq.s32.totalorder %s15, 1
    %p46 = por %p44, %p45
    %p47 = scmp.ne.s32.totalorder %s39, %s42
    %p48 = scmp.eq.s32.totalorder %s15, 0
    %p49 = por %p47, %p48
    %p50 = scmp.ne.s32.totalorder %s39, %s42
    %p51 = scmp.eq.s32.totalorder %s20, 1
    %p52 = por %p50, %p51
    %p53 = scmp.ne.s32.totalorder %s42, %s43
    %p54 = scmp.eq.s32.totalorder %s20, 0
    %p55 = por %p53, %p54
    %p56 = scmp.ne.s32.totalorder %s42, %s43
    %p57 = scmp.eq.s32.totalorder %s21, 1
    %p58 = por %p56, %p57
    %p60 = scmp.ne.s32.totalorder %s43, %s59
    %p61 = scmp.eq.s32.totalorder %s21, 0
    %p62 = por %p60, %p61
    %s64 = sadd.s32 %s63, 1
    %p67 = scmp.eq.s32.totalorder %s15, 1
    %p68 = scmp.ne.s32.totalorder %s63, %s65
    %p69 = scmp.eq.s32.totalorder %s15, 0
    %p70 = por %p68, %p69
    %p71 = scmp.ne.s32.totalorder %s63, %s65
    %p72 = scmp.eq.s32.totalorder %s20, 1
    %p73 = por %p71, %p72
    %p74 = scmp.ne.s32.totalorder %s65, %s66
    %p75 = scmp.eq.s32.totalorder %s20, 0
    %p76 = por %p74, %p75
    %p77 = scmp.ne.s32.totalorder %s65, %s66
    %p78 = scmp.eq.s32.totalorder %s21, 1
    %p79 = por %p77, %p78
    %p81 = scmp.ne.s32.totalorder %s66, %s80
    %p82 = scmp.eq.s32.totalorder %s21, 0
    %p83 = por %p81, %p82
    %s85 = sadd.s32 %s84, 1
    %p88 = scmp.eq.s32.totalorder %s15, 1
    %p89 = scmp.ne.s32.totalorder %s84, %s86
    %p90 = scmp.eq.s32.totalorder %s15, 0
    %p91 = por %p89, %p90
    %p92 = scmp.ne.s32.totalorder %s84, %s86
    %p93 = scmp.eq.s32.totalorder %s20, 1
    %p94 = por %p92, %p93
    %p95 = scmp.ne.s32.totalorder %s86, %s87
    %p96 = scmp.eq.s32.totalorder %s20, 0
    %p97 = por %p95, %p96
    %p98 = scmp.ne.s32.totalorder %s86, %s87
    %p99 = scmp.eq.s32.totalorder %s21, 1
    %p100 = por %p98, %p99
    %p102 = scmp.ne.s32.totalorder %s87, %s101
    %p103 = scmp.eq.s32.totalorder %s21, 0
    %p104 = por %p102, %p103
    %s106 = sadd.s32 %s105, 1
    %p109 = scmp.eq.s32.totalorder %s15, 1
    %p110 = scmp.ne.s32.totalorder %s105, %s107
    %p111 = scmp.eq.s32.totalorder %s15, 0
    %p112 = por %p110, %p111
    %p113 = scmp.ne.s32.totalorder %s105, %s107
    %p114 = scmp.eq.s32.totalorder %s20, 1
    %p115 = por %p113, %p114
    %p116 = scmp.ne.s32.totalorder %s107, %s108
    %p117 = scmp.eq.s32.totalorder %s20, 0
    %p118 = por %p116, %p117
    %p119 = scmp.ne.s32.totalorder %s107, %s108
    %p120 = scmp.eq.s32.totalorder %s21, 1
    %p121 = por %p119, %p120
    %p123 = scmp.ne.s32.totalorder %s108, %s122
    %p124 = scmp.eq.s32.totalorder %s21, 0
    %p125 = por %p123, %p124
    %s127 = sadd.s32 %s126, 1
    %p130 = scmp.eq.s32.totalorder %s15, 1
    %p131 = scmp.ne.s32.totalorder %s126, %s128
    %p132 = scmp.eq.s32.totalorder %s15, 0
    %p133 = por %p131, %p132
    %p134 = scmp.ne.s32.totalorder %s126, %s128
    %p135 = scmp.eq.s32.totalorder %s20, 1
    %p136 = por %p134, %p135
    %p137 = scmp.ne.s32.totalorder %s128, %s129
    %p138 = scmp.eq.s32.totalorder %s20, 0
    %p139 = por %p137, %p138
    %p140 = scmp.ne.s32.totalorder %s128, %s129
    %p141 = scmp.eq.s32.totalorder %s21, 1
    %p142 = por %p140, %p141
    %p144 = scmp.ne.s32.totalorder %s129, %s143
    %p145 = scmp.eq.s32.totalorder %s21, 0
    %p146 = por %p144, %p145
    %s148 = sadd.s32 %s147, 1
    %p151 = scmp.eq.s32.totalorder %s15, 1
    %p152 = scmp.ne.s32.totalorder %s147, %s149
    %p153 = scmp.eq.s32.totalorder %s15, 0
    %p154 = por %p152, %p153
    %p155 = scmp.ne.s32.totalorder %s147, %s149
    %p156 = scmp.eq.s32.totalorder %s20, 1
    %p157 = por %p155, %p156
    %p158 = scmp.ne.s32.totalorder %s149, %s150
    %p159 = scmp.eq.s32.totalorder %s20, 0
    %p160 = por %p158, %p159
    %p161 = scmp.ne.s32.totalorder %s149, %s150
    %p162 = scmp.eq.s32.totalorder %s21, 1
    %p163 = por %p161, %p162
    %p165 = scmp.ne.s32.totalorder %s150, %s164
    %p166 = scmp.eq.s32.totalorder %s21, 0
    %p167 = por %p165, %p166
    %s168 = ssub.s32 %s22, %s34
    %s169 = ssub.s32 %s23, %s30
    %s170 = sor.u32 %s168, %s169
    %p171 = scmp.eq.s32.totalorder %s170, 0
    %s173 = sadd.s32 %s172, 1
    %s174 = scalar_select %p171, %s172, %s173
    %p177 = pneg %p171
    %p178 = scmp.eq.s32.totalorder %s15, 1
    %p179 = por %p177, %p178
    %p180 = scmp.ne.s32.totalorder %s172, %s175
    %p181 = scmp.eq.s32.totalorder %s15, 0
    %p182 = por %p180, %p181
    %p183 = scmp.ne.s32.totalorder %s172, %s175
    %p184 = scmp.eq.s32.totalorder %s20, 1
    %p185 = por %p183, %p184
    %p186 = scmp.ne.s32.totalorder %s175, %s176
    %p187 = scmp.eq.s32.totalorder %s20, 0
    %p188 = por %p186, %p187
    %p189 = scmp.ne.s32.totalorder %s175, %s176
    %p190 = scmp.eq.s32.totalorder %s21, 1
    %p191 = por %p189, %p190
    %p193 = scmp.ne.s32.totalorder %s176, %s192
    %p194 = scmp.eq.s32.totalorder %s21, 0
    %p195 = por %p193, %p194
    %s196 = ssub.s32 %s22, %s34
    %s197 = ssub.s32 %s23, %s30
    %s198 = sor.u32 %s196, %s197
    %p199 = scmp.eq.s32.totalorder %s198, 0
    %s201 = sadd.s32 %s200, 1
    %s202 = scalar_select %p199, %s200, %s201
    %p205 = pneg %p199
    %p206 = scmp.eq.s32.totalorder %s15, 1
    %p207 = por %p205, %p206
    %p208 = scmp.ne.s32.totalorder %s200, %s203
    %p209 = scmp.eq.s32.totalorder %s15, 0
    %p210 = por %p208, %p209
    %p211 = scmp.ne.s32.totalorder %s200, %s203
    %p212 = scmp.eq.s32.totalorder %s20, 1
    %p213 = por %p211, %p212
    %p214 = scmp.ne.s32.totalorder %s203, %s204
    %p215 = scmp.eq.s32.totalorder %s20, 0
    %p216 = por %p214, %p215
    %p217 = scmp.ne.s32.totalorder %s203, %s204
    %p218 = scmp.eq.s32.totalorder %s21, 1
    %p219 = por %p217, %p218
    %p221 = scmp.ne.s32.totalorder %s204, %s220
    %p222 = scmp.eq.s32.totalorder %s21, 0
    %p223 = por %p221, %p222
    %s224 = ssub.s32 %s22, %s34
    %s225 = ssub.s32 %s23, %s30
    %s226 = sor.u32 %s224, %s225
    %p227 = scmp.eq.s32.totalorder %s226, 0
    %s229 = sadd.s32 %s228, 1
    %s230 = scalar_select %p227, %s228, %s229
    %p233 = pneg %p227
    %p234 = scmp.eq.s32.totalorder %s15, 1
    %p235 = por %p233, %p234
    %p236 = scmp.ne.s32.totalorder %s228, %s231
    %p237 = scmp.eq.s32.totalorder %s15, 0
    %p238 = por %p236, %p237
    %p239 = scmp.ne.s32.totalorder %s228, %s231
    %p240 = scmp.eq.s32.totalorder %s20, 1
    %p241 = por %p239, %p240
    %p242 = scmp.ne.s32.totalorder %s231, %s232
    %p243 = scmp.eq.s32.totalorder %s20, 0
    %p244 = por %p242, %p243
    %p245 = scmp.ne.s32.totalorder %s231, %s232
    %p246 = scmp.eq.s32.totalorder %s21, 1
    %p247 = por %p245, %p246
    %p249 = scmp.ne.s32.totalorder %s232, %s248
    %p250 = scmp.eq.s32.totalorder %s21, 0
    %p251 = por %p249, %p250
    %p252 = scmp.le.s32.totalorder 1, %s15
    %p253 = scmp.lt.s32.totalorder %s15, 3
    %p254 = pnand %p252, %p253
    %p255 = pneg %p254
    // Predicated region
    $region9: #{vector_quantiser_forward.2} parent=5 // pred_check
      _
    $region10: #{vector_quantiser_forward.2} parent=5 // pred_check_branch
      %257 = sbr.rel (%p254) target = $region12
    $region11: #{vector_quantiser_forward.2} parent=5 // pred_region
      %s258 = ssub.s32 %s15, 1
      // Predicated region
      $region13: #{vector_quantiser_forward.2} parent=11 // pred_check
        %p259 = pneg %p76
      $region14: #{vector_quantiser_forward.2} parent=11 // pred_check_branch
        %261 = sbr.rel (%p259) target = $region16
      $region15: #{vector_quantiser_forward.2} parent=11 // pred_region
        _
      $region16: #{vector_quantiser_forward.2} parent=11 // pred_fallthru
        _
      // Predicated region
      $region17: #{vector_quantiser_forward.2} parent=11 // pred_check
        %p262 = pneg %p97
      $region18: #{vector_quantiser_forward.2} parent=11 // pred_check_branch
        %264 = sbr.rel (%p262) target = $region20
      $region19: #{vector_quantiser_forward.2} parent=11 // pred_region
        _
      $region20: #{vector_quantiser_forward.2} parent=11 // pred_fallthru
        _
      // Predicated region
      $region21: #{vector_quantiser_forward.2} parent=11 // pred_check
        %p265 = pneg %p118
      $region22: #{vector_quantiser_forward.2} parent=11 // pred_check_branch
        %267 = sbr.rel (%p265) target = $region24
      $region23: #{vector_quantiser_forward.2} parent=11 // pred_region
        _
      $region24: #{vector_quantiser_forward.2} parent=11 // pred_fallthru
        _
      // Predicated region
      $region25: #{vector_quantiser_forward.2} parent=11 // pred_check
        %p268 = pneg %p139
      $region26: #{vector_quantiser_forward.2} parent=11 // pred_check_branch
        %270 = sbr.rel (%p268) target = $region28
      $region27: #{vector_quantiser_forward.2} parent=11 // pred_region
        _
      $region28: #{vector_quantiser_forward.2} parent=11 // pred_fallthru
        _
      // Predicated region
      $region29: #{vector_quantiser_forward.2} parent=11 // pred_check
        %p271 = pneg %p160
      $region30: #{vector_quantiser_forward.2} parent=11 // pred_check_branch
        %273 = sbr.rel (%p271) target = $region32
      $region31: #{vector_quantiser_forward.2} parent=11 // pred_region
        _
      $region32: #{vector_quantiser_forward.2} parent=11 // pred_fallthru
        _
    $region12: #{vector_quantiser_forward.2} parent=5 // pred_fallthru
      _
    %p274 = scmp.lt.s32.totalorder %s15, 2
    // Predicated region
    $region33: #{vector_quantiser_forward.2} parent=5 // pred_check
      %p275 = pneg %p274
    $region34: #{vector_quantiser_forward.2} parent=5 // pred_check_branch
      %277 = sbr.rel (%p275) target = $region36
    $region35: #{vector_quantiser_forward.2} parent=5 // pred_region
      // Predicated region
      $region37: #{vector_quantiser_forward.2} parent=35 // pred_check
        %p278 = pneg %p49
      $region38: #{vector_quantiser_forward.2} parent=35 // pred_check_branch
        %280 = sbr.rel (%p278) target = $region40
      $region39: #{vector_quantiser_forward.2} parent=35 // pred_region
        %s281 = smul.u32 4, %s23
        %p282 = scmp.lt.s32.totalorder %s22, 1
        %s283 = scalar_select %p282, %s22, 1
        %p284 = scmp.lt.s32.totalorder %s281, 3
        %s285 = scalar_select %p284, %s281, 3
        %s286 = smul.addr %s283, 32
        %s287 = sadd.s32 %s285, %s286
        %s288 = smul.addr %s287, 8
        %s289 = scalar_lea.vmem %s0, %s288
        %s290 = smul.u32 4, %s23
      $region40: #{vector_quantiser_forward.2} parent=35 // pred_fallthru
        _
    $region36: #{vector_quantiser_forward.2} parent=5 // pred_fallthru
      _
    %p291 = scmp.le.s32.totalorder 1, %s15
    %p292 = scmp.lt.s32.totalorder %s15, 3
    %p293 = pnand %p291, %p292
    %p294 = pneg %p293
    // Predicated region
    $region41: #{vector_quantiser_forward.2} parent=5 // pred_check
      _
    $region42: #{vector_quantiser_forward.2} parent=5 // pred_check_branch
      %296 = sbr.rel (%p293) target = $region44
    $region43: #{vector_quantiser_forward.2} parent=5 // pred_region
      %s297 = ssub.s32 %s15, 1
      %s298 = smul.u32 4, %s25
      %p299 = scmp.lt.s32.totalorder %s24, 1
      %s300 = scalar_select %p299, %s24, 1
      %p301 = scmp.lt.s32.totalorder %s298, 3
      %s302 = scalar_select %p301, %s298, 3
      %s303 = smul.addr %s300, 32
      %s304 = sadd.s32 %s302, %s303
      %s305 = smul.addr %s304, 8
      %s306 = scalar_lea.vmem %s0, %s305
      %p307 = pneg %p55
      %p308 = pneg %p52
      %p309 = pneg %p76
      %p310 = pneg %p73
      %p311 = pneg %p97
      %p312 = pneg %p94
      %p313 = pneg %p118
      %p314 = pneg %p115
      %p315 = pneg %p139
      %p316 = pneg %p136
      %p317 = pneg %p160
      %p318 = pneg %p157
      %p319 = pneg %p188
      %p320 = pneg %p185
      %s321 = smul.u32 4, %s25
      %p322 = scmp.lt.s32.totalorder %s24, 1
      %s323 = scalar_select %p322, %s24, 1
      %p324 = scmp.lt.s32.totalorder %s321, 3
      %s325 = scalar_select %p324, %s321, 3
      %s326 = smul.addr %s323, 32
      %s327 = sadd.s32 %s325, %s326
      %s328 = smul.addr %s327, 8
      %s329 = scalar_lea.vmem %s6, %s328
      %p330 = pneg %p216
      %p331 = pneg %p213
      %s332 = smul.u32 4, %s25
      %p333 = scmp.lt.s32.totalorder %s24, 1
      %s334 = scalar_select %p333, %s24, 1
      %p335 = scmp.lt.s32.totalorder %s332, 3
      %s336 = scalar_select %p335, %s332, 3
      %s337 = smul.addr %s334, 4
      %s338 = sadd.s32 %s336, %s337
      %s339 = scalar_lea.vmem %s7, %s338
      %p340 = pneg %p244
      %p341 = pneg %p241
      %p342 = scmp.lt.s32.totalorder %s24, 1
      %s343 = scalar_select %p342, %s24, 1
      %p344 = scmp.lt.s32.totalorder %s25, 0
      %s345 = scalar_select %p344, %s25, 0
      %s346 = sadd.s32 %s345, %s343
      %s347 = scalar_lea.vmem %s8, %s346
      %s348 = smul.u32 4, %s25
      %p349 = scmp.lt.s32.totalorder %s24, 1
      %s350 = scalar_select %p349, %s24, 1
      %p351 = scmp.lt.s32.totalorder %s348, 3
      %s352 = scalar_select %p351, %s348, 3
      %s353 = smul.addr %s350, 32
      %s354 = sadd.s32 %s352, %s353
      %s355 = smul.addr %s354, 8
      %s356 = scalar_lea.vmem %s0, %s355
      %s357 = smul.u32 4, %s25
      %s358 = smul.u32 4, %s25
      %p359 = scmp.lt.s32.totalorder %s24, 1
      %s360 = scalar_select %p359, %s24, 1
      %p361 = scmp.lt.s32.totalorder %s358, 3
      %s362 = scalar_select %p361, %s358, 3
      %s363 = smul.addr %s360, 32
      %s364 = sadd.s32 %s362, %s363
      %s365 = smul.addr %s364, 8
      %s366 = scalar_lea.vmem %s6, %s365
      %s367 = smul.u32 4, %s25
      %s368 = smul.u32 4, %s25
      %p369 = scmp.lt.s32.totalorder %s24, 1
      %s370 = scalar_select %p369, %s24, 1
      %p371 = scmp.lt.s32.totalorder %s368, 3
      %s372 = scalar_select %p371, %s368, 3
      %s373 = smul.addr %s370, 4
      %s374 = sadd.s32 %s372, %s373
      %s375 = scalar_lea.vmem %s7, %s374
      %s376 = smul.u32 4, %s25
      %p377 = scmp.lt.s32.totalorder %s24, 1
      %s378 = scalar_select %p377, %s24, 1
      %p379 = scmp.lt.s32.totalorder %s25, 0
      %s380 = scalar_select %p379, %s25, 0
      %s381 = sadd.s32 %s380, %s378
      %s382 = scalar_lea.vmem %s8, %s381
      %v384 = vld [vmem:[%s356] sm:$0xff]
      %v385 = vld [vmem:[%s356 + $0x8] sm:$0xff]
      %v386 = vld [vmem:[%s356 + $0x10] sm:$0xff]
      %v387 = vld [vmem:[%s356 + $0x18] sm:$0xff]
      %v388 = vld [vmem:[%s356 + $0x20] sm:$0xff]
      %v389 = vld [vmem:[%s356 + $0x28] sm:$0xff]
      %v390 = vld [vmem:[%s356 + $0x30] sm:$0xff]
      %v391 = vld [vmem:[%s356 + $0x38] sm:$0xff]
      %v392 = vld [vmem:[%s356 + $0x40] sm:$0xff]
      %v393 = vld [vmem:[%s356 + $0x48] sm:$0xff]
      %v394 = vld [vmem:[%s356 + $0x50] sm:$0xff]
      %v395 = vld [vmem:[%s356 + $0x58] sm:$0xff]
      %v396 = vld [vmem:[%s356 + $0x60] sm:$0xff]
      %v397 = vld [vmem:[%s356 + $0x68] sm:$0xff]
      %v398 = vld [vmem:[%s356 + $0x70] sm:$0xff]
      %v399 = vld [vmem:[%s356 + $0x78] sm:$0xff]
      %v400 = vld [vmem:[%s356 + $0x80] sm:$0xff]
      %v401 = vld [vmem:[%s356 + $0x88] sm:$0xff]
      %v402 = vld [vmem:[%s356 + $0x90] sm:$0xff]
      %v403 = vld [vmem:[%s356 + $0x98] sm:$0xff]
      %v404 = vld [vmem:[%s356 + $0xa0] sm:$0xff]
      %v405 = vld [vmem:[%s356 + $0xa8] sm:$0xff]
      %v406 = vld [vmem:[%s356 + $0xb0] sm:$0xff]
      %v407 = vld [vmem:[%s356 + $0xb8] sm:$0xff]
      %v408 = vld [vmem:[%s356 + $0xc0] sm:$0xff]
      %v409 = vld [vmem:[%s356 + $0xc8] sm:$0xff]
      %v410 = vld [vmem:[%s356 + $0xd0] sm:$0xff]
      %v411 = vld [vmem:[%s356 + $0xd8] sm:$0xff]
      %v412 = vld [vmem:[%s356 + $0xe0] sm:$0xff]
      %v413 = vld [vmem:[%s356 + $0xe8] sm:$0xff]
      %v414 = vld [vmem:[%s356 + $0xf0] sm:$0xff]
      %v415 = vld [vmem:[%s356 + $0xf8] sm:$0xff]
      %v416 = vld [vmem:[%s1] sm:$0xff]
      %v417 = vld [vmem:[%s1 + $0x8] sm:$0xff]
      %v418 = vld [vmem:[%s1 + $0x10] sm:$0xff]
      %v419 = vld [vmem:[%s1 + $0x18] sm:$0xff]
      %v420 = vld [vmem:[%s1 + $0x20] sm:$0xff]
      %v421 = vld [vmem:[%s1 + $0x28] sm:$0xff]
      %v422 = vld [vmem:[%s1 + $0x30] sm:$0xff]
      %v423 = vld [vmem:[%s1 + $0x38] sm:$0xff]
      %v424 = vld [vmem:[%s1 + $0x40] sm:$0xff]
      %v425 = vld [vmem:[%s1 + $0x48] sm:$0xff]
      %v426 = vld [vmem:[%s1 + $0x50] sm:$0xff]
      %v427 = vld [vmem:[%s1 + $0x58] sm:$0xff]
      %v428 = vld [vmem:[%s1 + $0x60] sm:$0xff]
      %v429 = vld [vmem:[%s1 + $0x68] sm:$0xff]
      %v430 = vld [vmem:[%s1 + $0x70] sm:$0xff]
      %v431 = vld [vmem:[%s1 + $0x78] sm:$0xff]
      %v432 = vld [vmem:[%s1 + $0x80] sm:$0xff]
      %v433 = vld [vmem:[%s1 + $0x88] sm:$0xff]
      %v434 = vld [vmem:[%s1 + $0x90] sm:$0xff]
      %v435 = vld [vmem:[%s1 + $0x98] sm:$0xff]
      %v436 = vld [vmem:[%s1 + $0xa0] sm:$0xff]
      %v437 = vld [vmem:[%s1 + $0xa8] sm:$0xff]
      %v438 = vld [vmem:[%s1 + $0xb0] sm:$0xff]
      %v439 = vld [vmem:[%s1 + $0xb8] sm:$0xff]
      %v440 = vld [vmem:[%s1 + $0xc0] sm:$0xff]
      %v441 = vld [vmem:[%s1 + $0xc8] sm:$0xff]
      %v442 = vld [vmem:[%s1 + $0xd0] sm:$0xff]
      %v443 = vld [vmem:[%s1 + $0xd8] sm:$0xff]
      %v444 = vld [vmem:[%s1 + $0xe0] sm:$0xff]
      %v445 = vld [vmem:[%s1 + $0xe8] sm:$0xff]
      %v446 = vld [vmem:[%s1 + $0xf0] sm:$0xff]
      %v447 = vld [vmem:[%s1 + $0xf8] sm:$0xff]
      %v448 = vld [vmem:[%s1 + $0x100] sm:$0xff]
      %v449 = vld [vmem:[%s1 + $0x108] sm:$0xff]
      %v450 = vld [vmem:[%s1 + $0x110] sm:$0xff]
      %v451 = vld [vmem:[%s1 + $0x118] sm:$0xff]
      %v452 = vld [vmem:[%s1 + $0x120] sm:$0xff]
      %v453 = vld [vmem:[%s1 + $0x128] sm:$0xff]
      %v454 = vld [vmem:[%s1 + $0x130] sm:$0xff]
      %v455 = vld [vmem:[%s1 + $0x138] sm:$0xff]
      %v456 = vld [vmem:[%s1 + $0x140] sm:$0xff]
      %v457 = vld [vmem:[%s1 + $0x148] sm:$0xff]
      %v458 = vld [vmem:[%s1 + $0x150] sm:$0xff]
      %v459 = vld [vmem:[%s1 + $0x158] sm:$0xff]
      %v460 = vld [vmem:[%s1 + $0x160] sm:$0xff]
      %v461 = vld [vmem:[%s1 + $0x168] sm:$0xff]
      %v462 = vld [vmem:[%s1 + $0x170] sm:$0xff]
      %v463 = vld [vmem:[%s1 + $0x178] sm:$0xff]
      %v464 = vld [vmem:[%s1 + $0x180] sm:$0xff]
      %v465 = vld [vmem:[%s1 + $0x188] sm:$0xff]
      %v466 = vld [vmem:[%s1 + $0x190] sm:$0xff]
      %v467 = vld [vmem:[%s1 + $0x198] sm:$0xff]
      %v468 = vld [vmem:[%s1 + $0x1a0] sm:$0xff]
      %v469 = vld [vmem:[%s1 + $0x1a8] sm:$0xff]
      %v470 = vld [vmem:[%s1 + $0x1b0] sm:$0xff]
      %v471 = vld [vmem:[%s1 + $0x1b8] sm:$0xff]
      %v472 = vld [vmem:[%s1 + $0x1c0] sm:$0xff]
      %v473 = vld [vmem:[%s1 + $0x1c8] sm:$0xff]
      %v474 = vld [vmem:[%s1 + $0x1d0] sm:$0xff]
      %v475 = vld [vmem:[%s1 + $0x1d8] sm:$0xff]
      %v476 = vld [vmem:[%s1 + $0x1e0] sm:$0xff]
      %v477 = vld [vmem:[%s1 + $0x1e8] sm:$0xff]
      %v478 = vld [vmem:[%s1 + $0x1f0] sm:$0xff]
      %v479 = vld [vmem:[%s1 + $0x1f8] sm:$0xff]
      %v480 = vld [vmem:[%s2] sm:$0xf]
      %v481 = vld [vmem:[%s2 + $0x4] sm:$0xf]
      %v482 = vld [vmem:[%s2 + $0x8] sm:$0xf]
      %v483 = vld [vmem:[%s2 + $0xc] sm:$0xf]
      %v484 = vld [vmem:[%s2 + $0x10] sm:$0xf]
      %v485 = vld [vmem:[%s2 + $0x14] sm:$0xf]
      %v486 = vld [vmem:[%s2 + $0x18] sm:$0xf]
      %v487 = vld [vmem:[%s2 + $0x1c] sm:$0xf]
      %v488 = vld [vmem:[%s2 + $0x20] sm:$0xf]
      %v489 = vld [vmem:[%s2 + $0x24] sm:$0xf]
      %v490 = vld [vmem:[%s2 + $0x28] sm:$0xf]
      %v491 = vld [vmem:[%s2 + $0x2c] sm:$0xf]
      %v492 = vld [vmem:[%s2 + $0x30] sm:$0xf]
      %v493 = vld [vmem:[%s2 + $0x34] sm:$0xf]
      %v494 = vld [vmem:[%s2 + $0x38] sm:$0xf]
      %v495 = vld [vmem:[%s2 + $0x3c] sm:$0xf]
      %v496 = vld [vmem:[%s2 + $0x40] sm:$0xf]
      %v497 = vld [vmem:[%s2 + $0x44] sm:$0xf]
      %v498 = vld [vmem:[%s2 + $0x48] sm:$0xf]
      %v499 = vld [vmem:[%s2 + $0x4c] sm:$0xf]
      %v500 = vld [vmem:[%s2 + $0x50] sm:$0xf]
      %v501 = vld [vmem:[%s2 + $0x54] sm:$0xf]
      %v502 = vld [vmem:[%s2 + $0x58] sm:$0xf]
      %v503 = vld [vmem:[%s2 + $0x5c] sm:$0xf]
      %v504 = vld [vmem:[%s2 + $0x60] sm:$0xf]
      %v505 = vld [vmem:[%s2 + $0x64] sm:$0xf]
      %v506 = vld [vmem:[%s2 + $0x68] sm:$0xf]
      %v507 = vld [vmem:[%s2 + $0x6c] sm:$0xf]
      %v508 = vld [vmem:[%s2 + $0x70] sm:$0xf]
      %v509 = vld [vmem:[%s2 + $0x74] sm:$0xf]
      %v510 = vld [vmem:[%s2 + $0x78] sm:$0xf]
      %v511 = vld [vmem:[%s2 + $0x7c] sm:$0xf]
      %v512 = vld [vmem:[%s2 + $0x80] sm:$0xf]
      %v513 = vld [vmem:[%s2 + $0x84] sm:$0xf]
      %v514 = vld [vmem:[%s2 + $0x88] sm:$0xf]
      %v515 = vld [vmem:[%s2 + $0x8c] sm:$0xf]
      %v516 = vld [vmem:[%s2 + $0x90] sm:$0xf]
      %v517 = vld [vmem:[%s2 + $0x94] sm:$0xf]
      %v518 = vld [vmem:[%s2 + $0x98] sm:$0xf]
      %v519 = vld [vmem:[%s2 + $0x9c] sm:$0xf]
      %v520 = vld [vmem:[%s2 + $0xa0] sm:$0xf]
      %v521 = vld [vmem:[%s2 + $0xa4] sm:$0xf]
      %v522 = vld [vmem:[%s2 + $0xa8] sm:$0xf]
      %v523 = vld [vmem:[%s2 + $0xac] sm:$0xf]
      %v524 = vld [vmem:[%s2 + $0xb0] sm:$0xf]
      %v525 = vld [vmem:[%s2 + $0xb4] sm:$0xf]
      %v526 = vld [vmem:[%s2 + $0xb8] sm:$0xf]
      %v527 = vld [vmem:[%s2 + $0xbc] sm:$0xf]
      %v528 = vld [vmem:[%s2 + $0xc0] sm:$0xf]
      %v529 = vld [vmem:[%s2 + $0xc4] sm:$0xf]
      %v530 = vld [vmem:[%s2 + $0xc8] sm:$0xf]
      %v531 = vld [vmem:[%s2 + $0xcc] sm:$0xf]
      %v532 = vld [vmem:[%s2 + $0xd0] sm:$0xf]
      %v533 = vld [vmem:[%s2 + $0xd4] sm:$0xf]
      %v534 = vld [vmem:[%s2 + $0xd8] sm:$0xf]
      %v535 = vld [vmem:[%s2 + $0xdc] sm:$0xf]
      %v536 = vld [vmem:[%s2 + $0xe0] sm:$0xf]
      %v537 = vld [vmem:[%s2 + $0xe4] sm:$0xf]
      %v538 = vld [vmem:[%s2 + $0xe8] sm:$0xf]
      %v539 = vld [vmem:[%s2 + $0xec] sm:$0xf]
      %v540 = vld [vmem:[%s2 + $0xf0] sm:$0xf]
      %v541 = vld [vmem:[%s2 + $0xf4] sm:$0xf]
      %v542 = vld [vmem:[%s2 + $0xf8] sm:$0xf]
      %v543 = vld [vmem:[%s2 + $0xfc] sm:$0xf]
      %v544 = vpack.c.bf16 %v388, %v384
      %v545 = vpack.c.bf16 %v389, %v385
      %v546 = vpack.c.bf16 %v390, %v386
      %v547 = vpack.c.bf16 %v391, %v387
      %v548 = vpack.c.bf16 %v396, %v392
      %v549 = vpack.c.bf16 %v397, %v393
      %v550 = vpack.c.bf16 %v398, %v394
      %v551 = vpack.c.bf16 %v399, %v395
      %v552 = vpack.c.bf16 %v404, %v400
      %v553 = vpack.c.bf16 %v405, %v401
      %v554 = vpack.c.bf16 %v406, %v402
      %v555 = vpack.c.bf16 %v407, %v403
      %v556 = vpack.c.bf16 %v412, %v408
      %v557 = vpack.c.bf16 %v413, %v409
      %v558 = vpack.c.bf16 %v414, %v410
      %v559 = vpack.c.bf16 %v415, %v411
      %v624 = vunpack.c.l.b16 %v480
      %v625 = vunpack.c.l.b16 %v481
      %v626 = vunpack.c.l.b16 %v482
      %v627 = vunpack.c.l.b16 %v483
      %v628 = vunpack.c.l.b16 %v484
      %v629 = vunpack.c.l.b16 %v485
      %v630 = vunpack.c.l.b16 %v486
      %v631 = vunpack.c.l.b16 %v487
      %v632 = vunpack.c.l.b16 %v488
      %v633 = vunpack.c.l.b16 %v489
      %v634 = vunpack.c.l.b16 %v490
      %v635 = vunpack.c.l.b16 %v491
      %v636 = vunpack.c.l.b16 %v492
      %v637 = vunpack.c.l.b16 %v493
      %v638 = vunpack.c.l.b16 %v494
      %v639 = vunpack.c.l.b16 %v495
      %v640 = vunpack.c.l.b16 %v496
      %v641 = vunpack.c.l.b16 %v497
      %v642 = vunpack.c.l.b16 %v498
      %v643 = vunpack.c.l.b16 %v499
      %v644 = vunpack.c.l.b16 %v500
      %v645 = vunpack.c.l.b16 %v501
      %v646 = vunpack.c.l.b16 %v502
      %v647 = vunpack.c.l.b16 %v503
      %v648 = vunpack.c.l.b16 %v504
      %v649 = vunpack.c.l.b16 %v505
      %v650 = vunpack.c.l.b16 %v506
      %v651 = vunpack.c.l.b16 %v507
      %v652 = vunpack.c.l.b16 %v508
      %v653 = vunpack.c.l.b16 %v509
      %v654 = vunpack.c.l.b16 %v510
      %v655 = vunpack.c.l.b16 %v511
      %v656 = vunpack.c.l.b16 %v512
      %v657 = vunpack.c.l.b16 %v513
      %v658 = vunpack.c.l.b16 %v514
      %v659 = vunpack.c.l.b16 %v515
      %v660 = vunpack.c.l.b16 %v516
      %v661 = vunpack.c.l.b16 %v517
      %v662 = vunpack.c.l.b16 %v518
      %v663 = vunpack.c.l.b16 %v519
      %v664 = vunpack.c.l.b16 %v520
      %v665 = vunpack.c.l.b16 %v521
      %v666 = vunpack.c.l.b16 %v522
      %v667 = vunpack.c.l.b16 %v523
      %v668 = vunpack.c.l.b16 %v524
      %v669 = vunpack.c.l.b16 %v525
      %v670 = vunpack.c.l.b16 %v526
      %v671 = vunpack.c.l.b16 %v527
      %v672 = vunpack.c.l.b16 %v528
      %v673 = vunpack.c.l.b16 %v529
      %v674 = vunpack.c.l.b16 %v530
      %v675 = vunpack.c.l.b16 %v531
      %v676 = vunpack.c.l.b16 %v532
      %v677 = vunpack.c.l.b16 %v533
      %v678 = vunpack.c.l.b16 %v534
      %v679 = vunpack.c.l.b16 %v535
      %v680 = vunpack.c.l.b16 %v536
      %v681 = vunpack.c.l.b16 %v537
      %v682 = vunpack.c.l.b16 %v538
      %v683 = vunpack.c.l.b16 %v539
      %v684 = vunpack.c.l.b16 %v540
      %v685 = vunpack.c.l.b16 %v541
      %v686 = vunpack.c.l.b16 %v542
      %v687 = vunpack.c.l.b16 %v543
      %v688 = vpack.c.b16 %v625, %v624
      %v689 = vpack.c.b16 %v627, %v626
      %v690 = vpack.c.b16 %v629, %v628
      %v691 = vpack.c.b16 %v631, %v630
      %v692 = vpack.c.b16 %v633, %v632
      %v693 = vpack.c.b16 %v635, %v634
      %v694 = vpack.c.b16 %v637, %v636
      %v695 = vpack.c.b16 %v639, %v638
      %v696 = vpack.c.b16 %v641, %v640
      %v697 = vpack.c.b16 %v643, %v642
      %v698 = vpack.c.b16 %v645, %v644
      %v699 = vpack.c.b16 %v647, %v646
      %v700 = vpack.c.b16 %v649, %v648
      %v701 = vpack.c.b16 %v651, %v650
      %v702 = vpack.c.b16 %v653, %v652
      %v703 = vpack.c.b16 %v655, %v654
      %v704 = vpack.c.b16 %v657, %v656
      %v705 = vpack.c.b16 %v659, %v658
      %v706 = vpack.c.b16 %v661, %v660
      %v707 = vpack.c.b16 %v663, %v662
      %v708 = vpack.c.b16 %v665, %v664
      %v709 = vpack.c.b16 %v667, %v666
      %v710 = vpack.c.b16 %v669, %v668
      %v711 = vpack.c.b16 %v671, %v670
      %v712 = vpack.c.b16 %v673, %v672
      %v713 = vpack.c.b16 %v675, %v674
      %v714 = vpack.c.b16 %v677, %v676
      %v715 = vpack.c.b16 %v679, %v678
      %v716 = vpack.c.b16 %v681, %v680
      %v717 = vpack.c.b16 %v683, %v682
      %v718 = vpack.c.b16 %v685, %v684
      %v719 = vpack.c.b16 %v687, %v686
      %vm720 = vcmask 523264
      %v722 = vsel %vm720, %v688, 0
      %v725 = vsel %vm720, %v689, 0
      %v728 = vsel %vm720, %v690, 0
      %v731 = vsel %vm720, %v691, 0
      %v734 = vsel %vm720, %v692, 0
      %v737 = vsel %vm720, %v693, 0
      %v740 = vsel %vm720, %v694, 0
      %v743 = vsel %vm720, %v695, 0
      %v746 = vsel %vm720, %v696, 0
      %v749 = vsel %vm720, %v697, 0
      %v752 = vsel %vm720, %v698, 0
      %v755 = vsel %vm720, %v699, 0
      %v758 = vsel %vm720, %v700, 0
      %v761 = vsel %vm720, %v701, 0
      %v764 = vsel %vm720, %v702, 0
      %v767 = vsel %vm720, %v703, 0
      %v770 = vsel %vm720, %v704, 0
      %v773 = vsel %vm720, %v705, 0
      %v776 = vsel %vm720, %v706, 0
      %v779 = vsel %vm720, %v707, 0
      %v782 = vsel %vm720, %v708, 0
      %v785 = vsel %vm720, %v709, 0
      %v788 = vsel %vm720, %v710, 0
      %v791 = vsel %vm720, %v711, 0
      %v794 = vsel %vm720, %v712, 0
      %v797 = vsel %vm720, %v713, 0
      %v800 = vsel %vm720, %v714, 0
      %v803 = vsel %vm720, %v715, 0
      %v806 = vsel %vm720, %v716, 0
      %v809 = vsel %vm720, %v717, 0
      %v812 = vsel %vm720, %v718, 0
      %v815 = vsel %vm720, %v719, 0
      %817 = vmatprep.subr.bf16.mxu0 %v545
      %818 = vmatpush1.bf16.msra.mxu0 %v544
      %819 = vmatprep.subr.bf16.mxu0 %v549
      %820 = vmatpush1.bf16.msra.mxu0 %v548
      %821 = vmatprep.subr.bf16.mxu0 %v553
      %822 = vmatpush1.bf16.msra.mxu0 %v552
      %823 = vmatprep.subr.bf16.mxu0 %v557
      %824 = vmatpush1.bf16.msra.mxu0 %v556
      %825 = vmatprep.subr.bf16.mxu0 0
      %826 = vmatpush1.bf16.msra.mxu0 0
      %827 = vmatprep.subr.bf16.mxu0 0
      %828 = vmatpush1.bf16.msra.mxu0 0
      %829 = vmatprep.subr.bf16.mxu0 0
      %830 = vmatpush1.bf16.msra.mxu0 0
      %831 = vmatprep.subr.bf16.mxu0 0
      %832 = vmatpush1.bf16.msra.mxu0 0
      %833 = vmatprep.subr.bf16.mxu0 0
      %834 = vmatpush1.bf16.msra.mxu0 0
      %835 = vmatprep.subr.bf16.mxu0 0
      %836 = vmatpush1.bf16.msra.mxu0 0
      %837 = vmatprep.subr.bf16.mxu0 0
      %838 = vmatpush1.bf16.msra.mxu0 0
      %839 = vmatprep.subr.bf16.mxu0 0
      %840 = vmatpush1.bf16.msra.mxu0 0
      %841 = vmatprep.subr.bf16.mxu0 0
      %842 = vmatpush1.bf16.msra.mxu0 0
      %843 = vmatprep.subr.bf16.mxu0 0
      %844 = vmatpush1.bf16.msra.mxu0 0
      %845 = vmatprep.subr.bf16.mxu0 0
      %846 = vmatpush1.bf16.msra.mxu0 0
      %847 = vmatprep.subr.bf16.mxu0 0
      %848 = vmatpush1.bf16.msra.mxu0 0
      %849 = vmatprep.mubr.bf16.mxu0 0
      %850 = vmatmul.mubr.bf16.gmra.mrb[0].mxu0 %v722
      %v851 = vpop.f32.mrb[0].mxu0
      %v852 = vadd.f32 0.0, %v851
      %v853 = vpop.f32.mrb[0].mxu0
      %v854 = vadd.f32 0.0, %v853
      %v855 = vpop.f32.mrb[0].mxu0
      %v856 = vadd.f32 0.0, %v855
      %v857 = vpop.f32.mrb[0].mxu0
      %v858 = vadd.f32 0.0, %v857
      %859 = vmatprep.mubr.bf16.mxu0 0
      %860 = vmatmul.mubr.bf16.gmra.mrb[0].mxu0 %v725
      %v861 = vpop.f32.mrb[0].mxu0
      %v862 = vadd.f32 0.0, %v861
      %v863 = vpop.f32.mrb[0].mxu0
      %v864 = vadd.f32 0.0, %v863
      %v865 = vpop.f32.mrb[0].mxu0
      %v866 = vadd.f32 0.0, %v865
      %v867 = vpop.f32.mrb[0].mxu0
      %v868 = vadd.f32 0.0, %v867
      %869 = vmatprep.mubr.bf16.mxu0 0
      %870 = vmatmul.mubr.bf16.gmra.mrb[0].mxu0 %v728
      %v871 = vpop.f32.mrb[0].mxu0
      %v872 = vadd.f32 0.0, %v871
      %v873 = vpop.f32.mrb[0].mxu0
      %v874 = vadd.f32 0.0, %v873
      %v875 = vpop.f32.mrb[0].mxu0
      %v876 = vadd.f32 0.0, %v875
      %v877 = vpop.f32.mrb[0].mxu0
      %v878 = vadd.f32 0.0, %v877
      %879 = vmatprep.mubr.bf16.mxu0 0
      %880 = vmatmul.mubr.bf16.gmra.mrb[0].mxu0 %v731
      %v881 = vpop.f32.mrb[0].mxu0
      %v882 = vadd.f32 0.0, %v881
      %v883 = vpop.f32.mrb[0].mxu0
      %v884 = vadd.f32 0.0, %v883
      %v885 = vpop.f32.mrb[0].mxu0
      %v886 = vadd.f32 0.0, %v885
      %v887 = vpop.f32.mrb[0].mxu0
      %v888 = vadd.f32 0.0, %v887
      %889 = vmatprep.mubr.bf16.mxu0 0
      %890 = vmatmul.mubr.bf16.gmra.mrb[0].mxu0 %v734
      %v891 = vpop.f32.mrb[0].mxu0
      %v892 = vadd.f32 0.0, %v891
      %v893 = vpop.f32.mrb[0].mxu0
      %v894 = vadd.f32 0.0, %v893
      %v895 = vpop.f32.mrb[0].mxu0
      %v896 = vadd.f32 0.0, %v895
      %v897 = vpop.f32.mrb[0].mxu0
      %v898 = vadd.f32 0.0, %v897
      %899 = vmatprep.mubr.bf16.mxu0 0
      %900 = vmatmul.mubr.bf16.gmra.mrb[0].mxu0 %v737
      %v901 = vpop.f32.mrb[0].mxu0
      %v902 = vadd.f32 0.0, %v901
      %v903 = vpop.f32.mrb[0].mxu0
      %v904 = vadd.f32 0.0, %v903
      %v905 = vpop.f32.mrb[0].mxu0
      %v906 = vadd.f32 0.0, %v905
      %v907 = vpop.f32.mrb[0].mxu0
      %v908 = vadd.f32 0.0, %v907
      %909 = vmatprep.mubr.bf16.mxu0 0
      %910 = vmatmul.mubr.bf16.gmra.mrb[0].mxu0 %v740
      %v911 = vpop.f32.mrb[0].mxu0
      %v912 = vadd.f32 0.0, %v911
      %v913 = vpop.f32.mrb[0].mxu0
      %v914 = vadd.f32 0.0, %v913
      %v915 = vpop.f32.mrb[0].mxu0
      %v916 = vadd.f32 0.0, %v915
      %v917 = vpop.f32.mrb[0].mxu0
      %v918 = vadd.f32 0.0, %v917
      %919 = vmatprep.mubr.bf16.mxu0 0
      %920 = vmatmul.mubr.bf16.gmra.mrb[0].mxu0 %v743
      %v921 = vpop.f32.mrb[0].mxu0
      %v922 = vadd.f32 0.0, %v921
      %v923 = vpop.f32.mrb[0].mxu0
      %v924 = vadd.f32 0.0, %v923
      %v925 = vpop.f32.mrb[0].mxu0
      %v926 = vadd.f32 0.0, %v925
      %v927 = vpop.f32.mrb[0].mxu0
      %v928 = vadd.f32 0.0, %v927
      %929 = vmatprep.mubr.bf16.mxu0 0
      %930 = vmatmul.mubr.bf16.gmra.mrb[0].mxu0 %v746
      %v931 = vpop.f32.mrb[0].mxu0
      %v932 = vadd.f32 0.0, %v931
      %v933 = vpop.f32.mrb[0].mxu0
      %v934 = vadd.f32 0.0, %v933
      %v935 = vpop.f32.mrb[0].mxu0
      %v936 = vadd.f32 0.0, %v935
      %v937 = vpop.f32.mrb[0].mxu0
      %v938 = vadd.f32 0.0, %v937
      %939 = vmatprep.mubr.bf16.mxu0 0
      %940 = vmatmul.mubr.bf16.gmra.mrb[0].mxu0 %v749
      %v941 = vpop.f32.mrb[0].mxu0
      %v942 = vadd.f32 0.0, %v941
      %v943 = vpop.f32.mrb[0].mxu0
      %v944 = vadd.f32 0.0, %v943
      %v945 = vpop.f32.mrb[0].mxu0
      %v946 = vadd.f32 0.0, %v945
      %v947 = vpop.f32.mrb[0].mxu0
      %v948 = vadd.f32 0.0, %v947
      %949 = vmatprep.mubr.bf16.mxu0 0
      %950 = vmatmul.mubr.bf16.gmra.mrb[0].mxu0 %v752
      %v951 = vpop.f32.mrb[0].mxu0
      %v952 = vadd.f32 0.0, %v951
      %v953 = vpop.f32.mrb[0].mxu0
      %v954 = vadd.f32 0.0, %v953
      %v955 = vpop.f32.mrb[0].mxu0
      %v956 = vadd.f32 0.0, %v955
      %v957 = vpop.f32.mrb[0].mxu0
      %v958 = vadd.f32 0.0, %v957
      %959 = vmatprep.mubr.bf16.mxu0 0
      %960 = vmatmul.mubr.bf16.gmra.mrb[0].mxu0 %v755
      %v961 = vpop.f32.mrb[0].mxu0
      %v962 = vadd.f32 0.0, %v961
      %v963 = vpop.f32.mrb[0].mxu0
      %v964 = vadd.f32 0.0, %v963
      %v965 = vpop.f32.mrb[0].mxu0
      %v966 = vadd.f32 0.0, %v965
      %v967 = vpop.f32.mrb[0].mxu0
      %v968 = vadd.f32 0.0, %v967
      %969 = vmatprep.mubr.bf16.mxu0 0
      %970 = vmatmul.mubr.bf16.gmra.mrb[0].mxu0 %v758
      %v971 = vpop.f32.mrb[0].mxu0
      %v972 = vadd.f32 0.0, %v971
      %v973 = vpop.f32.mrb[0].mxu0
      %v974 = vadd.f32 0.0, %v973
      %v975 = vpop.f32.mrb[0].mxu0
      %v976 = vadd.f32 0.0, %v975
      %v977 = vpop.f32.mrb[0].mxu0
      %v978 = vadd.f32 0.0, %v977
      %979 = vmatprep.mubr.bf16.mxu0 0
      %980 = vmatmul.mubr.bf16.gmra.mrb[0].mxu0 %v761
      %v981 = vpop.f32.mrb[0].mxu0
      %v982 = vadd.f32 0.0, %v981
      %v983 = vpop.f32.mrb[0].mxu0
      %v984 = vadd.f32 0.0, %v983
      %v985 = vpop.f32.mrb[0].mxu0
      %v986 = vadd.f32 0.0, %v985
      %v987 = vpop.f32.mrb[0].mxu0
      %v988 = vadd.f32 0.0, %v987
      %989 = vmatprep.mubr.bf16.mxu0 0
      %990 = vmatmul.mubr.bf16.gmra.mrb[0].mxu0 %v764
      %v991 = vpop.f32.mrb[0].mxu0
      %v992 = vadd.f32 0.0, %v991
      %v993 = vpop.f32.mrb[0].mxu0
      %v994 = vadd.f32 0.0, %v993
      %v995 = vpop.f32.mrb[0].mxu0
      %v996 = vadd.f32 0.0, %v995
      %v997 = vpop.f32.mrb[0].mxu0
      %v998 = vadd.f32 0.0, %v997
      %999 = vmatprep.mubr.bf16.mxu0 0
      %1000 = vmatmul.mubr.bf16.gmra.mrb[0].mxu0 %v767
      %v1001 = vpop.f32.mrb[0].mxu0
      %v1002 = vadd.f32 0.0, %v1001
      %v1003 = vpop.f32.mrb[0].mxu0
      %v1004 = vadd.f32 0.0, %v1003
      %v1005 = vpop.f32.mrb[0].mxu0
      %v1006 = vadd.f32 0.0, %v1005
      %v1007 = vpop.f32.mrb[0].mxu0
      %v1008 = vadd.f32 0.0, %v1007
      %1009 = vmatprep.mubr.bf16.mxu0 0
      %1010 = vmatmul.mubr.bf16.gmra.mrb[0].mxu0 %v770
      %v1011 = vpop.f32.mrb[0].mxu0
      %v1012 = vadd.f32 0.0, %v1011
      %v1013 = vpop.f32.mrb[0].mxu0
      %v1014 = vadd.f32 0.0, %v1013
      %v1015 = vpop.f32.mrb[0].mxu0
      %v1016 = vadd.f32 0.0, %v1015
      %v1017 = vpop.f32.mrb[0].mxu0
      %v1018 = vadd.f32 0.0, %v1017
      %1019 = vmatprep.mubr.bf16.mxu0 0
      %1020 = vmatmul.mubr.bf16.gmra.mrb[0].mxu0 %v773
      %v1021 = vpop.f32.mrb[0].mxu0
      %v1022 = vadd.f32 0.0, %v1021
      %v1023 = vpop.f32.mrb[0].mxu0
      %v1024 = vadd.f32 0.0, %v1023
      %v1025 = vpop.f32.mrb[0].mxu0
      %v1026 = vadd.f32 0.0, %v1025
      %v1027 = vpop.f32.mrb[0].mxu0
      %v1028 = vadd.f32 0.0, %v1027
      %1029 = vmatprep.mubr.bf16.mxu0 0
      %1030 = vmatmul.mubr.bf16.gmra.mrb[0].mxu0 %v776
      %v1031 = vpop.f32.mrb[0].mxu0
      %v1032 = vadd.f32 0.0, %v1031
      %v1033 = vpop.f32.mrb[0].mxu0
      %v1034 = vadd.f32 0.0, %v1033
      %v1035 = vpop.f32.mrb[0].mxu0
      %v1036 = vadd.f32 0.0, %v1035
      %v1037 = vpop.f32.mrb[0].mxu0
      %v1038 = vadd.f32 0.0, %v1037
      %1039 = vmatprep.mubr.bf16.mxu0 0
      %1040 = vmatmul.mubr.bf16.gmra.mrb[0].mxu0 %v779
      %v1041 = vpop.f32.mrb[0].mxu0
      %v1042 = vadd.f32 0.0, %v1041
      %v1043 = vpop.f32.mrb[0].mxu0
      %v1044 = vadd.f32 0.0, %v1043
      %v1045 = vpop.f32.mrb[0].mxu0
      %v1046 = vadd.f32 0.0, %v1045
      %v1047 = vpop.f32.mrb[0].mxu0
      %v1048 = vadd.f32 0.0, %v1047
      %1049 = vmatprep.mubr.bf16.mxu0 0
      %1050 = vmatmul.mubr.bf16.gmra.mrb[0].mxu0 %v782
      %v1051 = vpop.f32.mrb[0].mxu0
      %v1052 = vadd.f32 0.0, %v1051
      %v1053 = vpop.f32.mrb[0].mxu0
      %v1054 = vadd.f32 0.0, %v1053
      %v1055 = vpop.f32.mrb[0].mxu0
      %v1056 = vadd.f32 0.0, %v1055
      %v1057 = vpop.f32.mrb[0].mxu0
      %v1058 = vadd.f32 0.0, %v1057
      %1059 = vmatprep.mubr.bf16.mxu0 0
      %1060 = vmatmul.mubr.bf16.gmra.mrb[0].mxu0 %v785
      %v1061 = vpop.f32.mrb[0].mxu0
      %v1062 = vadd.f32 0.0, %v1061
      %v1063 = vpop.f32.mrb[0].mxu0
      %v1064 = vadd.f32 0.0, %v1063
      %v1065 = vpop.f32.mrb[0].mxu0
      %v1066 = vadd.f32 0.0, %v1065
      %v1067 = vpop.f32.mrb[0].mxu0
      %v1068 = vadd.f32 0.0, %v1067
      %1069 = vmatprep.mubr.bf16.mxu0 0
      %1070 = vmatmul.mubr.bf16.gmra.mrb[0].mxu0 %v788
      %v1071 = vpop.f32.mrb[0].mxu0
      %v1072 = vadd.f32 0.0, %v1071
      %v1073 = vpop.f32.mrb[0].mxu0
      %v1074 = vadd.f32 0.0, %v1073
      %v1075 = vpop.f32.mrb[0].mxu0
      %v1076 = vadd.f32 0.0, %v1075
      %v1077 = vpop.f32.mrb[0].mxu0
      %v1078 = vadd.f32 0.0, %v1077
      %1079 = vmatprep.mubr.bf16.mxu0 0
      %1080 = vmatmul.mubr.bf16.gmra.mrb[0].mxu0 %v791
      %v1081 = vpop.f32.mrb[0].mxu0
      %v1082 = vadd.f32 0.0, %v1081
      %v1083 = vpop.f32.mrb[0].mxu0
      %v1084 = vadd.f32 0.0, %v1083
      %v1085 = vpop.f32.mrb[0].mxu0
      %v1086 = vadd.f32 0.0, %v1085
      %v1087 = vpop.f32.mrb[0].mxu0
      %v1088 = vadd.f32 0.0, %v1087
      %1089 = vmatprep.mubr.bf16.mxu0 0
      %1090 = vmatmul.mubr.bf16.gmra.mrb[0].mxu0 %v794
      %v1091 = vpop.f32.mrb[0].mxu0
      %v1092 = vadd.f32 0.0, %v1091
      %v1093 = vpop.f32.mrb[0].mxu0
      %v1094 = vadd.f32 0.0, %v1093
      %v1095 = vpop.f32.mrb[0].mxu0
      %v1096 = vadd.f32 0.0, %v1095
      %v1097 = vpop.f32.mrb[0].mxu0
      %v1098 = vadd.f32 0.0, %v1097
      %1099 = vmatprep.mubr.bf16.mxu0 0
      %1100 = vmatmul.mubr.bf16.gmra.mrb[0].mxu0 %v797
      %v1101 = vpop.f32.mrb[0].mxu0
      %v1102 = vadd.f32 0.0, %v1101
      %v1103 = vpop.f32.mrb[0].mxu0
      %v1104 = vadd.f32 0.0, %v1103
      %v1105 = vpop.f32.mrb[0].mxu0
      %v1106 = vadd.f32 0.0, %v1105
      %v1107 = vpop.f32.mrb[0].mxu0
      %v1108 = vadd.f32 0.0, %v1107
      %1109 = vmatprep.mubr.bf16.mxu0 0
      %1110 = vmatmul.mubr.bf16.gmra.mrb[0].mxu0 %v800
      %v1111 = vpop.f32.mrb[0].mxu0
      %v1112 = vadd.f32 0.0, %v1111
      %v1113 = vpop.f32.mrb[0].mxu0
      %v1114 = vadd.f32 0.0, %v1113
      %v1115 = vpop.f32.mrb[0].mxu0
      %v1116 = vadd.f32 0.0, %v1115
      %v1117 = vpop.f32.mrb[0].mxu0
      %v1118 = vadd.f32 0.0, %v1117
      %1119 = vmatprep.mubr.bf16.mxu0 0
      %1120 = vmatmul.mubr.bf16.gmra.mrb[0].mxu0 %v803
      %v1121 = vpop.f32.mrb[0].mxu0
      %v1122 = vadd.f32 0.0, %v1121
      %v1123 = vpop.f32.mrb[0].mxu0
      %v1124 = vadd.f32 0.0, %v1123
      %v1125 = vpop.f32.mrb[0].mxu0
      %v1126 = vadd.f32 0.0, %v1125
      %v1127 = vpop.f32.mrb[0].mxu0
      %v1128 = vadd.f32 0.0, %v1127
      %1129 = vmatprep.mubr.bf16.mxu0 0
      %1130 = vmatmul.mubr.bf16.gmra.mrb[0].mxu0 %v806
      %v1131 = vpop.f32.mrb[0].mxu0
      %v1132 = vadd.f32 0.0, %v1131
      %v1133 = vpop.f32.mrb[0].mxu0
      %v1134 = vadd.f32 0.0, %v1133
      %v1135 = vpop.f32.mrb[0].mxu0
      %v1136 = vadd.f32 0.0, %v1135
      %v1137 = vpop.f32.mrb[0].mxu0
      %v1138 = vadd.f32 0.0, %v1137
      %1139 = vmatprep.mubr.bf16.mxu0 0
      %1140 = vmatmul.mubr.bf16.gmra.mrb[0].mxu0 %v809
      %v1141 = vpop.f32.mrb[0].mxu0
      %v1142 = vadd.f32 0.0, %v1141
      %v1143 = vpop.f32.mrb[0].mxu0
      %v1144 = vadd.f32 0.0, %v1143
      %v1145 = vpop.f32.mrb[0].mxu0
      %v1146 = vadd.f32 0.0, %v1145
      %v1147 = vpop.f32.mrb[0].mxu0
      %v1148 = vadd.f32 0.0, %v1147
      %1149 = vmatprep.mubr.bf16.mxu0 0
      %1150 = vmatmul.mubr.bf16.gmra.mrb[0].mxu0 %v812
      %v1151 = vpop.f32.mrb[0].mxu0
      %v1152 = vadd.f32 0.0, %v1151
      %v1153 = vpop.f32.mrb[0].mxu0
      %v1154 = vadd.f32 0.0, %v1153
      %v1155 = vpop.f32.mrb[0].mxu0
      %v1156 = vadd.f32 0.0, %v1155
      %v1157 = vpop.f32.mrb[0].mxu0
      %v1158 = vadd.f32 0.0, %v1157
      %1159 = vmatprep.mubr.bf16.mxu0 0
      %1160 = vmatmul.mubr.bf16.gmra.mrb[0].mxu0 %v815
      %v1161 = vpop.f32.mrb[0].mxu0
      %v1162 = vadd.f32 0.0, %v1161
      %v1163 = vpop.f32.mrb[0].mxu0
      %v1164 = vadd.f32 0.0, %v1163
      %v1165 = vpop.f32.mrb[0].mxu0
      %v1166 = vadd.f32 0.0, %v1165
      %v1167 = vpop.f32.mrb[0].mxu0
      %v1168 = vadd.f32 0.0, %v1167
      %1169 = vdwg.mxu0
      %1170 = vmatprep.subr.bf16.mxu0 %v547
      %1171 = vmatpush1.bf16.msra.mxu0 %v546
      %1172 = vmatprep.subr.bf16.mxu0 %v551
      %1173 = vmatpush1.bf16.msra.mxu0 %v550
      %1174 = vmatprep.subr.bf16.mxu0 %v555
      %1175 = vmatpush1.bf16.msra.mxu0 %v554
      %1176 = vmatprep.subr.bf16.mxu0 %v559
      %1177 = vmatpush1.bf16.msra.mxu0 %v558
      %1178 = vmatprep.subr.bf16.mxu0 0
      %1179 = vmatpush1.bf16.msra.mxu0 0
      %1180 = vmatprep.subr.bf16.mxu0 0
      %1181 = vmatpush1.bf16.msra.mxu0 0
      %1182 = vmatprep.subr.bf16.mxu0 0
      %1183 = vmatpush1.bf16.msra.mxu0 0
      %1184 = vmatprep.subr.bf16.mxu0 0
      %1185 = vmatpush1.bf16.msra.mxu0 0
      %1186 = vmatprep.subr.bf16.mxu0 0
      %1187 = vmatpush1.bf16.msra.mxu0 0
      %1188 = vmatprep.subr.bf16.mxu0 0
      %1189 = vmatpush1.bf16.msra.mxu0 0
      %1190 = vmatprep.subr.bf16.mxu0 0
      %1191 = vmatpush1.bf16.msra.mxu0 0
      %1192 = vmatprep.subr.bf16.mxu0 0
      %1193 = vmatpush1.bf16.msra.mxu0 0
      %1194 = vmatprep.subr.bf16.mxu0 0
      %1195 = vmatpush1.bf16.msra.mxu0 0
      %1196 = vmatprep.subr.bf16.mxu0 0
      %1197 = vmatpush1.bf16.msra.mxu0 0
      %1198 = vmatprep.subr.bf16.mxu0 0
      %1199 = vmatpush1.bf16.msra.mxu0 0
      %1200 = vmatprep.subr.bf16.mxu0 0
      %1201 = vmatpush1.bf16.msra.mxu0 0
      %1202 = vmatprep.mubr.bf16.mxu0 0
      %1203 = vmatmul.mubr.bf16.gmra.mrb[0].mxu0 %v722
      %v1204 = vpop.f32.mrb[0].mxu0
      %v1205 = vadd.f32 0.0, %v1204
      %v1206 = vpop.f32.mrb[0].mxu0
      %v1207 = vadd.f32 0.0, %v1206
      %v1208 = vpop.f32.mrb[0].mxu0
      %v1209 = vadd.f32 0.0, %v1208
      %v1210 = vpop.f32.mrb[0].mxu0
      %v1211 = vadd.f32 0.0, %v1210
      %1212 = vmatprep.mubr.bf16.mxu0 0
      %1213 = vmatmul.mubr.bf16.gmra.mrb[0].mxu0 %v725
      %v1214 = vpop.f32.mrb[0].mxu0
      %v1215 = vadd.f32 0.0, %v1214
      %v1216 = vpop.f32.mrb[0].mxu0
      %v1217 = vadd.f32 0.0, %v1216
      %v1218 = vpop.f32.mrb[0].mxu0
      %v1219 = vadd.f32 0.0, %v1218
      %v1220 = vpop.f32.mrb[0].mxu0
      %v1221 = vadd.f32 0.0, %v1220
      %1222 = vmatprep.mubr.bf16.mxu0 0
      %1223 = vmatmul.mubr.bf16.gmra.mrb[0].mxu0 %v728
      %v1224 = vpop.f32.mrb[0].mxu0
      %v1225 = vadd.f32 0.0, %v1224
      %v1226 = vpop.f32.mrb[0].mxu0
      %v1227 = vadd.f32 0.0, %v1226
      %v1228 = vpop.f32.mrb[0].mxu0
      %v1229 = vadd.f32 0.0, %v1228
      %v1230 = vpop.f32.mrb[0].mxu0
      %v1231 = vadd.f32 0.0, %v1230
      %1232 = vmatprep.mubr.bf16.mxu0 0
      %1233 = vmatmul.mubr.bf16.gmra.mrb[0].mxu0 %v731
      %v1234 = vpop.f32.mrb[0].mxu0
      %v1235 = vadd.f32 0.0, %v1234
      %v1236 = vpop.f32.mrb[0].mxu0
      %v1237 = vadd.f32 0.0, %v1236
      %v1238 = vpop.f32.mrb[0].mxu0
      %v1239 = vadd.f32 0.0, %v1238
      %v1240 = vpop.f32.mrb[0].mxu0
      %v1241 = vadd.f32 0.0, %v1240
      %1242 = vmatprep.mubr.bf16.mxu0 0
      %1243 = vmatmul.mubr.bf16.gmra.mrb[0].mxu0 %v734
      %v1244 = vpop.f32.mrb[0].mxu0
      %v1245 = vadd.f32 0.0, %v1244
      %v1246 = vpop.f32.mrb[0].mxu0
      %v1247 = vadd.f32 0.0, %v1246
      %v1248 = vpop.f32.mrb[0].mxu0
      %v1249 = vadd.f32 0.0, %v1248
      %v1250 = vpop.f32.mrb[0].mxu0
      %v1251 = vadd.f32 0.0, %v1250
      %1252 = vmatprep.mubr.bf16.mxu0 0
      %1253 = vmatmul.mubr.bf16.gmra.mrb[0].mxu0 %v737
      %v1254 = vpop.f32.mrb[0].mxu0
      %v1255 = vadd.f32 0.0, %v1254
      %v1256 = vpop.f32.mrb[0].mxu0
      %v1257 = vadd.f32 0.0, %v1256
      %v1258 = vpop.f32.mrb[0].mxu0
      %v1259 = vadd.f32 0.0, %v1258
      %v1260 = vpop.f32.mrb[0].mxu0
      %v1261 = vadd.f32 0.0, %v1260
      %1262 = vmatprep.mubr.bf16.mxu0 0
      %1263 = vmatmul.mubr.bf16.gmra.mrb[0].mxu0 %v740
      %v1264 = vpop.f32.mrb[0].mxu0
      %v1265 = vadd.f32 0.0, %v1264
      %v1266 = vpop.f32.mrb[0].mxu0
      %v1267 = vadd.f32 0.0, %v1266
      %v1268 = vpop.f32.mrb[0].mxu0
      %v1269 = vadd.f32 0.0, %v1268
      %v1270 = vpop.f32.mrb[0].mxu0
      %v1271 = vadd.f32 0.0, %v1270
      %1272 = vmatprep.mubr.bf16.mxu0 0
      %1273 = vmatmul.mubr.bf16.gmra.mrb[0].mxu0 %v743
      %v1274 = vpop.f32.mrb[0].mxu0
      %v1275 = vadd.f32 0.0, %v1274
      %v1276 = vpop.f32.mrb[0].mxu0
      %v1277 = vadd.f32 0.0, %v1276
      %v1278 = vpop.f32.mrb[0].mxu0
      %v1279 = vadd.f32 0.0, %v1278
      %v1280 = vpop.f32.mrb[0].mxu0
      %v1281 = vadd.f32 0.0, %v1280
      %1282 = vmatprep.mubr.bf16.mxu0 0
      %1283 = vmatmul.mubr.bf16.gmra.mrb[0].mxu0 %v746
      %v1284 = vpop.f32.mrb[0].mxu0
      %v1285 = vadd.f32 0.0, %v1284
      %v1286 = vpop.f32.mrb[0].mxu0
      %v1287 = vadd.f32 0.0, %v1286
      %v1288 = vpop.f32.mrb[0].mxu0
      %v1289 = vadd.f32 0.0, %v1288
      %v1290 = vpop.f32.mrb[0].mxu0
      %v1291 = vadd.f32 0.0, %v1290
      %1292 = vmatprep.mubr.bf16.mxu0 0
      %1293 = vmatmul.mubr.bf16.gmra.mrb[0].mxu0 %v749
      %v1294 = vpop.f32.mrb[0].mxu0
      %v1295 = vadd.f32 0.0, %v1294
      %v1296 = vpop.f32.mrb[0].mxu0
      %v1297 = vadd.f32 0.0, %v1296
      %v1298 = vpop.f32.mrb[0].mxu0
      %v1299 = vadd.f32 0.0, %v1298
      %v1300 = vpop.f32.mrb[0].mxu0
      %v1301 = vadd.f32 0.0, %v1300
      %1302 = vmatprep.mubr.bf16.mxu0 0
      %1303 = vmatmul.mubr.bf16.gmra.mrb[0].mxu0 %v752
      %v1304 = vpop.f32.mrb[0].mxu0
      %v1305 = vadd.f32 0.0, %v1304
      %v1306 = vpop.f32.mrb[0].mxu0
      %v1307 = vadd.f32 0.0, %v1306
      %v1308 = vpop.f32.mrb[0].mxu0
      %v1309 = vadd.f32 0.0, %v1308
      %v1310 = vpop.f32.mrb[0].mxu0
      %v1311 = vadd.f32 0.0, %v1310
      %1312 = vmatprep.mubr.bf16.mxu0 0
      %1313 = vmatmul.mubr.bf16.gmra.mrb[0].mxu0 %v755
      %v1314 = vpop.f32.mrb[0].mxu0
      %v1315 = vadd.f32 0.0, %v1314
      %v1316 = vpop.f32.mrb[0].mxu0
      %v1317 = vadd.f32 0.0, %v1316
      %v1318 = vpop.f32.mrb[0].mxu0
      %v1319 = vadd.f32 0.0, %v1318
      %v1320 = vpop.f32.mrb[0].mxu0
      %v1321 = vadd.f32 0.0, %v1320
      %1322 = vmatprep.mubr.bf16.mxu0 0
      %1323 = vmatmul.mubr.bf16.gmra.mrb[0].mxu0 %v758
      %v1324 = vpop.f32.mrb[0].mxu0
      %v1325 = vadd.f32 0.0, %v1324
      %v1326 = vpop.f32.mrb[0].mxu0
      %v1327 = vadd.f32 0.0, %v1326
      %v1328 = vpop.f32.mrb[0].mxu0
      %v1329 = vadd.f32 0.0, %v1328
      %v1330 = vpop.f32.mrb[0].mxu0
      %v1331 = vadd.f32 0.0, %v1330
      %1332 = vmatprep.mubr.bf16.mxu0 0
      %1333 = vmatmul.mubr.bf16.gmra.mrb[0].mxu0 %v761
      %v1334 = vpop.f32.mrb[0].mxu0
      %v1335 = vadd.f32 0.0, %v1334
      %v1336 = vpop.f32.mrb[0].mxu0
      %v1337 = vadd.f32 0.0, %v1336
      %v1338 = vpop.f32.mrb[0].mxu0
      %v1339 = vadd.f32 0.0, %v1338
      %v1340 = vpop.f32.mrb[0].mxu0
      %v1341 = vadd.f32 0.0, %v1340
      %1342 = vmatprep.mubr.bf16.mxu0 0
      %1343 = vmatmul.mubr.bf16.gmra.mrb[0].mxu0 %v764
      %v1344 = vpop.f32.mrb[0].mxu0
      %v1345 = vadd.f32 0.0, %v1344
      %v1346 = vpop.f32.mrb[0].mxu0
      %v1347 = vadd.f32 0.0, %v1346
      %v1348 = vpop.f32.mrb[0].mxu0
      %v1349 = vadd.f32 0.0, %v1348
      %v1350 = vpop.f32.mrb[0].mxu0
      %v1351 = vadd.f32 0.0, %v1350
      %1352 = vmatprep.mubr.bf16.mxu0 0
      %1353 = vmatmul.mubr.bf16.gmra.mrb[0].mxu0 %v767
      %v1354 = vpop.f32.mrb[0].mxu0
      %v1355 = vadd.f32 0.0, %v1354
      %v1356 = vpop.f32.mrb[0].mxu0
      %v1357 = vadd.f32 0.0, %v1356
      %v1358 = vpop.f32.mrb[0].mxu0
      %v1359 = vadd.f32 0.0, %v1358
      %v1360 = vpop.f32.mrb[0].mxu0
      %v1361 = vadd.f32 0.0, %v1360
      %1362 = vmatprep.mubr.bf16.mxu0 0
      %1363 = vmatmul.mubr.bf16.gmra.mrb[0].mxu0 %v770
      %v1364 = vpop.f32.mrb[0].mxu0
      %v1365 = vadd.f32 0.0, %v1364
      %v1366 = vpop.f32.mrb[0].mxu0
      %v1367 = vadd.f32 0.0, %v1366
      %v1368 = vpop.f32.mrb[0].mxu0
      %v1369 = vadd.f32 0.0, %v1368
      %v1370 = vpop.f32.mrb[0].mxu0
      %v1371 = vadd.f32 0.0, %v1370
      %1372 = vmatprep.mubr.bf16.mxu0 0
      %1373 = vmatmul.mubr.bf16.gmra.mrb[0].mxu0 %v773
      %v1374 = vpop.f32.mrb[0].mxu0
      %v1375 = vadd.f32 0.0, %v1374
      %v1376 = vpop.f32.mrb[0].mxu0
      %v1377 = vadd.f32 0.0, %v1376
      %v1378 = vpop.f32.mrb[0].mxu0
      %v1379 = vadd.f32 0.0, %v1378
      %v1380 = vpop.f32.mrb[0].mxu0
      %v1381 = vadd.f32 0.0, %v1380
      %1382 = vmatprep.mubr.bf16.mxu0 0
      %1383 = vmatmul.mubr.bf16.gmra.mrb[0].mxu0 %v776
      %v1384 = vpop.f32.mrb[0].mxu0
      %v1385 = vadd.f32 0.0, %v1384
      %v1386 = vpop.f32.mrb[0].mxu0
      %v1387 = vadd.f32 0.0, %v1386
      %v1388 = vpop.f32.mrb[0].mxu0
      %v1389 = vadd.f32 0.0, %v1388
      %v1390 = vpop.f32.mrb[0].mxu0
      %v1391 = vadd.f32 0.0, %v1390
      %1392 = vmatprep.mubr.bf16.mxu0 0
      %1393 = vmatmul.mubr.bf16.gmra.mrb[0].mxu0 %v779
      %v1394 = vpop.f32.mrb[0].mxu0
      %v1395 = vadd.f32 0.0, %v1394
      %v1396 = vpop.f32.mrb[0].mxu0
      %v1397 = vadd.f32 0.0, %v1396
      %v1398 = vpop.f32.mrb[0].mxu0
      %v1399 = vadd.f32 0.0, %v1398
      %v1400 = vpop.f32.mrb[0].mxu0
      %v1401 = vadd.f32 0.0, %v1400
      %1402 = vmatprep.mubr.bf16.mxu0 0
      %1403 = vmatmul.mubr.bf16.gmra.mrb[0].mxu0 %v782
      %v1404 = vpop.f32.mrb[0].mxu0
      %v1405 = vadd.f32 0.0, %v1404
      %v1406 = vpop.f32.mrb[0].mxu0
      %v1407 = vadd.f32 0.0, %v1406
      %v1408 = vpop.f32.mrb[0].mxu0
      %v1409 = vadd.f32 0.0, %v1408
      %v1410 = vpop.f32.mrb[0].mxu0
      %v1411 = vadd.f32 0.0, %v1410
      %1412 = vmatprep.mubr.bf16.mxu0 0
      %1413 = vmatmul.mubr.bf16.gmra.mrb[0].mxu0 %v785
      %v1414 = vpop.f32.mrb[0].mxu0
      %v1415 = vadd.f32 0.0, %v1414
      %v1416 = vpop.f32.mrb[0].mxu0
      %v1417 = vadd.f32 0.0, %v1416
      %v1418 = vpop.f32.mrb[0].mxu0
      %v1419 = vadd.f32 0.0, %v1418
      %v1420 = vpop.f32.mrb[0].mxu0
      %v1421 = vadd.f32 0.0, %v1420
      %1422 = vmatprep.mubr.bf16.mxu0 0
      %1423 = vmatmul.mubr.bf16.gmra.mrb[0].mxu0 %v788
      %v1424 = vpop.f32.mrb[0].mxu0
      %v1425 = vadd.f32 0.0, %v1424
      %v1426 = vpop.f32.mrb[0].mxu0
      %v1427 = vadd.f32 0.0, %v1426
      %v1428 = vpop.f32.mrb[0].mxu0
      %v1429 = vadd.f32 0.0, %v1428
      %v1430 = vpop.f32.mrb[0].mxu0
      %v1431 = vadd.f32 0.0, %v1430
      %1432 = vmatprep.mubr.bf16.mxu0 0
      %1433 = vmatmul.mubr.bf16.gmra.mrb[0].mxu0 %v791
      %v1434 = vpop.f32.mrb[0].mxu0
      %v1435 = vadd.f32 0.0, %v1434
      %v1436 = vpop.f32.mrb[0].mxu0
      %v1437 = vadd.f32 0.0, %v1436
      %v1438 = vpop.f32.mrb[0].mxu0
      %v1439 = vadd.f32 0.0, %v1438
      %v1440 = vpop.f32.mrb[0].mxu0
      %v1441 = vadd.f32 0.0, %v1440
      %1442 = vmatprep.mubr.bf16.mxu0 0
      %1443 = vmatmul.mubr.bf16.gmra.mrb[0].mxu0 %v794
      %v1444 = vpop.f32.mrb[0].mxu0
      %v1445 = vadd.f32 0.0, %v1444
      %v1446 = vpop.f32.mrb[0].mxu0
      %v1447 = vadd.f32 0.0, %v1446
      %v1448 = vpop.f32.mrb[0].mxu0
      %v1449 = vadd.f32 0.0, %v1448
      %v1450 = vpop.f32.mrb[0].mxu0
      %v1451 = vadd.f32 0.0, %v1450
      %1452 = vmatprep.mubr.bf16.mxu0 0
      %1453 = vmatmul.mubr.bf16.gmra.mrb[0].mxu0 %v797
      %v1454 = vpop.f32.mrb[0].mxu0
      %v1455 = vadd.f32 0.0, %v1454
      %v1456 = vpop.f32.mrb[0].mxu0
      %v1457 = vadd.f32 0.0, %v1456
      %v1458 = vpop.f32.mrb[0].mxu0
      %v1459 = vadd.f32 0.0, %v1458
      %v1460 = vpop.f32.mrb[0].mxu0
      %v1461 = vadd.f32 0.0, %v1460
      %1462 = vmatprep.mubr.bf16.mxu0 0
      %1463 = vmatmul.mubr.bf16.gmra.mrb[0].mxu0 %v800
      %v1464 = vpop.f32.mrb[0].mxu0
      %v1465 = vadd.f32 0.0, %v1464
      %v1466 = vpop.f32.mrb[0].mxu0
      %v1467 = vadd.f32 0.0, %v1466
      %v1468 = vpop.f32.mrb[0].mxu0
      %v1469 = vadd.f32 0.0, %v1468
      %v1470 = vpop.f32.mrb[0].mxu0
      %v1471 = vadd.f32 0.0, %v1470
      %1472 = vmatprep.mubr.bf16.mxu0 0
      %1473 = vmatmul.mubr.bf16.gmra.mrb[0].mxu0 %v803
      %v1474 = vpop.f32.mrb[0].mxu0
      %v1475 = vadd.f32 0.0, %v1474
      %v1476 = vpop.f32.mrb[0].mxu0
      %v1477 = vadd.f32 0.0, %v1476
      %v1478 = vpop.f32.mrb[0].mxu0
      %v1479 = vadd.f32 0.0, %v1478
      %v1480 = vpop.f32.mrb[0].mxu0
      %v1481 = vadd.f32 0.0, %v1480
      %1482 = vmatprep.mubr.bf16.mxu0 0
      %1483 = vmatmul.mubr.bf16.gmra.mrb[0].mxu0 %v806
      %v1484 = vpop.f32.mrb[0].mxu0
      %v1485 = vadd.f32 0.0, %v1484
      %v1486 = vpop.f32.mrb[0].mxu0
      %v1487 = vadd.f32 0.0, %v1486
      %v1488 = vpop.f32.mrb[0].mxu0
      %v1489 = vadd.f32 0.0, %v1488
      %v1490 = vpop.f32.mrb[0].mxu0
      %v1491 = vadd.f32 0.0, %v1490
      %1492 = vmatprep.mubr.bf16.mxu0 0
      %1493 = vmatmul.mubr.bf16.gmra.mrb[0].mxu0 %v809
      %v1494 = vpop.f32.mrb[0].mxu0
      %v1495 = vadd.f32 0.0, %v1494
      %v1496 = vpop.f32.mrb[0].mxu0
      %v1497 = vadd.f32 0.0, %v1496
      %v1498 = vpop.f32.mrb[0].mxu0
      %v1499 = vadd.f32 0.0, %v1498
      %v1500 = vpop.f32.mrb[0].mxu0
      %v1501 = vadd.f32 0.0, %v1500
      %1502 = vmatprep.mubr.bf16.mxu0 0
      %1503 = vmatmul.mubr.bf16.gmra.mrb[0].mxu0 %v812
      %v1504 = vpop.f32.mrb[0].mxu0
      %v1505 = vadd.f32 0.0, %v1504
      %v1506 = vpop.f32.mrb[0].mxu0
      %v1507 = vadd.f32 0.0, %v1506
      %v1508 = vpop.f32.mrb[0].mxu0
      %v1509 = vadd.f32 0.0, %v1508
      %v1510 = vpop.f32.mrb[0].mxu0
      %v1511 = vadd.f32 0.0, %v1510
      %1512 = vmatprep.mubr.bf16.mxu0 0
      %1513 = vmatmul.mubr.bf16.gmra.mrb[0].mxu0 %v815
      %v1514 = vpop.f32.mrb[0].mxu0
      %v1515 = vadd.f32 0.0, %v1514
      %v1516 = vpop.f32.mrb[0].mxu0
      %v1517 = vadd.f32 0.0, %v1516
      %v1518 = vpop.f32.mrb[0].mxu0
      %v1519 = vadd.f32 0.0, %v1518
      %v1520 = vpop.f32.mrb[0].mxu0
      %v1521 = vadd.f32 0.0, %v1520
      %1522 = vdwg.mxu0
      %v1523 = vld [vmem:[%s5] sm:$0xff]
      %v1524 = vld [vmem:[%s5 + $0x8] sm:$0xff]
      %v1525 = vld [vmem:[%s5 + $0x10] sm:$0xff]
      %v1526 = vld [vmem:[%s5 + $0x18] sm:$0xff]
      %v1527 = vld [vmem:[%s5 + $0x20] sm:$0xff]
      %v1528 = vld [vmem:[%s5 + $0x28] sm:$0xff]
      %v1529 = vld [vmem:[%s5 + $0x30] sm:$0xff]
      %v1530 = vld [vmem:[%s5 + $0x38] sm:$0xff]
      %v1531 = vld [vmem:[%s5 + $0x40] sm:$0xff]
      %v1532 = vld [vmem:[%s5 + $0x48] sm:$0xff]
      %v1533 = vld [vmem:[%s5 + $0x50] sm:$0xff]
      %v1534 = vld [vmem:[%s5 + $0x58] sm:$0xff]
      %v1535 = vld [vmem:[%s5 + $0x60] sm:$0xff]
      %v1536 = vld [vmem:[%s5 + $0x68] sm:$0xff]
      %v1537 = vld [vmem:[%s5 + $0x70] sm:$0xff]
      %v1538 = vld [vmem:[%s5 + $0x78] sm:$0xff]
      %v1539 = vld [vmem:[%s5 + $0x80] sm:$0xff]
      %v1540 = vld [vmem:[%s5 + $0x88] sm:$0xff]
      %v1541 = vld [vmem:[%s5 + $0x90] sm:$0xff]
      %v1542 = vld [vmem:[%s5 + $0x98] sm:$0xff]
      %v1543 = vld [vmem:[%s5 + $0xa0] sm:$0xff]
      %v1544 = vld [vmem:[%s5 + $0xa8] sm:$0xff]
      %v1545 = vld [vmem:[%s5 + $0xb0] sm:$0xff]
      %v1546 = vld [vmem:[%s5 + $0xb8] sm:$0xff]
      %v1547 = vld [vmem:[%s5 + $0xc0] sm:$0xff]
      %v1548 = vld [vmem:[%s5 + $0xc8] sm:$0xff]
      %v1549 = vld [vmem:[%s5 + $0xd0] sm:$0xff]
      %v1550 = vld [vmem:[%s5 + $0xd8] sm:$0xff]
      %v1551 = vld [vmem:[%s5 + $0xe0] sm:$0xff]
      %v1552 = vld [vmem:[%s5 + $0xe8] sm:$0xff]
      %v1553 = vld [vmem:[%s5 + $0xf0] sm:$0xff]
      %v1554 = vld [vmem:[%s5 + $0xf8] sm:$0xff]
      %v1555 = vld [vmem:[%s5 + $0x100] sm:$0xff]
      %v1556 = vld [vmem:[%s5 + $0x108] sm:$0xff]
      %v1557 = vld [vmem:[%s5 + $0x110] sm:$0xff]
      %v1558 = vld [vmem:[%s5 + $0x118] sm:$0xff]
      %v1559 = vld [vmem:[%s5 + $0x120] sm:$0xff]
      %v1560 = vld [vmem:[%s5 + $0x128] sm:$0xff]
      %v1561 = vld [vmem:[%s5 + $0x130] sm:$0xff]
      %v1562 = vld [vmem:[%s5 + $0x138] sm:$0xff]
      %v1563 = vld [vmem:[%s5 + $0x140] sm:$0xff]
      %v1564 = vld [vmem:[%s5 + $0x148] sm:$0xff]
      %v1565 = vld [vmem:[%s5 + $0x150] sm:$0xff]
      %v1566 = vld [vmem:[%s5 + $0x158] sm:$0xff]
      %v1567 = vld [vmem:[%s5 + $0x160] sm:$0xff]
      %v1568 = vld [vmem:[%s5 + $0x168] sm:$0xff]
      %v1569 = vld [vmem:[%s5 + $0x170] sm:$0xff]
      %v1570 = vld [vmem:[%s5 + $0x178] sm:$0xff]
      %v1571 = vld [vmem:[%s5 + $0x180] sm:$0xff]
      %v1572 = vld [vmem:[%s5 + $0x188] sm:$0xff]
      %v1573 = vld [vmem:[%s5 + $0x190] sm:$0xff]
      %v1574 = vld [vmem:[%s5 + $0x198] sm:$0xff]
      %v1575 = vld [vmem:[%s5 + $0x1a0] sm:$0xff]
      %v1576 = vld [vmem:[%s5 + $0x1a8] sm:$0xff]
      %v1577 = vld [vmem:[%s5 + $0x1b0] sm:$0xff]
      %v1578 = vld [vmem:[%s5 + $0x1b8] sm:$0xff]
      %v1579 = vld [vmem:[%s5 + $0x1c0] sm:$0xff]
      %v1580 = vld [vmem:[%s5 + $0x1c8] sm:$0xff]
      %v1581 = vld [vmem:[%s5 + $0x1d0] sm:$0xff]
      %v1582 = vld [vmem:[%s5 + $0x1d8] sm:$0xff]
      %v1583 = vld [vmem:[%s5 + $0x1e0] sm:$0xff]
      %v1584 = vld [vmem:[%s5 + $0x1e8] sm:$0xff]
      %v1585 = vld [vmem:[%s5 + $0x1f0] sm:$0xff]
      %v1586 = vld [vmem:[%s5 + $0x1f8] sm:$0xff]
      %1588 = vset.pattern.permute.xlu0 0
      %1589 = vperm.xlu0 %1588, %v1523
      %v1590 = vpop.permute.xlu0 %1589
      %1593 = vset.pattern.permute.xlu0 0
      %1594 = vperm.xlu0 %1593, %v1524
      %v1595 = vpop.permute.xlu0 %1594
      %1598 = vset.pattern.permute.xlu0 0
      %1599 = vperm.xlu0 %1598, %v1525
      %v1600 = vpop.permute.xlu0 %1599
      %1603 = vset.pattern.permute.xlu0 0
      %1604 = vperm.xlu0 %1603, %v1526
      %v1605 = vpop.permute.xlu0 %1604
      %1608 = vset.pattern.permute.xlu0 0
      %1609 = vperm.xlu0 %1608, %v1527
      %v1610 = vpop.permute.xlu0 %1609
      %1613 = vset.pattern.permute.xlu0 0
      %1614 = vperm.xlu0 %1613, %v1528
      %v1615 = vpop.permute.xlu0 %1614
      %1618 = vset.pattern.permute.xlu0 0
      %1619 = vperm.xlu0 %1618, %v1529
      %v1620 = vpop.permute.xlu0 %1619
      %1623 = vset.pattern.permute.xlu0 0
      %1624 = vperm.xlu0 %1623, %v1530
      %v1625 = vpop.permute.xlu0 %1624
      %1628 = vset.pattern.permute.xlu0 0
      %1629 = vperm.xlu0 %1628, %v1531
      %v1630 = vpop.permute.xlu0 %1629
      %1633 = vset.pattern.permute.xlu0 0
      %1634 = vperm.xlu0 %1633, %v1532
      %v1635 = vpop.permute.xlu0 %1634
      %1638 = vset.pattern.permute.xlu0 0
      %1639 = vperm.xlu0 %1638, %v1533
      %v1640 = vpop.permute.xlu0 %1639
      %1643 = vset.pattern.permute.xlu0 0
      %1644 = vperm.xlu0 %1643, %v1534
      %v1645 = vpop.permute.xlu0 %1644
      %1648 = vset.pattern.permute.xlu0 0
      %1649 = vperm.xlu0 %1648, %v1535
      %v1650 = vpop.permute.xlu0 %1649
      %1653 = vset.pattern.permute.xlu0 0
      %1654 = vperm.xlu0 %1653, %v1536
      %v1655 = vpop.permute.xlu0 %1654
      %1658 = vset.pattern.permute.xlu0 0
      %1659 = vperm.xlu0 %1658, %v1537
      %v1660 = vpop.permute.xlu0 %1659
      %1663 = vset.pattern.permute.xlu0 0
      %1664 = vperm.xlu0 %1663, %v1538
      %v1665 = vpop.permute.xlu0 %1664
      %1668 = vset.pattern.permute.xlu0 0
      %1669 = vperm.xlu0 %1668, %v1539
      %v1670 = vpop.permute.xlu0 %1669
      %1673 = vset.pattern.permute.xlu0 0
      %1674 = vperm.xlu0 %1673, %v1540
      %v1675 = vpop.permute.xlu0 %1674
      %1678 = vset.pattern.permute.xlu0 0
      %1679 = vperm.xlu0 %1678, %v1541
      %v1680 = vpop.permute.xlu0 %1679
      %1683 = vset.pattern.permute.xlu0 0
      %1684 = vperm.xlu0 %1683, %v1542
      %v1685 = vpop.permute.xlu0 %1684
      %1688 = vset.pattern.permute.xlu0 0
      %1689 = vperm.xlu0 %1688, %v1543
      %v1690 = vpop.permute.xlu0 %1689
      %1693 = vset.pattern.permute.xlu0 0
      %1694 = vperm.xlu0 %1693, %v1544
      %v1695 = vpop.permute.xlu0 %1694
      %1698 = vset.pattern.permute.xlu0 0
      %1699 = vperm.xlu0 %1698, %v1545
      %v1700 = vpop.permute.xlu0 %1699
      %1703 = vset.pattern.permute.xlu0 0
      %1704 = vperm.xlu0 %1703, %v1546
      %v1705 = vpop.permute.xlu0 %1704
      %1708 = vset.pattern.permute.xlu0 0
      %1709 = vperm.xlu0 %1708, %v1547
      %v1710 = vpop.permute.xlu0 %1709
      %1713 = vset.pattern.permute.xlu0 0
      %1714 = vperm.xlu0 %1713, %v1548
      %v1715 = vpop.permute.xlu0 %1714
      %1718 = vset.pattern.permute.xlu0 0
      %1719 = vperm.xlu0 %1718, %v1549
      %v1720 = vpop.permute.xlu0 %1719
      %1723 = vset.pattern.permute.xlu0 0
      %1724 = vperm.xlu0 %1723, %v1550
      %v1725 = vpop.permute.xlu0 %1724
      %1728 = vset.pattern.permute.xlu0 0
      %1729 = vperm.xlu0 %1728, %v1551
      %v1730 = vpop.permute.xlu0 %1729
      %1733 = vset.pattern.permute.xlu0 0
      %1734 = vperm.xlu0 %1733, %v1552
      %v1735 = vpop.permute.xlu0 %1734
      %1738 = vset.pattern.permute.xlu0 0
      %1739 = vperm.xlu0 %1738, %v1553
      %v1740 = vpop.permute.xlu0 %1739
      %1743 = vset.pattern.permute.xlu0 0
      %1744 = vperm.xlu0 %1743, %v1554
      %v1745 = vpop.permute.xlu0 %1744
      %1748 = vset.pattern.permute.xlu0 0
      %1749 = vperm.xlu0 %1748, %v1555
      %v1750 = vpop.permute.xlu0 %1749
      %1753 = vset.pattern.permute.xlu0 0
      %1754 = vperm.xlu0 %1753, %v1556
      %v1755 = vpop.permute.xlu0 %1754
      %1758 = vset.pattern.permute.xlu0 0
      %1759 = vperm.xlu0 %1758, %v1557
      %v1760 = vpop.permute.xlu0 %1759
      %1763 = vset.pattern.permute.xlu0 0
      %1764 = vperm.xlu0 %1763, %v1558
      %v1765 = vpop.permute.xlu0 %1764
      %1768 = vset.pattern.permute.xlu0 0
      %1769 = vperm.xlu0 %1768, %v1559
      %v1770 = vpop.permute.xlu0 %1769
      %1773 = vset.pattern.permute.xlu0 0
      %1774 = vperm.xlu0 %1773, %v1560
      %v1775 = vpop.permute.xlu0 %1774
      %1778 = vset.pattern.permute.xlu0 0
      %1779 = vperm.xlu0 %1778, %v1561
      %v1780 = vpop.permute.xlu0 %1779
      %1783 = vset.pattern.permute.xlu0 0
      %1784 = vperm.xlu0 %1783, %v1562
      %v1785 = vpop.permute.xlu0 %1784
      %1788 = vset.pattern.permute.xlu0 0
      %1789 = vperm.xlu0 %1788, %v1563
      %v1790 = vpop.permute.xlu0 %1789
      %1793 = vset.pattern.permute.xlu0 0
      %1794 = vperm.xlu0 %1793, %v1564
      %v1795 = vpop.permute.xlu0 %1794
      %1798 = vset.pattern.permute.xlu0 0
      %1799 = vperm.xlu0 %1798, %v1565
      %v1800 = vpop.permute.xlu0 %1799
      %1803 = vset.pattern.permute.xlu0 0
      %1804 = vperm.xlu0 %1803, %v1566
      %v1805 = vpop.permute.xlu0 %1804
      %1808 = vset.pattern.permute.xlu0 0
      %1809 = vperm.xlu0 %1808, %v1567
      %v1810 = vpop.permute.xlu0 %1809
      %1813 = vset.pattern.permute.xlu0 0
      %1814 = vperm.xlu0 %1813, %v1568
      %v1815 = vpop.permute.xlu0 %1814
      %1818 = vset.pattern.permute.xlu0 0
      %1819 = vperm.xlu0 %1818, %v1569
      %v1820 = vpop.permute.xlu0 %1819
      %1823 = vset.pattern.permute.xlu0 0
      %1824 = vperm.xlu0 %1823, %v1570
      %v1825 = vpop.permute.xlu0 %1824
      %1828 = vset.pattern.permute.xlu0 0
      %1829 = vperm.xlu0 %1828, %v1571
      %v1830 = vpop.permute.xlu0 %1829
      %1833 = vset.pattern.permute.xlu0 0
      %1834 = vperm.xlu0 %1833, %v1572
      %v1835 = vpop.permute.xlu0 %1834
      %1838 = vset.pattern.permute.xlu0 0
      %1839 = vperm.xlu0 %1838, %v1573
      %v1840 = vpop.permute.xlu0 %1839
      %1843 = vset.pattern.permute.xlu0 0
      %1844 = vperm.xlu0 %1843, %v1574
      %v1845 = vpop.permute.xlu0 %1844
      %1848 = vset.pattern.permute.xlu0 0
      %1849 = vperm.xlu0 %1848, %v1575
      %v1850 = vpop.permute.xlu0 %1849
      %1853 = vset.pattern.permute.xlu0 0
      %1854 = vperm.xlu0 %1853, %v1576
      %v1855 = vpop.permute.xlu0 %1854
      %1858 = vset.pattern.permute.xlu0 0
      %1859 = vperm.xlu0 %1858, %v1577
      %v1860 = vpop.permute.xlu0 %1859
      %1863 = vset.pattern.permute.xlu0 0
      %1864 = vperm.xlu0 %1863, %v1578
      %v1865 = vpop.permute.xlu0 %1864
      %1868 = vset.pattern.permute.xlu0 0
      %1869 = vperm.xlu0 %1868, %v1579
      %v1870 = vpop.permute.xlu0 %1869
      %1873 = vset.pattern.permute.xlu0 0
      %1874 = vperm.xlu0 %1873, %v1580
      %v1875 = vpop.permute.xlu0 %1874
      %1878 = vset.pattern.permute.xlu0 0
      %1879 = vperm.xlu0 %1878, %v1581
      %v1880 = vpop.permute.xlu0 %1879
      %1883 = vset.pattern.permute.xlu0 0
      %1884 = vperm.xlu0 %1883, %v1582
      %v1885 = vpop.permute.xlu0 %1884
      %1888 = vset.pattern.permute.xlu0 0
      %1889 = vperm.xlu0 %1888, %v1583
      %v1890 = vpop.permute.xlu0 %1889
      %1893 = vset.pattern.permute.xlu0 0
      %1894 = vperm.xlu0 %1893, %v1584
      %v1895 = vpop.permute.xlu0 %1894
      %1898 = vset.pattern.permute.xlu0 0
      %1899 = vperm.xlu0 %1898, %v1585
      %v1900 = vpop.permute.xlu0 %1899
      %1903 = vset.pattern.permute.xlu0 0
      %1904 = vperm.xlu0 %1903, %v1586
      %v1905 = vpop.permute.xlu0 %1904
      %v1907 = vsub.f32 %v1590, %v852
      %v1908 = vsub.f32 %v1590, %v854
      %v1909 = vsub.f32 %v1590, %v1205
      %v1910 = vsub.f32 %v1590, %v1207
      %v1911 = vsub.f32 %v1595, %v856
      %v1912 = vsub.f32 %v1595, %v858
      %v1913 = vsub.f32 %v1595, %v1209
      %v1914 = vsub.f32 %v1595, %v1211
      %v1915 = vsub.f32 %v1600, %v862
      %v1916 = vsub.f32 %v1600, %v864
      %v1917 = vsub.f32 %v1600, %v1215
      %v1918 = vsub.f32 %v1600, %v1217
      %v1919 = vsub.f32 %v1605, %v866
      %v1920 = vsub.f32 %v1605, %v868
      %v1921 = vsub.f32 %v1605, %v1219
      %v1922 = vsub.f32 %v1605, %v1221
      %v1923 = vsub.f32 %v1610, %v872
      %v1924 = vsub.f32 %v1610, %v874
      %v1925 = vsub.f32 %v1610, %v1225
      %v1926 = vsub.f32 %v1610, %v1227
      %v1927 = vsub.f32 %v1615, %v876
      %v1928 = vsub.f32 %v1615, %v878
      %v1929 = vsub.f32 %v1615, %v1229
      %v1930 = vsub.f32 %v1615, %v1231
      %v1931 = vsub.f32 %v1620, %v882
      %v1932 = vsub.f32 %v1620, %v884
      %v1933 = vsub.f32 %v1620, %v1235
      %v1934 = vsub.f32 %v1620, %v1237
      %v1935 = vsub.f32 %v1625, %v886
      %v1936 = vsub.f32 %v1625, %v888
      %v1937 = vsub.f32 %v1625, %v1239
      %v1938 = vsub.f32 %v1625, %v1241
      %v1939 = vsub.f32 %v1630, %v892
      %v1940 = vsub.f32 %v1630, %v894
      %v1941 = vsub.f32 %v1630, %v1245
      %v1942 = vsub.f32 %v1630, %v1247
      %v1943 = vsub.f32 %v1635, %v896
      %v1944 = vsub.f32 %v1635, %v898
      %v1945 = vsub.f32 %v1635, %v1249
      %v1946 = vsub.f32 %v1635, %v1251
      %v1947 = vsub.f32 %v1640, %v902
      %v1948 = vsub.f32 %v1640, %v904
      %v1949 = vsub.f32 %v1640, %v1255
      %v1950 = vsub.f32 %v1640, %v1257
      %v1951 = vsub.f32 %v1645, %v906
      %v1952 = vsub.f32 %v1645, %v908
      %v1953 = vsub.f32 %v1645, %v1259
      %v1954 = vsub.f32 %v1645, %v1261
      %v1955 = vsub.f32 %v1650, %v912
      %v1956 = vsub.f32 %v1650, %v914
      %v1957 = vsub.f32 %v1650, %v1265
      %v1958 = vsub.f32 %v1650, %v1267
      %v1959 = vsub.f32 %v1655, %v916
      %v1960 = vsub.f32 %v1655, %v918
      %v1961 = vsub.f32 %v1655, %v1269
      %v1962 = vsub.f32 %v1655, %v1271
      %v1963 = vsub.f32 %v1660, %v922
      %v1964 = vsub.f32 %v1660, %v924
      %v1965 = vsub.f32 %v1660, %v1275
      %v1966 = vsub.f32 %v1660, %v1277
      %v1967 = vsub.f32 %v1665, %v926
      %v1968 = vsub.f32 %v1665, %v928
      %v1969 = vsub.f32 %v1665, %v1279
      %v1970 = vsub.f32 %v1665, %v1281
      %v1971 = vsub.f32 %v1670, %v932
      %v1972 = vsub.f32 %v1670, %v934
      %v1973 = vsub.f32 %v1670, %v1285
      %v1974 = vsub.f32 %v1670, %v1287
      %v1975 = vsub.f32 %v1675, %v936
      %v1976 = vsub.f32 %v1675, %v938
      %v1977 = vsub.f32 %v1675, %v1289
      %v1978 = vsub.f32 %v1675, %v1291
      %v1979 = vsub.f32 %v1680, %v942
      %v1980 = vsub.f32 %v1680, %v944
      %v1981 = vsub.f32 %v1680, %v1295
      %v1982 = vsub.f32 %v1680, %v1297
      %v1983 = vsub.f32 %v1685, %v946
      %v1984 = vsub.f32 %v1685, %v948
      %v1985 = vsub.f32 %v1685, %v1299
      %v1986 = vsub.f32 %v1685, %v1301
      %v1987 = vsub.f32 %v1690, %v952
      %v1988 = vsub.f32 %v1690, %v954
      %v1989 = vsub.f32 %v1690, %v1305
      %v1990 = vsub.f32 %v1690, %v1307
      %v1991 = vsub.f32 %v1695, %v956
      %v1992 = vsub.f32 %v1695, %v958
      %v1993 = vsub.f32 %v1695, %v1309
      %v1994 = vsub.f32 %v1695, %v1311
      %v1995 = vsub.f32 %v1700, %v962
      %v1996 = vsub.f32 %v1700, %v964
      %v1997 = vsub.f32 %v1700, %v1315
      %v1998 = vsub.f32 %v1700, %v1317
      %v1999 = vsub.f32 %v1705, %v966
      %v2000 = vsub.f32 %v1705, %v968
      %v2001 = vsub.f32 %v1705, %v1319
      %v2002 = vsub.f32 %v1705, %v1321
      %v2003 = vsub.f32 %v1710, %v972
      %v2004 = vsub.f32 %v1710, %v974
      %v2005 = vsub.f32 %v1710, %v1325
      %v2006 = vsub.f32 %v1710, %v1327
      %v2007 = vsub.f32 %v1715, %v976
      %v2008 = vsub.f32 %v1715, %v978
      %v2009 = vsub.f32 %v1715, %v1329
      %v2010 = vsub.f32 %v1715, %v1331
      %v2011 = vsub.f32 %v1720, %v982
      %v2012 = vsub.f32 %v1720, %v984
      %v2013 = vsub.f32 %v1720, %v1335
      %v2014 = vsub.f32 %v1720, %v1337
      %v2015 = vsub.f32 %v1725, %v986
      %v2016 = vsub.f32 %v1725, %v988
      %v2017 = vsub.f32 %v1725, %v1339
      %v2018 = vsub.f32 %v1725, %v1341
      %v2019 = vsub.f32 %v1730, %v992
      %v2020 = vsub.f32 %v1730, %v994
      %v2021 = vsub.f32 %v1730, %v1345
      %v2022 = vsub.f32 %v1730, %v1347
      %v2023 = vsub.f32 %v1735, %v996
      %v2024 = vsub.f32 %v1735, %v998
      %v2025 = vsub.f32 %v1735, %v1349
      %v2026 = vsub.f32 %v1735, %v1351
      %v2027 = vsub.f32 %v1740, %v1002
      %v2028 = vsub.f32 %v1740, %v1004
      %v2029 = vsub.f32 %v1740, %v1355
      %v2030 = vsub.f32 %v1740, %v1357
      %v2031 = vsub.f32 %v1745, %v1006
      %v2032 = vsub.f32 %v1745, %v1008
      %v2033 = vsub.f32 %v1745, %v1359
      %v2034 = vsub.f32 %v1745, %v1361
      %v2035 = vsub.f32 %v1750, %v1012
      %v2036 = vsub.f32 %v1750, %v1014
      %v2037 = vsub.f32 %v1750, %v1365
      %v2038 = vsub.f32 %v1750, %v1367
      %v2039 = vsub.f32 %v1755, %v1016
      %v2040 = vsub.f32 %v1755, %v1018
      %v2041 = vsub.f32 %v1755, %v1369
      %v2042 = vsub.f32 %v1755, %v1371
      %v2043 = vsub.f32 %v1760, %v1022
      %v2044 = vsub.f32 %v1760, %v1024
      %v2045 = vsub.f32 %v1760, %v1375
      %v2046 = vsub.f32 %v1760, %v1377
      %v2047 = vsub.f32 %v1765, %v1026
      %v2048 = vsub.f32 %v1765, %v1028
      %v2049 = vsub.f32 %v1765, %v1379
      %v2050 = vsub.f32 %v1765, %v1381
      %v2051 = vsub.f32 %v1770, %v1032
      %v2052 = vsub.f32 %v1770, %v1034
      %v2053 = vsub.f32 %v1770, %v1385
      %v2054 = vsub.f32 %v1770, %v1387
      %v2055 = vsub.f32 %v1775, %v1036
      %v2056 = vsub.f32 %v1775, %v1038
      %v2057 = vsub.f32 %v1775, %v1389
      %v2058 = vsub.f32 %v1775, %v1391
      %v2059 = vsub.f32 %v1780, %v1042
      %v2060 = vsub.f32 %v1780, %v1044
      %v2061 = vsub.f32 %v1780, %v1395
      %v2062 = vsub.f32 %v1780, %v1397
      %v2063 = vsub.f32 %v1785, %v1046
      %v2064 = vsub.f32 %v1785, %v1048
      %v2065 = vsub.f32 %v1785, %v1399
      %v2066 = vsub.f32 %v1785, %v1401
      %v2067 = vsub.f32 %v1790, %v1052
      %v2068 = vsub.f32 %v1790, %v1054
      %v2069 = vsub.f32 %v1790, %v1405
      %v2070 = vsub.f32 %v1790, %v1407
      %v2071 = vsub.f32 %v1795, %v1056
      %v2072 = vsub.f32 %v1795, %v1058
      %v2073 = vsub.f32 %v1795, %v1409
      %v2074 = vsub.f32 %v1795, %v1411
      %v2075 = vsub.f32 %v1800, %v1062
      %v2076 = vsub.f32 %v1800, %v1064
      %v2077 = vsub.f32 %v1800, %v1415
      %v2078 = vsub.f32 %v1800, %v1417
      %v2079 = vsub.f32 %v1805, %v1066
      %v2080 = vsub.f32 %v1805, %v1068
      %v2081 = vsub.f32 %v1805, %v1419
      %v2082 = vsub.f32 %v1805, %v1421
      %v2083 = vsub.f32 %v1810, %v1072
      %v2084 = vsub.f32 %v1810, %v1074
      %v2085 = vsub.f32 %v1810, %v1425
      %v2086 = vsub.f32 %v1810, %v1427
      %v2087 = vsub.f32 %v1815, %v1076
      %v2088 = vsub.f32 %v1815, %v1078
      %v2089 = vsub.f32 %v1815, %v1429
      %v2090 = vsub.f32 %v1815, %v1431
      %v2091 = vsub.f32 %v1820, %v1082
      %v2092 = vsub.f32 %v1820, %v1084
      %v2093 = vsub.f32 %v1820, %v1435
      %v2094 = vsub.f32 %v1820, %v1437
      %v2095 = vsub.f32 %v1825, %v1086
      %v2096 = vsub.f32 %v1825, %v1088
      %v2097 = vsub.f32 %v1825, %v1439
      %v2098 = vsub.f32 %v1825, %v1441
      %v2099 = vsub.f32 %v1830, %v1092
      %v2100 = vsub.f32 %v1830, %v1094
      %v2101 = vsub.f32 %v1830, %v1445
      %v2102 = vsub.f32 %v1830, %v1447
      %v2103 = vsub.f32 %v1835, %v1096
      %v2104 = vsub.f32 %v1835, %v1098
      %v2105 = vsub.f32 %v1835, %v1449
      %v2106 = vsub.f32 %v1835, %v1451
      %v2107 = vsub.f32 %v1840, %v1102
      %v2108 = vsub.f32 %v1840, %v1104
      %v2109 = vsub.f32 %v1840, %v1455
      %v2110 = vsub.f32 %v1840, %v1457
      %v2111 = vsub.f32 %v1845, %v1106
      %v2112 = vsub.f32 %v1845, %v1108
      %v2113 = vsub.f32 %v1845, %v1459
      %v2114 = vsub.f32 %v1845, %v1461
      %v2115 = vsub.f32 %v1850, %v1112
      %v2116 = vsub.f32 %v1850, %v1114
      %v2117 = vsub.f32 %v1850, %v1465
      %v2118 = vsub.f32 %v1850, %v1467
      %v2119 = vsub.f32 %v1855, %v1116
      %v2120 = vsub.f32 %v1855, %v1118
      %v2121 = vsub.f32 %v1855, %v1469
      %v2122 = vsub.f32 %v1855, %v1471
      %v2123 = vsub.f32 %v1860, %v1122
      %v2124 = vsub.f32 %v1860, %v1124
      %v2125 = vsub.f32 %v1860, %v1475
      %v2126 = vsub.f32 %v1860, %v1477
      %v2127 = vsub.f32 %v1865, %v1126
      %v2128 = vsub.f32 %v1865, %v1128
      %v2129 = vsub.f32 %v1865, %v1479
      %v2130 = vsub.f32 %v1865, %v1481
      %v2131 = vsub.f32 %v1870, %v1132
      %v2132 = vsub.f32 %v1870, %v1134
      %v2133 = vsub.f32 %v1870, %v1485
      %v2134 = vsub.f32 %v1870, %v1487
      %v2135 = vsub.f32 %v1875, %v1136
      %v2136 = vsub.f32 %v1875, %v1138
      %v2137 = vsub.f32 %v1875, %v1489
      %v2138 = vsub.f32 %v1875, %v1491
      %v2139 = vsub.f32 %v1880, %v1142
      %v2140 = vsub.f32 %v1880, %v1144
      %v2141 = vsub.f32 %v1880, %v1495
      %v2142 = vsub.f32 %v1880, %v1497
      %v2143 = vsub.f32 %v1885, %v1146
      %v2144 = vsub.f32 %v1885, %v1148
      %v2145 = vsub.f32 %v1885, %v1499
      %v2146 = vsub.f32 %v1885, %v1501
      %v2147 = vsub.f32 %v1890, %v1152
      %v2148 = vsub.f32 %v1890, %v1154
      %v2149 = vsub.f32 %v1890, %v1505
      %v2150 = vsub.f32 %v1890, %v1507
      %v2151 = vsub.f32 %v1895, %v1156
      %v2152 = vsub.f32 %v1895, %v1158
      %v2153 = vsub.f32 %v1895, %v1509
      %v2154 = vsub.f32 %v1895, %v1511
      %v2155 = vsub.f32 %v1900, %v1162
      %v2156 = vsub.f32 %v1900, %v1164
      %v2157 = vsub.f32 %v1900, %v1515
      %v2158 = vsub.f32 %v1900, %v1517
      %v2159 = vsub.f32 %v1905, %v1166
      %v2160 = vsub.f32 %v1905, %v1168
      %v2161 = vsub.f32 %v1905, %v1519
      %v2162 = vsub.f32 %v1905, %v1521
      %v2163 = vmin.f32 %v1907, %v1911
      %v2164 = vmin.f32 %v2163, %v1915
      %v2165 = vmin.f32 %v2164, %v1919
      %v2166 = vmin.f32 %v2165, %v1923
      %v2167 = vmin.f32 %v2166, %v1927
      %v2168 = vmin.f32 %v2167, %v1931
      %v2169 = vmin.f32 %v2168, %v1935
      %v2170 = vmin.f32 %v2169, %v1939
      %v2171 = vmin.f32 %v2170, %v1943
      %v2172 = vmin.f32 %v2171, %v1947
      %v2173 = vmin.f32 %v2172, %v1951
      %v2174 = vmin.f32 %v2173, %v1955
      %v2175 = vmin.f32 %v2174, %v1959
      %v2176 = vmin.f32 %v2175, %v1963
      %v2177 = vmin.f32 %v2176, %v1967
      %v2178 = vmin.f32 %v2177, %v1971
      %v2179 = vmin.f32 %v2178, %v1975
      %v2180 = vmin.f32 %v2179, %v1979
      %v2181 = vmin.f32 %v2180, %v1983
      %v2182 = vmin.f32 %v2181, %v1987
      %v2183 = vmin.f32 %v2182, %v1991
      %v2184 = vmin.f32 %v2183, %v1995
      %v2185 = vmin.f32 %v2184, %v1999
      %v2186 = vmin.f32 %v2185, %v2003
      %v2187 = vmin.f32 %v2186, %v2007
      %v2188 = vmin.f32 %v2187, %v2011
      %v2189 = vmin.f32 %v2188, %v2015
      %v2190 = vmin.f32 %v2189, %v2019
      %v2191 = vmin.f32 %v2190, %v2023
      %v2192 = vmin.f32 %v2191, %v2027
      %v2193 = vmin.f32 %v2192, %v2031
      %v2194 = vmin.f32 %v2193, %v2035
      %v2195 = vmin.f32 %v2194, %v2039
      %v2196 = vmin.f32 %v2195, %v2043
      %v2197 = vmin.f32 %v2196, %v2047
      %v2198 = vmin.f32 %v2197, %v2051
      %v2199 = vmin.f32 %v2198, %v2055
      %v2200 = vmin.f32 %v2199, %v2059
      %v2201 = vmin.f32 %v2200, %v2063
      %v2202 = vmin.f32 %v2201, %v2067
      %v2203 = vmin.f32 %v2202, %v2071
      %v2204 = vmin.f32 %v2203, %v2075
      %v2205 = vmin.f32 %v2204, %v2079
      %v2206 = vmin.f32 %v2205, %v2083
      %v2207 = vmin.f32 %v2206, %v2087
      %v2208 = vmin.f32 %v2207, %v2091
      %v2209 = vmin.f32 %v2208, %v2095
      %v2210 = vmin.f32 %v2209, %v2099
      %v2211 = vmin.f32 %v2210, %v2103
      %v2212 = vmin.f32 %v2211, %v2107
      %v2213 = vmin.f32 %v2212, %v2111
      %v2214 = vmin.f32 %v2213, %v2115
      %v2215 = vmin.f32 %v2214, %v2119
      %v2216 = vmin.f32 %v2215, %v2123
      %v2217 = vmin.f32 %v2216, %v2127
      %v2218 = vmin.f32 %v2217, %v2131
      %v2219 = vmin.f32 %v2218, %v2135
      %v2220 = vmin.f32 %v2219, %v2139
      %v2221 = vmin.f32 %v2220, %v2143
      %v2222 = vmin.f32 %v2221, %v2147
      %v2223 = vmin.f32 %v2222, %v2151
      %v2224 = vmin.f32 %v2223, %v2155
      %v2225 = vmin.f32 %v2224, %v2159
      %v2226 = vrot.slane %v2225, 4
      %v2227 = vmin.f32 %v2225, %v2226
      %v2228 = vrot.slane %v2227, 2
      %v2229 = vmin.f32 %v2227, %v2228
      %v2230 = vrot.slane %v2229, 1
      %v2231 = vmin.f32 %v2229, %v2230
      %v2232 = vmin.f32 %v1908, %v1912
      %v2233 = vmin.f32 %v2232, %v1916
      %v2234 = vmin.f32 %v2233, %v1920
      %v2235 = vmin.f32 %v2234, %v1924
      %v2236 = vmin.f32 %v2235, %v1928
      %v2237 = vmin.f32 %v2236, %v1932
      %v2238 = vmin.f32 %v2237, %v1936
      %v2239 = vmin.f32 %v2238, %v1940
      %v2240 = vmin.f32 %v2239, %v1944
      %v2241 = vmin.f32 %v2240, %v1948
      %v2242 = vmin.f32 %v2241, %v1952
      %v2243 = vmin.f32 %v2242, %v1956
      %v2244 = vmin.f32 %v2243, %v1960
      %v2245 = vmin.f32 %v2244, %v1964
      %v2246 = vmin.f32 %v2245, %v1968
      %v2247 = vmin.f32 %v2246, %v1972
      %v2248 = vmin.f32 %v2247, %v1976
      %v2249 = vmin.f32 %v2248, %v1980
      %v2250 = vmin.f32 %v2249, %v1984
      %v2251 = vmin.f32 %v2250, %v1988
      %v2252 = vmin.f32 %v2251, %v1992
      %v2253 = vmin.f32 %v2252, %v1996
      %v2254 = vmin.f32 %v2253, %v2000
      %v2255 = vmin.f32 %v2254, %v2004
      %v2256 = vmin.f32 %v2255, %v2008
      %v2257 = vmin.f32 %v2256, %v2012
      %v2258 = vmin.f32 %v2257, %v2016
      %v2259 = vmin.f32 %v2258, %v2020
      %v2260 = vmin.f32 %v2259, %v2024
      %v2261 = vmin.f32 %v2260, %v2028
      %v2262 = vmin.f32 %v2261, %v2032
      %v2263 = vmin.f32 %v2262, %v2036
      %v2264 = vmin.f32 %v2263, %v2040
      %v2265 = vmin.f32 %v2264, %v2044
      %v2266 = vmin.f32 %v2265, %v2048
      %v2267 = vmin.f32 %v2266, %v2052
      %v2268 = vmin.f32 %v2267, %v2056
      %v2269 = vmin.f32 %v2268, %v2060
      %v2270 = vmin.f32 %v2269, %v2064
      %v2271 = vmin.f32 %v2270, %v2068
      %v2272 = vmin.f32 %v2271, %v2072
      %v2273 = vmin.f32 %v2272, %v2076
      %v2274 = vmin.f32 %v2273, %v2080
      %v2275 = vmin.f32 %v2274, %v2084
      %v2276 = vmin.f32 %v2275, %v2088
      %v2277 = vmin.f32 %v2276, %v2092
      %v2278 = vmin.f32 %v2277, %v2096
      %v2279 = vmin.f32 %v2278, %v2100
      %v2280 = vmin.f32 %v2279, %v2104
      %v2281 = vmin.f32 %v2280, %v2108
      %v2282 = vmin.f32 %v2281, %v2112
      %v2283 = vmin.f32 %v2282, %v2116
      %v2284 = vmin.f32 %v2283, %v2120
      %v2285 = vmin.f32 %v2284, %v2124
      %v2286 = vmin.f32 %v2285, %v2128
      %v2287 = vmin.f32 %v2286, %v2132
      %v2288 = vmin.f32 %v2287, %v2136
      %v2289 = vmin.f32 %v2288, %v2140
      %v2290 = vmin.f32 %v2289, %v2144
      %v2291 = vmin.f32 %v2290, %v2148
      %v2292 = vmin.f32 %v2291, %v2152
      %v2293 = vmin.f32 %v2292, %v2156
      %v2294 = vmin.f32 %v2293, %v2160
      %v2295 = vrot.slane %v2294, 4
      %v2296 = vmin.f32 %v2294, %v2295
      %v2297 = vrot.slane %v2296, 2
      %v2298 = vmin.f32 %v2296, %v2297
      %v2299 = vrot.slane %v2298, 1
      %v2300 = vmin.f32 %v2298, %v2299
      %v2301 = vmin.f32 %v1909, %v1913
      %v2302 = vmin.f32 %v2301, %v1917
      %v2303 = vmin.f32 %v2302, %v1921
      %v2304 = vmin.f32 %v2303, %v1925
      %v2305 = vmin.f32 %v2304, %v1929
      %v2306 = vmin.f32 %v2305, %v1933
      %v2307 = vmin.f32 %v2306, %v1937
      %v2308 = vmin.f32 %v2307, %v1941
      %v2309 = vmin.f32 %v2308, %v1945
      %v2310 = vmin.f32 %v2309, %v1949
      %v2311 = vmin.f32 %v2310, %v1953
      %v2312 = vmin.f32 %v2311, %v1957
      %v2313 = vmin.f32 %v2312, %v1961
      %v2314 = vmin.f32 %v2313, %v1965
      %v2315 = vmin.f32 %v2314, %v1969
      %v2316 = vmin.f32 %v2315, %v1973
      %v2317 = vmin.f32 %v2316, %v1977
      %v2318 = vmin.f32 %v2317, %v1981
      %v2319 = vmin.f32 %v2318, %v1985
      %v2320 = vmin.f32 %v2319, %v1989
      %v2321 = vmin.f32 %v2320, %v1993
      %v2322 = vmin.f32 %v2321, %v1997
      %v2323 = vmin.f32 %v2322, %v2001
      %v2324 = vmin.f32 %v2323, %v2005
      %v2325 = vmin.f32 %v2324, %v2009
      %v2326 = vmin.f32 %v2325, %v2013
      %v2327 = vmin.f32 %v2326, %v2017
      %v2328 = vmin.f32 %v2327, %v2021
      %v2329 = vmin.f32 %v2328, %v2025
      %v2330 = vmin.f32 %v2329, %v2029
      %v2331 = vmin.f32 %v2330, %v2033
      %v2332 = vmin.f32 %v2331, %v2037
      %v2333 = vmin.f32 %v2332, %v2041
      %v2334 = vmin.f32 %v2333, %v2045
      %v2335 = vmin.f32 %v2334, %v2049
      %v2336 = vmin.f32 %v2335, %v2053
      %v2337 = vmin.f32 %v2336, %v2057
      %v2338 = vmin.f32 %v2337, %v2061
      %v2339 = vmin.f32 %v2338, %v2065
      %v2340 = vmin.f32 %v2339, %v2069
      %v2341 = vmin.f32 %v2340, %v2073
      %v2342 = vmin.f32 %v2341, %v2077
      %v2343 = vmin.f32 %v2342, %v2081
      %v2344 = vmin.f32 %v2343, %v2085
      %v2345 = vmin.f32 %v2344, %v2089
      %v2346 = vmin.f32 %v2345, %v2093
      %v2347 = vmin.f32 %v2346, %v2097
      %v2348 = vmin.f32 %v2347, %v2101
      %v2349 = vmin.f32 %v2348, %v2105
      %v2350 = vmin.f32 %v2349, %v2109
      %v2351 = vmin.f32 %v2350, %v2113
      %v2352 = vmin.f32 %v2351, %v2117
      %v2353 = vmin.f32 %v2352, %v2121
      %v2354 = vmin.f32 %v2353, %v2125
      %v2355 = vmin.f32 %v2354, %v2129
      %v2356 = vmin.f32 %v2355, %v2133
      %v2357 = vmin.f32 %v2356, %v2137
      %v2358 = vmin.f32 %v2357, %v2141
      %v2359 = vmin.f32 %v2358, %v2145
      %v2360 = vmin.f32 %v2359, %v2149
      %v2361 = vmin.f32 %v2360, %v2153
      %v2362 = vmin.f32 %v2361, %v2157
      %v2363 = vmin.f32 %v2362, %v2161
      %v2364 = vrot.slane %v2363, 4
      %v2365 = vmin.f32 %v2363, %v2364
      %v2366 = vrot.slane %v2365, 2
      %v2367 = vmin.f32 %v2365, %v2366
      %v2368 = vrot.slane %v2367, 1
      %v2369 = vmin.f32 %v2367, %v2368
      %v2370 = vmin.f32 %v1910, %v1914
      %v2371 = vmin.f32 %v2370, %v1918
      %v2372 = vmin.f32 %v2371, %v1922
      %v2373 = vmin.f32 %v2372, %v1926
      %v2374 = vmin.f32 %v2373, %v1930
      %v2375 = vmin.f32 %v2374, %v1934
      %v2376 = vmin.f32 %v2375, %v1938
      %v2377 = vmin.f32 %v2376, %v1942
      %v2378 = vmin.f32 %v2377, %v1946
      %v2379 = vmin.f32 %v2378, %v1950
      %v2380 = vmin.f32 %v2379, %v1954
      %v2381 = vmin.f32 %v2380, %v1958
      %v2382 = vmin.f32 %v2381, %v1962
      %v2383 = vmin.f32 %v2382, %v1966
      %v2384 = vmin.f32 %v2383, %v1970
      %v2385 = vmin.f32 %v2384, %v1974
      %v2386 = vmin.f32 %v2385, %v1978
      %v2387 = vmin.f32 %v2386, %v1982
      %v2388 = vmin.f32 %v2387, %v1986
      %v2389 = vmin.f32 %v2388, %v1990
      %v2390 = vmin.f32 %v2389, %v1994
      %v2391 = vmin.f32 %v2390, %v1998
      %v2392 = vmin.f32 %v2391, %v2002
      %v2393 = vmin.f32 %v2392, %v2006
      %v2394 = vmin.f32 %v2393, %v2010
      %v2395 = vmin.f32 %v2394, %v2014
      %v2396 = vmin.f32 %v2395, %v2018
      %v2397 = vmin.f32 %v2396, %v2022
      %v2398 = vmin.f32 %v2397, %v2026
      %v2399 = vmin.f32 %v2398, %v2030
      %v2400 = vmin.f32 %v2399, %v2034
      %v2401 = vmin.f32 %v2400, %v2038
      %v2402 = vmin.f32 %v2401, %v2042
      %v2403 = vmin.f32 %v2402, %v2046
      %v2404 = vmin.f32 %v2403, %v2050
      %v2405 = vmin.f32 %v2404, %v2054
      %v2406 = vmin.f32 %v2405, %v2058
      %v2407 = vmin.f32 %v2406, %v2062
      %v2408 = vmin.f32 %v2407, %v2066
      %v2409 = vmin.f32 %v2408, %v2070
      %v2410 = vmin.f32 %v2409, %v2074
      %v2411 = vmin.f32 %v2410, %v2078
      %v2412 = vmin.f32 %v2411, %v2082
      %v2413 = vmin.f32 %v2412, %v2086
      %v2414 = vmin.f32 %v2413, %v2090
      %v2415 = vmin.f32 %v2414, %v2094
      %v2416 = vmin.f32 %v2415, %v2098
      %v2417 = vmin.f32 %v2416, %v2102
      %v2418 = vmin.f32 %v2417, %v2106
      %v2419 = vmin.f32 %v2418, %v2110
      %v2420 = vmin.f32 %v2419, %v2114
      %v2421 = vmin.f32 %v2420, %v2118
      %v2422 = vmin.f32 %v2421, %v2122
      %v2423 = vmin.f32 %v2422, %v2126
      %v2424 = vmin.f32 %v2423, %v2130
      %v2425 = vmin.f32 %v2424, %v2134
      %v2426 = vmin.f32 %v2425, %v2138
      %v2427 = vmin.f32 %v2426, %v2142
      %v2428 = vmin.f32 %v2427, %v2146
      %v2429 = vmin.f32 %v2428, %v2150
      %v2430 = vmin.f32 %v2429, %v2154
      %v2431 = vmin.f32 %v2430, %v2158
      %v2432 = vmin.f32 %v2431, %v2162
      %v2433 = vrot.slane %v2432, 4
      %v2434 = vmin.f32 %v2432, %v2433
      %v2435 = vrot.slane %v2434, 2
      %v2436 = vmin.f32 %v2434, %v2435
      %v2437 = vrot.slane %v2436, 1
      %v2438 = vmin.f32 %v2436, %v2437
      %vm2439 = vcmp.eq.f32.partialorder %v1907, %v2231
      %vm2440 = vcmp.eq.f32.partialorder %v1908, %v2300
      %vm2441 = vcmp.eq.f32.partialorder %v1909, %v2369
      %vm2442 = vcmp.eq.f32.partialorder %v1910, %v2438
      %vm2443 = vcmp.eq.f32.partialorder %v1911, %v2231
      %vm2444 = vcmp.eq.f32.partialorder %v1912, %v2300
      %vm2445 = vcmp.eq.f32.partialorder %v1913, %v2369
      %vm2446 = vcmp.eq.f32.partialorder %v1914, %v2438
      %vm2447 = vcmp.eq.f32.partialorder %v1915, %v2231
      %vm2448 = vcmp.eq.f32.partialorder %v1916, %v2300
      %vm2449 = vcmp.eq.f32.partialorder %v1917, %v2369
      %vm2450 = vcmp.eq.f32.partialorder %v1918, %v2438
      %vm2451 = vcmp.eq.f32.partialorder %v1919, %v2231
      %vm2452 = vcmp.eq.f32.partialorder %v1920, %v2300
      %vm2453 = vcmp.eq.f32.partialorder %v1921, %v2369
      %vm2454 = vcmp.eq.f32.partialorder %v1922, %v2438
      %vm2455 = vcmp.eq.f32.partialorder %v1923, %v2231
      %vm2456 = vcmp.eq.f32.partialorder %v1924, %v2300
      %vm2457 = vcmp.eq.f32.partialorder %v1925, %v2369
      %vm2458 = vcmp.eq.f32.partialorder %v1926, %v2438
      %vm2459 = vcmp.eq.f32.partialorder %v1927, %v2231
      %vm2460 = vcmp.eq.f32.partialorder %v1928, %v2300
      %vm2461 = vcmp.eq.f32.partialorder %v1929, %v2369
      %vm2462 = vcmp.eq.f32.partialorder %v1930, %v2438
      %vm2463 = vcmp.eq.f32.partialorder %v1931, %v2231
      %vm2464 = vcmp.eq.f32.partialorder %v1932, %v2300
      %vm2465 = vcmp.eq.f32.partialorder %v1933, %v2369
      %vm2466 = vcmp.eq.f32.partialorder %v1934, %v2438
      %vm2467 = vcmp.eq.f32.partialorder %v1935, %v2231
      %vm2468 = vcmp.eq.f32.partialorder %v1936, %v2300
      %vm2469 = vcmp.eq.f32.partialorder %v1937, %v2369
      %vm2470 = vcmp.eq.f32.partialorder %v1938, %v2438
      %vm2471 = vcmp.eq.f32.partialorder %v1939, %v2231
      %vm2472 = vcmp.eq.f32.partialorder %v1940, %v2300
      %vm2473 = vcmp.eq.f32.partialorder %v1941, %v2369
      %vm2474 = vcmp.eq.f32.partialorder %v1942, %v2438
      %vm2475 = vcmp.eq.f32.partialorder %v1943, %v2231
      %vm2476 = vcmp.eq.f32.partialorder %v1944, %v2300
      %vm2477 = vcmp.eq.f32.partialorder %v1945, %v2369
      %vm2478 = vcmp.eq.f32.partialorder %v1946, %v2438
      %vm2479 = vcmp.eq.f32.partialorder %v1947, %v2231
      %vm2480 = vcmp.eq.f32.partialorder %v1948, %v2300
      %vm2481 = vcmp.eq.f32.partialorder %v1949, %v2369
      %vm2482 = vcmp.eq.f32.partialorder %v1950, %v2438
      %vm2483 = vcmp.eq.f32.partialorder %v1951, %v2231
      %vm2484 = vcmp.eq.f32.partialorder %v1952, %v2300
      %vm2485 = vcmp.eq.f32.partialorder %v1953, %v2369
      %vm2486 = vcmp.eq.f32.partialorder %v1954, %v2438
      %vm2487 = vcmp.eq.f32.partialorder %v1955, %v2231
      %vm2488 = vcmp.eq.f32.partialorder %v1956, %v2300
      %vm2489 = vcmp.eq.f32.partialorder %v1957, %v2369
      %vm2490 = vcmp.eq.f32.partialorder %v1958, %v2438
      %vm2491 = vcmp.eq.f32.partialorder %v1959, %v2231
      %vm2492 = vcmp.eq.f32.partialorder %v1960, %v2300
      %vm2493 = vcmp.eq.f32.partialorder %v1961, %v2369
      %vm2494 = vcmp.eq.f32.partialorder %v1962, %v2438
      %vm2495 = vcmp.eq.f32.partialorder %v1963, %v2231
      %vm2496 = vcmp.eq.f32.partialorder %v1964, %v2300
      %vm2497 = vcmp.eq.f32.partialorder %v1965, %v2369
      %vm2498 = vcmp.eq.f32.partialorder %v1966, %v2438
      %vm2499 = vcmp.eq.f32.partialorder %v1967, %v2231
      %vm2500 = vcmp.eq.f32.partialorder %v1968, %v2300
      %vm2501 = vcmp.eq.f32.partialorder %v1969, %v2369
      %vm2502 = vcmp.eq.f32.partialorder %v1970, %v2438
      %vm2503 = vcmp.eq.f32.partialorder %v1971, %v2231
      %vm2504 = vcmp.eq.f32.partialorder %v1972, %v2300
      %vm2505 = vcmp.eq.f32.partialorder %v1973, %v2369
      %vm2506 = vcmp.eq.f32.partialorder %v1974, %v2438
      %vm2507 = vcmp.eq.f32.partialorder %v1975, %v2231
      %vm2508 = vcmp.eq.f32.partialorder %v1976, %v2300
      %vm2509 = vcmp.eq.f32.partialorder %v1977, %v2369
      %vm2510 = vcmp.eq.f32.partialorder %v1978, %v2438
      %vm2511 = vcmp.eq.f32.partialorder %v1979, %v2231
      %vm2512 = vcmp.eq.f32.partialorder %v1980, %v2300
      %vm2513 = vcmp.eq.f32.partialorder %v1981, %v2369
      %vm2514 = vcmp.eq.f32.partialorder %v1982, %v2438
      %vm2515 = vcmp.eq.f32.partialorder %v1983, %v2231
      %vm2516 = vcmp.eq.f32.partialorder %v1984, %v2300
      %vm2517 = vcmp.eq.f32.partialorder %v1985, %v2369
      %vm2518 = vcmp.eq.f32.partialorder %v1986, %v2438
      %vm2519 = vcmp.eq.f32.partialorder %v1987, %v2231
      %vm2520 = vcmp.eq.f32.partialorder %v1988, %v2300
      %vm2521 = vcmp.eq.f32.partialorder %v1989, %v2369
      %vm2522 = vcmp.eq.f32.partialorder %v1990, %v2438
      %vm2523 = vcmp.eq.f32.partialorder %v1991, %v2231
      %vm2524 = vcmp.eq.f32.partialorder %v1992, %v2300
      %vm2525 = vcmp.eq.f32.partialorder %v1993, %v2369
      %vm2526 = vcmp.eq.f32.partialorder %v1994, %v2438
      %vm2527 = vcmp.eq.f32.partialorder %v1995, %v2231
      %vm2528 = vcmp.eq.f32.partialorder %v1996, %v2300
      %vm2529 = vcmp.eq.f32.partialorder %v1997, %v2369
      %vm2530 = vcmp.eq.f32.partialorder %v1998, %v2438
      %vm2531 = vcmp.eq.f32.partialorder %v1999, %v2231
      %vm2532 = vcmp.eq.f32.partialorder %v2000, %v2300
      %vm2533 = vcmp.eq.f32.partialorder %v2001, %v2369
      %vm2534 = vcmp.eq.f32.partialorder %v2002, %v2438
      %vm2535 = vcmp.eq.f32.partialorder %v2003, %v2231
      %vm2536 = vcmp.eq.f32.partialorder %v2004, %v2300
      %vm2537 = vcmp.eq.f32.partialorder %v2005, %v2369
      %vm2538 = vcmp.eq.f32.partialorder %v2006, %v2438
      %vm2539 = vcmp.eq.f32.partialorder %v2007, %v2231
      %vm2540 = vcmp.eq.f32.partialorder %v2008, %v2300
      %vm2541 = vcmp.eq.f32.partialorder %v2009, %v2369
      %vm2542 = vcmp.eq.f32.partialorder %v2010, %v2438
      %vm2543 = vcmp.eq.f32.partialorder %v2011, %v2231
      %vm2544 = vcmp.eq.f32.partialorder %v2012, %v2300
      %vm2545 = vcmp.eq.f32.partialorder %v2013, %v2369
      %vm2546 = vcmp.eq.f32.partialorder %v2014, %v2438
      %vm2547 = vcmp.eq.f32.partialorder %v2015, %v2231
      %vm2548 = vcmp.eq.f32.partialorder %v2016, %v2300
      %vm2549 = vcmp.eq.f32.partialorder %v2017, %v2369
      %vm2550 = vcmp.eq.f32.partialorder %v2018, %v2438
      %vm2551 = vcmp.eq.f32.partialorder %v2019, %v2231
      %vm2552 = vcmp.eq.f32.partialorder %v2020, %v2300
      %vm2553 = vcmp.eq.f32.partialorder %v2021, %v2369
      %vm2554 = vcmp.eq.f32.partialorder %v2022, %v2438
      %vm2555 = vcmp.eq.f32.partialorder %v2023, %v2231
      %vm2556 = vcmp.eq.f32.partialorder %v2024, %v2300
      %vm2557 = vcmp.eq.f32.partialorder %v2025, %v2369
      %vm2558 = vcmp.eq.f32.partialorder %v2026, %v2438
      %vm2559 = vcmp.eq.f32.partialorder %v2027, %v2231
      %vm2560 = vcmp.eq.f32.partialorder %v2028, %v2300
      %vm2561 = vcmp.eq.f32.partialorder %v2029, %v2369
      %vm2562 = vcmp.eq.f32.partialorder %v2030, %v2438
      %vm2563 = vcmp.eq.f32.partialorder %v2031, %v2231
      %vm2564 = vcmp.eq.f32.partialorder %v2032, %v2300
      %vm2565 = vcmp.eq.f32.partialorder %v2033, %v2369
      %vm2566 = vcmp.eq.f32.partialorder %v2034, %v2438
      %vm2567 = vcmp.eq.f32.partialorder %v2035, %v2231
      %vm2568 = vcmp.eq.f32.partialorder %v2036, %v2300
      %vm2569 = vcmp.eq.f32.partialorder %v2037, %v2369
      %vm2570 = vcmp.eq.f32.partialorder %v2038, %v2438
      %vm2571 = vcmp.eq.f32.partialorder %v2039, %v2231
      %vm2572 = vcmp.eq.f32.partialorder %v2040, %v2300
      %vm2573 = vcmp.eq.f32.partialorder %v2041, %v2369
      %vm2574 = vcmp.eq.f32.partialorder %v2042, %v2438
      %vm2575 = vcmp.eq.f32.partialorder %v2043, %v2231
      %vm2576 = vcmp.eq.f32.partialorder %v2044, %v2300
      %vm2577 = vcmp.eq.f32.partialorder %v2045, %v2369
      %vm2578 = vcmp.eq.f32.partialorder %v2046, %v2438
      %vm2579 = vcmp.eq.f32.partialorder %v2047, %v2231
      %vm2580 = vcmp.eq.f32.partialorder %v2048, %v2300
      %vm2581 = vcmp.eq.f32.partialorder %v2049, %v2369
      %vm2582 = vcmp.eq.f32.partialorder %v2050, %v2438
      %vm2583 = vcmp.eq.f32.partialorder %v2051, %v2231
      %vm2584 = vcmp.eq.f32.partialorder %v2052, %v2300
      %vm2585 = vcmp.eq.f32.partialorder %v2053, %v2369
      %vm2586 = vcmp.eq.f32.partialorder %v2054, %v2438
      %vm2587 = vcmp.eq.f32.partialorder %v2055, %v2231
      %vm2588 = vcmp.eq.f32.partialorder %v2056, %v2300
      %vm2589 = vcmp.eq.f32.partialorder %v2057, %v2369
      %vm2590 = vcmp.eq.f32.partialorder %v2058, %v2438
      %vm2591 = vcmp.eq.f32.partialorder %v2059, %v2231
      %vm2592 = vcmp.eq.f32.partialorder %v2060, %v2300
      %vm2593 = vcmp.eq.f32.partialorder %v2061, %v2369
      %vm2594 = vcmp.eq.f32.partialorder %v2062, %v2438
      %vm2595 = vcmp.eq.f32.partialorder %v2063, %v2231
      %vm2596 = vcmp.eq.f32.partialorder %v2064, %v2300
      %vm2597 = vcmp.eq.f32.partialorder %v2065, %v2369
      %vm2598 = vcmp.eq.f32.partialorder %v2066, %v2438
      %vm2599 = vcmp.eq.f32.partialorder %v2067, %v2231
      %vm2600 = vcmp.eq.f32.partialorder %v2068, %v2300
      %vm2601 = vcmp.eq.f32.partialorder %v2069, %v2369
      %vm2602 = vcmp.eq.f32.partialorder %v2070, %v2438
      %vm2603 = vcmp.eq.f32.partialorder %v2071, %v2231
      %vm2604 = vcmp.eq.f32.partialorder %v2072, %v2300
      %vm2605 = vcmp.eq.f32.partialorder %v2073, %v2369
      %vm2606 = vcmp.eq.f32.partialorder %v2074, %v2438
      %vm2607 = vcmp.eq.f32.partialorder %v2075, %v2231
      %vm2608 = vcmp.eq.f32.partialorder %v2076, %v2300
      %vm2609 = vcmp.eq.f32.partialorder %v2077, %v2369
      %vm2610 = vcmp.eq.f32.partialorder %v2078, %v2438
      %vm2611 = vcmp.eq.f32.partialorder %v2079, %v2231
      %vm2612 = vcmp.eq.f32.partialorder %v2080, %v2300
      %vm2613 = vcmp.eq.f32.partialorder %v2081, %v2369
      %vm2614 = vcmp.eq.f32.partialorder %v2082, %v2438
      %vm2615 = vcmp.eq.f32.partialorder %v2083, %v2231
      %vm2616 = vcmp.eq.f32.partialorder %v2084, %v2300
      %vm2617 = vcmp.eq.f32.partialorder %v2085, %v2369
      %vm2618 = vcmp.eq.f32.partialorder %v2086, %v2438
      %vm2619 = vcmp.eq.f32.partialorder %v2087, %v2231
      %vm2620 = vcmp.eq.f32.partialorder %v2088, %v2300
      %vm2621 = vcmp.eq.f32.partialorder %v2089, %v2369
      %vm2622 = vcmp.eq.f32.partialorder %v2090, %v2438
      %vm2623 = vcmp.eq.f32.partialorder %v2091, %v2231
      %vm2624 = vcmp.eq.f32.partialorder %v2092, %v2300
      %vm2625 = vcmp.eq.f32.partialorder %v2093, %v2369
      %vm2626 = vcmp.eq.f32.partialorder %v2094, %v2438
      %vm2627 = vcmp.eq.f32.partialorder %v2095, %v2231
      %vm2628 = vcmp.eq.f32.partialorder %v2096, %v2300
      %vm2629 = vcmp.eq.f32.partialorder %v2097, %v2369
      %vm2630 = vcmp.eq.f32.partialorder %v2098, %v2438
      %vm2631 = vcmp.eq.f32.partialorder %v2099, %v2231
      %vm2632 = vcmp.eq.f32.partialorder %v2100, %v2300
      %vm2633 = vcmp.eq.f32.partialorder %v2101, %v2369
      %vm2634 = vcmp.eq.f32.partialorder %v2102, %v2438
      %vm2635 = vcmp.eq.f32.partialorder %v2103, %v2231
      %vm2636 = vcmp.eq.f32.partialorder %v2104, %v2300
      %vm2637 = vcmp.eq.f32.partialorder %v2105, %v2369
      %vm2638 = vcmp.eq.f32.partialorder %v2106, %v2438
      %vm2639 = vcmp.eq.f32.partialorder %v2107, %v2231
      %vm2640 = vcmp.eq.f32.partialorder %v2108, %v2300
      %vm2641 = vcmp.eq.f32.partialorder %v2109, %v2369
      %vm2642 = vcmp.eq.f32.partialorder %v2110, %v2438
      %vm2643 = vcmp.eq.f32.partialorder %v2111, %v2231
      %vm2644 = vcmp.eq.f32.partialorder %v2112, %v2300
      %vm2645 = vcmp.eq.f32.partialorder %v2113, %v2369
      %vm2646 = vcmp.eq.f32.partialorder %v2114, %v2438
      %vm2647 = vcmp.eq.f32.partialorder %v2115, %v2231
      %vm2648 = vcmp.eq.f32.partialorder %v2116, %v2300
      %vm2649 = vcmp.eq.f32.partialorder %v2117, %v2369
      %vm2650 = vcmp.eq.f32.partialorder %v2118, %v2438
      %vm2651 = vcmp.eq.f32.partialorder %v2119, %v2231
      %vm2652 = vcmp.eq.f32.partialorder %v2120, %v2300
      %vm2653 = vcmp.eq.f32.partialorder %v2121, %v2369
      %vm2654 = vcmp.eq.f32.partialorder %v2122, %v2438
      %vm2655 = vcmp.eq.f32.partialorder %v2123, %v2231
      %vm2656 = vcmp.eq.f32.partialorder %v2124, %v2300
      %vm2657 = vcmp.eq.f32.partialorder %v2125, %v2369
      %vm2658 = vcmp.eq.f32.partialorder %v2126, %v2438
      %vm2659 = vcmp.eq.f32.partialorder %v2127, %v2231
      %vm2660 = vcmp.eq.f32.partialorder %v2128, %v2300
      %vm2661 = vcmp.eq.f32.partialorder %v2129, %v2369
      %vm2662 = vcmp.eq.f32.partialorder %v2130, %v2438
      %vm2663 = vcmp.eq.f32.partialorder %v2131, %v2231
      %vm2664 = vcmp.eq.f32.partialorder %v2132, %v2300
      %vm2665 = vcmp.eq.f32.partialorder %v2133, %v2369
      %vm2666 = vcmp.eq.f32.partialorder %v2134, %v2438
      %vm2667 = vcmp.eq.f32.partialorder %v2135, %v2231
      %vm2668 = vcmp.eq.f32.partialorder %v2136, %v2300
      %vm2669 = vcmp.eq.f32.partialorder %v2137, %v2369
      %vm2670 = vcmp.eq.f32.partialorder %v2138, %v2438
      %vm2671 = vcmp.eq.f32.partialorder %v2139, %v2231
      %vm2672 = vcmp.eq.f32.partialorder %v2140, %v2300
      %vm2673 = vcmp.eq.f32.partialorder %v2141, %v2369
      %vm2674 = vcmp.eq.f32.partialorder %v2142, %v2438
      %vm2675 = vcmp.eq.f32.partialorder %v2143, %v2231
      %vm2676 = vcmp.eq.f32.partialorder %v2144, %v2300
      %vm2677 = vcmp.eq.f32.partialorder %v2145, %v2369
      %vm2678 = vcmp.eq.f32.partialorder %v2146, %v2438
      %vm2679 = vcmp.eq.f32.partialorder %v2147, %v2231
      %vm2680 = vcmp.eq.f32.partialorder %v2148, %v2300
      %vm2681 = vcmp.eq.f32.partialorder %v2149, %v2369
      %vm2682 = vcmp.eq.f32.partialorder %v2150, %v2438
      %vm2683 = vcmp.eq.f32.partialorder %v2151, %v2231
      %vm2684 = vcmp.eq.f32.partialorder %v2152, %v2300
      %vm2685 = vcmp.eq.f32.partialorder %v2153, %v2369
      %vm2686 = vcmp.eq.f32.partialorder %v2154, %v2438
      %vm2687 = vcmp.eq.f32.partialorder %v2155, %v2231
      %vm2688 = vcmp.eq.f32.partialorder %v2156, %v2300
      %vm2689 = vcmp.eq.f32.partialorder %v2157, %v2369
      %vm2690 = vcmp.eq.f32.partialorder %v2158, %v2438
      %vm2691 = vcmp.eq.f32.partialorder %v2159, %v2231
      %vm2692 = vcmp.eq.f32.partialorder %v2160, %v2300
      %vm2693 = vcmp.eq.f32.partialorder %v2161, %v2369
      %vm2694 = vcmp.eq.f32.partialorder %v2162, %v2438
      %2695 = vset.pattern.permute.xlu0 0
      %2696 = vperm.xlu0 %2695, %v416
      %v2697 = vpop.permute.xlu0 %2696
      %2698 = vset.pattern.permute.xlu0 0
      %2699 = vperm.xlu0 %2698, %v417
      %v2700 = vpop.permute.xlu0 %2699
      %2701 = vset.pattern.permute.xlu0 0
      %2702 = vperm.xlu0 %2701, %v418
      %v2703 = vpop.permute.xlu0 %2702
      %2704 = vset.pattern.permute.xlu0 0
      %2705 = vperm.xlu0 %2704, %v419
      %v2706 = vpop.permute.xlu0 %2705
      %2707 = vset.pattern.permute.xlu0 0
      %2708 = vperm.xlu0 %2707, %v420
      %v2709 = vpop.permute.xlu0 %2708
      %2710 = vset.pattern.permute.xlu0 0
      %2711 = vperm.xlu0 %2710, %v421
      %v2712 = vpop.permute.xlu0 %2711
      %2713 = vset.pattern.permute.xlu0 0
      %2714 = vperm.xlu0 %2713, %v422
      %v2715 = vpop.permute.xlu0 %2714
      %2716 = vset.pattern.permute.xlu0 0
      %2717 = vperm.xlu0 %2716, %v423
      %v2718 = vpop.permute.xlu0 %2717
      %2719 = vset.pattern.permute.xlu0 0
      %2720 = vperm.xlu0 %2719, %v424
      %v2721 = vpop.permute.xlu0 %2720
      %2722 = vset.pattern.permute.xlu0 0
      %2723 = vperm.xlu0 %2722, %v425
      %v2724 = vpop.permute.xlu0 %2723
      %2725 = vset.pattern.permute.xlu0 0
      %2726 = vperm.xlu0 %2725, %v426
      %v2727 = vpop.permute.xlu0 %2726
      %2728 = vset.pattern.permute.xlu0 0
      %2729 = vperm.xlu0 %2728, %v427
      %v2730 = vpop.permute.xlu0 %2729
      %2731 = vset.pattern.permute.xlu0 0
      %2732 = vperm.xlu0 %2731, %v428
      %v2733 = vpop.permute.xlu0 %2732
      %2734 = vset.pattern.permute.xlu0 0
      %2735 = vperm.xlu0 %2734, %v429
      %v2736 = vpop.permute.xlu0 %2735
      %2737 = vset.pattern.permute.xlu0 0
      %2738 = vperm.xlu0 %2737, %v430
      %v2739 = vpop.permute.xlu0 %2738
      %2740 = vset.pattern.permute.xlu0 0
      %2741 = vperm.xlu0 %2740, %v431
      %v2742 = vpop.permute.xlu0 %2741
      %2743 = vset.pattern.permute.xlu0 0
      %2744 = vperm.xlu0 %2743, %v432
      %v2745 = vpop.permute.xlu0 %2744
      %2746 = vset.pattern.permute.xlu0 0
      %2747 = vperm.xlu0 %2746, %v433
      %v2748 = vpop.permute.xlu0 %2747
      %2749 = vset.pattern.permute.xlu0 0
      %2750 = vperm.xlu0 %2749, %v434
      %v2751 = vpop.permute.xlu0 %2750
      %2752 = vset.pattern.permute.xlu0 0
      %2753 = vperm.xlu0 %2752, %v435
      %v2754 = vpop.permute.xlu0 %2753
      %2755 = vset.pattern.permute.xlu0 0
      %2756 = vperm.xlu0 %2755, %v436
      %v2757 = vpop.permute.xlu0 %2756
      %2758 = vset.pattern.permute.xlu0 0
      %2759 = vperm.xlu0 %2758, %v437
      %v2760 = vpop.permute.xlu0 %2759
      %2761 = vset.pattern.permute.xlu0 0
      %2762 = vperm.xlu0 %2761, %v438
      %v2763 = vpop.permute.xlu0 %2762
      %2764 = vset.pattern.permute.xlu0 0
      %2765 = vperm.xlu0 %2764, %v439
      %v2766 = vpop.permute.xlu0 %2765
      %2767 = vset.pattern.permute.xlu0 0
      %2768 = vperm.xlu0 %2767, %v440
      %v2769 = vpop.permute.xlu0 %2768
      %2770 = vset.pattern.permute.xlu0 0
      %2771 = vperm.xlu0 %2770, %v441
      %v2772 = vpop.permute.xlu0 %2771
      %2773 = vset.pattern.permute.xlu0 0
      %2774 = vperm.xlu0 %2773, %v442
      %v2775 = vpop.permute.xlu0 %2774
      %2776 = vset.pattern.permute.xlu0 0
      %2777 = vperm.xlu0 %2776, %v443
      %v2778 = vpop.permute.xlu0 %2777
      %2779 = vset.pattern.permute.xlu0 0
      %2780 = vperm.xlu0 %2779, %v444
      %v2781 = vpop.permute.xlu0 %2780
      %2782 = vset.pattern.permute.xlu0 0
      %2783 = vperm.xlu0 %2782, %v445
      %v2784 = vpop.permute.xlu0 %2783
      %2785 = vset.pattern.permute.xlu0 0
      %2786 = vperm.xlu0 %2785, %v446
      %v2787 = vpop.permute.xlu0 %2786
      %2788 = vset.pattern.permute.xlu0 0
      %2789 = vperm.xlu0 %2788, %v447
      %v2790 = vpop.permute.xlu0 %2789
      %2791 = vset.pattern.permute.xlu0 0
      %2792 = vperm.xlu0 %2791, %v448
      %v2793 = vpop.permute.xlu0 %2792
      %2794 = vset.pattern.permute.xlu0 0
      %2795 = vperm.xlu0 %2794, %v449
      %v2796 = vpop.permute.xlu0 %2795
      %2797 = vset.pattern.permute.xlu0 0
      %2798 = vperm.xlu0 %2797, %v450
      %v2799 = vpop.permute.xlu0 %2798
      %2800 = vset.pattern.permute.xlu0 0
      %2801 = vperm.xlu0 %2800, %v451
      %v2802 = vpop.permute.xlu0 %2801
      %2803 = vset.pattern.permute.xlu0 0
      %2804 = vperm.xlu0 %2803, %v452
      %v2805 = vpop.permute.xlu0 %2804
      %2806 = vset.pattern.permute.xlu0 0
      %2807 = vperm.xlu0 %2806, %v453
      %v2808 = vpop.permute.xlu0 %2807
      %2809 = vset.pattern.permute.xlu0 0
      %2810 = vperm.xlu0 %2809, %v454
      %v2811 = vpop.permute.xlu0 %2810
      %2812 = vset.pattern.permute.xlu0 0
      %2813 = vperm.xlu0 %2812, %v455
      %v2814 = vpop.permute.xlu0 %2813
      %2815 = vset.pattern.permute.xlu0 0
      %2816 = vperm.xlu0 %2815, %v456
      %v2817 = vpop.permute.xlu0 %2816
      %2818 = vset.pattern.permute.xlu0 0
      %2819 = vperm.xlu0 %2818, %v457
      %v2820 = vpop.permute.xlu0 %2819
      %2821 = vset.pattern.permute.xlu0 0
      %2822 = vperm.xlu0 %2821, %v458
      %v2823 = vpop.permute.xlu0 %2822
      %2824 = vset.pattern.permute.xlu0 0
      %2825 = vperm.xlu0 %2824, %v459
      %v2826 = vpop.permute.xlu0 %2825
      %2827 = vset.pattern.permute.xlu0 0
      %2828 = vperm.xlu0 %2827, %v460
      %v2829 = vpop.permute.xlu0 %2828
      %2830 = vset.pattern.permute.xlu0 0
      %2831 = vperm.xlu0 %2830, %v461
      %v2832 = vpop.permute.xlu0 %2831
      %2833 = vset.pattern.permute.xlu0 0
      %2834 = vperm.xlu0 %2833, %v462
      %v2835 = vpop.permute.xlu0 %2834
      %2836 = vset.pattern.permute.xlu0 0
      %2837 = vperm.xlu0 %2836, %v463
      %v2838 = vpop.permute.xlu0 %2837
      %2839 = vset.pattern.permute.xlu0 0
      %2840 = vperm.xlu0 %2839, %v464
      %v2841 = vpop.permute.xlu0 %2840
      %2842 = vset.pattern.permute.xlu0 0
      %2843 = vperm.xlu0 %2842, %v465
      %v2844 = vpop.permute.xlu0 %2843
      %2845 = vset.pattern.permute.xlu0 0
      %2846 = vperm.xlu0 %2845, %v466
      %v2847 = vpop.permute.xlu0 %2846
      %2848 = vset.pattern.permute.xlu0 0
      %2849 = vperm.xlu0 %2848, %v467
      %v2850 = vpop.permute.xlu0 %2849
      %2851 = vset.pattern.permute.xlu0 0
      %2852 = vperm.xlu0 %2851, %v468
      %v2853 = vpop.permute.xlu0 %2852
      %2854 = vset.pattern.permute.xlu0 0
      %2855 = vperm.xlu0 %2854, %v469
      %v2856 = vpop.permute.xlu0 %2855
      %2857 = vset.pattern.permute.xlu0 0
      %2858 = vperm.xlu0 %2857, %v470
      %v2859 = vpop.permute.xlu0 %2858
      %2860 = vset.pattern.permute.xlu0 0
      %2861 = vperm.xlu0 %2860, %v471
      %v2862 = vpop.permute.xlu0 %2861
      %2863 = vset.pattern.permute.xlu0 0
      %2864 = vperm.xlu0 %2863, %v472
      %v2865 = vpop.permute.xlu0 %2864
      %2866 = vset.pattern.permute.xlu0 0
      %2867 = vperm.xlu0 %2866, %v473
      %v2868 = vpop.permute.xlu0 %2867
      %2869 = vset.pattern.permute.xlu0 0
      %2870 = vperm.xlu0 %2869, %v474
      %v2871 = vpop.permute.xlu0 %2870
      %2872 = vset.pattern.permute.xlu0 0
      %2873 = vperm.xlu0 %2872, %v475
      %v2874 = vpop.permute.xlu0 %2873
      %2875 = vset.pattern.permute.xlu0 0
      %2876 = vperm.xlu0 %2875, %v476
      %v2877 = vpop.permute.xlu0 %2876
      %2878 = vset.pattern.permute.xlu0 0
      %2879 = vperm.xlu0 %2878, %v477
      %v2880 = vpop.permute.xlu0 %2879
      %2881 = vset.pattern.permute.xlu0 0
      %2882 = vperm.xlu0 %2881, %v478
      %v2883 = vpop.permute.xlu0 %2882
      %2884 = vset.pattern.permute.xlu0 0
      %2885 = vperm.xlu0 %2884, %v479
      %v2886 = vpop.permute.xlu0 %2885
      %v2887 = vsel %vm2439, %v2697, 512
      %v2888 = vsel %vm2440, %v2697, 512
      %v2889 = vsel %vm2441, %v2697, 512
      %v2890 = vsel %vm2442, %v2697, 512
      %v2891 = vsel %vm2443, %v2700, 512
      %v2892 = vsel %vm2444, %v2700, 512
      %v2893 = vsel %vm2445, %v2700, 512
      %v2894 = vsel %vm2446, %v2700, 512
      %v2895 = vsel %vm2447, %v2703, 512
      %v2896 = vsel %vm2448, %v2703, 512
      %v2897 = vsel %vm2449, %v2703, 512
      %v2898 = vsel %vm2450, %v2703, 512
      %v2899 = vsel %vm2451, %v2706, 512
      %v2900 = vsel %vm2452, %v2706, 512
      %v2901 = vsel %vm2453, %v2706, 512
      %v2902 = vsel %vm2454, %v2706, 512
      %v2903 = vsel %vm2455, %v2709, 512
      %v2904 = vsel %vm2456, %v2709, 512
      %v2905 = vsel %vm2457, %v2709, 512
      %v2906 = vsel %vm2458, %v2709, 512
      %v2907 = vsel %vm2459, %v2712, 512
      %v2908 = vsel %vm2460, %v2712, 512
      %v2909 = vsel %vm2461, %v2712, 512
      %v2910 = vsel %vm2462, %v2712, 512
      %v2911 = vsel %vm2463, %v2715, 512
      %v2912 = vsel %vm2464, %v2715, 512
      %v2913 = vsel %vm2465, %v2715, 512
      %v2914 = vsel %vm2466, %v2715, 512
      %v2915 = vsel %vm2467, %v2718, 512
      %v2916 = vsel %vm2468, %v2718, 512
      %v2917 = vsel %vm2469, %v2718, 512
      %v2918 = vsel %vm2470, %v2718, 512
      %v2919 = vsel %vm2471, %v2721, 512
      %v2920 = vsel %vm2472, %v2721, 512
      %v2921 = vsel %vm2473, %v2721, 512
      %v2922 = vsel %vm2474, %v2721, 512
      %v2923 = vsel %vm2475, %v2724, 512
      %v2924 = vsel %vm2476, %v2724, 512
      %v2925 = vsel %vm2477, %v2724, 512
      %v2926 = vsel %vm2478, %v2724, 512
      %v2927 = vsel %vm2479, %v2727, 512
      %v2928 = vsel %vm2480, %v2727, 512
      %v2929 = vsel %vm2481, %v2727, 512
      %v2930 = vsel %vm2482, %v2727, 512
      %v2931 = vsel %vm2483, %v2730, 512
      %v2932 = vsel %vm2484, %v2730, 512
      %v2933 = vsel %vm2485, %v2730, 512
      %v2934 = vsel %vm2486, %v2730, 512
      %v2935 = vsel %vm2487, %v2733, 512
      %v2936 = vsel %vm2488, %v2733, 512
      %v2937 = vsel %vm2489, %v2733, 512
      %v2938 = vsel %vm2490, %v2733, 512
      %v2939 = vsel %vm2491, %v2736, 512
      %v2940 = vsel %vm2492, %v2736, 512
      %v2941 = vsel %vm2493, %v2736, 512
      %v2942 = vsel %vm2494, %v2736, 512
      %v2943 = vsel %vm2495, %v2739, 512
      %v2944 = vsel %vm2496, %v2739, 512
      %v2945 = vsel %vm2497, %v2739, 512
      %v2946 = vsel %vm2498, %v2739, 512
      %v2947 = vsel %vm2499, %v2742, 512
      %v2948 = vsel %vm2500, %v2742, 512
      %v2949 = vsel %vm2501, %v2742, 512
      %v2950 = vsel %vm2502, %v2742, 512
      %v2951 = vsel %vm2503, %v2745, 512
      %v2952 = vsel %vm2504, %v2745, 512
      %v2953 = vsel %vm2505, %v2745, 512
      %v2954 = vsel %vm2506, %v2745, 512
      %v2955 = vsel %vm2507, %v2748, 512
      %v2956 = vsel %vm2508, %v2748, 512
      %v2957 = vsel %vm2509, %v2748, 512
      %v2958 = vsel %vm2510, %v2748, 512
      %v2959 = vsel %vm2511, %v2751, 512
      %v2960 = vsel %vm2512, %v2751, 512
      %v2961 = vsel %vm2513, %v2751, 512
      %v2962 = vsel %vm2514, %v2751, 512
      %v2963 = vsel %vm2515, %v2754, 512
      %v2964 = vsel %vm2516, %v2754, 512
      %v2965 = vsel %vm2517, %v2754, 512
      %v2966 = vsel %vm2518, %v2754, 512
      %v2967 = vsel %vm2519, %v2757, 512
      %v2968 = vsel %vm2520, %v2757, 512
      %v2969 = vsel %vm2521, %v2757, 512
      %v2970 = vsel %vm2522, %v2757, 512
      %v2971 = vsel %vm2523, %v2760, 512
      %v2972 = vsel %vm2524, %v2760, 512
      %v2973 = vsel %vm2525, %v2760, 512
      %v2974 = vsel %vm2526, %v2760, 512
      %v2975 = vsel %vm2527, %v2763, 512
      %v2976 = vsel %vm2528, %v2763, 512
      %v2977 = vsel %vm2529, %v2763, 512
      %v2978 = vsel %vm2530, %v2763, 512
      %v2979 = vsel %vm2531, %v2766, 512
      %v2980 = vsel %vm2532, %v2766, 512
      %v2981 = vsel %vm2533, %v2766, 512
      %v2982 = vsel %vm2534, %v2766, 512
      %v2983 = vsel %vm2535, %v2769, 512
      %v2984 = vsel %vm2536, %v2769, 512
      %v2985 = vsel %vm2537, %v2769, 512
      %v2986 = vsel %vm2538, %v2769, 512
      %v2987 = vsel %vm2539, %v2772, 512
      %v2988 = vsel %vm2540, %v2772, 512
      %v2989 = vsel %vm2541, %v2772, 512
      %v2990 = vsel %vm2542, %v2772, 512
      %v2991 = vsel %vm2543, %v2775, 512
      %v2992 = vsel %vm2544, %v2775, 512
      %v2993 = vsel %vm2545, %v2775, 512
      %v2994 = vsel %vm2546, %v2775, 512
      %v2995 = vsel %vm2547, %v2778, 512
      %v2996 = vsel %vm2548, %v2778, 512
      %v2997 = vsel %vm2549, %v2778, 512
      %v2998 = vsel %vm2550, %v2778, 512
      %v2999 = vsel %vm2551, %v2781, 512
      %v3000 = vsel %vm2552, %v2781, 512
      %v3001 = vsel %vm2553, %v2781, 512
      %v3002 = vsel %vm2554, %v2781, 512
      %v3003 = vsel %vm2555, %v2784, 512
      %v3004 = vsel %vm2556, %v2784, 512
      %v3005 = vsel %vm2557, %v2784, 512
      %v3006 = vsel %vm2558, %v2784, 512
      %v3007 = vsel %vm2559, %v2787, 512
      %v3008 = vsel %vm2560, %v2787, 512
      %v3009 = vsel %vm2561, %v2787, 512
      %v3010 = vsel %vm2562, %v2787, 512
      %v3011 = vsel %vm2563, %v2790, 512
      %v3012 = vsel %vm2564, %v2790, 512
      %v3013 = vsel %vm2565, %v2790, 512
      %v3014 = vsel %vm2566, %v2790, 512
      %v3015 = vsel %vm2567, %v2793, 512
      %v3016 = vsel %vm2568, %v2793, 512
      %v3017 = vsel %vm2569, %v2793, 512
      %v3018 = vsel %vm2570, %v2793, 512
      %v3019 = vsel %vm2571, %v2796, 512
      %v3020 = vsel %vm2572, %v2796, 512
      %v3021 = vsel %vm2573, %v2796, 512
      %v3022 = vsel %vm2574, %v2796, 512
      %v3023 = vsel %vm2575, %v2799, 512
      %v3024 = vsel %vm2576, %v2799, 512
      %v3025 = vsel %vm2577, %v2799, 512
      %v3026 = vsel %vm2578, %v2799, 512
      %v3027 = vsel %vm2579, %v2802, 512
      %v3028 = vsel %vm2580, %v2802, 512
      %v3029 = vsel %vm2581, %v2802, 512
      %v3030 = vsel %vm2582, %v2802, 512
      %v3031 = vsel %vm2583, %v2805, 512
      %v3032 = vsel %vm2584, %v2805, 512
      %v3033 = vsel %vm2585, %v2805, 512
      %v3034 = vsel %vm2586, %v2805, 512
      %v3035 = vsel %vm2587, %v2808, 512
      %v3036 = vsel %vm2588, %v2808, 512
      %v3037 = vsel %vm2589, %v2808, 512
      %v3038 = vsel %vm2590, %v2808, 512
      %v3039 = vsel %vm2591, %v2811, 512
      %v3040 = vsel %vm2592, %v2811, 512
      %v3041 = vsel %vm2593, %v2811, 512
      %v3042 = vsel %vm2594, %v2811, 512
      %v3043 = vsel %vm2595, %v2814, 512
      %v3044 = vsel %vm2596, %v2814, 512
      %v3045 = vsel %vm2597, %v2814, 512
      %v3046 = vsel %vm2598, %v2814, 512
      %v3047 = vsel %vm2599, %v2817, 512
      %v3048 = vsel %vm2600, %v2817, 512
      %v3049 = vsel %vm2601, %v2817, 512
      %v3050 = vsel %vm2602, %v2817, 512
      %v3051 = vsel %vm2603, %v2820, 512
      %v3052 = vsel %vm2604, %v2820, 512
      %v3053 = vsel %vm2605, %v2820, 512
      %v3054 = vsel %vm2606, %v2820, 512
      %v3055 = vsel %vm2607, %v2823, 512
      %v3056 = vsel %vm2608, %v2823, 512
      %v3057 = vsel %vm2609, %v2823, 512
      %v3058 = vsel %vm2610, %v2823, 512
      %v3059 = vsel %vm2611, %v2826, 512
      %v3060 = vsel %vm2612, %v2826, 512
      %v3061 = vsel %vm2613, %v2826, 512
      %v3062 = vsel %vm2614, %v2826, 512
      %v3063 = vsel %vm2615, %v2829, 512
      %v3064 = vsel %vm2616, %v2829, 512
      %v3065 = vsel %vm2617, %v2829, 512
      %v3066 = vsel %vm2618, %v2829, 512
      %v3067 = vsel %vm2619, %v2832, 512
      %v3068 = vsel %vm2620, %v2832, 512
      %v3069 = vsel %vm2621, %v2832, 512
      %v3070 = vsel %vm2622, %v2832, 512
      %v3071 = vsel %vm2623, %v2835, 512
      %v3072 = vsel %vm2624, %v2835, 512
      %v3073 = vsel %vm2625, %v2835, 512
      %v3074 = vsel %vm2626, %v2835, 512
      %v3075 = vsel %vm2627, %v2838, 512
      %v3076 = vsel %vm2628, %v2838, 512
      %v3077 = vsel %vm2629, %v2838, 512
      %v3078 = vsel %vm2630, %v2838, 512
      %v3079 = vsel %vm2631, %v2841, 512
      %v3080 = vsel %vm2632, %v2841, 512
      %v3081 = vsel %vm2633, %v2841, 512
      %v3082 = vsel %vm2634, %v2841, 512
      %v3083 = vsel %vm2635, %v2844, 512
      %v3084 = vsel %vm2636, %v2844, 512
      %v3085 = vsel %vm2637, %v2844, 512
      %v3086 = vsel %vm2638, %v2844, 512
      %v3087 = vsel %vm2639, %v2847, 512
      %v3088 = vsel %vm2640, %v2847, 512
      %v3089 = vsel %vm2641, %v2847, 512
      %v3090 = vsel %vm2642, %v2847, 512
      %v3091 = vsel %vm2643, %v2850, 512
      %v3092 = vsel %vm2644, %v2850, 512
      %v3093 = vsel %vm2645, %v2850, 512
      %v3094 = vsel %vm2646, %v2850, 512
      %v3095 = vsel %vm2647, %v2853, 512
      %v3096 = vsel %vm2648, %v2853, 512
      %v3097 = vsel %vm2649, %v2853, 512
      %v3098 = vsel %vm2650, %v2853, 512
      %v3099 = vsel %vm2651, %v2856, 512
      %v3100 = vsel %vm2652, %v2856, 512
      %v3101 = vsel %vm2653, %v2856, 512
      %v3102 = vsel %vm2654, %v2856, 512
      %v3103 = vsel %vm2655, %v2859, 512
      %v3104 = vsel %vm2656, %v2859, 512
      %v3105 = vsel %vm2657, %v2859, 512
      %v3106 = vsel %vm2658, %v2859, 512
      %v3107 = vsel %vm2659, %v2862, 512
      %v3108 = vsel %vm2660, %v2862, 512
      %v3109 = vsel %vm2661, %v2862, 512
      %v3110 = vsel %vm2662, %v2862, 512
      %v3111 = vsel %vm2663, %v2865, 512
      %v3112 = vsel %vm2664, %v2865, 512
      %v3113 = vsel %vm2665, %v2865, 512
      %v3114 = vsel %vm2666, %v2865, 512
      %v3115 = vsel %vm2667, %v2868, 512
      %v3116 = vsel %vm2668, %v2868, 512
      %v3117 = vsel %vm2669, %v2868, 512
      %v3118 = vsel %vm2670, %v2868, 512
      %v3119 = vsel %vm2671, %v2871, 512
      %v3120 = vsel %vm2672, %v2871, 512
      %v3121 = vsel %vm2673, %v2871, 512
      %v3122 = vsel %vm2674, %v2871, 512
      %v3123 = vsel %vm2675, %v2874, 512
      %v3124 = vsel %vm2676, %v2874, 512
      %v3125 = vsel %vm2677, %v2874, 512
      %v3126 = vsel %vm2678, %v2874, 512
      %v3127 = vsel %vm2679, %v2877, 512
      %v3128 = vsel %vm2680, %v2877, 512
      %v3129 = vsel %vm2681, %v2877, 512
      %v3130 = vsel %vm2682, %v2877, 512
      %v3131 = vsel %vm2683, %v2880, 512
      %v3132 = vsel %vm2684, %v2880, 512
      %v3133 = vsel %vm2685, %v2880, 512
      %v3134 = vsel %vm2686, %v2880, 512
      %v3135 = vsel %vm2687, %v2883, 512
      %v3136 = vsel %vm2688, %v2883, 512
      %v3137 = vsel %vm2689, %v2883, 512
      %v3138 = vsel %vm2690, %v2883, 512
      %v3139 = vsel %vm2691, %v2886, 512
      %v3140 = vsel %vm2692, %v2886, 512
      %v3141 = vsel %vm2693, %v2886, 512
      %v3142 = vsel %vm2694, %v2886, 512
      %vm3143 = vcmp.lt.s32.totalorder %v2887, %v2891
      %v3144 = vsel %vm3143, %v2887, %v2891
      %vm3145 = vcmp.lt.s32.totalorder %v3144, %v2895
      %v3146 = vsel %vm3145, %v3144, %v2895
      %vm3147 = vcmp.lt.s32.totalorder %v3146, %v2899
      %v3148 = vsel %vm3147, %v3146, %v2899
      %vm3149 = vcmp.lt.s32.totalorder %v3148, %v2903
      %v3150 = vsel %vm3149, %v3148, %v2903
      %vm3151 = vcmp.lt.s32.totalorder %v3150, %v2907
      %v3152 = vsel %vm3151, %v3150, %v2907
      %vm3153 = vcmp.lt.s32.totalorder %v3152, %v2911
      %v3154 = vsel %vm3153, %v3152, %v2911
      %vm3155 = vcmp.lt.s32.totalorder %v3154, %v2915
      %v3156 = vsel %vm3155, %v3154, %v2915
      %vm3157 = vcmp.lt.s32.totalorder %v3156, %v2919
      %v3158 = vsel %vm3157, %v3156, %v2919
      %vm3159 = vcmp.lt.s32.totalorder %v3158, %v2923
      %v3160 = vsel %vm3159, %v3158, %v2923
      %vm3161 = vcmp.lt.s32.totalorder %v3160, %v2927
      %v3162 = vsel %vm3161, %v3160, %v2927
      %vm3163 = vcmp.lt.s32.totalorder %v3162, %v2931
      %v3164 = vsel %vm3163, %v3162, %v2931
      %vm3165 = vcmp.lt.s32.totalorder %v3164, %v2935
      %v3166 = vsel %vm3165, %v3164, %v2935
      %vm3167 = vcmp.lt.s32.totalorder %v3166, %v2939
      %v3168 = vsel %vm3167, %v3166, %v2939
      %vm3169 = vcmp.lt.s32.totalorder %v3168, %v2943
      %v3170 = vsel %vm3169, %v3168, %v2943
      %vm3171 = vcmp.lt.s32.totalorder %v3170, %v2947
      %v3172 = vsel %vm3171, %v3170, %v2947
      %vm3173 = vcmp.lt.s32.totalorder %v3172, %v2951
      %v3174 = vsel %vm3173, %v3172, %v2951
      %vm3175 = vcmp.lt.s32.totalorder %v3174, %v2955
      %v3176 = vsel %vm3175, %v3174, %v2955
      %vm3177 = vcmp.lt.s32.totalorder %v3176, %v2959
      %v3178 = vsel %vm3177, %v3176, %v2959
      %vm3179 = vcmp.lt.s32.totalorder %v3178, %v2963
      %v3180 = vsel %vm3179, %v3178, %v2963
      %vm3181 = vcmp.lt.s32.totalorder %v3180, %v2967
      %v3182 = vsel %vm3181, %v3180, %v2967
      %vm3183 = vcmp.lt.s32.totalorder %v3182, %v2971
      %v3184 = vsel %vm3183, %v3182, %v2971
      %vm3185 = vcmp.lt.s32.totalorder %v3184, %v2975
      %v3186 = vsel %vm3185, %v3184, %v2975
      %vm3187 = vcmp.lt.s32.totalorder %v3186, %v2979
      %v3188 = vsel %vm3187, %v3186, %v2979
      %vm3189 = vcmp.lt.s32.totalorder %v3188, %v2983
      %v3190 = vsel %vm3189, %v3188, %v2983
      %vm3191 = vcmp.lt.s32.totalorder %v3190, %v2987
      %v3192 = vsel %vm3191, %v3190, %v2987
      %vm3193 = vcmp.lt.s32.totalorder %v3192, %v2991
      %v3194 = vsel %vm3193, %v3192, %v2991
      %vm3195 = vcmp.lt.s32.totalorder %v3194, %v2995
      %v3196 = vsel %vm3195, %v3194, %v2995
      %vm3197 = vcmp.lt.s32.totalorder %v3196, %v2999
      %v3198 = vsel %vm3197, %v3196, %v2999
      %vm3199 = vcmp.lt.s32.totalorder %v3198, %v3003
      %v3200 = vsel %vm3199, %v3198, %v3003
      %vm3201 = vcmp.lt.s32.totalorder %v3200, %v3007
      %v3202 = vsel %vm3201, %v3200, %v3007
      %vm3203 = vcmp.lt.s32.totalorder %v3202, %v3011
      %v3204 = vsel %vm3203, %v3202, %v3011
      %vm3205 = vcmp.lt.s32.totalorder %v3204, %v3015
      %v3206 = vsel %vm3205, %v3204, %v3015
      %vm3207 = vcmp.lt.s32.totalorder %v3206, %v3019
      %v3208 = vsel %vm3207, %v3206, %v3019
      %vm3209 = vcmp.lt.s32.totalorder %v3208, %v3023
      %v3210 = vsel %vm3209, %v3208, %v3023
      %vm3211 = vcmp.lt.s32.totalorder %v3210, %v3027
      %v3212 = vsel %vm3211, %v3210, %v3027
      %vm3213 = vcmp.lt.s32.totalorder %v3212, %v3031
      %v3214 = vsel %vm3213, %v3212, %v3031
      %vm3215 = vcmp.lt.s32.totalorder %v3214, %v3035
      %v3216 = vsel %vm3215, %v3214, %v3035
      %vm3217 = vcmp.lt.s32.totalorder %v3216, %v3039
      %v3218 = vsel %vm3217, %v3216, %v3039
      %vm3219 = vcmp.lt.s32.totalorder %v3218, %v3043
      %v3220 = vsel %vm3219, %v3218, %v3043
      %vm3221 = vcmp.lt.s32.totalorder %v3220, %v3047
      %v3222 = vsel %vm3221, %v3220, %v3047
      %vm3223 = vcmp.lt.s32.totalorder %v3222, %v3051
      %v3224 = vsel %vm3223, %v3222, %v3051
      %vm3225 = vcmp.lt.s32.totalorder %v3224, %v3055
      %v3226 = vsel %vm3225, %v3224, %v3055
      %vm3227 = vcmp.lt.s32.totalorder %v3226, %v3059
      %v3228 = vsel %vm3227, %v3226, %v3059
      %vm3229 = vcmp.lt.s32.totalorder %v3228, %v3063
      %v3230 = vsel %vm3229, %v3228, %v3063
      %vm3231 = vcmp.lt.s32.totalorder %v3230, %v3067
      %v3232 = vsel %vm3231, %v3230, %v3067
      %vm3233 = vcmp.lt.s32.totalorder %v3232, %v3071
      %v3234 = vsel %vm3233, %v3232, %v3071
      %vm3235 = vcmp.lt.s32.totalorder %v3234, %v3075
      %v3236 = vsel %vm3235, %v3234, %v3075
      %vm3237 = vcmp.lt.s32.totalorder %v3236, %v3079
      %v3238 = vsel %vm3237, %v3236, %v3079
      %vm3239 = vcmp.lt.s32.totalorder %v3238, %v3083
      %v3240 = vsel %vm3239, %v3238, %v3083
      %vm3241 = vcmp.lt.s32.totalorder %v3240, %v3087
      %v3242 = vsel %vm3241, %v3240, %v3087
      %vm3243 = vcmp.lt.s32.totalorder %v3242, %v3091
      %v3244 = vsel %vm3243, %v3242, %v3091
      %vm3245 = vcmp.lt.s32.totalorder %v3244, %v3095
      %v3246 = vsel %vm3245, %v3244, %v3095
      %vm3247 = vcmp.lt.s32.totalorder %v3246, %v3099
      %v3248 = vsel %vm3247, %v3246, %v3099
      %vm3249 = vcmp.lt.s32.totalorder %v3248, %v3103
      %v3250 = vsel %vm3249, %v3248, %v3103
      %vm3251 = vcmp.lt.s32.totalorder %v3250, %v3107
      %v3252 = vsel %vm3251, %v3250, %v3107
      %vm3253 = vcmp.lt.s32.totalorder %v3252, %v3111
      %v3254 = vsel %vm3253, %v3252, %v3111
      %vm3255 = vcmp.lt.s32.totalorder %v3254, %v3115
      %v3256 = vsel %vm3255, %v3254, %v3115
      %vm3257 = vcmp.lt.s32.totalorder %v3256, %v3119
      %v3258 = vsel %vm3257, %v3256, %v3119
      %vm3259 = vcmp.lt.s32.totalorder %v3258, %v3123
      %v3260 = vsel %vm3259, %v3258, %v3123
      %vm3261 = vcmp.lt.s32.totalorder %v3260, %v3127
      %v3262 = vsel %vm3261, %v3260, %v3127
      %vm3263 = vcmp.lt.s32.totalorder %v3262, %v3131
      %v3264 = vsel %vm3263, %v3262, %v3131
      %vm3265 = vcmp.lt.s32.totalorder %v3264, %v3135
      %v3266 = vsel %vm3265, %v3264, %v3135
      %vm3267 = vcmp.lt.s32.totalorder %v3266, %v3139
      %v3268 = vsel %vm3267, %v3266, %v3139
      %v3269 = vrot.slane %v3268, 4
      %vm3270 = vcmp.lt.s32.totalorder %v3268, %v3269
      %v3271 = vsel %vm3270, %v3268, %v3269
      %v3272 = vrot.slane %v3271, 2
      %vm3273 = vcmp.lt.s32.totalorder %v3271, %v3272
      %v3274 = vsel %vm3273, %v3271, %v3272
      %v3275 = vrot.slane %v3274, 1
      %vm3276 = vcmp.lt.s32.totalorder %v3274, %v3275
      %v3277 = vsel %vm3276, %v3274, %v3275
      %vm3278 = vcmp.lt.s32.totalorder %v2888, %v2892
      %v3279 = vsel %vm3278, %v2888, %v2892
      %vm3280 = vcmp.lt.s32.totalorder %v3279, %v2896
      %v3281 = vsel %vm3280, %v3279, %v2896
      %vm3282 = vcmp.lt.s32.totalorder %v3281, %v2900
      %v3283 = vsel %vm3282, %v3281, %v2900
      %vm3284 = vcmp.lt.s32.totalorder %v3283, %v2904
      %v3285 = vsel %vm3284, %v3283, %v2904
      %vm3286 = vcmp.lt.s32.totalorder %v3285, %v2908
      %v3287 = vsel %vm3286, %v3285, %v2908
      %vm3288 = vcmp.lt.s32.totalorder %v3287, %v2912
      %v3289 = vsel %vm3288, %v3287, %v2912
      %vm3290 = vcmp.lt.s32.totalorder %v3289, %v2916
      %v3291 = vsel %vm3290, %v3289, %v2916
      %vm3292 = vcmp.lt.s32.totalorder %v3291, %v2920
      %v3293 = vsel %vm3292, %v3291, %v2920
      %vm3294 = vcmp.lt.s32.totalorder %v3293, %v2924
      %v3295 = vsel %vm3294, %v3293, %v2924
      %vm3296 = vcmp.lt.s32.totalorder %v3295, %v2928
      %v3297 = vsel %vm3296, %v3295, %v2928
      %vm3298 = vcmp.lt.s32.totalorder %v3297, %v2932
      %v3299 = vsel %vm3298, %v3297, %v2932
      %vm3300 = vcmp.lt.s32.totalorder %v3299, %v2936
      %v3301 = vsel %vm3300, %v3299, %v2936
      %vm3302 = vcmp.lt.s32.totalorder %v3301, %v2940
      %v3303 = vsel %vm3302, %v3301, %v2940
      %vm3304 = vcmp.lt.s32.totalorder %v3303, %v2944
      %v3305 = vsel %vm3304, %v3303, %v2944
      %vm3306 = vcmp.lt.s32.totalorder %v3305, %v2948
      %v3307 = vsel %vm3306, %v3305, %v2948
      %vm3308 = vcmp.lt.s32.totalorder %v3307, %v2952
      %v3309 = vsel %vm3308, %v3307, %v2952
      %vm3310 = vcmp.lt.s32.totalorder %v3309, %v2956
      %v3311 = vsel %vm3310, %v3309, %v2956
      %vm3312 = vcmp.lt.s32.totalorder %v3311, %v2960
      %v3313 = vsel %vm3312, %v3311, %v2960
      %vm3314 = vcmp.lt.s32.totalorder %v3313, %v2964
      %v3315 = vsel %vm3314, %v3313, %v2964
      %vm3316 = vcmp.lt.s32.totalorder %v3315, %v2968
      %v3317 = vsel %vm3316, %v3315, %v2968
      %vm3318 = vcmp.lt.s32.totalorder %v3317, %v2972
      %v3319 = vsel %vm3318, %v3317, %v2972
      %vm3320 = vcmp.lt.s32.totalorder %v3319, %v2976
      %v3321 = vsel %vm3320, %v3319, %v2976
      %vm3322 = vcmp.lt.s32.totalorder %v3321, %v2980
      %v3323 = vsel %vm3322, %v3321, %v2980
      %vm3324 = vcmp.lt.s32.totalorder %v3323, %v2984
      %v3325 = vsel %vm3324, %v3323, %v2984
      %vm3326 = vcmp.lt.s32.totalorder %v3325, %v2988
      %v3327 = vsel %vm3326, %v3325, %v2988
      %vm3328 = vcmp.lt.s32.totalorder %v3327, %v2992
      %v3329 = vsel %vm3328, %v3327, %v2992
      %vm3330 = vcmp.lt.s32.totalorder %v3329, %v2996
      %v3331 = vsel %vm3330, %v3329, %v2996
      %vm3332 = vcmp.lt.s32.totalorder %v3331, %v3000
      %v3333 = vsel %vm3332, %v3331, %v3000
      %vm3334 = vcmp.lt.s32.totalorder %v3333, %v3004
      %v3335 = vsel %vm3334, %v3333, %v3004
      %vm3336 = vcmp.lt.s32.totalorder %v3335, %v3008
      %v3337 = vsel %vm3336, %v3335, %v3008
      %vm3338 = vcmp.lt.s32.totalorder %v3337, %v3012
      %v3339 = vsel %vm3338, %v3337, %v3012
      %vm3340 = vcmp.lt.s32.totalorder %v3339, %v3016
      %v3341 = vsel %vm3340, %v3339, %v3016
      %vm3342 = vcmp.lt.s32.totalorder %v3341, %v3020
      %v3343 = vsel %vm3342, %v3341, %v3020
      %vm3344 = vcmp.lt.s32.totalorder %v3343, %v3024
      %v3345 = vsel %vm3344, %v3343, %v3024
      %vm3346 = vcmp.lt.s32.totalorder %v3345, %v3028
      %v3347 = vsel %vm3346, %v3345, %v3028
      %vm3348 = vcmp.lt.s32.totalorder %v3347, %v3032
      %v3349 = vsel %vm3348, %v3347, %v3032
      %vm3350 = vcmp.lt.s32.totalorder %v3349, %v3036
      %v3351 = vsel %vm3350, %v3349, %v3036
      %vm3352 = vcmp.lt.s32.totalorder %v3351, %v3040
      %v3353 = vsel %vm3352, %v3351, %v3040
      %vm3354 = vcmp.lt.s32.totalorder %v3353, %v3044
      %v3355 = vsel %vm3354, %v3353, %v3044
      %vm3356 = vcmp.lt.s32.totalorder %v3355, %v3048
      %v3357 = vsel %vm3356, %v3355, %v3048
      %vm3358 = vcmp.lt.s32.totalorder %v3357, %v3052
      %v3359 = vsel %vm3358, %v3357, %v3052
      %vm3360 = vcmp.lt.s32.totalorder %v3359, %v3056
      %v3361 = vsel %vm3360, %v3359, %v3056
      %vm3362 = vcmp.lt.s32.totalorder %v3361, %v3060
      %v3363 = vsel %vm3362, %v3361, %v3060
      %vm3364 = vcmp.lt.s32.totalorder %v3363, %v3064
      %v3365 = vsel %vm3364, %v3363, %v3064
      %vm3366 = vcmp.lt.s32.totalorder %v3365, %v3068
      %v3367 = vsel %vm3366, %v3365, %v3068
      %vm3368 = vcmp.lt.s32.totalorder %v3367, %v3072
      %v3369 = vsel %vm3368, %v3367, %v3072
      %vm3370 = vcmp.lt.s32.totalorder %v3369, %v3076
      %v3371 = vsel %vm3370, %v3369, %v3076
      %vm3372 = vcmp.lt.s32.totalorder %v3371, %v3080
      %v3373 = vsel %vm3372, %v3371, %v3080
      %vm3374 = vcmp.lt.s32.totalorder %v3373, %v3084
      %v3375 = vsel %vm3374, %v3373, %v3084
      %vm3376 = vcmp.lt.s32.totalorder %v3375, %v3088
      %v3377 = vsel %vm3376, %v3375, %v3088
      %vm3378 = vcmp.lt.s32.totalorder %v3377, %v3092
      %v3379 = vsel %vm3378, %v3377, %v3092
      %vm3380 = vcmp.lt.s32.totalorder %v3379, %v3096
      %v3381 = vsel %vm3380, %v3379, %v3096
      %vm3382 = vcmp.lt.s32.totalorder %v3381, %v3100
      %v3383 = vsel %vm3382, %v3381, %v3100
      %vm3384 = vcmp.lt.s32.totalorder %v3383, %v3104
      %v3385 = vsel %vm3384, %v3383, %v3104
      %vm3386 = vcmp.lt.s32.totalorder %v3385, %v3108
      %v3387 = vsel %vm3386, %v3385, %v3108
      %vm3388 = vcmp.lt.s32.totalorder %v3387, %v3112
      %v3389 = vsel %vm3388, %v3387, %v3112
      %vm3390 = vcmp.lt.s32.totalorder %v3389, %v3116
      %v3391 = vsel %vm3390, %v3389, %v3116
      %vm3392 = vcmp.lt.s32.totalorder %v3391, %v3120
      %v3393 = vsel %vm3392, %v3391, %v3120
      %vm3394 = vcmp.lt.s32.totalorder %v3393, %v3124
      %v3395 = vsel %vm3394, %v3393, %v3124
      %vm3396 = vcmp.lt.s32.totalorder %v3395, %v3128
      %v3397 = vsel %vm3396, %v3395, %v3128
      %vm3398 = vcmp.lt.s32.totalorder %v3397, %v3132
      %v3399 = vsel %vm3398, %v3397, %v3132
      %vm3400 = vcmp.lt.s32.totalorder %v3399, %v3136
      %v3401 = vsel %vm3400, %v3399, %v3136
      %vm3402 = vcmp.lt.s32.totalorder %v3401, %v3140
      %v3403 = vsel %vm3402, %v3401, %v3140
      %v3404 = vrot.slane %v3403, 4
      %vm3405 = vcmp.lt.s32.totalorder %v3403, %v3404
      %v3406 = vsel %vm3405, %v3403, %v3404
      %v3407 = vrot.slane %v3406, 2
      %vm3408 = vcmp.lt.s32.totalorder %v3406, %v3407
      %v3409 = vsel %vm3408, %v3406, %v3407
      %v3410 = vrot.slane %v3409, 1
      %vm3411 = vcmp.lt.s32.totalorder %v3409, %v3410
      %v3412 = vsel %vm3411, %v3409, %v3410
      %vm3413 = vcmp.lt.s32.totalorder %v2889, %v2893
      %v3414 = vsel %vm3413, %v2889, %v2893
      %vm3415 = vcmp.lt.s32.totalorder %v3414, %v2897
      %v3416 = vsel %vm3415, %v3414, %v2897
      %vm3417 = vcmp.lt.s32.totalorder %v3416, %v2901
      %v3418 = vsel %vm3417, %v3416, %v2901
      %vm3419 = vcmp.lt.s32.totalorder %v3418, %v2905
      %v3420 = vsel %vm3419, %v3418, %v2905
      %vm3421 = vcmp.lt.s32.totalorder %v3420, %v2909
      %v3422 = vsel %vm3421, %v3420, %v2909
      %vm3423 = vcmp.lt.s32.totalorder %v3422, %v2913
      %v3424 = vsel %vm3423, %v3422, %v2913
      %vm3425 = vcmp.lt.s32.totalorder %v3424, %v2917
      %v3426 = vsel %vm3425, %v3424, %v2917
      %vm3427 = vcmp.lt.s32.totalorder %v3426, %v2921
      %v3428 = vsel %vm3427, %v3426, %v2921
      %vm3429 = vcmp.lt.s32.totalorder %v3428, %v2925
      %v3430 = vsel %vm3429, %v3428, %v2925
      %vm3431 = vcmp.lt.s32.totalorder %v3430, %v2929
      %v3432 = vsel %vm3431, %v3430, %v2929
      %vm3433 = vcmp.lt.s32.totalorder %v3432, %v2933
      %v3434 = vsel %vm3433, %v3432, %v2933
      %vm3435 = vcmp.lt.s32.totalorder %v3434, %v2937
      %v3436 = vsel %vm3435, %v3434, %v2937
      %vm3437 = vcmp.lt.s32.totalorder %v3436, %v2941
      %v3438 = vsel %vm3437, %v3436, %v2941
      %vm3439 = vcmp.lt.s32.totalorder %v3438, %v2945
      %v3440 = vsel %vm3439, %v3438, %v2945
      %vm3441 = vcmp.lt.s32.totalorder %v3440, %v2949
      %v3442 = vsel %vm3441, %v3440, %v2949
      %vm3443 = vcmp.lt.s32.totalorder %v3442, %v2953
      %v3444 = vsel %vm3443, %v3442, %v2953
      %vm3445 = vcmp.lt.s32.totalorder %v3444, %v2957
      %v3446 = vsel %vm3445, %v3444, %v2957
      %vm3447 = vcmp.lt.s32.totalorder %v3446, %v2961
      %v3448 = vsel %vm3447, %v3446, %v2961
      %vm3449 = vcmp.lt.s32.totalorder %v3448, %v2965
      %v3450 = vsel %vm3449, %v3448, %v2965
      %vm3451 = vcmp.lt.s32.totalorder %v3450, %v2969
      %v3452 = vsel %vm3451, %v3450, %v2969
      %vm3453 = vcmp.lt.s32.totalorder %v3452, %v2973
      %v3454 = vsel %vm3453, %v3452, %v2973
      %vm3455 = vcmp.lt.s32.totalorder %v3454, %v2977
      %v3456 = vsel %vm3455, %v3454, %v2977
      %vm3457 = vcmp.lt.s32.totalorder %v3456, %v2981
      %v3458 = vsel %vm3457, %v3456, %v2981
      %vm3459 = vcmp.lt.s32.totalorder %v3458, %v2985
      %v3460 = vsel %vm3459, %v3458, %v2985
      %vm3461 = vcmp.lt.s32.totalorder %v3460, %v2989
      %v3462 = vsel %vm3461, %v3460, %v2989
      %vm3463 = vcmp.lt.s32.totalorder %v3462, %v2993
      %v3464 = vsel %vm3463, %v3462, %v2993
      %vm3465 = vcmp.lt.s32.totalorder %v3464, %v2997
      %v3466 = vsel %vm3465, %v3464, %v2997
      %vm3467 = vcmp.lt.s32.totalorder %v3466, %v3001
      %v3468 = vsel %vm3467, %v3466, %v3001
      %vm3469 = vcmp.lt.s32.totalorder %v3468, %v3005
      %v3470 = vsel %vm3469, %v3468, %v3005
      %vm3471 = vcmp.lt.s32.totalorder %v3470, %v3009
      %v3472 = vsel %vm3471, %v3470, %v3009
      %vm3473 = vcmp.lt.s32.totalorder %v3472, %v3013
      %v3474 = vsel %vm3473, %v3472, %v3013
      %vm3475 = vcmp.lt.s32.totalorder %v3474, %v3017
      %v3476 = vsel %vm3475, %v3474, %v3017
      %vm3477 = vcmp.lt.s32.totalorder %v3476, %v3021
      %v3478 = vsel %vm3477, %v3476, %v3021
      %vm3479 = vcmp.lt.s32.totalorder %v3478, %v3025
      %v3480 = vsel %vm3479, %v3478, %v3025
      %vm3481 = vcmp.lt.s32.totalorder %v3480, %v3029
      %v3482 = vsel %vm3481, %v3480, %v3029
      %vm3483 = vcmp.lt.s32.totalorder %v3482, %v3033
      %v3484 = vsel %vm3483, %v3482, %v3033
      %vm3485 = vcmp.lt.s32.totalorder %v3484, %v3037
      %v3486 = vsel %vm3485, %v3484, %v3037
      %vm3487 = vcmp.lt.s32.totalorder %v3486, %v3041
      %v3488 = vsel %vm3487, %v3486, %v3041
      %vm3489 = vcmp.lt.s32.totalorder %v3488, %v3045
      %v3490 = vsel %vm3489, %v3488, %v3045
      %vm3491 = vcmp.lt.s32.totalorder %v3490, %v3049
      %v3492 = vsel %vm3491, %v3490, %v3049
      %vm3493 = vcmp.lt.s32.totalorder %v3492, %v3053
      %v3494 = vsel %vm3493, %v3492, %v3053
      %vm3495 = vcmp.lt.s32.totalorder %v3494, %v3057
      %v3496 = vsel %vm3495, %v3494, %v3057
      %vm3497 = vcmp.lt.s32.totalorder %v3496, %v3061
      %v3498 = vsel %vm3497, %v3496, %v3061
      %vm3499 = vcmp.lt.s32.totalorder %v3498, %v3065
      %v3500 = vsel %vm3499, %v3498, %v3065
      %vm3501 = vcmp.lt.s32.totalorder %v3500, %v3069
      %v3502 = vsel %vm3501, %v3500, %v3069
      %vm3503 = vcmp.lt.s32.totalorder %v3502, %v3073
      %v3504 = vsel %vm3503, %v3502, %v3073
      %vm3505 = vcmp.lt.s32.totalorder %v3504, %v3077
      %v3506 = vsel %vm3505, %v3504, %v3077
      %vm3507 = vcmp.lt.s32.totalorder %v3506, %v3081
      %v3508 = vsel %vm3507, %v3506, %v3081
      %vm3509 = vcmp.lt.s32.totalorder %v3508, %v3085
      %v3510 = vsel %vm3509, %v3508, %v3085
      %vm3511 = vcmp.lt.s32.totalorder %v3510, %v3089
      %v3512 = vsel %vm3511, %v3510, %v3089
      %vm3513 = vcmp.lt.s32.totalorder %v3512, %v3093
      %v3514 = vsel %vm3513, %v3512, %v3093
      %vm3515 = vcmp.lt.s32.totalorder %v3514, %v3097
      %v3516 = vsel %vm3515, %v3514, %v3097
      %vm3517 = vcmp.lt.s32.totalorder %v3516, %v3101
      %v3518 = vsel %vm3517, %v3516, %v3101
      %vm3519 = vcmp.lt.s32.totalorder %v3518, %v3105
      %v3520 = vsel %vm3519, %v3518, %v3105
      %vm3521 = vcmp.lt.s32.totalorder %v3520, %v3109
      %v3522 = vsel %vm3521, %v3520, %v3109
      %vm3523 = vcmp.lt.s32.totalorder %v3522, %v3113
      %v3524 = vsel %vm3523, %v3522, %v3113
      %vm3525 = vcmp.lt.s32.totalorder %v3524, %v3117
      %v3526 = vsel %vm3525, %v3524, %v3117
      %vm3527 = vcmp.lt.s32.totalorder %v3526, %v3121
      %v3528 = vsel %vm3527, %v3526, %v3121
      %vm3529 = vcmp.lt.s32.totalorder %v3528, %v3125
      %v3530 = vsel %vm3529, %v3528, %v3125
      %vm3531 = vcmp.lt.s32.totalorder %v3530, %v3129
      %v3532 = vsel %vm3531, %v3530, %v3129
      %vm3533 = vcmp.lt.s32.totalorder %v3532, %v3133
      %v3534 = vsel %vm3533, %v3532, %v3133
      %vm3535 = vcmp.lt.s32.totalorder %v3534, %v3137
      %v3536 = vsel %vm3535, %v3534, %v3137
      %vm3537 = vcmp.lt.s32.totalorder %v3536, %v3141
      %v3538 = vsel %vm3537, %v3536, %v3141
      %v3539 = vrot.slane %v3538, 4
      %vm3540 = vcmp.lt.s32.totalorder %v3538, %v3539
      %v3541 = vsel %vm3540, %v3538, %v3539
      %v3542 = vrot.slane %v3541, 2
      %vm3543 = vcmp.lt.s32.totalorder %v3541, %v3542
      %v3544 = vsel %vm3543, %v3541, %v3542
      %v3545 = vrot.slane %v3544, 1
      %vm3546 = vcmp.lt.s32.totalorder %v3544, %v3545
      %v3547 = vsel %vm3546, %v3544, %v3545
      %vm3548 = vcmp.lt.s32.totalorder %v2890, %v2894
      %v3549 = vsel %vm3548, %v2890, %v2894
      %vm3550 = vcmp.lt.s32.totalorder %v3549, %v2898
      %v3551 = vsel %vm3550, %v3549, %v2898
      %vm3552 = vcmp.lt.s32.totalorder %v3551, %v2902
      %v3553 = vsel %vm3552, %v3551, %v2902
      %vm3554 = vcmp.lt.s32.totalorder %v3553, %v2906
      %v3555 = vsel %vm3554, %v3553, %v2906
      %vm3556 = vcmp.lt.s32.totalorder %v3555, %v2910
      %v3557 = vsel %vm3556, %v3555, %v2910
      %vm3558 = vcmp.lt.s32.totalorder %v3557, %v2914
      %v3559 = vsel %vm3558, %v3557, %v2914
      %vm3560 = vcmp.lt.s32.totalorder %v3559, %v2918
      %v3561 = vsel %vm3560, %v3559, %v2918
      %vm3562 = vcmp.lt.s32.totalorder %v3561, %v2922
      %v3563 = vsel %vm3562, %v3561, %v2922
      %vm3564 = vcmp.lt.s32.totalorder %v3563, %v2926
      %v3565 = vsel %vm3564, %v3563, %v2926
      %vm3566 = vcmp.lt.s32.totalorder %v3565, %v2930
      %v3567 = vsel %vm3566, %v3565, %v2930
      %vm3568 = vcmp.lt.s32.totalorder %v3567, %v2934
      %v3569 = vsel %vm3568, %v3567, %v2934
      %vm3570 = vcmp.lt.s32.totalorder %v3569, %v2938
      %v3571 = vsel %vm3570, %v3569, %v2938
      %vm3572 = vcmp.lt.s32.totalorder %v3571, %v2942
      %v3573 = vsel %vm3572, %v3571, %v2942
      %vm3574 = vcmp.lt.s32.totalorder %v3573, %v2946
      %v3575 = vsel %vm3574, %v3573, %v2946
      %vm3576 = vcmp.lt.s32.totalorder %v3575, %v2950
      %v3577 = vsel %vm3576, %v3575, %v2950
      %vm3578 = vcmp.lt.s32.totalorder %v3577, %v2954
      %v3579 = vsel %vm3578, %v3577, %v2954
      %vm3580 = vcmp.lt.s32.totalorder %v3579, %v2958
      %v3581 = vsel %vm3580, %v3579, %v2958
      %vm3582 = vcmp.lt.s32.totalorder %v3581, %v2962
      %v3583 = vsel %vm3582, %v3581, %v2962
      %vm3584 = vcmp.lt.s32.totalorder %v3583, %v2966
      %v3585 = vsel %vm3584, %v3583, %v2966
      %vm3586 = vcmp.lt.s32.totalorder %v3585, %v2970
      %v3587 = vsel %vm3586, %v3585, %v2970
      %vm3588 = vcmp.lt.s32.totalorder %v3587, %v2974
      %v3589 = vsel %vm3588, %v3587, %v2974
      %vm3590 = vcmp.lt.s32.totalorder %v3589, %v2978
      %v3591 = vsel %vm3590, %v3589, %v2978
      %vm3592 = vcmp.lt.s32.totalorder %v3591, %v2982
      %v3593 = vsel %vm3592, %v3591, %v2982
      %vm3594 = vcmp.lt.s32.totalorder %v3593, %v2986
      %v3595 = vsel %vm3594, %v3593, %v2986
      %vm3596 = vcmp.lt.s32.totalorder %v3595, %v2990
      %v3597 = vsel %vm3596, %v3595, %v2990
      %vm3598 = vcmp.lt.s32.totalorder %v3597, %v2994
      %v3599 = vsel %vm3598, %v3597, %v2994
      %vm3600 = vcmp.lt.s32.totalorder %v3599, %v2998
      %v3601 = vsel %vm3600, %v3599, %v2998
      %vm3602 = vcmp.lt.s32.totalorder %v3601, %v3002
      %v3603 = vsel %vm3602, %v3601, %v3002
      %vm3604 = vcmp.lt.s32.totalorder %v3603, %v3006
      %v3605 = vsel %vm3604, %v3603, %v3006
      %vm3606 = vcmp.lt.s32.totalorder %v3605, %v3010
      %v3607 = vsel %vm3606, %v3605, %v3010
      %vm3608 = vcmp.lt.s32.totalorder %v3607, %v3014
      %v3609 = vsel %vm3608, %v3607, %v3014
      %vm3610 = vcmp.lt.s32.totalorder %v3609, %v3018
      %v3611 = vsel %vm3610, %v3609, %v3018
      %vm3612 = vcmp.lt.s32.totalorder %v3611, %v3022
      %v3613 = vsel %vm3612, %v3611, %v3022
      %vm3614 = vcmp.lt.s32.totalorder %v3613, %v3026
      %v3615 = vsel %vm3614, %v3613, %v3026
      %vm3616 = vcmp.lt.s32.totalorder %v3615, %v3030
      %v3617 = vsel %vm3616, %v3615, %v3030
      %vm3618 = vcmp.lt.s32.totalorder %v3617, %v3034
      %v3619 = vsel %vm3618, %v3617, %v3034
      %vm3620 = vcmp.lt.s32.totalorder %v3619, %v3038
      %v3621 = vsel %vm3620, %v3619, %v3038
      %vm3622 = vcmp.lt.s32.totalorder %v3621, %v3042
      %v3623 = vsel %vm3622, %v3621, %v3042
      %vm3624 = vcmp.lt.s32.totalorder %v3623, %v3046
      %v3625 = vsel %vm3624, %v3623, %v3046
      %vm3626 = vcmp.lt.s32.totalorder %v3625, %v3050
      %v3627 = vsel %vm3626, %v3625, %v3050
      %vm3628 = vcmp.lt.s32.totalorder %v3627, %v3054
      %v3629 = vsel %vm3628, %v3627, %v3054
      %vm3630 = vcmp.lt.s32.totalorder %v3629, %v3058
      %v3631 = vsel %vm3630, %v3629, %v3058
      %vm3632 = vcmp.lt.s32.totalorder %v3631, %v3062
      %v3633 = vsel %vm3632, %v3631, %v3062
      %vm3634 = vcmp.lt.s32.totalorder %v3633, %v3066
      %v3635 = vsel %vm3634, %v3633, %v3066
      %vm3636 = vcmp.lt.s32.totalorder %v3635, %v3070
      %v3637 = vsel %vm3636, %v3635, %v3070
      %vm3638 = vcmp.lt.s32.totalorder %v3637, %v3074
      %v3639 = vsel %vm3638, %v3637, %v3074
      %vm3640 = vcmp.lt.s32.totalorder %v3639, %v3078
      %v3641 = vsel %vm3640, %v3639, %v3078
      %vm3642 = vcmp.lt.s32.totalorder %v3641, %v3082
      %v3643 = vsel %vm3642, %v3641, %v3082
      %vm3644 = vcmp.lt.s32.totalorder %v3643, %v3086
      %v3645 = vsel %vm3644, %v3643, %v3086
      %vm3646 = vcmp.lt.s32.totalorder %v3645, %v3090
      %v3647 = vsel %vm3646, %v3645, %v3090
      %vm3648 = vcmp.lt.s32.totalorder %v3647, %v3094
      %v3649 = vsel %vm3648, %v3647, %v3094
      %vm3650 = vcmp.lt.s32.totalorder %v3649, %v3098
      %v3651 = vsel %vm3650, %v3649, %v3098
      %vm3652 = vcmp.lt.s32.totalorder %v3651, %v3102
      %v3653 = vsel %vm3652, %v3651, %v3102
      %vm3654 = vcmp.lt.s32.totalorder %v3653, %v3106
      %v3655 = vsel %vm3654, %v3653, %v3106
      %vm3656 = vcmp.lt.s32.totalorder %v3655, %v3110
      %v3657 = vsel %vm3656, %v3655, %v3110
      %vm3658 = vcmp.lt.s32.totalorder %v3657, %v3114
      %v3659 = vsel %vm3658, %v3657, %v3114
      %vm3660 = vcmp.lt.s32.totalorder %v3659, %v3118
      %v3661 = vsel %vm3660, %v3659, %v3118
      %vm3662 = vcmp.lt.s32.totalorder %v3661, %v3122
      %v3663 = vsel %vm3662, %v3661, %v3122
      %vm3664 = vcmp.lt.s32.totalorder %v3663, %v3126
      %v3665 = vsel %vm3664, %v3663, %v3126
      %vm3666 = vcmp.lt.s32.totalorder %v3665, %v3130
      %v3667 = vsel %vm3666, %v3665, %v3130
      %vm3668 = vcmp.lt.s32.totalorder %v3667, %v3134
      %v3669 = vsel %vm3668, %v3667, %v3134
      %vm3670 = vcmp.lt.s32.totalorder %v3669, %v3138
      %v3671 = vsel %vm3670, %v3669, %v3138
      %vm3672 = vcmp.lt.s32.totalorder %v3671, %v3142
      %v3673 = vsel %vm3672, %v3671, %v3142
      %v3674 = vrot.slane %v3673, 4
      %vm3675 = vcmp.lt.s32.totalorder %v3673, %v3674
      %v3676 = vsel %vm3675, %v3673, %v3674
      %v3677 = vrot.slane %v3676, 2
      %vm3678 = vcmp.lt.s32.totalorder %v3676, %v3677
      %v3679 = vsel %vm3678, %v3676, %v3677
      %v3680 = vrot.slane %v3679, 1
      %vm3681 = vcmp.lt.s32.totalorder %v3679, %v3680
      %v3682 = vsel %vm3681, %v3679, %v3680
      %v3683 = vcombine.low %v3277, %v3412
      %v3684 = vcombine.low %v3547, %v3682
      %v3686 = vunpack.c.l.s4 1966171168
      %v3687 = vunpack.c.0.s8 %v3686
      %v3688 = vlaneseq
      %v3689 = vshrl.u32 %v3688, 7
      %v3690 = vsub.s32 %v3687, %v3689
      %v3691 = vrot.slane %v3683, %v3690
      %v3693 = vunpack.c.l.s4 1966171168
      %v3694 = vunpack.c.0.s8 %v3693
      %v3695 = vlaneseq
      %v3696 = vshrl.u32 %v3695, 7
      %v3697 = vsub.s32 %v3694, %v3696
      %v3698 = vrot.slane %v3684, %v3697
      %v3699 = vcombine.low %v3691, %v3698
      %v3701 = vunpack.c.l.s4 1966171168
      %v3702 = vunpack.c.0.s8 %v3701
      %v3703 = vlaneseq
      %v3704 = vshrl.u32 %v3703, 7
      %v3705 = vsub.s32 %v3702, %v3704
      %v3706 = vrot.slane %v3699, %v3705
      %v3707 = vlaneseq
      %vm3708 = vcmp.ge.s32.totalorder %v3707, 0
      %vm3709 = vcmp.lt.s32.totalorder %v3707, 512
      %vm3710 = vmand %vm3708, %vm3709
      %3711 = vst.msk [vmem:[%s375] sm:$0xf] %vm3710, %v3706
      %vm3712 = vcmp.eq.s32.totalorder %v2697, %v3277
      %vm3713 = vcmp.eq.s32.totalorder %v2697, %v3412
      %vm3714 = vcmp.eq.s32.totalorder %v2697, %v3547
      %vm3715 = vcmp.eq.s32.totalorder %v2697, %v3682
      %vm3716 = vcmp.eq.s32.totalorder %v2700, %v3277
      %vm3717 = vcmp.eq.s32.totalorder %v2700, %v3412
      %vm3718 = vcmp.eq.s32.totalorder %v2700, %v3547
      %vm3719 = vcmp.eq.s32.totalorder %v2700, %v3682
      %vm3720 = vcmp.eq.s32.totalorder %v2703, %v3277
      %vm3721 = vcmp.eq.s32.totalorder %v2703, %v3412
      %vm3722 = vcmp.eq.s32.totalorder %v2703, %v3547
      %vm3723 = vcmp.eq.s32.totalorder %v2703, %v3682
      %vm3724 = vcmp.eq.s32.totalorder %v2706, %v3277
      %vm3725 = vcmp.eq.s32.totalorder %v2706, %v3412
      %vm3726 = vcmp.eq.s32.totalorder %v2706, %v3547
      %vm3727 = vcmp.eq.s32.totalorder %v2706, %v3682
      %vm3728 = vcmp.eq.s32.totalorder %v2709, %v3277
      %vm3729 = vcmp.eq.s32.totalorder %v2709, %v3412
      %vm3730 = vcmp.eq.s32.totalorder %v2709, %v3547
      %vm3731 = vcmp.eq.s32.totalorder %v2709, %v3682
      %vm3732 = vcmp.eq.s32.totalorder %v2712, %v3277
      %vm3733 = vcmp.eq.s32.totalorder %v2712, %v3412
      %vm3734 = vcmp.eq.s32.totalorder %v2712, %v3547
      %vm3735 = vcmp.eq.s32.totalorder %v2712, %v3682
      %vm3736 = vcmp.eq.s32.totalorder %v2715, %v3277
      %vm3737 = vcmp.eq.s32.totalorder %v2715, %v3412
      %vm3738 = vcmp.eq.s32.totalorder %v2715, %v3547
      %vm3739 = vcmp.eq.s32.totalorder %v2715, %v3682
      %vm3740 = vcmp.eq.s32.totalorder %v2718, %v3277
      %vm3741 = vcmp.eq.s32.totalorder %v2718, %v3412
      %vm3742 = vcmp.eq.s32.totalorder %v2718, %v3547
      %vm3743 = vcmp.eq.s32.totalorder %v2718, %v3682
      %vm3744 = vcmp.eq.s32.totalorder %v2721, %v3277
      %vm3745 = vcmp.eq.s32.totalorder %v2721, %v3412
      %vm3746 = vcmp.eq.s32.totalorder %v2721, %v3547
      %vm3747 = vcmp.eq.s32.totalorder %v2721, %v3682
      %vm3748 = vcmp.eq.s32.totalorder %v2724, %v3277
      %vm3749 = vcmp.eq.s32.totalorder %v2724, %v3412
      %vm3750 = vcmp.eq.s32.totalorder %v2724, %v3547
      %vm3751 = vcmp.eq.s32.totalorder %v2724, %v3682
      %vm3752 = vcmp.eq.s32.totalorder %v2727, %v3277
      %vm3753 = vcmp.eq.s32.totalorder %v2727, %v3412
      %vm3754 = vcmp.eq.s32.totalorder %v2727, %v3547
      %vm3755 = vcmp.eq.s32.totalorder %v2727, %v3682
      %vm3756 = vcmp.eq.s32.totalorder %v2730, %v3277
      %vm3757 = vcmp.eq.s32.totalorder %v2730, %v3412
      %vm3758 = vcmp.eq.s32.totalorder %v2730, %v3547
      %vm3759 = vcmp.eq.s32.totalorder %v2730, %v3682
      %vm3760 = vcmp.eq.s32.totalorder %v2733, %v3277
      %vm3761 = vcmp.eq.s32.totalorder %v2733, %v3412
      %vm3762 = vcmp.eq.s32.totalorder %v2733, %v3547
      %vm3763 = vcmp.eq.s32.totalorder %v2733, %v3682
      %vm3764 = vcmp.eq.s32.totalorder %v2736, %v3277
      %vm3765 = vcmp.eq.s32.totalorder %v2736, %v3412
      %vm3766 = vcmp.eq.s32.totalorder %v2736, %v3547
      %vm3767 = vcmp.eq.s32.totalorder %v2736, %v3682
      %vm3768 = vcmp.eq.s32.totalorder %v2739, %v3277
      %vm3769 = vcmp.eq.s32.totalorder %v2739, %v3412
      %vm3770 = vcmp.eq.s32.totalorder %v2739, %v3547
      %vm3771 = vcmp.eq.s32.totalorder %v2739, %v3682
      %vm3772 = vcmp.eq.s32.totalorder %v2742, %v3277
      %vm3773 = vcmp.eq.s32.totalorder %v2742, %v3412
      %vm3774 = vcmp.eq.s32.totalorder %v2742, %v3547
      %vm3775 = vcmp.eq.s32.totalorder %v2742, %v3682
      %vm3776 = vcmp.eq.s32.totalorder %v2745, %v3277
      %vm3777 = vcmp.eq.s32.totalorder %v2745, %v3412
      %vm3778 = vcmp.eq.s32.totalorder %v2745, %v3547
      %vm3779 = vcmp.eq.s32.totalorder %v2745, %v3682
      %vm3780 = vcmp.eq.s32.totalorder %v2748, %v3277
      %vm3781 = vcmp.eq.s32.totalorder %v2748, %v3412
      %vm3782 = vcmp.eq.s32.totalorder %v2748, %v3547
      %vm3783 = vcmp.eq.s32.totalorder %v2748, %v3682
      %vm3784 = vcmp.eq.s32.totalorder %v2751, %v3277
      %vm3785 = vcmp.eq.s32.totalorder %v2751, %v3412
      %vm3786 = vcmp.eq.s32.totalorder %v2751, %v3547
      %vm3787 = vcmp.eq.s32.totalorder %v2751, %v3682
      %vm3788 = vcmp.eq.s32.totalorder %v2754, %v3277
      %vm3789 = vcmp.eq.s32.totalorder %v2754, %v3412
      %vm3790 = vcmp.eq.s32.totalorder %v2754, %v3547
      %vm3791 = vcmp.eq.s32.totalorder %v2754, %v3682
      %vm3792 = vcmp.eq.s32.totalorder %v2757, %v3277
      %vm3793 = vcmp.eq.s32.totalorder %v2757, %v3412
      %vm3794 = vcmp.eq.s32.totalorder %v2757, %v3547
      %vm3795 = vcmp.eq.s32.totalorder %v2757, %v3682
      %vm3796 = vcmp.eq.s32.totalorder %v2760, %v3277
      %vm3797 = vcmp.eq.s32.totalorder %v2760, %v3412
      %vm3798 = vcmp.eq.s32.totalorder %v2760, %v3547
      %vm3799 = vcmp.eq.s32.totalorder %v2760, %v3682
      %vm3800 = vcmp.eq.s32.totalorder %v2763, %v3277
      %vm3801 = vcmp.eq.s32.totalorder %v2763, %v3412
      %vm3802 = vcmp.eq.s32.totalorder %v2763, %v3547
      %vm3803 = vcmp.eq.s32.totalorder %v2763, %v3682
      %vm3804 = vcmp.eq.s32.totalorder %v2766, %v3277
      %vm3805 = vcmp.eq.s32.totalorder %v2766, %v3412
      %vm3806 = vcmp.eq.s32.totalorder %v2766, %v3547
      %vm3807 = vcmp.eq.s32.totalorder %v2766, %v3682
      %vm3808 = vcmp.eq.s32.totalorder %v2769, %v3277
      %vm3809 = vcmp.eq.s32.totalorder %v2769, %v3412
      %vm3810 = vcmp.eq.s32.totalorder %v2769, %v3547
      %vm3811 = vcmp.eq.s32.totalorder %v2769, %v3682
      %vm3812 = vcmp.eq.s32.totalorder %v2772, %v3277
      %vm3813 = vcmp.eq.s32.totalorder %v2772, %v3412
      %vm3814 = vcmp.eq.s32.totalorder %v2772, %v3547
      %vm3815 = vcmp.eq.s32.totalorder %v2772, %v3682
      %vm3816 = vcmp.eq.s32.totalorder %v2775, %v3277
      %vm3817 = vcmp.eq.s32.totalorder %v2775, %v3412
      %vm3818 = vcmp.eq.s32.totalorder %v2775, %v3547
      %vm3819 = vcmp.eq.s32.totalorder %v2775, %v3682
      %vm3820 = vcmp.eq.s32.totalorder %v2778, %v3277
      %vm3821 = vcmp.eq.s32.totalorder %v2778, %v3412
      %vm3822 = vcmp.eq.s32.totalorder %v2778, %v3547
      %vm3823 = vcmp.eq.s32.totalorder %v2778, %v3682
      %vm3824 = vcmp.eq.s32.totalorder %v2781, %v3277
      %vm3825 = vcmp.eq.s32.totalorder %v2781, %v3412
      %vm3826 = vcmp.eq.s32.totalorder %v2781, %v3547
      %vm3827 = vcmp.eq.s32.totalorder %v2781, %v3682
      %vm3828 = vcmp.eq.s32.totalorder %v2784, %v3277
      %vm3829 = vcmp.eq.s32.totalorder %v2784, %v3412
      %vm3830 = vcmp.eq.s32.totalorder %v2784, %v3547
      %vm3831 = vcmp.eq.s32.totalorder %v2784, %v3682
      %vm3832 = vcmp.eq.s32.totalorder %v2787, %v3277
      %vm3833 = vcmp.eq.s32.totalorder %v2787, %v3412
      %vm3834 = vcmp.eq.s32.totalorder %v2787, %v3547
      %vm3835 = vcmp.eq.s32.totalorder %v2787, %v3682
      %vm3836 = vcmp.eq.s32.totalorder %v2790, %v3277
      %vm3837 = vcmp.eq.s32.totalorder %v2790, %v3412
      %vm3838 = vcmp.eq.s32.totalorder %v2790, %v3547
      %vm3839 = vcmp.eq.s32.totalorder %v2790, %v3682
      %vm3840 = vcmp.eq.s32.totalorder %v2793, %v3277
      %vm3841 = vcmp.eq.s32.totalorder %v2793, %v3412
      %vm3842 = vcmp.eq.s32.totalorder %v2793, %v3547
      %vm3843 = vcmp.eq.s32.totalorder %v2793, %v3682
      %vm3844 = vcmp.eq.s32.totalorder %v2796, %v3277
      %vm3845 = vcmp.eq.s32.totalorder %v2796, %v3412
      %vm3846 = vcmp.eq.s32.totalorder %v2796, %v3547
      %vm3847 = vcmp.eq.s32.totalorder %v2796, %v3682
      %vm3848 = vcmp.eq.s32.totalorder %v2799, %v3277
      %vm3849 = vcmp.eq.s32.totalorder %v2799, %v3412
      %vm3850 = vcmp.eq.s32.totalorder %v2799, %v3547
      %vm3851 = vcmp.eq.s32.totalorder %v2799, %v3682
      %vm3852 = vcmp.eq.s32.totalorder %v2802, %v3277
      %vm3853 = vcmp.eq.s32.totalorder %v2802, %v3412
      %vm3854 = vcmp.eq.s32.totalorder %v2802, %v3547
      %vm3855 = vcmp.eq.s32.totalorder %v2802, %v3682
      %vm3856 = vcmp.eq.s32.totalorder %v2805, %v3277
      %vm3857 = vcmp.eq.s32.totalorder %v2805, %v3412
      %vm3858 = vcmp.eq.s32.totalorder %v2805, %v3547
      %vm3859 = vcmp.eq.s32.totalorder %v2805, %v3682
      %vm3860 = vcmp.eq.s32.totalorder %v2808, %v3277
      %vm3861 = vcmp.eq.s32.totalorder %v2808, %v3412
      %vm3862 = vcmp.eq.s32.totalorder %v2808, %v3547
      %vm3863 = vcmp.eq.s32.totalorder %v2808, %v3682
      %vm3864 = vcmp.eq.s32.totalorder %v2811, %v3277
      %vm3865 = vcmp.eq.s32.totalorder %v2811, %v3412
      %vm3866 = vcmp.eq.s32.totalorder %v2811, %v3547
      %vm3867 = vcmp.eq.s32.totalorder %v2811, %v3682
      %vm3868 = vcmp.eq.s32.totalorder %v2814, %v3277
      %vm3869 = vcmp.eq.s32.totalorder %v2814, %v3412
      %vm3870 = vcmp.eq.s32.totalorder %v2814, %v3547
      %vm3871 = vcmp.eq.s32.totalorder %v2814, %v3682
      %vm3872 = vcmp.eq.s32.totalorder %v2817, %v3277
      %vm3873 = vcmp.eq.s32.totalorder %v2817, %v3412
      %vm3874 = vcmp.eq.s32.totalorder %v2817, %v3547
      %vm3875 = vcmp.eq.s32.totalorder %v2817, %v3682
      %vm3876 = vcmp.eq.s32.totalorder %v2820, %v3277
      %vm3877 = vcmp.eq.s32.totalorder %v2820, %v3412
      %vm3878 = vcmp.eq.s32.totalorder %v2820, %v3547
      %vm3879 = vcmp.eq.s32.totalorder %v2820, %v3682
      %vm3880 = vcmp.eq.s32.totalorder %v2823, %v3277
      %vm3881 = vcmp.eq.s32.totalorder %v2823, %v3412
      %vm3882 = vcmp.eq.s32.totalorder %v2823, %v3547
      %vm3883 = vcmp.eq.s32.totalorder %v2823, %v3682
      %vm3884 = vcmp.eq.s32.totalorder %v2826, %v3277
      %vm3885 = vcmp.eq.s32.totalorder %v2826, %v3412
      %vm3886 = vcmp.eq.s32.totalorder %v2826, %v3547
      %vm3887 = vcmp.eq.s32.totalorder %v2826, %v3682
      %vm3888 = vcmp.eq.s32.totalorder %v2829, %v3277
      %vm3889 = vcmp.eq.s32.totalorder %v2829, %v3412
      %vm3890 = vcmp.eq.s32.totalorder %v2829, %v3547
      %vm3891 = vcmp.eq.s32.totalorder %v2829, %v3682
      %vm3892 = vcmp.eq.s32.totalorder %v2832, %v3277
      %vm3893 = vcmp.eq.s32.totalorder %v2832, %v3412
      %vm3894 = vcmp.eq.s32.totalorder %v2832, %v3547
      %vm3895 = vcmp.eq.s32.totalorder %v2832, %v3682
      %vm3896 = vcmp.eq.s32.totalorder %v2835, %v3277
      %vm3897 = vcmp.eq.s32.totalorder %v2835, %v3412
      %vm3898 = vcmp.eq.s32.totalorder %v2835, %v3547
      %vm3899 = vcmp.eq.s32.totalorder %v2835, %v3682
      %vm3900 = vcmp.eq.s32.totalorder %v2838, %v3277
      %vm3901 = vcmp.eq.s32.totalorder %v2838, %v3412
      %vm3902 = vcmp.eq.s32.totalorder %v2838, %v3547
      %vm3903 = vcmp.eq.s32.totalorder %v2838, %v3682
      %vm3904 = vcmp.eq.s32.totalorder %v2841, %v3277
      %vm3905 = vcmp.eq.s32.totalorder %v2841, %v3412
      %vm3906 = vcmp.eq.s32.totalorder %v2841, %v3547
      %vm3907 = vcmp.eq.s32.totalorder %v2841, %v3682
      %vm3908 = vcmp.eq.s32.totalorder %v2844, %v3277
      %vm3909 = vcmp.eq.s32.totalorder %v2844, %v3412
      %vm3910 = vcmp.eq.s32.totalorder %v2844, %v3547
      %vm3911 = vcmp.eq.s32.totalorder %v2844, %v3682
      %vm3912 = vcmp.eq.s32.totalorder %v2847, %v3277
      %vm3913 = vcmp.eq.s32.totalorder %v2847, %v3412
      %vm3914 = vcmp.eq.s32.totalorder %v2847, %v3547
      %vm3915 = vcmp.eq.s32.totalorder %v2847, %v3682
      %vm3916 = vcmp.eq.s32.totalorder %v2850, %v3277
      %vm3917 = vcmp.eq.s32.totalorder %v2850, %v3412
      %vm3918 = vcmp.eq.s32.totalorder %v2850, %v3547
      %vm3919 = vcmp.eq.s32.totalorder %v2850, %v3682
      %vm3920 = vcmp.eq.s32.totalorder %v2853, %v3277
      %vm3921 = vcmp.eq.s32.totalorder %v2853, %v3412
      %vm3922 = vcmp.eq.s32.totalorder %v2853, %v3547
      %vm3923 = vcmp.eq.s32.totalorder %v2853, %v3682
      %vm3924 = vcmp.eq.s32.totalorder %v2856, %v3277
      %vm3925 = vcmp.eq.s32.totalorder %v2856, %v3412
      %vm3926 = vcmp.eq.s32.totalorder %v2856, %v3547
      %vm3927 = vcmp.eq.s32.totalorder %v2856, %v3682
      %vm3928 = vcmp.eq.s32.totalorder %v2859, %v3277
      %vm3929 = vcmp.eq.s32.totalorder %v2859, %v3412
      %vm3930 = vcmp.eq.s32.totalorder %v2859, %v3547
      %vm3931 = vcmp.eq.s32.totalorder %v2859, %v3682
      %vm3932 = vcmp.eq.s32.totalorder %v2862, %v3277
      %vm3933 = vcmp.eq.s32.totalorder %v2862, %v3412
      %vm3934 = vcmp.eq.s32.totalorder %v2862, %v3547
      %vm3935 = vcmp.eq.s32.totalorder %v2862, %v3682
      %vm3936 = vcmp.eq.s32.totalorder %v2865, %v3277
      %vm3937 = vcmp.eq.s32.totalorder %v2865, %v3412
      %vm3938 = vcmp.eq.s32.totalorder %v2865, %v3547
      %vm3939 = vcmp.eq.s32.totalorder %v2865, %v3682
      %vm3940 = vcmp.eq.s32.totalorder %v2868, %v3277
      %vm3941 = vcmp.eq.s32.totalorder %v2868, %v3412
      %vm3942 = vcmp.eq.s32.totalorder %v2868, %v3547
      %vm3943 = vcmp.eq.s32.totalorder %v2868, %v3682
      %vm3944 = vcmp.eq.s32.totalorder %v2871, %v3277
      %vm3945 = vcmp.eq.s32.totalorder %v2871, %v3412
      %vm3946 = vcmp.eq.s32.totalorder %v2871, %v3547
      %vm3947 = vcmp.eq.s32.totalorder %v2871, %v3682
      %vm3948 = vcmp.eq.s32.totalorder %v2874, %v3277
      %vm3949 = vcmp.eq.s32.totalorder %v2874, %v3412
      %vm3950 = vcmp.eq.s32.totalorder %v2874, %v3547
      %vm3951 = vcmp.eq.s32.totalorder %v2874, %v3682
      %vm3952 = vcmp.eq.s32.totalorder %v2877, %v3277
      %vm3953 = vcmp.eq.s32.totalorder %v2877, %v3412
      %vm3954 = vcmp.eq.s32.totalorder %v2877, %v3547
      %vm3955 = vcmp.eq.s32.totalorder %v2877, %v3682
      %vm3956 = vcmp.eq.s32.totalorder %v2880, %v3277
      %vm3957 = vcmp.eq.s32.totalorder %v2880, %v3412
      %vm3958 = vcmp.eq.s32.totalorder %v2880, %v3547
      %vm3959 = vcmp.eq.s32.totalorder %v2880, %v3682
      %vm3960 = vcmp.eq.s32.totalorder %v2883, %v3277
      %vm3961 = vcmp.eq.s32.totalorder %v2883, %v3412
      %vm3962 = vcmp.eq.s32.totalorder %v2883, %v3547
      %vm3963 = vcmp.eq.s32.totalorder %v2883, %v3682
      %vm3964 = vcmp.eq.s32.totalorder %v2886, %v3277
      %vm3965 = vcmp.eq.s32.totalorder %v2886, %v3412
      %vm3966 = vcmp.eq.s32.totalorder %v2886, %v3547
      %vm3967 = vcmp.eq.s32.totalorder %v2886, %v3682
      %v3968 = vsel %vm3712, 1, 0
      %v3969 = vsel %vm3713, 1, 0
      %v3970 = vsel %vm3714, 1, 0
      %v3971 = vsel %vm3715, 1, 0
      %v3972 = vsel %vm3716, 1, 0
      %v3973 = vsel %vm3717, 1, 0
      %v3974 = vsel %vm3718, 1, 0
      %v3975 = vsel %vm3719, 1, 0
      %v3976 = vsel %vm3720, 1, 0
      %v3977 = vsel %vm3721, 1, 0
      %v3978 = vsel %vm3722, 1, 0
      %v3979 = vsel %vm3723, 1, 0
      %v3980 = vsel %vm3724, 1, 0
      %v3981 = vsel %vm3725, 1, 0
      %v3982 = vsel %vm3726, 1, 0
      %v3983 = vsel %vm3727, 1, 0
      %v3984 = vsel %vm3728, 1, 0
      %v3985 = vsel %vm3729, 1, 0
      %v3986 = vsel %vm3730, 1, 0
      %v3987 = vsel %vm3731, 1, 0
      %v3988 = vsel %vm3732, 1, 0
      %v3989 = vsel %vm3733, 1, 0
      %v3990 = vsel %vm3734, 1, 0
      %v3991 = vsel %vm3735, 1, 0
      %v3992 = vsel %vm3736, 1, 0
      %v3993 = vsel %vm3737, 1, 0
      %v3994 = vsel %vm3738, 1, 0
      %v3995 = vsel %vm3739, 1, 0
      %v3996 = vsel %vm3740, 1, 0
      %v3997 = vsel %vm3741, 1, 0
      %v3998 = vsel %vm3742, 1, 0
      %v3999 = vsel %vm3743, 1, 0
      %v4000 = vsel %vm3744, 1, 0
      %v4001 = vsel %vm3745, 1, 0
      %v4002 = vsel %vm3746, 1, 0
      %v4003 = vsel %vm3747, 1, 0
      %v4004 = vsel %vm3748, 1, 0
      %v4005 = vsel %vm3749, 1, 0
      %v4006 = vsel %vm3750, 1, 0
      %v4007 = vsel %vm3751, 1, 0
      %v4008 = vsel %vm3752, 1, 0
      %v4009 = vsel %vm3753, 1, 0
      %v4010 = vsel %vm3754, 1, 0
      %v4011 = vsel %vm3755, 1, 0
      %v4012 = vsel %vm3756, 1, 0
      %v4013 = vsel %vm3757, 1, 0
      %v4014 = vsel %vm3758, 1, 0
      %v4015 = vsel %vm3759, 1, 0
      %v4016 = vsel %vm3760, 1, 0
      %v4017 = vsel %vm3761, 1, 0
      %v4018 = vsel %vm3762, 1, 0
      %v4019 = vsel %vm3763, 1, 0
      %v4020 = vsel %vm3764, 1, 0
      %v4021 = vsel %vm3765, 1, 0
      %v4022 = vsel %vm3766, 1, 0
      %v4023 = vsel %vm3767, 1, 0
      %v4024 = vsel %vm3768, 1, 0
      %v4025 = vsel %vm3769, 1, 0
      %v4026 = vsel %vm3770, 1, 0
      %v4027 = vsel %vm3771, 1, 0
      %v4028 = vsel %vm3772, 1, 0
      %v4029 = vsel %vm3773, 1, 0
      %v4030 = vsel %vm3774, 1, 0
      %v4031 = vsel %vm3775, 1, 0
      %v4032 = vsel %vm3776, 1, 0
      %v4033 = vsel %vm3777, 1, 0
      %v4034 = vsel %vm3778, 1, 0
      %v4035 = vsel %vm3779, 1, 0
      %v4036 = vsel %vm3780, 1, 0
      %v4037 = vsel %vm3781, 1, 0
      %v4038 = vsel %vm3782, 1, 0
      %v4039 = vsel %vm3783, 1, 0
      %v4040 = vsel %vm3784, 1, 0
      %v4041 = vsel %vm3785, 1, 0
      %v4042 = vsel %vm3786, 1, 0
      %v4043 = vsel %vm3787, 1, 0
      %v4044 = vsel %vm3788, 1, 0
      %v4045 = vsel %vm3789, 1, 0
      %v4046 = vsel %vm3790, 1, 0
      %v4047 = vsel %vm3791, 1, 0
      %v4048 = vsel %vm3792, 1, 0
      %v4049 = vsel %vm3793, 1, 0
      %v4050 = vsel %vm3794, 1, 0
      %v4051 = vsel %vm3795, 1, 0
      %v4052 = vsel %vm3796, 1, 0
      %v4053 = vsel %vm3797, 1, 0
      %v4054 = vsel %vm3798, 1, 0
      %v4055 = vsel %vm3799, 1, 0
      %v4056 = vsel %vm3800, 1, 0
      %v4057 = vsel %vm3801, 1, 0
      %v4058 = vsel %vm3802, 1, 0
      %v4059 = vsel %vm3803, 1, 0
      %v4060 = vsel %vm3804, 1, 0
      %v4061 = vsel %vm3805, 1, 0
      %v4062 = vsel %vm3806, 1, 0
      %v4063 = vsel %vm3807, 1, 0
      %v4064 = vsel %vm3808, 1, 0
      %v4065 = vsel %vm3809, 1, 0
      %v4066 = vsel %vm3810, 1, 0
      %v4067 = vsel %vm3811, 1, 0
      %v4068 = vsel %vm3812, 1, 0
      %v4069 = vsel %vm3813, 1, 0
      %v4070 = vsel %vm3814, 1, 0
      %v4071 = vsel %vm3815, 1, 0
      %v4072 = vsel %vm3816, 1, 0
      %v4073 = vsel %vm3817, 1, 0
      %v4074 = vsel %vm3818, 1, 0
      %v4075 = vsel %vm3819, 1, 0
      %v4076 = vsel %vm3820, 1, 0
      %v4077 = vsel %vm3821, 1, 0
      %v4078 = vsel %vm3822, 1, 0
      %v4079 = vsel %vm3823, 1, 0
      %v4080 = vsel %vm3824, 1, 0
      %v4081 = vsel %vm3825, 1, 0
      %v4082 = vsel %vm3826, 1, 0
      %v4083 = vsel %vm3827, 1, 0
      %v4084 = vsel %vm3828, 1, 0
      %v4085 = vsel %vm3829, 1, 0
      %v4086 = vsel %vm3830, 1, 0
      %v4087 = vsel %vm3831, 1, 0
      %v4088 = vsel %vm3832, 1, 0
      %v4089 = vsel %vm3833, 1, 0
      %v4090 = vsel %vm3834, 1, 0
      %v4091 = vsel %vm3835, 1, 0
      %v4092 = vsel %vm3836, 1, 0
      %v4093 = vsel %vm3837, 1, 0
      %v4094 = vsel %vm3838, 1, 0
      %v4095 = vsel %vm3839, 1, 0
      %v4096 = vsel %vm3840, 1, 0
      %v4097 = vsel %vm3841, 1, 0
      %v4098 = vsel %vm3842, 1, 0
      %v4099 = vsel %vm3843, 1, 0
      %v4100 = vsel %vm3844, 1, 0
      %v4101 = vsel %vm3845, 1, 0
      %v4102 = vsel %vm3846, 1, 0
      %v4103 = vsel %vm3847, 1, 0
      %v4104 = vsel %vm3848, 1, 0
      %v4105 = vsel %vm3849, 1, 0
      %v4106 = vsel %vm3850, 1, 0
      %v4107 = vsel %vm3851, 1, 0
      %v4108 = vsel %vm3852, 1, 0
      %v4109 = vsel %vm3853, 1, 0
      %v4110 = vsel %vm3854, 1, 0
      %v4111 = vsel %vm3855, 1, 0
      %v4112 = vsel %vm3856, 1, 0
      %v4113 = vsel %vm3857, 1, 0
      %v4114 = vsel %vm3858, 1, 0
      %v4115 = vsel %vm3859, 1, 0
      %v4116 = vsel %vm3860, 1, 0
      %v4117 = vsel %vm3861, 1, 0
      %v4118 = vsel %vm3862, 1, 0
      %v4119 = vsel %vm3863, 1, 0
      %v4120 = vsel %vm3864, 1, 0
      %v4121 = vsel %vm3865, 1, 0
      %v4122 = vsel %vm3866, 1, 0
      %v4123 = vsel %vm3867, 1, 0
      %v4124 = vsel %vm3868, 1, 0
      %v4125 = vsel %vm3869, 1, 0
      %v4126 = vsel %vm3870, 1, 0
      %v4127 = vsel %vm3871, 1, 0
      %v4128 = vsel %vm3872, 1, 0
      %v4129 = vsel %vm3873, 1, 0
      %v4130 = vsel %vm3874, 1, 0
      %v4131 = vsel %vm3875, 1, 0
      %v4132 = vsel %vm3876, 1, 0
      %v4133 = vsel %vm3877, 1, 0
      %v4134 = vsel %vm3878, 1, 0
      %v4135 = vsel %vm3879, 1, 0
      %v4136 = vsel %vm3880, 1, 0
      %v4137 = vsel %vm3881, 1, 0
      %v4138 = vsel %vm3882, 1, 0
      %v4139 = vsel %vm3883, 1, 0
      %v4140 = vsel %vm3884, 1, 0
      %v4141 = vsel %vm3885, 1, 0
      %v4142 = vsel %vm3886, 1, 0
      %v4143 = vsel %vm3887, 1, 0
      %v4144 = vsel %vm3888, 1, 0
      %v4145 = vsel %vm3889, 1, 0
      %v4146 = vsel %vm3890, 1, 0
      %v4147 = vsel %vm3891, 1, 0
      %v4148 = vsel %vm3892, 1, 0
      %v4149 = vsel %vm3893, 1, 0
      %v4150 = vsel %vm3894, 1, 0
      %v4151 = vsel %vm3895, 1, 0
      %v4152 = vsel %vm3896, 1, 0
      %v4153 = vsel %vm3897, 1, 0
      %v4154 = vsel %vm3898, 1, 0
      %v4155 = vsel %vm3899, 1, 0
      %v4156 = vsel %vm3900, 1, 0
      %v4157 = vsel %vm3901, 1, 0
      %v4158 = vsel %vm3902, 1, 0
      %v4159 = vsel %vm3903, 1, 0
      %v4160 = vsel %vm3904, 1, 0
      %v4161 = vsel %vm3905, 1, 0
      %v4162 = vsel %vm3906, 1, 0
      %v4163 = vsel %vm3907, 1, 0
      %v4164 = vsel %vm3908, 1, 0
      %v4165 = vsel %vm3909, 1, 0
      %v4166 = vsel %vm3910, 1, 0
      %v4167 = vsel %vm3911, 1, 0
      %v4168 = vsel %vm3912, 1, 0
      %v4169 = vsel %vm3913, 1, 0
      %v4170 = vsel %vm3914, 1, 0
      %v4171 = vsel %vm3915, 1, 0
      %v4172 = vsel %vm3916, 1, 0
      %v4173 = vsel %vm3917, 1, 0
      %v4174 = vsel %vm3918, 1, 0
      %v4175 = vsel %vm3919, 1, 0
      %v4176 = vsel %vm3920, 1, 0
      %v4177 = vsel %vm3921, 1, 0
      %v4178 = vsel %vm3922, 1, 0
      %v4179 = vsel %vm3923, 1, 0
      %v4180 = vsel %vm3924, 1, 0
      %v4181 = vsel %vm3925, 1, 0
      %v4182 = vsel %vm3926, 1, 0
      %v4183 = vsel %vm3927, 1, 0
      %v4184 = vsel %vm3928, 1, 0
      %v4185 = vsel %vm3929, 1, 0
      %v4186 = vsel %vm3930, 1, 0
      %v4187 = vsel %vm3931, 1, 0
      %v4188 = vsel %vm3932, 1, 0
      %v4189 = vsel %vm3933, 1, 0
      %v4190 = vsel %vm3934, 1, 0
      %v4191 = vsel %vm3935, 1, 0
      %v4192 = vsel %vm3936, 1, 0
      %v4193 = vsel %vm3937, 1, 0
      %v4194 = vsel %vm3938, 1, 0
      %v4195 = vsel %vm3939, 1, 0
      %v4196 = vsel %vm3940, 1, 0
      %v4197 = vsel %vm3941, 1, 0
      %v4198 = vsel %vm3942, 1, 0
      %v4199 = vsel %vm3943, 1, 0
      %v4200 = vsel %vm3944, 1, 0
      %v4201 = vsel %vm3945, 1, 0
      %v4202 = vsel %vm3946, 1, 0
      %v4203 = vsel %vm3947, 1, 0
      %v4204 = vsel %vm3948, 1, 0
      %v4205 = vsel %vm3949, 1, 0
      %v4206 = vsel %vm3950, 1, 0
      %v4207 = vsel %vm3951, 1, 0
      %v4208 = vsel %vm3952, 1, 0
      %v4209 = vsel %vm3953, 1, 0
      %v4210 = vsel %vm3954, 1, 0
      %v4211 = vsel %vm3955, 1, 0
      %v4212 = vsel %vm3956, 1, 0
      %v4213 = vsel %vm3957, 1, 0
      %v4214 = vsel %vm3958, 1, 0
      %v4215 = vsel %vm3959, 1, 0
      %v4216 = vsel %vm3960, 1, 0
      %v4217 = vsel %vm3961, 1, 0
      %v4218 = vsel %vm3962, 1, 0
      %v4219 = vsel %vm3963, 1, 0
      %v4220 = vsel %vm3964, 1, 0
      %v4221 = vsel %vm3965, 1, 0
      %v4222 = vsel %vm3966, 1, 0
      %v4223 = vsel %vm3967, 1, 0
      %v4224 = vcvt.s32.f32 %v3968
      %v4225 = vcvt.s32.f32 %v3969
      %v4226 = vcvt.s32.f32 %v3970
      %v4227 = vcvt.s32.f32 %v3971
      %v4228 = vcvt.s32.f32 %v3972
      %v4229 = vcvt.s32.f32 %v3973
      %v4230 = vcvt.s32.f32 %v3974
      %v4231 = vcvt.s32.f32 %v3975
      %v4232 = vcvt.s32.f32 %v3976
      %v4233 = vcvt.s32.f32 %v3977
      %v4234 = vcvt.s32.f32 %v3978
      %v4235 = vcvt.s32.f32 %v3979
      %v4236 = vcvt.s32.f32 %v3980
      %v4237 = vcvt.s32.f32 %v3981
      %v4238 = vcvt.s32.f32 %v3982
      %v4239 = vcvt.s32.f32 %v3983
      %v4240 = vcvt.s32.f32 %v3984
      %v4241 = vcvt.s32.f32 %v3985
      %v4242 = vcvt.s32.f32 %v3986
      %v4243 = vcvt.s32.f32 %v3987
      %v4244 = vcvt.s32.f32 %v3988
      %v4245 = vcvt.s32.f32 %v3989
      %v4246 = vcvt.s32.f32 %v3990
      %v4247 = vcvt.s32.f32 %v3991
      %v4248 = vcvt.s32.f32 %v3992
      %v4249 = vcvt.s32.f32 %v3993
      %v4250 = vcvt.s32.f32 %v3994
      %v4251 = vcvt.s32.f32 %v3995
      %v4252 = vcvt.s32.f32 %v3996
      %v4253 = vcvt.s32.f32 %v3997
      %v4254 = vcvt.s32.f32 %v3998
      %v4255 = vcvt.s32.f32 %v3999
      %v4256 = vcvt.s32.f32 %v4000
      %v4257 = vcvt.s32.f32 %v4001
      %v4258 = vcvt.s32.f32 %v4002
      %v4259 = vcvt.s32.f32 %v4003
      %v4260 = vcvt.s32.f32 %v4004
      %v4261 = vcvt.s32.f32 %v4005
      %v4262 = vcvt.s32.f32 %v4006
      %v4263 = vcvt.s32.f32 %v4007
      %v4264 = vcvt.s32.f32 %v4008
      %v4265 = vcvt.s32.f32 %v4009
      %v4266 = vcvt.s32.f32 %v4010
      %v4267 = vcvt.s32.f32 %v4011
      %v4268 = vcvt.s32.f32 %v4012
      %v4269 = vcvt.s32.f32 %v4013
      %v4270 = vcvt.s32.f32 %v4014
      %v4271 = vcvt.s32.f32 %v4015
      %v4272 = vcvt.s32.f32 %v4016
      %v4273 = vcvt.s32.f32 %v4017
      %v4274 = vcvt.s32.f32 %v4018
      %v4275 = vcvt.s32.f32 %v4019
      %v4276 = vcvt.s32.f32 %v4020
      %v4277 = vcvt.s32.f32 %v4021
      %v4278 = vcvt.s32.f32 %v4022
      %v4279 = vcvt.s32.f32 %v4023
      %v4280 = vcvt.s32.f32 %v4024
      %v4281 = vcvt.s32.f32 %v4025
      %v4282 = vcvt.s32.f32 %v4026
      %v4283 = vcvt.s32.f32 %v4027
      %v4284 = vcvt.s32.f32 %v4028
      %v4285 = vcvt.s32.f32 %v4029
      %v4286 = vcvt.s32.f32 %v4030
      %v4287 = vcvt.s32.f32 %v4031
      %v4288 = vcvt.s32.f32 %v4032
      %v4289 = vcvt.s32.f32 %v4033
      %v4290 = vcvt.s32.f32 %v4034
      %v4291 = vcvt.s32.f32 %v4035
      %v4292 = vcvt.s32.f32 %v4036
      %v4293 = vcvt.s32.f32 %v4037
      %v4294 = vcvt.s32.f32 %v4038
      %v4295 = vcvt.s32.f32 %v4039
      %v4296 = vcvt.s32.f32 %v4040
      %v4297 = vcvt.s32.f32 %v4041
      %v4298 = vcvt.s32.f32 %v4042
      %v4299 = vcvt.s32.f32 %v4043
      %v4300 = vcvt.s32.f32 %v4044
      %v4301 = vcvt.s32.f32 %v4045
      %v4302 = vcvt.s32.f32 %v4046
      %v4303 = vcvt.s32.f32 %v4047
      %v4304 = vcvt.s32.f32 %v4048
      %v4305 = vcvt.s32.f32 %v4049
      %v4306 = vcvt.s32.f32 %v4050
      %v4307 = vcvt.s32.f32 %v4051
      %v4308 = vcvt.s32.f32 %v4052
      %v4309 = vcvt.s32.f32 %v4053
      %v4310 = vcvt.s32.f32 %v4054
      %v4311 = vcvt.s32.f32 %v4055
      %v4312 = vcvt.s32.f32 %v4056
      %v4313 = vcvt.s32.f32 %v4057
      %v4314 = vcvt.s32.f32 %v4058
      %v4315 = vcvt.s32.f32 %v4059
      %v4316 = vcvt.s32.f32 %v4060
      %v4317 = vcvt.s32.f32 %v4061
      %v4318 = vcvt.s32.f32 %v4062
      %v4319 = vcvt.s32.f32 %v4063
      %v4320 = vcvt.s32.f32 %v4064
      %v4321 = vcvt.s32.f32 %v4065
      %v4322 = vcvt.s32.f32 %v4066
      %v4323 = vcvt.s32.f32 %v4067
      %v4324 = vcvt.s32.f32 %v4068
      %v4325 = vcvt.s32.f32 %v4069
      %v4326 = vcvt.s32.f32 %v4070
      %v4327 = vcvt.s32.f32 %v4071
      %v4328 = vcvt.s32.f32 %v4072
      %v4329 = vcvt.s32.f32 %v4073
      %v4330 = vcvt.s32.f32 %v4074
      %v4331 = vcvt.s32.f32 %v4075
      %v4332 = vcvt.s32.f32 %v4076
      %v4333 = vcvt.s32.f32 %v4077
      %v4334 = vcvt.s32.f32 %v4078
      %v4335 = vcvt.s32.f32 %v4079
      %v4336 = vcvt.s32.f32 %v4080
      %v4337 = vcvt.s32.f32 %v4081
      %v4338 = vcvt.s32.f32 %v4082
      %v4339 = vcvt.s32.f32 %v4083
      %v4340 = vcvt.s32.f32 %v4084
      %v4341 = vcvt.s32.f32 %v4085
      %v4342 = vcvt.s32.f32 %v4086
      %v4343 = vcvt.s32.f32 %v4087
      %v4344 = vcvt.s32.f32 %v4088
      %v4345 = vcvt.s32.f32 %v4089
      %v4346 = vcvt.s32.f32 %v4090
      %v4347 = vcvt.s32.f32 %v4091
      %v4348 = vcvt.s32.f32 %v4092
      %v4349 = vcvt.s32.f32 %v4093
      %v4350 = vcvt.s32.f32 %v4094
      %v4351 = vcvt.s32.f32 %v4095
      %v4352 = vcvt.s32.f32 %v4096
      %v4353 = vcvt.s32.f32 %v4097
      %v4354 = vcvt.s32.f32 %v4098
      %v4355 = vcvt.s32.f32 %v4099
      %v4356 = vcvt.s32.f32 %v4100
      %v4357 = vcvt.s32.f32 %v4101
      %v4358 = vcvt.s32.f32 %v4102
      %v4359 = vcvt.s32.f32 %v4103
      %v4360 = vcvt.s32.f32 %v4104
      %v4361 = vcvt.s32.f32 %v4105
      %v4362 = vcvt.s32.f32 %v4106
      %v4363 = vcvt.s32.f32 %v4107
      %v4364 = vcvt.s32.f32 %v4108
      %v4365 = vcvt.s32.f32 %v4109
      %v4366 = vcvt.s32.f32 %v4110
      %v4367 = vcvt.s32.f32 %v4111
      %v4368 = vcvt.s32.f32 %v4112
      %v4369 = vcvt.s32.f32 %v4113
      %v4370 = vcvt.s32.f32 %v4114
      %v4371 = vcvt.s32.f32 %v4115
      %v4372 = vcvt.s32.f32 %v4116
      %v4373 = vcvt.s32.f32 %v4117
      %v4374 = vcvt.s32.f32 %v4118
      %v4375 = vcvt.s32.f32 %v4119
      %v4376 = vcvt.s32.f32 %v4120
      %v4377 = vcvt.s32.f32 %v4121
      %v4378 = vcvt.s32.f32 %v4122
      %v4379 = vcvt.s32.f32 %v4123
      %v4380 = vcvt.s32.f32 %v4124
      %v4381 = vcvt.s32.f32 %v4125
      %v4382 = vcvt.s32.f32 %v4126
      %v4383 = vcvt.s32.f32 %v4127
      %v4384 = vcvt.s32.f32 %v4128
      %v4385 = vcvt.s32.f32 %v4129
      %v4386 = vcvt.s32.f32 %v4130
      %v4387 = vcvt.s32.f32 %v4131
      %v4388 = vcvt.s32.f32 %v4132
      %v4389 = vcvt.s32.f32 %v4133
      %v4390 = vcvt.s32.f32 %v4134
      %v4391 = vcvt.s32.f32 %v4135
      %v4392 = vcvt.s32.f32 %v4136
      %v4393 = vcvt.s32.f32 %v4137
      %v4394 = vcvt.s32.f32 %v4138
      %v4395 = vcvt.s32.f32 %v4139
      %v4396 = vcvt.s32.f32 %v4140
      %v4397 = vcvt.s32.f32 %v4141
      %v4398 = vcvt.s32.f32 %v4142
      %v4399 = vcvt.s32.f32 %v4143
      %v4400 = vcvt.s32.f32 %v4144
      %v4401 = vcvt.s32.f32 %v4145
      %v4402 = vcvt.s32.f32 %v4146
      %v4403 = vcvt.s32.f32 %v4147
      %v4404 = vcvt.s32.f32 %v4148
      %v4405 = vcvt.s32.f32 %v4149
      %v4406 = vcvt.s32.f32 %v4150
      %v4407 = vcvt.s32.f32 %v4151
      %v4408 = vcvt.s32.f32 %v4152
      %v4409 = vcvt.s32.f32 %v4153
      %v4410 = vcvt.s32.f32 %v4154
      %v4411 = vcvt.s32.f32 %v4155
      %v4412 = vcvt.s32.f32 %v4156
      %v4413 = vcvt.s32.f32 %v4157
      %v4414 = vcvt.s32.f32 %v4158
      %v4415 = vcvt.s32.f32 %v4159
      %v4416 = vcvt.s32.f32 %v4160
      %v4417 = vcvt.s32.f32 %v4161
      %v4418 = vcvt.s32.f32 %v4162
      %v4419 = vcvt.s32.f32 %v4163
      %v4420 = vcvt.s32.f32 %v4164
      %v4421 = vcvt.s32.f32 %v4165
      %v4422 = vcvt.s32.f32 %v4166
      %v4423 = vcvt.s32.f32 %v4167
      %v4424 = vcvt.s32.f32 %v4168
      %v4425 = vcvt.s32.f32 %v4169
      %v4426 = vcvt.s32.f32 %v4170
      %v4427 = vcvt.s32.f32 %v4171
      %v4428 = vcvt.s32.f32 %v4172
      %v4429 = vcvt.s32.f32 %v4173
      %v4430 = vcvt.s32.f32 %v4174
      %v4431 = vcvt.s32.f32 %v4175
      %v4432 = vcvt.s32.f32 %v4176
      %v4433 = vcvt.s32.f32 %v4177
      %v4434 = vcvt.s32.f32 %v4178
      %v4435 = vcvt.s32.f32 %v4179
      %v4436 = vcvt.s32.f32 %v4180
      %v4437 = vcvt.s32.f32 %v4181
      %v4438 = vcvt.s32.f32 %v4182
      %v4439 = vcvt.s32.f32 %v4183
      %v4440 = vcvt.s32.f32 %v4184
      %v4441 = vcvt.s32.f32 %v4185
      %v4442 = vcvt.s32.f32 %v4186
      %v4443 = vcvt.s32.f32 %v4187
      %v4444 = vcvt.s32.f32 %v4188
      %v4445 = vcvt.s32.f32 %v4189
      %v4446 = vcvt.s32.f32 %v4190
      %v4447 = vcvt.s32.f32 %v4191
      %v4448 = vcvt.s32.f32 %v4192
      %v4449 = vcvt.s32.f32 %v4193
      %v4450 = vcvt.s32.f32 %v4194
      %v4451 = vcvt.s32.f32 %v4195
      %v4452 = vcvt.s32.f32 %v4196
      %v4453 = vcvt.s32.f32 %v4197
      %v4454 = vcvt.s32.f32 %v4198
      %v4455 = vcvt.s32.f32 %v4199
      %v4456 = vcvt.s32.f32 %v4200
      %v4457 = vcvt.s32.f32 %v4201
      %v4458 = vcvt.s32.f32 %v4202
      %v4459 = vcvt.s32.f32 %v4203
      %v4460 = vcvt.s32.f32 %v4204
      %v4461 = vcvt.s32.f32 %v4205
      %v4462 = vcvt.s32.f32 %v4206
      %v4463 = vcvt.s32.f32 %v4207
      %v4464 = vcvt.s32.f32 %v4208
      %v4465 = vcvt.s32.f32 %v4209
      %v4466 = vcvt.s32.f32 %v4210
      %v4467 = vcvt.s32.f32 %v4211
      %v4468 = vcvt.s32.f32 %v4212
      %v4469 = vcvt.s32.f32 %v4213
      %v4470 = vcvt.s32.f32 %v4214
      %v4471 = vcvt.s32.f32 %v4215
      %v4472 = vcvt.s32.f32 %v4216
      %v4473 = vcvt.s32.f32 %v4217
      %v4474 = vcvt.s32.f32 %v4218
      %v4475 = vcvt.s32.f32 %v4219
      %v4476 = vcvt.s32.f32 %v4220
      %v4477 = vcvt.s32.f32 %v4221
      %v4478 = vcvt.s32.f32 %v4222
      %v4479 = vcvt.s32.f32 %v4223
      %v4480 = vpack.c.bf16 %v4228, %v4224
      %v4481 = vpack.c.bf16 %v4229, %v4225
      %v4482 = vpack.c.bf16 %v4230, %v4226
      %v4483 = vpack.c.bf16 %v4231, %v4227
      %v4484 = vpack.c.bf16 %v4236, %v4232
      %v4485 = vpack.c.bf16 %v4237, %v4233
      %v4486 = vpack.c.bf16 %v4238, %v4234
      %v4487 = vpack.c.bf16 %v4239, %v4235
      %v4488 = vpack.c.bf16 %v4244, %v4240
      %v4489 = vpack.c.bf16 %v4245, %v4241
      %v4490 = vpack.c.bf16 %v4246, %v4242
      %v4491 = vpack.c.bf16 %v4247, %v4243
      %v4492 = vpack.c.bf16 %v4252, %v4248
      %v4493 = vpack.c.bf16 %v4253, %v4249
      %v4494 = vpack.c.bf16 %v4254, %v4250
      %v4495 = vpack.c.bf16 %v4255, %v4251
      %v4496 = vpack.c.bf16 %v4260, %v4256
      %v4497 = vpack.c.bf16 %v4261, %v4257
      %v4498 = vpack.c.bf16 %v4262, %v4258
      %v4499 = vpack.c.bf16 %v4263, %v4259
      %v4500 = vpack.c.bf16 %v4268, %v4264
      %v4501 = vpack.c.bf16 %v4269, %v4265
      %v4502 = vpack.c.bf16 %v4270, %v4266
      %v4503 = vpack.c.bf16 %v4271, %v4267
      %v4504 = vpack.c.bf16 %v4276, %v4272
      %v4505 = vpack.c.bf16 %v4277, %v4273
      %v4506 = vpack.c.bf16 %v4278, %v4274
      %v4507 = vpack.c.bf16 %v4279, %v4275
      %v4508 = vpack.c.bf16 %v4284, %v4280
      %v4509 = vpack.c.bf16 %v4285, %v4281
      %v4510 = vpack.c.bf16 %v4286, %v4282
      %v4511 = vpack.c.bf16 %v4287, %v4283
      %v4512 = vpack.c.bf16 %v4292, %v4288
      %v4513 = vpack.c.bf16 %v4293, %v4289
      %v4514 = vpack.c.bf16 %v4294, %v4290
      %v4515 = vpack.c.bf16 %v4295, %v4291
      %v4516 = vpack.c.bf16 %v4300, %v4296
      %v4517 = vpack.c.bf16 %v4301, %v4297
      %v4518 = vpack.c.bf16 %v4302, %v4298
      %v4519 = vpack.c.bf16 %v4303, %v4299
      %v4520 = vpack.c.bf16 %v4308, %v4304
      %v4521 = vpack.c.bf16 %v4309, %v4305
      %v4522 = vpack.c.bf16 %v4310, %v4306
      %v4523 = vpack.c.bf16 %v4311, %v4307
      %v4524 = vpack.c.bf16 %v4316, %v4312
      %v4525 = vpack.c.bf16 %v4317, %v4313
      %v4526 = vpack.c.bf16 %v4318, %v4314
      %v4527 = vpack.c.bf16 %v4319, %v4315
      %v4528 = vpack.c.bf16 %v4324, %v4320
      %v4529 = vpack.c.bf16 %v4325, %v4321
      %v4530 = vpack.c.bf16 %v4326, %v4322
      %v4531 = vpack.c.bf16 %v4327, %v4323
      %v4532 = vpack.c.bf16 %v4332, %v4328
      %v4533 = vpack.c.bf16 %v4333, %v4329
      %v4534 = vpack.c.bf16 %v4334, %v4330
      %v4535 = vpack.c.bf16 %v4335, %v4331
      %v4536 = vpack.c.bf16 %v4340, %v4336
      %v4537 = vpack.c.bf16 %v4341, %v4337
      %v4538 = vpack.c.bf16 %v4342, %v4338
      %v4539 = vpack.c.bf16 %v4343, %v4339
      %v4540 = vpack.c.bf16 %v4348, %v4344
      %v4541 = vpack.c.bf16 %v4349, %v4345
      %v4542 = vpack.c.bf16 %v4350, %v4346
      %v4543 = vpack.c.bf16 %v4351, %v4347
      %v4544 = vpack.c.bf16 %v4356, %v4352
      %v4545 = vpack.c.bf16 %v4357, %v4353
      %v4546 = vpack.c.bf16 %v4358, %v4354
      %v4547 = vpack.c.bf16 %v4359, %v4355
      %v4548 = vpack.c.bf16 %v4364, %v4360
      %v4549 = vpack.c.bf16 %v4365, %v4361
      %v4550 = vpack.c.bf16 %v4366, %v4362
      %v4551 = vpack.c.bf16 %v4367, %v4363
      %v4552 = vpack.c.bf16 %v4372, %v4368
      %v4553 = vpack.c.bf16 %v4373, %v4369
      %v4554 = vpack.c.bf16 %v4374, %v4370
      %v4555 = vpack.c.bf16 %v4375, %v4371
      %v4556 = vpack.c.bf16 %v4380, %v4376
      %v4557 = vpack.c.bf16 %v4381, %v4377
      %v4558 = vpack.c.bf16 %v4382, %v4378
      %v4559 = vpack.c.bf16 %v4383, %v4379
      %v4560 = vpack.c.bf16 %v4388, %v4384
      %v4561 = vpack.c.bf16 %v4389, %v4385
      %v4562 = vpack.c.bf16 %v4390, %v4386
      %v4563 = vpack.c.bf16 %v4391, %v4387
      %v4564 = vpack.c.bf16 %v4396, %v4392
      %v4565 = vpack.c.bf16 %v4397, %v4393
      %v4566 = vpack.c.bf16 %v4398, %v4394
      %v4567 = vpack.c.bf16 %v4399, %v4395
      %v4568 = vpack.c.bf16 %v4404, %v4400
      %v4569 = vpack.c.bf16 %v4405, %v4401
      %v4570 = vpack.c.bf16 %v4406, %v4402
      %v4571 = vpack.c.bf16 %v4407, %v4403
      %v4572 = vpack.c.bf16 %v4412, %v4408
      %v4573 = vpack.c.bf16 %v4413, %v4409
      %v4574 = vpack.c.bf16 %v4414, %v4410
      %v4575 = vpack.c.bf16 %v4415, %v4411
      %v4576 = vpack.c.bf16 %v4420, %v4416
      %v4577 = vpack.c.bf16 %v4421, %v4417
      %v4578 = vpack.c.bf16 %v4422, %v4418
      %v4579 = vpack.c.bf16 %v4423, %v4419
      %v4580 = vpack.c.bf16 %v4428, %v4424
      %v4581 = vpack.c.bf16 %v4429, %v4425
      %v4582 = vpack.c.bf16 %v4430, %v4426
      %v4583 = vpack.c.bf16 %v4431, %v4427
      %v4584 = vpack.c.bf16 %v4436, %v4432
      %v4585 = vpack.c.bf16 %v4437, %v4433
      %v4586 = vpack.c.bf16 %v4438, %v4434
      %v4587 = vpack.c.bf16 %v4439, %v4435
      %v4588 = vpack.c.bf16 %v4444, %v4440
      %v4589 = vpack.c.bf16 %v4445, %v4441
      %v4590 = vpack.c.bf16 %v4446, %v4442
      %v4591 = vpack.c.bf16 %v4447, %v4443
      %v4592 = vpack.c.bf16 %v4452, %v4448
      %v4593 = vpack.c.bf16 %v4453, %v4449
      %v4594 = vpack.c.bf16 %v4454, %v4450
      %v4595 = vpack.c.bf16 %v4455, %v4451
      %v4596 = vpack.c.bf16 %v4460, %v4456
      %v4597 = vpack.c.bf16 %v4461, %v4457
      %v4598 = vpack.c.bf16 %v4462, %v4458
      %v4599 = vpack.c.bf16 %v4463, %v4459
      %v4600 = vpack.c.bf16 %v4468, %v4464
      %v4601 = vpack.c.bf16 %v4469, %v4465
      %v4602 = vpack.c.bf16 %v4470, %v4466
      %v4603 = vpack.c.bf16 %v4471, %v4467
      %v4604 = vpack.c.bf16 %v4476, %v4472
      %v4605 = vpack.c.bf16 %v4477, %v4473
      %v4606 = vpack.c.bf16 %v4478, %v4474
      %v4607 = vpack.c.bf16 %v4479, %v4475
      %v4608 = vld [vmem:[%s3] sm:$0xff]
      %v4609 = vld [vmem:[%s3 + $0x8] sm:$0xff]
      %v4610 = vld [vmem:[%s3 + $0x10] sm:$0xff]
      %v4611 = vld [vmem:[%s3 + $0x18] sm:$0xff]
      %v4612 = vld [vmem:[%s3 + $0x20] sm:$0xff]
      %v4613 = vld [vmem:[%s3 + $0x28] sm:$0xff]
      %v4614 = vld [vmem:[%s3 + $0x30] sm:$0xff]
      %v4615 = vld [vmem:[%s3 + $0x38] sm:$0xff]
      %v4616 = vld [vmem:[%s3 + $0x40] sm:$0xff]
      %v4617 = vld [vmem:[%s3 + $0x48] sm:$0xff]
      %v4618 = vld [vmem:[%s3 + $0x50] sm:$0xff]
      %v4619 = vld [vmem:[%s3 + $0x58] sm:$0xff]
      %v4620 = vld [vmem:[%s3 + $0x60] sm:$0xff]
      %v4621 = vld [vmem:[%s3 + $0x68] sm:$0xff]
      %v4622 = vld [vmem:[%s3 + $0x70] sm:$0xff]
      %v4623 = vld [vmem:[%s3 + $0x78] sm:$0xff]
      %v4624 = vld [vmem:[%s4] sm:$0xff]
      %v4625 = vld [vmem:[%s4 + $0x8] sm:$0xff]
      %v4626 = vld [vmem:[%s4 + $0x10] sm:$0xff]
      %v4627 = vld [vmem:[%s4 + $0x18] sm:$0xff]
      %v4628 = vld [vmem:[%s4 + $0x20] sm:$0xff]
      %v4629 = vld [vmem:[%s4 + $0x28] sm:$0xff]
      %v4630 = vld [vmem:[%s4 + $0x30] sm:$0xff]
      %v4631 = vld [vmem:[%s4 + $0x38] sm:$0xff]
      %v4632 = vld [vmem:[%s4 + $0x40] sm:$0xff]
      %v4633 = vld [vmem:[%s4 + $0x48] sm:$0xff]
      %v4634 = vld [vmem:[%s4 + $0x50] sm:$0xff]
      %v4635 = vld [vmem:[%s4 + $0x58] sm:$0xff]
      %v4636 = vld [vmem:[%s4 + $0x60] sm:$0xff]
      %v4637 = vld [vmem:[%s4 + $0x68] sm:$0xff]
      %v4638 = vld [vmem:[%s4 + $0x70] sm:$0xff]
      %v4639 = vld [vmem:[%s4 + $0x78] sm:$0xff]
      %v4656 = vunpack.c.l.b16 %v4624
      %v4657 = vunpack.c.h.b16 %v4624
      %v4658 = vunpack.c.l.b16 %v4625
      %v4659 = vunpack.c.h.b16 %v4625
      %v4660 = vunpack.c.l.b16 %v4626
      %v4661 = vunpack.c.h.b16 %v4626
      %v4662 = vunpack.c.l.b16 %v4627
      %v4663 = vunpack.c.h.b16 %v4627
      %v4664 = vunpack.c.l.b16 %v4628
      %v4665 = vunpack.c.h.b16 %v4628
      %v4666 = vunpack.c.l.b16 %v4629
      %v4667 = vunpack.c.h.b16 %v4629
      %v4668 = vunpack.c.l.b16 %v4630
      %v4669 = vunpack.c.h.b16 %v4630
      %v4670 = vunpack.c.l.b16 %v4631
      %v4671 = vunpack.c.h.b16 %v4631
      %v4672 = vunpack.c.l.b16 %v4632
      %v4673 = vunpack.c.h.b16 %v4632
      %v4674 = vunpack.c.l.b16 %v4633
      %v4675 = vunpack.c.h.b16 %v4633
      %v4676 = vunpack.c.l.b16 %v4634
      %v4677 = vunpack.c.h.b16 %v4634
      %v4678 = vunpack.c.l.b16 %v4635
      %v4679 = vunpack.c.h.b16 %v4635
      %v4680 = vunpack.c.l.b16 %v4636
      %v4681 = vunpack.c.h.b16 %v4636
      %v4682 = vunpack.c.l.b16 %v4637
      %v4683 = vunpack.c.h.b16 %v4637
      %v4684 = vunpack.c.l.b16 %v4638
      %v4685 = vunpack.c.h.b16 %v4638
      %v4686 = vunpack.c.l.b16 %v4639
      %v4687 = vunpack.c.h.b16 %v4639
      %v4688 = vpack.c.b16 %v4660, %v4656
      %v4689 = vpack.c.b16 %v4661, %v4657
      %v4690 = vpack.c.b16 %v4662, %v4658
      %v4691 = vpack.c.b16 %v4663, %v4659
      %v4692 = vpack.c.b16 %v4668, %v4664
      %v4693 = vpack.c.b16 %v4669, %v4665
      %v4694 = vpack.c.b16 %v4670, %v4666
      %v4695 = vpack.c.b16 %v4671, %v4667
      %v4696 = vpack.c.b16 %v4676, %v4672
      %v4697 = vpack.c.b16 %v4677, %v4673
      %v4698 = vpack.c.b16 %v4678, %v4674
      %v4699 = vpack.c.b16 %v4679, %v4675
      %v4700 = vpack.c.b16 %v4684, %v4680
      %v4701 = vpack.c.b16 %v4685, %v4681
      %v4702 = vpack.c.b16 %v4686, %v4682
      %v4703 = vpack.c.b16 %v4687, %v4683
      %4720 = vmatprep.subr.bf16.mxu0 %v4481
      %4721 = vmatpush1.bf16.msra.mxu0 %v4480
      %4722 = vmatprep.subr.bf16.mxu0 %v4485
      %4723 = vmatpush1.bf16.msra.mxu0 %v4484
      %4724 = vmatprep.subr.bf16.mxu0 %v4489
      %4725 = vmatpush1.bf16.msra.mxu0 %v4488
      %4726 = vmatprep.subr.bf16.mxu0 %v4493
      %4727 = vmatpush1.bf16.msra.mxu0 %v4492
      %4728 = vmatprep.subr.bf16.mxu0 %v4497
      %4729 = vmatpush1.bf16.msra.mxu0 %v4496
      %4730 = vmatprep.subr.bf16.mxu0 %v4501
      %4731 = vmatpush1.bf16.msra.mxu0 %v4500
      %4732 = vmatprep.subr.bf16.mxu0 %v4505
      %4733 = vmatpush1.bf16.msra.mxu0 %v4504
      %4734 = vmatprep.subr.bf16.mxu0 %v4509
      %4735 = vmatpush1.bf16.msra.mxu0 %v4508
      %4736 = vmatprep.subr.bf16.mxu0 %v4513
      %4737 = vmatpush1.bf16.msra.mxu0 %v4512
      %4738 = vmatprep.subr.bf16.mxu0 %v4517
      %4739 = vmatpush1.bf16.msra.mxu0 %v4516
      %4740 = vmatprep.subr.bf16.mxu0 %v4521
      %4741 = vmatpush1.bf16.msra.mxu0 %v4520
      %4742 = vmatprep.subr.bf16.mxu0 %v4525
      %4743 = vmatpush1.bf16.msra.mxu0 %v4524
      %4744 = vmatprep.subr.bf16.mxu0 %v4529
      %4745 = vmatpush1.bf16.msra.mxu0 %v4528
      %4746 = vmatprep.subr.bf16.mxu0 %v4533
      %4747 = vmatpush1.bf16.msra.mxu0 %v4532
      %4748 = vmatprep.subr.bf16.mxu0 %v4537
      %4749 = vmatpush1.bf16.msra.mxu0 %v4536
      %4750 = vmatprep.subr.bf16.mxu0 %v4541
      %4751 = vmatpush1.bf16.msra.mxu0 %v4540
      %4752 = vmatprep.mubr.bf16.mxu0 %v4689
      %4753 = vmatmul.mubr.bf16.gmra.mrb[0].mxu0 %v4688
      %v4754 = vpop.f32.mrb[0].mxu0
      %v4755 = vadd.f32 0.0, %v4754
      %v4756 = vpop.f32.mrb[0].mxu0
      %v4757 = vadd.f32 0.0, %v4756
      %v4758 = vpop.f32.mrb[0].mxu0
      %v4759 = vadd.f32 0.0, %v4758
      %v4760 = vpop.f32.mrb[0].mxu0
      %v4761 = vadd.f32 0.0, %v4760
      %4762 = vmatprep.mubr.bf16.mxu0 %v4693
      %4763 = vmatmul.mubr.bf16.gmra.mrb[0].mxu0 %v4692
      %v4764 = vpop.f32.mrb[0].mxu0
      %v4765 = vadd.f32 0.0, %v4764
      %v4766 = vpop.f32.mrb[0].mxu0
      %v4767 = vadd.f32 0.0, %v4766
      %v4768 = vpop.f32.mrb[0].mxu0
      %v4769 = vadd.f32 0.0, %v4768
      %v4770 = vpop.f32.mrb[0].mxu0
      %v4771 = vadd.f32 0.0, %v4770
      %4772 = vmatprep.mubr.bf16.mxu0 %v4697
      %4773 = vmatmul.mubr.bf16.gmra.mrb[0].mxu0 %v4696
      %v4774 = vpop.f32.mrb[0].mxu0
      %v4775 = vadd.f32 0.0, %v4774
      %v4776 = vpop.f32.mrb[0].mxu0
      %v4777 = vadd.f32 0.0, %v4776
      %v4778 = vpop.f32.mrb[0].mxu0
      %v4779 = vadd.f32 0.0, %v4778
      %v4780 = vpop.f32.mrb[0].mxu0
      %v4781 = vadd.f32 0.0, %v4780
      %4782 = vmatprep.mubr.bf16.mxu0 %v4701
      %4783 = vmatmul.mubr.bf16.gmra.mrb[0].mxu0 %v4700
      %v4784 = vpop.f32.mrb[0].mxu0
      %v4785 = vadd.f32 0.0, %v4784
      %v4786 = vpop.f32.mrb[0].mxu0
      %v4787 = vadd.f32 0.0, %v4786
      %v4788 = vpop.f32.mrb[0].mxu0
      %v4789 = vadd.f32 0.0, %v4788
      %v4790 = vpop.f32.mrb[0].mxu0
      %v4791 = vadd.f32 0.0, %v4790
      %4792 = vdwg.mxu0
      %4793 = vmatprep.subr.bf16.mxu0 %v4545
      %4794 = vmatpush1.bf16.msra.mxu0 %v4544
      %4795 = vmatprep.subr.bf16.mxu0 %v4549
      %4796 = vmatpush1.bf16.msra.mxu0 %v4548
      %4797 = vmatprep.subr.bf16.mxu0 %v4553
      %4798 = vmatpush1.bf16.msra.mxu0 %v4552
      %4799 = vmatprep.subr.bf16.mxu0 %v4557
      %4800 = vmatpush1.bf16.msra.mxu0 %v4556
      %4801 = vmatprep.subr.bf16.mxu0 %v4561
      %4802 = vmatpush1.bf16.msra.mxu0 %v4560
      %4803 = vmatprep.subr.bf16.mxu0 %v4565
      %4804 = vmatpush1.bf16.msra.mxu0 %v4564
      %4805 = vmatprep.subr.bf16.mxu0 %v4569
      %4806 = vmatpush1.bf16.msra.mxu0 %v4568
      %4807 = vmatprep.subr.bf16.mxu0 %v4573
      %4808 = vmatpush1.bf16.msra.mxu0 %v4572
      %4809 = vmatprep.subr.bf16.mxu0 %v4577
      %4810 = vmatpush1.bf16.msra.mxu0 %v4576
      %4811 = vmatprep.subr.bf16.mxu0 %v4581
      %4812 = vmatpush1.bf16.msra.mxu0 %v4580
      %4813 = vmatprep.subr.bf16.mxu0 %v4585
      %4814 = vmatpush1.bf16.msra.mxu0 %v4584
      %4815 = vmatprep.subr.bf16.mxu0 %v4589
      %4816 = vmatpush1.bf16.msra.mxu0 %v4588
      %4817 = vmatprep.subr.bf16.mxu0 %v4593
      %4818 = vmatpush1.bf16.msra.mxu0 %v4592
      %4819 = vmatprep.subr.bf16.mxu0 %v4597
      %4820 = vmatpush1.bf16.msra.mxu0 %v4596
      %4821 = vmatprep.subr.bf16.mxu0 %v4601
      %4822 = vmatpush1.bf16.msra.mxu0 %v4600
      %4823 = vmatprep.subr.bf16.mxu0 %v4605
      %4824 = vmatpush1.bf16.msra.mxu0 %v4604
      %4825 = vmatprep.mubr.bf16.mxu0 %v4691
      %4826 = vmatmul.mubr.bf16.gmra.mrb[0].mxu0 %v4690
      %v4827 = vpop.f32.mrb[0].mxu0
      %v4828 = vadd.f32 %v4755, %v4827
      %v4829 = vpop.f32.mrb[0].mxu0
      %v4830 = vadd.f32 %v4757, %v4829
      %v4831 = vpop.f32.mrb[0].mxu0
      %v4832 = vadd.f32 %v4759, %v4831
      %v4833 = vpop.f32.mrb[0].mxu0
      %v4834 = vadd.f32 %v4761, %v4833
      %4835 = vmatprep.mubr.bf16.mxu0 %v4695
      %4836 = vmatmul.mubr.bf16.gmra.mrb[0].mxu0 %v4694
      %v4837 = vpop.f32.mrb[0].mxu0
      %v4838 = vadd.f32 %v4765, %v4837
      %v4839 = vpop.f32.mrb[0].mxu0
      %v4840 = vadd.f32 %v4767, %v4839
      %v4841 = vpop.f32.mrb[0].mxu0
      %v4842 = vadd.f32 %v4769, %v4841
      %v4843 = vpop.f32.mrb[0].mxu0
      %v4844 = vadd.f32 %v4771, %v4843
      %4845 = vmatprep.mubr.bf16.mxu0 %v4699
      %4846 = vmatmul.mubr.bf16.gmra.mrb[0].mxu0 %v4698
      %v4847 = vpop.f32.mrb[0].mxu0
      %v4848 = vadd.f32 %v4775, %v4847
      %v4849 = vpop.f32.mrb[0].mxu0
      %v4850 = vadd.f32 %v4777, %v4849
      %v4851 = vpop.f32.mrb[0].mxu0
      %v4852 = vadd.f32 %v4779, %v4851
      %v4853 = vpop.f32.mrb[0].mxu0
      %v4854 = vadd.f32 %v4781, %v4853
      %4855 = vmatprep.mubr.bf16.mxu0 %v4703
      %4856 = vmatmul.mubr.bf16.gmra.mrb[0].mxu0 %v4702
      %v4857 = vpop.f32.mrb[0].mxu0
      %v4858 = vadd.f32 %v4785, %v4857
      %v4859 = vpop.f32.mrb[0].mxu0
      %v4860 = vadd.f32 %v4787, %v4859
      %v4861 = vpop.f32.mrb[0].mxu0
      %v4862 = vadd.f32 %v4789, %v4861
      %v4863 = vpop.f32.mrb[0].mxu0
      %v4864 = vadd.f32 %v4791, %v4863
      %4865 = vdwg.mxu0
      %4866 = vmatprep.subr.bf16.mxu0 %v4483
      %4867 = vmatpush1.bf16.msra.mxu0 %v4482
      %4868 = vmatprep.subr.bf16.mxu0 %v4487
      %4869 = vmatpush1.bf16.msra.mxu0 %v4486
      %4870 = vmatprep.subr.bf16.mxu0 %v4491
      %4871 = vmatpush1.bf16.msra.mxu0 %v4490
      %4872 = vmatprep.subr.bf16.mxu0 %v4495
      %4873 = vmatpush1.bf16.msra.mxu0 %v4494
      %4874 = vmatprep.subr.bf16.mxu0 %v4499
      %4875 = vmatpush1.bf16.msra.mxu0 %v4498
      %4876 = vmatprep.subr.bf16.mxu0 %v4503
      %4877 = vmatpush1.bf16.msra.mxu0 %v4502
      %4878 = vmatprep.subr.bf16.mxu0 %v4507
      %4879 = vmatpush1.bf16.msra.mxu0 %v4506
      %4880 = vmatprep.subr.bf16.mxu0 %v4511
      %4881 = vmatpush1.bf16.msra.mxu0 %v4510
      %4882 = vmatprep.subr.bf16.mxu0 %v4515
      %4883 = vmatpush1.bf16.msra.mxu0 %v4514
      %4884 = vmatprep.subr.bf16.mxu0 %v4519
      %4885 = vmatpush1.bf16.msra.mxu0 %v4518
      %4886 = vmatprep.subr.bf16.mxu0 %v4523
      %4887 = vmatpush1.bf16.msra.mxu0 %v4522
      %4888 = vmatprep.subr.bf16.mxu0 %v4527
      %4889 = vmatpush1.bf16.msra.mxu0 %v4526
      %4890 = vmatprep.subr.bf16.mxu0 %v4531
      %4891 = vmatpush1.bf16.msra.mxu0 %v4530
      %4892 = vmatprep.subr.bf16.mxu0 %v4535
      %4893 = vmatpush1.bf16.msra.mxu0 %v4534
      %4894 = vmatprep.subr.bf16.mxu0 %v4539
      %4895 = vmatpush1.bf16.msra.mxu0 %v4538
      %4896 = vmatprep.subr.bf16.mxu0 %v4543
      %4897 = vmatpush1.bf16.msra.mxu0 %v4542
      %4898 = vmatprep.mubr.bf16.mxu0 %v4689
      %4899 = vmatmul.mubr.bf16.gmra.mrb[0].mxu0 %v4688
      %v4900 = vpop.f32.mrb[0].mxu0
      %v4901 = vadd.f32 0.0, %v4900
      %v4902 = vpop.f32.mrb[0].mxu0
      %v4903 = vadd.f32 0.0, %v4902
      %v4904 = vpop.f32.mrb[0].mxu0
      %v4905 = vadd.f32 0.0, %v4904
      %v4906 = vpop.f32.mrb[0].mxu0
      %v4907 = vadd.f32 0.0, %v4906
      %4908 = vmatprep.mubr.bf16.mxu0 %v4693
      %4909 = vmatmul.mubr.bf16.gmra.mrb[0].mxu0 %v4692
      %v4910 = vpop.f32.mrb[0].mxu0
      %v4911 = vadd.f32 0.0, %v4910
      %v4912 = vpop.f32.mrb[0].mxu0
      %v4913 = vadd.f32 0.0, %v4912
      %v4914 = vpop.f32.mrb[0].mxu0
      %v4915 = vadd.f32 0.0, %v4914
      %v4916 = vpop.f32.mrb[0].mxu0
      %v4917 = vadd.f32 0.0, %v4916
      %4918 = vmatprep.mubr.bf16.mxu0 %v4697
      %4919 = vmatmul.mubr.bf16.gmra.mrb[0].mxu0 %v4696
      %v4920 = vpop.f32.mrb[0].mxu0
      %v4921 = vadd.f32 0.0, %v4920
      %v4922 = vpop.f32.mrb[0].mxu0
      %v4923 = vadd.f32 0.0, %v4922
      %v4924 = vpop.f32.mrb[0].mxu0
      %v4925 = vadd.f32 0.0, %v4924
      %v4926 = vpop.f32.mrb[0].mxu0
      %v4927 = vadd.f32 0.0, %v4926
      %4928 = vmatprep.mubr.bf16.mxu0 %v4701
      %4929 = vmatmul.mubr.bf16.gmra.mrb[0].mxu0 %v4700
      %v4930 = vpop.f32.mrb[0].mxu0
      %v4931 = vadd.f32 0.0, %v4930
      %v4932 = vpop.f32.mrb[0].mxu0
      %v4933 = vadd.f32 0.0, %v4932
      %v4934 = vpop.f32.mrb[0].mxu0
      %v4935 = vadd.f32 0.0, %v4934
      %v4936 = vpop.f32.mrb[0].mxu0
      %v4937 = vadd.f32 0.0, %v4936
      %4938 = vdwg.mxu0
      %4939 = vmatprep.subr.bf16.mxu0 %v4547
      %4940 = vmatpush1.bf16.msra.mxu0 %v4546
      %4941 = vmatprep.subr.bf16.mxu0 %v4551
      %4942 = vmatpush1.bf16.msra.mxu0 %v4550
      %4943 = vmatprep.subr.bf16.mxu0 %v4555
      %4944 = vmatpush1.bf16.msra.mxu0 %v4554
      %4945 = vmatprep.subr.bf16.mxu0 %v4559
      %4946 = vmatpush1.bf16.msra.mxu0 %v4558
      %4947 = vmatprep.subr.bf16.mxu0 %v4563
      %4948 = vmatpush1.bf16.msra.mxu0 %v4562
      %4949 = vmatprep.subr.bf16.mxu0 %v4567
      %4950 = vmatpush1.bf16.msra.mxu0 %v4566
      %4951 = vmatprep.subr.bf16.mxu0 %v4571
      %4952 = vmatpush1.bf16.msra.mxu0 %v4570
      %4953 = vmatprep.subr.bf16.mxu0 %v4575
      %4954 = vmatpush1.bf16.msra.mxu0 %v4574
      %4955 = vmatprep.subr.bf16.mxu0 %v4579
      %4956 = vmatpush1.bf16.msra.mxu0 %v4578
      %4957 = vmatprep.subr.bf16.mxu0 %v4583
      %4958 = vmatpush1.bf16.msra.mxu0 %v4582
      %4959 = vmatprep.subr.bf16.mxu0 %v4587
      %4960 = vmatpush1.bf16.msra.mxu0 %v4586
      %4961 = vmatprep.subr.bf16.mxu0 %v4591
      %4962 = vmatpush1.bf16.msra.mxu0 %v4590
      %4963 = vmatprep.subr.bf16.mxu0 %v4595
      %4964 = vmatpush1.bf16.msra.mxu0 %v4594
      %4965 = vmatprep.subr.bf16.mxu0 %v4599
      %4966 = vmatpush1.bf16.msra.mxu0 %v4598
      %4967 = vmatprep.subr.bf16.mxu0 %v4603
      %4968 = vmatpush1.bf16.msra.mxu0 %v4602
      %4969 = vmatprep.subr.bf16.mxu0 %v4607
      %4970 = vmatpush1.bf16.msra.mxu0 %v4606
      %4971 = vmatprep.mubr.bf16.mxu0 %v4691
      %4972 = vmatmul.mubr.bf16.gmra.mrb[0].mxu0 %v4690
      %v4973 = vpop.f32.mrb[0].mxu0
      %v4974 = vadd.f32 %v4901, %v4973
      %v4975 = vpop.f32.mrb[0].mxu0
      %v4976 = vadd.f32 %v4903, %v4975
      %v4977 = vpop.f32.mrb[0].mxu0
      %v4978 = vadd.f32 %v4905, %v4977
      %v4979 = vpop.f32.mrb[0].mxu0
      %v4980 = vadd.f32 %v4907, %v4979
      %4981 = vmatprep.mubr.bf16.mxu0 %v4695
      %4982 = vmatmul.mubr.bf16.gmra.mrb[0].mxu0 %v4694
      %v4983 = vpop.f32.mrb[0].mxu0
      %v4984 = vadd.f32 %v4911, %v4983
      %v4985 = vpop.f32.mrb[0].mxu0
      %v4986 = vadd.f32 %v4913, %v4985
      %v4987 = vpop.f32.mrb[0].mxu0
      %v4988 = vadd.f32 %v4915, %v4987
      %v4989 = vpop.f32.mrb[0].mxu0
      %v4990 = vadd.f32 %v4917, %v4989
      %4991 = vmatprep.mubr.bf16.mxu0 %v4699
      %4992 = vmatmul.mubr.bf16.gmra.mrb[0].mxu0 %v4698
      %v4993 = vpop.f32.mrb[0].mxu0
      %v4994 = vadd.f32 %v4921, %v4993
      %v4995 = vpop.f32.mrb[0].mxu0
      %v4996 = vadd.f32 %v4923, %v4995
      %v4997 = vpop.f32.mrb[0].mxu0
      %v4998 = vadd.f32 %v4925, %v4997
      %v4999 = vpop.f32.mrb[0].mxu0
      %v5000 = vadd.f32 %v4927, %v4999
      %5001 = vmatprep.mubr.bf16.mxu0 %v4703
      %5002 = vmatmul.mubr.bf16.gmra.mrb[0].mxu0 %v4702
      %v5003 = vpop.f32.mrb[0].mxu0
      %v5004 = vadd.f32 %v4931, %v5003
      %v5005 = vpop.f32.mrb[0].mxu0
      %v5006 = vadd.f32 %v4933, %v5005
      %v5007 = vpop.f32.mrb[0].mxu0
      %v5008 = vadd.f32 %v4935, %v5007
      %v5009 = vpop.f32.mrb[0].mxu0
      %v5010 = vadd.f32 %v4937, %v5009
      %5011 = vdwg.mxu0
      %v5028 = vunpack.c.l.b16 %v4608
      %v5029 = vunpack.c.h.b16 %v4608
      %v5030 = vunpack.c.l.b16 %v4609
      %v5031 = vunpack.c.h.b16 %v4609
      %v5032 = vunpack.c.l.b16 %v4610
      %v5033 = vunpack.c.h.b16 %v4610
      %v5034 = vunpack.c.l.b16 %v4611
      %v5035 = vunpack.c.h.b16 %v4611
      %v5036 = vunpack.c.l.b16 %v4612
      %v5037 = vunpack.c.h.b16 %v4612
      %v5038 = vunpack.c.l.b16 %v4613
      %v5039 = vunpack.c.h.b16 %v4613
      %v5040 = vunpack.c.l.b16 %v4614
      %v5041 = vunpack.c.h.b16 %v4614
      %v5042 = vunpack.c.l.b16 %v4615
      %v5043 = vunpack.c.h.b16 %v4615
      %v5044 = vunpack.c.l.b16 %v4616
      %v5045 = vunpack.c.h.b16 %v4616
      %v5046 = vunpack.c.l.b16 %v4617
      %v5047 = vunpack.c.h.b16 %v4617
      %v5048 = vunpack.c.l.b16 %v4618
      %v5049 = vunpack.c.h.b16 %v4618
      %v5050 = vunpack.c.l.b16 %v4619
      %v5051 = vunpack.c.h.b16 %v4619
      %v5052 = vunpack.c.l.b16 %v4620
      %v5053 = vunpack.c.h.b16 %v4620
      %v5054 = vunpack.c.l.b16 %v4621
      %v5055 = vunpack.c.h.b16 %v4621
      %v5056 = vunpack.c.l.b16 %v4622
      %v5057 = vunpack.c.h.b16 %v4622
      %v5058 = vunpack.c.l.b16 %v4623
      %v5059 = vunpack.c.h.b16 %v4623
      %v5060 = vpack.c.b16 %v5032, %v5028
      %v5061 = vpack.c.b16 %v5033, %v5029
      %v5062 = vpack.c.b16 %v5034, %v5030
      %v5063 = vpack.c.b16 %v5035, %v5031
      %v5064 = vpack.c.b16 %v5040, %v5036
      %v5065 = vpack.c.b16 %v5041, %v5037
      %v5066 = vpack.c.b16 %v5042, %v5038
      %v5067 = vpack.c.b16 %v5043, %v5039
      %v5068 = vpack.c.b16 %v5048, %v5044
      %v5069 = vpack.c.b16 %v5049, %v5045
      %v5070 = vpack.c.b16 %v5050, %v5046
      %v5071 = vpack.c.b16 %v5051, %v5047
      %v5072 = vpack.c.b16 %v5056, %v5052
      %v5073 = vpack.c.b16 %v5057, %v5053
      %v5074 = vpack.c.b16 %v5058, %v5054
      %v5075 = vpack.c.b16 %v5059, %v5055
      %5092 = vmatprep.subr.bf16.mxu0 %v4481
      %5093 = vmatpush1.bf16.msra.mxu0 %v4480
      %5094 = vmatprep.subr.bf16.mxu0 %v4485
      %5095 = vmatpush1.bf16.msra.mxu0 %v4484
      %5096 = vmatprep.subr.bf16.mxu0 %v4489
      %5097 = vmatpush1.bf16.msra.mxu0 %v4488
      %5098 = vmatprep.subr.bf16.mxu0 %v4493
      %5099 = vmatpush1.bf16.msra.mxu0 %v4492
      %5100 = vmatprep.subr.bf16.mxu0 %v4497
      %5101 = vmatpush1.bf16.msra.mxu0 %v4496
      %5102 = vmatprep.subr.bf16.mxu0 %v4501
      %5103 = vmatpush1.bf16.msra.mxu0 %v4500
      %5104 = vmatprep.subr.bf16.mxu0 %v4505
      %5105 = vmatpush1.bf16.msra.mxu0 %v4504
      %5106 = vmatprep.subr.bf16.mxu0 %v4509
      %5107 = vmatpush1.bf16.msra.mxu0 %v4508
      %5108 = vmatprep.subr.bf16.mxu0 %v4513
      %5109 = vmatpush1.bf16.msra.mxu0 %v4512
      %5110 = vmatprep.subr.bf16.mxu0 %v4517
      %5111 = vmatpush1.bf16.msra.mxu0 %v4516
      %5112 = vmatprep.subr.bf16.mxu0 %v4521
      %5113 = vmatpush1.bf16.msra.mxu0 %v4520
      %5114 = vmatprep.subr.bf16.mxu0 %v4525
      %5115 = vmatpush1.bf16.msra.mxu0 %v4524
      %5116 = vmatprep.subr.bf16.mxu0 %v4529
      %5117 = vmatpush1.bf16.msra.mxu0 %v4528
      %5118 = vmatprep.subr.bf16.mxu0 %v4533
      %5119 = vmatpush1.bf16.msra.mxu0 %v4532
      %5120 = vmatprep.subr.bf16.mxu0 %v4537
      %5121 = vmatpush1.bf16.msra.mxu0 %v4536
      %5122 = vmatprep.subr.bf16.mxu0 %v4541
      %5123 = vmatpush1.bf16.msra.mxu0 %v4540
      %5124 = vmatprep.mubr.bf16.mxu0 %v5061
      %5125 = vmatmul.mubr.bf16.gmra.mrb[0].mxu0 %v5060
      %v5126 = vpop.f32.mrb[0].mxu0
      %v5127 = vadd.f32 %v4828, %v5126
      %v5128 = vpop.f32.mrb[0].mxu0
      %v5129 = vadd.f32 %v4830, %v5128
      %v5130 = vpop.f32.mrb[0].mxu0
      %v5131 = vadd.f32 %v4832, %v5130
      %v5132 = vpop.f32.mrb[0].mxu0
      %v5133 = vadd.f32 %v4834, %v5132
      %5134 = vmatprep.mubr.bf16.mxu0 %v5065
      %5135 = vmatmul.mubr.bf16.gmra.mrb[0].mxu0 %v5064
      %v5136 = vpop.f32.mrb[0].mxu0
      %v5137 = vadd.f32 %v4838, %v5136
      %v5138 = vpop.f32.mrb[0].mxu0
      %v5139 = vadd.f32 %v4840, %v5138
      %v5140 = vpop.f32.mrb[0].mxu0
      %v5141 = vadd.f32 %v4842, %v5140
      %v5142 = vpop.f32.mrb[0].mxu0
      %v5143 = vadd.f32 %v4844, %v5142
      %5144 = vmatprep.mubr.bf16.mxu0 %v5069
      %5145 = vmatmul.mubr.bf16.gmra.mrb[0].mxu0 %v5068
      %v5146 = vpop.f32.mrb[0].mxu0
      %v5147 = vadd.f32 %v4848, %v5146
      %v5148 = vpop.f32.mrb[0].mxu0
      %v5149 = vadd.f32 %v4850, %v5148
      %v5150 = vpop.f32.mrb[0].mxu0
      %v5151 = vadd.f32 %v4852, %v5150
      %v5152 = vpop.f32.mrb[0].mxu0
      %v5153 = vadd.f32 %v4854, %v5152
      %5154 = vmatprep.mubr.bf16.mxu0 %v5073
      %5155 = vmatmul.mubr.bf16.gmra.mrb[0].mxu0 %v5072
      %v5156 = vpop.f32.mrb[0].mxu0
      %v5157 = vadd.f32 %v4858, %v5156
      %v5158 = vpop.f32.mrb[0].mxu0
      %v5159 = vadd.f32 %v4860, %v5158
      %v5160 = vpop.f32.mrb[0].mxu0
      %v5161 = vadd.f32 %v4862, %v5160
      %v5162 = vpop.f32.mrb[0].mxu0
      %v5163 = vadd.f32 %v4864, %v5162
      %5164 = vdwg.mxu0
      %5165 = vmatprep.subr.bf16.mxu0 %v4545
      %5166 = vmatpush1.bf16.msra.mxu0 %v4544
      %5167 = vmatprep.subr.bf16.mxu0 %v4549
      %5168 = vmatpush1.bf16.msra.mxu0 %v4548
      %5169 = vmatprep.subr.bf16.mxu0 %v4553
      %5170 = vmatpush1.bf16.msra.mxu0 %v4552
      %5171 = vmatprep.subr.bf16.mxu0 %v4557
      %5172 = vmatpush1.bf16.msra.mxu0 %v4556
      %5173 = vmatprep.subr.bf16.mxu0 %v4561
      %5174 = vmatpush1.bf16.msra.mxu0 %v4560
      %5175 = vmatprep.subr.bf16.mxu0 %v4565
      %5176 = vmatpush1.bf16.msra.mxu0 %v4564
      %5177 = vmatprep.subr.bf16.mxu0 %v4569
      %5178 = vmatpush1.bf16.msra.mxu0 %v4568
      %5179 = vmatprep.subr.bf16.mxu0 %v4573
      %5180 = vmatpush1.bf16.msra.mxu0 %v4572
      %5181 = vmatprep.subr.bf16.mxu0 %v4577
      %5182 = vmatpush1.bf16.msra.mxu0 %v4576
      %5183 = vmatprep.subr.bf16.mxu0 %v4581
      %5184 = vmatpush1.bf16.msra.mxu0 %v4580
      %5185 = vmatprep.subr.bf16.mxu0 %v4585
      %5186 = vmatpush1.bf16.msra.mxu0 %v4584
      %5187 = vmatprep.subr.bf16.mxu0 %v4589
      %5188 = vmatpush1.bf16.msra.mxu0 %v4588
      %5189 = vmatprep.subr.bf16.mxu0 %v4593
      %5190 = vmatpush1.bf16.msra.mxu0 %v4592
      %5191 = vmatprep.subr.bf16.mxu0 %v4597
      %5192 = vmatpush1.bf16.msra.mxu0 %v4596
      %5193 = vmatprep.subr.bf16.mxu0 %v4601
      %5194 = vmatpush1.bf16.msra.mxu0 %v4600
      %5195 = vmatprep.subr.bf16.mxu0 %v4605
      %5196 = vmatpush1.bf16.msra.mxu0 %v4604
      %5197 = vmatprep.mubr.bf16.mxu0 %v5063
      %5198 = vmatmul.mubr.bf16.gmra.mrb[0].mxu0 %v5062
      %v5199 = vpop.f32.mrb[0].mxu0
      %v5200 = vadd.f32 %v5127, %v5199
      %v5201 = vpop.f32.mrb[0].mxu0
      %v5202 = vadd.f32 %v5129, %v5201
      %v5203 = vpop.f32.mrb[0].mxu0
      %v5204 = vadd.f32 %v5131, %v5203
      %v5205 = vpop.f32.mrb[0].mxu0
      %v5206 = vadd.f32 %v5133, %v5205
      %5207 = vmatprep.mubr.bf16.mxu0 %v5067
      %5208 = vmatmul.mubr.bf16.gmra.mrb[0].mxu0 %v5066
      %v5209 = vpop.f32.mrb[0].mxu0
      %v5210 = vadd.f32 %v5137, %v5209
      %v5211 = vpop.f32.mrb[0].mxu0
      %v5212 = vadd.f32 %v5139, %v5211
      %v5213 = vpop.f32.mrb[0].mxu0
      %v5214 = vadd.f32 %v5141, %v5213
      %v5215 = vpop.f32.mrb[0].mxu0
      %v5216 = vadd.f32 %v5143, %v5215
      %5217 = vmatprep.mubr.bf16.mxu0 %v5071
      %5218 = vmatmul.mubr.bf16.gmra.mrb[0].mxu0 %v5070
      %v5219 = vpop.f32.mrb[0].mxu0
      %v5220 = vadd.f32 %v5147, %v5219
      %v5221 = vpop.f32.mrb[0].mxu0
      %v5222 = vadd.f32 %v5149, %v5221
      %v5223 = vpop.f32.mrb[0].mxu0
      %v5224 = vadd.f32 %v5151, %v5223
      %v5225 = vpop.f32.mrb[0].mxu0
      %v5226 = vadd.f32 %v5153, %v5225
      %5227 = vmatprep.mubr.bf16.mxu0 %v5075
      %5228 = vmatmul.mubr.bf16.gmra.mrb[0].mxu0 %v5074
      %v5229 = vpop.f32.mrb[0].mxu0
      %v5230 = vadd.f32 %v5157, %v5229
      %v5231 = vpop.f32.mrb[0].mxu0
      %v5232 = vadd.f32 %v5159, %v5231
      %v5233 = vpop.f32.mrb[0].mxu0
      %v5234 = vadd.f32 %v5161, %v5233
      %v5235 = vpop.f32.mrb[0].mxu0
      %v5236 = vadd.f32 %v5163, %v5235
      %5237 = vdwg.mxu0
      %5238 = vmatprep.subr.bf16.mxu0 %v4483
      %5239 = vmatpush1.bf16.msra.mxu0 %v4482
      %5240 = vmatprep.subr.bf16.mxu0 %v4487
      %5241 = vmatpush1.bf16.msra.mxu0 %v4486
      %5242 = vmatprep.subr.bf16.mxu0 %v4491
      %5243 = vmatpush1.bf16.msra.mxu0 %v4490
      %5244 = vmatprep.subr.bf16.mxu0 %v4495
      %5245 = vmatpush1.bf16.msra.mxu0 %v4494
      %5246 = vmatprep.subr.bf16.mxu0 %v4499
      %5247 = vmatpush1.bf16.msra.mxu0 %v4498
      %5248 = vmatprep.subr.bf16.mxu0 %v4503
      %5249 = vmatpush1.bf16.msra.mxu0 %v4502
      %5250 = vmatprep.subr.bf16.mxu0 %v4507
      %5251 = vmatpush1.bf16.msra.mxu0 %v4506
      %5252 = vmatprep.subr.bf16.mxu0 %v4511
      %5253 = vmatpush1.bf16.msra.mxu0 %v4510
      %5254 = vmatprep.subr.bf16.mxu0 %v4515
      %5255 = vmatpush1.bf16.msra.mxu0 %v4514
      %5256 = vmatprep.subr.bf16.mxu0 %v4519
      %5257 = vmatpush1.bf16.msra.mxu0 %v4518
      %5258 = vmatprep.subr.bf16.mxu0 %v4523
      %5259 = vmatpush1.bf16.msra.mxu0 %v4522
      %5260 = vmatprep.subr.bf16.mxu0 %v4527
      %5261 = vmatpush1.bf16.msra.mxu0 %v4526
      %5262 = vmatprep.subr.bf16.mxu0 %v4531
      %5263 = vmatpush1.bf16.msra.mxu0 %v4530
      %5264 = vmatprep.subr.bf16.mxu0 %v4535
      %5265 = vmatpush1.bf16.msra.mxu0 %v4534
      %5266 = vmatprep.subr.bf16.mxu0 %v4539
      %5267 = vmatpush1.bf16.msra.mxu0 %v4538
      %5268 = vmatprep.subr.bf16.mxu0 %v4543
      %5269 = vmatpush1.bf16.msra.mxu0 %v4542
      %5270 = vmatprep.mubr.bf16.mxu0 %v5061
      %5271 = vmatmul.mubr.bf16.gmra.mrb[0].mxu0 %v5060
      %v5272 = vpop.f32.mrb[0].mxu0
      %v5273 = vadd.f32 %v4974, %v5272
      %v5274 = vpop.f32.mrb[0].mxu0
      %v5275 = vadd.f32 %v4976, %v5274
      %v5276 = vpop.f32.mrb[0].mxu0
      %v5277 = vadd.f32 %v4978, %v5276
      %v5278 = vpop.f32.mrb[0].mxu0
      %v5279 = vadd.f32 %v4980, %v5278
      %5280 = vmatprep.mubr.bf16.mxu0 %v5065
      %5281 = vmatmul.mubr.bf16.gmra.mrb[0].mxu0 %v5064
      %v5282 = vpop.f32.mrb[0].mxu0
      %v5283 = vadd.f32 %v4984, %v5282
      %v5284 = vpop.f32.mrb[0].mxu0
      %v5285 = vadd.f32 %v4986, %v5284
      %v5286 = vpop.f32.mrb[0].mxu0
      %v5287 = vadd.f32 %v4988, %v5286
      %v5288 = vpop.f32.mrb[0].mxu0
      %v5289 = vadd.f32 %v4990, %v5288
      %5290 = vmatprep.mubr.bf16.mxu0 %v5069
      %5291 = vmatmul.mubr.bf16.gmra.mrb[0].mxu0 %v5068
      %v5292 = vpop.f32.mrb[0].mxu0
      %v5293 = vadd.f32 %v4994, %v5292
      %v5294 = vpop.f32.mrb[0].mxu0
      %v5295 = vadd.f32 %v4996, %v5294
      %v5296 = vpop.f32.mrb[0].mxu0
      %v5297 = vadd.f32 %v4998, %v5296
      %v5298 = vpop.f32.mrb[0].mxu0
      %v5299 = vadd.f32 %v5000, %v5298
      %5300 = vmatprep.mubr.bf16.mxu0 %v5073
      %5301 = vmatmul.mubr.bf16.gmra.mrb[0].mxu0 %v5072
      %v5302 = vpop.f32.mrb[0].mxu0
      %v5303 = vadd.f32 %v5004, %v5302
      %v5304 = vpop.f32.mrb[0].mxu0
      %v5305 = vadd.f32 %v5006, %v5304
      %v5306 = vpop.f32.mrb[0].mxu0
      %v5307 = vadd.f32 %v5008, %v5306
      %v5308 = vpop.f32.mrb[0].mxu0
      %v5309 = vadd.f32 %v5010, %v5308
      %5310 = vdwg.mxu0
      %5311 = vmatprep.subr.bf16.mxu0 %v4547
      %5312 = vmatpush1.bf16.msra.mxu0 %v4546
      %5313 = vmatprep.subr.bf16.mxu0 %v4551
      %5314 = vmatpush1.bf16.msra.mxu0 %v4550
      %5315 = vmatprep.subr.bf16.mxu0 %v4555
      %5316 = vmatpush1.bf16.msra.mxu0 %v4554
      %5317 = vmatprep.subr.bf16.mxu0 %v4559
      %5318 = vmatpush1.bf16.msra.mxu0 %v4558
      %5319 = vmatprep.subr.bf16.mxu0 %v4563
      %5320 = vmatpush1.bf16.msra.mxu0 %v4562
      %5321 = vmatprep.subr.bf16.mxu0 %v4567
      %5322 = vmatpush1.bf16.msra.mxu0 %v4566
      %5323 = vmatprep.subr.bf16.mxu0 %v4571
      %5324 = vmatpush1.bf16.msra.mxu0 %v4570
      %5325 = vmatprep.subr.bf16.mxu0 %v4575
      %5326 = vmatpush1.bf16.msra.mxu0 %v4574
      %5327 = vmatprep.subr.bf16.mxu0 %v4579
      %5328 = vmatpush1.bf16.msra.mxu0 %v4578
      %5329 = vmatprep.subr.bf16.mxu0 %v4583
      %5330 = vmatpush1.bf16.msra.mxu0 %v4582
      %5331 = vmatprep.subr.bf16.mxu0 %v4587
      %5332 = vmatpush1.bf16.msra.mxu0 %v4586
      %5333 = vmatprep.subr.bf16.mxu0 %v4591
      %5334 = vmatpush1.bf16.msra.mxu0 %v4590
      %5335 = vmatprep.subr.bf16.mxu0 %v4595
      %5336 = vmatpush1.bf16.msra.mxu0 %v4594
      %5337 = vmatprep.subr.bf16.mxu0 %v4599
      %5338 = vmatpush1.bf16.msra.mxu0 %v4598
      %5339 = vmatprep.subr.bf16.mxu0 %v4603
      %5340 = vmatpush1.bf16.msra.mxu0 %v4602
      %5341 = vmatprep.subr.bf16.mxu0 %v4607
      %5342 = vmatpush1.bf16.msra.mxu0 %v4606
      %5343 = vmatprep.mubr.bf16.mxu0 %v5063
      %5344 = vmatmul.mubr.bf16.gmra.mrb[0].mxu0 %v5062
      %v5345 = vpop.f32.mrb[0].mxu0
      %v5346 = vadd.f32 %v5273, %v5345
      %v5347 = vpop.f32.mrb[0].mxu0
      %v5348 = vadd.f32 %v5275, %v5347
      %v5349 = vpop.f32.mrb[0].mxu0
      %v5350 = vadd.f32 %v5277, %v5349
      %v5351 = vpop.f32.mrb[0].mxu0
      %v5352 = vadd.f32 %v5279, %v5351
      %5353 = vmatprep.mubr.bf16.mxu0 %v5067
      %5354 = vmatmul.mubr.bf16.gmra.mrb[0].mxu0 %v5066
      %v5355 = vpop.f32.mrb[0].mxu0
      %v5356 = vadd.f32 %v5283, %v5355
      %v5357 = vpop.f32.mrb[0].mxu0
      %v5358 = vadd.f32 %v5285, %v5357
      %v5359 = vpop.f32.mrb[0].mxu0
      %v5360 = vadd.f32 %v5287, %v5359
      %v5361 = vpop.f32.mrb[0].mxu0
      %v5362 = vadd.f32 %v5289, %v5361
      %5363 = vmatprep.mubr.bf16.mxu0 %v5071
      %5364 = vmatmul.mubr.bf16.gmra.mrb[0].mxu0 %v5070
      %v5365 = vpop.f32.mrb[0].mxu0
      %v5366 = vadd.f32 %v5293, %v5365
      %v5367 = vpop.f32.mrb[0].mxu0
      %v5368 = vadd.f32 %v5295, %v5367
      %v5369 = vpop.f32.mrb[0].mxu0
      %v5370 = vadd.f32 %v5297, %v5369
      %v5371 = vpop.f32.mrb[0].mxu0
      %v5372 = vadd.f32 %v5299, %v5371
      %5373 = vmatprep.mubr.bf16.mxu0 %v5075
      %5374 = vmatmul.mubr.bf16.gmra.mrb[0].mxu0 %v5074
      %v5375 = vpop.f32.mrb[0].mxu0
      %v5376 = vadd.f32 %v5303, %v5375
      %v5377 = vpop.f32.mrb[0].mxu0
      %v5378 = vadd.f32 %v5305, %v5377
      %v5379 = vpop.f32.mrb[0].mxu0
      %v5380 = vadd.f32 %v5307, %v5379
      %v5381 = vpop.f32.mrb[0].mxu0
      %v5382 = vadd.f32 %v5309, %v5381
      %5383 = vdwg.mxu0
      %5384 = vst [vmem:[%s366] sm:$0xff] %v5200
      %5385 = vst [vmem:[%s366 + $0x8] sm:$0xff] %v5202
      %5386 = vst [vmem:[%s366 + $0x10] sm:$0xff] %v5346
      %5387 = vst [vmem:[%s366 + $0x18] sm:$0xff] %v5348
      %5388 = vst [vmem:[%s366 + $0x20] sm:$0xff] %v5204
      %5389 = vst [vmem:[%s366 + $0x28] sm:$0xff] %v5206
      %5390 = vst [vmem:[%s366 + $0x30] sm:$0xff] %v5350
      %5391 = vst [vmem:[%s366 + $0x38] sm:$0xff] %v5352
      %5392 = vst [vmem:[%s366 + $0x40] sm:$0xff] %v5210
      %5393 = vst [vmem:[%s366 + $0x48] sm:$0xff] %v5212
      %5394 = vst [vmem:[%s366 + $0x50] sm:$0xff] %v5356
      %5395 = vst [vmem:[%s366 + $0x58] sm:$0xff] %v5358
      %5396 = vst [vmem:[%s366 + $0x60] sm:$0xff] %v5214
      %5397 = vst [vmem:[%s366 + $0x68] sm:$0xff] %v5216
      %5398 = vst [vmem:[%s366 + $0x70] sm:$0xff] %v5360
      %5399 = vst [vmem:[%s366 + $0x78] sm:$0xff] %v5362
      %5400 = vst [vmem:[%s366 + $0x80] sm:$0xff] %v5220
      %5401 = vst [vmem:[%s366 + $0x88] sm:$0xff] %v5222
      %5402 = vst [vmem:[%s366 + $0x90] sm:$0xff] %v5366
      %5403 = vst [vmem:[%s366 + $0x98] sm:$0xff] %v5368
      %5404 = vst [vmem:[%s366 + $0xa0] sm:$0xff] %v5224
      %5405 = vst [vmem:[%s366 + $0xa8] sm:$0xff] %v5226
      %5406 = vst [vmem:[%s366 + $0xb0] sm:$0xff] %v5370
      %5407 = vst [vmem:[%s366 + $0xb8] sm:$0xff] %v5372
      %5408 = vst [vmem:[%s366 + $0xc0] sm:$0xff] %v5230
      %5409 = vst [vmem:[%s366 + $0xc8] sm:$0xff] %v5232
      %5410 = vst [vmem:[%s366 + $0xd0] sm:$0xff] %v5376
      %5411 = vst [vmem:[%s366 + $0xd8] sm:$0xff] %v5378
      %5412 = vst [vmem:[%s366 + $0xe0] sm:$0xff] %v5234
      %5413 = vst [vmem:[%s366 + $0xe8] sm:$0xff] %v5236
      %5414 = vst [vmem:[%s366 + $0xf0] sm:$0xff] %v5380
      %5415 = vst [vmem:[%s366 + $0xf8] sm:$0xff] %v5382
      %v5416 = vsub.f32 %v5200, %v384
      %v5417 = vsub.f32 %v5202, %v385
      %v5418 = vsub.f32 %v5346, %v386
      %v5419 = vsub.f32 %v5348, %v387
      %v5420 = vsub.f32 %v5204, %v388
      %v5421 = vsub.f32 %v5206, %v389
      %v5422 = vsub.f32 %v5350, %v390
      %v5423 = vsub.f32 %v5352, %v391
      %v5424 = vsub.f32 %v5210, %v392
      %v5425 = vsub.f32 %v5212, %v393
      %v5426 = vsub.f32 %v5356, %v394
      %v5427 = vsub.f32 %v5358, %v395
      %v5428 = vsub.f32 %v5214, %v396
      %v5429 = vsub.f32 %v5216, %v397
      %v5430 = vsub.f32 %v5360, %v398
      %v5431 = vsub.f32 %v5362, %v399
      %v5432 = vsub.f32 %v5220, %v400
      %v5433 = vsub.f32 %v5222, %v401
      %v5434 = vsub.f32 %v5366, %v402
      %v5435 = vsub.f32 %v5368, %v403
      %v5436 = vsub.f32 %v5224, %v404
      %v5437 = vsub.f32 %v5226, %v405
      %v5438 = vsub.f32 %v5370, %v406
      %v5439 = vsub.f32 %v5372, %v407
      %v5440 = vsub.f32 %v5230, %v408
      %v5441 = vsub.f32 %v5232, %v409
      %v5442 = vsub.f32 %v5376, %v410
      %v5443 = vsub.f32 %v5378, %v411
      %v5444 = vsub.f32 %v5234, %v412
      %v5445 = vsub.f32 %v5236, %v413
      %v5446 = vsub.f32 %v5380, %v414
      %v5447 = vsub.f32 %v5382, %v415
      %v5448 = vmul.f32 %v5416, %v5416
      %v5449 = vmul.f32 %v5417, %v5417
      %v5450 = vmul.f32 %v5418, %v5418
      %v5451 = vmul.f32 %v5419, %v5419
      %v5452 = vmul.f32 %v5420, %v5420
      %v5453 = vmul.f32 %v5421, %v5421
      %v5454 = vmul.f32 %v5422, %v5422
      %v5455 = vmul.f32 %v5423, %v5423
      %v5456 = vmul.f32 %v5424, %v5424
      %v5457 = vmul.f32 %v5425, %v5425
      %v5458 = vmul.f32 %v5426, %v5426
      %v5459 = vmul.f32 %v5427, %v5427
      %v5460 = vmul.f32 %v5428, %v5428
      %v5461 = vmul.f32 %v5429, %v5429
      %v5462 = vmul.f32 %v5430, %v5430
      %v5463 = vmul.f32 %v5431, %v5431
      %v5464 = vmul.f32 %v5432, %v5432
      %v5465 = vmul.f32 %v5433, %v5433
      %v5466 = vmul.f32 %v5434, %v5434
      %v5467 = vmul.f32 %v5435, %v5435
      %v5468 = vmul.f32 %v5436, %v5436
      %v5469 = vmul.f32 %v5437, %v5437
      %v5470 = vmul.f32 %v5438, %v5438
      %v5471 = vmul.f32 %v5439, %v5439
      %v5472 = vmul.f32 %v5440, %v5440
      %v5473 = vmul.f32 %v5441, %v5441
      %v5474 = vmul.f32 %v5442, %v5442
      %v5475 = vmul.f32 %v5443, %v5443
      %v5476 = vmul.f32 %v5444, %v5444
      %v5477 = vmul.f32 %v5445, %v5445
      %v5478 = vmul.f32 %v5446, %v5446
      %v5479 = vmul.f32 %v5447, %v5447
      %v5480 = vadd.f32 %v5448, %v5449
      %v5481 = vadd.f32 %v5480, %v5450
      %v5482 = vadd.f32 %v5481, %v5451
      %v5483 = vadd.f32 %v5482, %v5452
      %v5484 = vadd.f32 %v5483, %v5453
      %v5485 = vadd.f32 %v5484, %v5454
      %v5486 = vadd.f32 %v5485, %v5455
      %v5487 = vadd.f32 %v5486, %v5456
      %v5488 = vadd.f32 %v5487, %v5457
      %v5489 = vadd.f32 %v5488, %v5458
      %v5490 = vadd.f32 %v5489, %v5459
      %v5491 = vadd.f32 %v5490, %v5460
      %v5492 = vadd.f32 %v5491, %v5461
      %v5493 = vadd.f32 %v5492, %v5462
      %v5494 = vadd.f32 %v5493, %v5463
      %v5495 = vadd.f32 %v5494, %v5464
      %v5496 = vadd.f32 %v5495, %v5465
      %v5497 = vadd.f32 %v5496, %v5466
      %v5498 = vadd.f32 %v5497, %v5467
      %v5499 = vadd.f32 %v5498, %v5468
      %v5500 = vadd.f32 %v5499, %v5469
      %v5501 = vadd.f32 %v5500, %v5470
      %v5502 = vadd.f32 %v5501, %v5471
      %v5503 = vadd.f32 %v5502, %v5472
      %v5504 = vadd.f32 %v5503, %v5473
      %v5505 = vadd.f32 %v5504, %v5474
      %v5506 = vadd.f32 %v5505, %v5475
      %v5507 = vadd.f32 %v5506, %v5476
      %v5508 = vadd.f32 %v5507, %v5477
      %v5509 = vadd.f32 %v5508, %v5478
      %v5510 = vadd.f32 %v5509, %v5479
      %5511 = vadd.xlane.f32.xlu0 %v5510
      %v5512 = vpop.xlane.xlu0 %5511
      %v5513 = vrot.slane %v5512, 4
      %v5514 = vadd.f32 %v5512, %v5513
      %v5515 = vrot.slane %v5514, 2
      %v5516 = vadd.f32 %v5514, %v5515
      %v5517 = vrot.slane %v5516, 1
      %v5518 = vadd.f32 %v5516, %v5517
      %s5519 = vtos %v5518
      %v5520 = vstv %s5519
      %5521 = vst [vmem:[%s382] sm:$0x1] %v5520
      %s5522 = smul.u32 4, %s25
      %p5523 = scmp.lt.s32.totalorder %s24, 1
      %s5524 = scalar_select %p5523, %s24, 1
      %p5525 = scmp.lt.s32.totalorder %s5522, 3
      %s5526 = scalar_select %p5525, %s5522, 3
      %s5527 = smul.addr %s5524, 32
      %s5528 = sadd.s32 %s5526, %s5527
      %s5529 = smul.addr %s5528, 8
      %s5530 = scalar_lea.vmem %s6, %s5529
      %s5531 = smul.u32 4, %s25
      %p5532 = scmp.lt.s32.totalorder %s24, 1
      %s5533 = scalar_select %p5532, %s24, 1
      %p5534 = scmp.lt.s32.totalorder %s5531, 3
      %s5535 = scalar_select %p5534, %s5531, 3
      %s5536 = smul.addr %s5533, 4
      %s5537 = sadd.s32 %s5535, %s5536
      %s5538 = scalar_lea.vmem %s7, %s5537
      %p5539 = scmp.lt.s32.totalorder %s24, 1
      %s5540 = scalar_select %p5539, %s24, 1
      %p5541 = scmp.lt.s32.totalorder %s25, 0
      %s5542 = scalar_select %p5541, %s25, 0
      %s5543 = sadd.s32 %s5542, %s5540
      %s5544 = scalar_lea.vmem %s8, %s5543
      // Predicated region
      $region45: #{vector_quantiser_forward.2} parent=43 // pred_check
        %p5545 = pneg %p185
      $region46: #{vector_quantiser_forward.2} parent=43 // pred_check_branch
        %5547 = sbr.rel (%p5545) target = $region48
      $region47: #{vector_quantiser_forward.2} parent=43 // pred_region
        %s5548 = smul.u32 4, %s25
      $region48: #{vector_quantiser_forward.2} parent=43 // pred_fallthru
        _
      // Predicated region
      $region49: #{vector_quantiser_forward.2} parent=43 // pred_check
        %p5549 = pneg %p213
      $region50: #{vector_quantiser_forward.2} parent=43 // pred_check_branch
        %5551 = sbr.rel (%p5549) target = $region52
      $region51: #{vector_quantiser_forward.2} parent=43 // pred_region
        %s5552 = smul.u32 4, %s25
      $region52: #{vector_quantiser_forward.2} parent=43 // pred_fallthru
        _
      // Predicated region
      $region53: #{vector_quantiser_forward.2} parent=43 // pred_check
        %p5553 = pneg %p241
      $region54: #{vector_quantiser_forward.2} parent=43 // pred_check_branch
        %5555 = sbr.rel (%p5553) target = $region56
      $region55: #{vector_quantiser_forward.2} parent=43 // pred_region
        _
      $region56: #{vector_quantiser_forward.2} parent=43 // pred_fallthru
        _
    $region44: #{vector_quantiser_forward.2} parent=5 // pred_fallthru
      _
    %p5556 = scmp.le.s32.totalorder 2, %s15
    // Predicated region
    $region57: #{vector_quantiser_forward.2} parent=5 // pred_check
      %p5557 = pneg %p5556
    $region58: #{vector_quantiser_forward.2} parent=5 // pred_check_branch
      %5559 = sbr.rel (%p5557) target = $region60
    $region59: #{vector_quantiser_forward.2} parent=5 // pred_region
      %s5560 = ssub.s32 %s15, 2
      // Predicated region
      $region61: #{vector_quantiser_forward.2} parent=59 // pred_check
        %p5561 = pneg %p191
      $region62: #{vector_quantiser_forward.2} parent=59 // pred_check_branch
        %5563 = sbr.rel (%p5561) target = $region64
      $region63: #{vector_quantiser_forward.2} parent=59 // pred_region
        %s5564 = smul.u32 4, %s27
        %p5565 = scmp.lt.s32.totalorder %s26, 1
        %s5566 = scalar_select %p5565, %s26, 1
        %p5567 = scmp.lt.s32.totalorder %s5564, 3
        %s5568 = scalar_select %p5567, %s5564, 3
        %s5569 = smul.addr %s5566, 32
        %s5570 = sadd.s32 %s5568, %s5569
        %s5571 = smul.addr %s5570, 8
        %s5572 = scalar_lea.vmem %s6, %s5571
      $region64: #{vector_quantiser_forward.2} parent=59 // pred_fallthru
        _
      // Predicated region
      $region65: #{vector_quantiser_forward.2} parent=59 // pred_check
        %p5573 = pneg %p219
      $region66: #{vector_quantiser_forward.2} parent=59 // pred_check_branch
        %5575 = sbr.rel (%p5573) target = $region68
      $region67: #{vector_quantiser_forward.2} parent=59 // pred_region
        %s5576 = smul.u32 4, %s27
        %p5577 = scmp.lt.s32.totalorder %s26, 1
        %s5578 = scalar_select %p5577, %s26, 1
        %p5579 = scmp.lt.s32.totalorder %s5576, 3
        %s5580 = scalar_select %p5579, %s5576, 3
        %s5581 = smul.addr %s5578, 4
        %s5582 = sadd.s32 %s5580, %s5581
        %s5583 = scalar_lea.vmem %s7, %s5582
      $region68: #{vector_quantiser_forward.2} parent=59 // pred_fallthru
        _
      // Predicated region
      $region69: #{vector_quantiser_forward.2} parent=59 // pred_check
        %p5584 = pneg %p247
      $region70: #{vector_quantiser_forward.2} parent=59 // pred_check_branch
        %5586 = sbr.rel (%p5584) target = $region72
      $region71: #{vector_quantiser_forward.2} parent=59 // pred_region
        %p5587 = scmp.lt.s32.totalorder %s26, 1
        %s5588 = scalar_select %p5587, %s26, 1
        %p5589 = scmp.lt.s32.totalorder %s27, 0
        %s5590 = scalar_select %p5589, %s27, 0
        %s5591 = sadd.s32 %s5590, %s5588
        %s5592 = scalar_lea.vmem %s8, %s5591
      $region72: #{vector_quantiser_forward.2} parent=59 // pred_fallthru
        _
    $region60: #{vector_quantiser_forward.2} parent=5 // pred_fallthru
      _
  $region6: #{vector_quantiser_forward.2} parent=0 // loop_footer
    %s19 = sadd.s32 1, %s15
  $region7: #{vector_quantiser_forward.2} parent=0 // loop_footer_branch
    %14 = sbr.rel target = $region3
  $region8: #{vector_quantiser_forward.2} parent=0 // loop_exit
    _

// kernel: vector_quantiser_forward.3
$region0: #{vector_quantiser_forward.3}
  #allocation0 [shape = 'u32[]', space=smem, size = 0x4, offset = 0x4, fixed_abs, tag = 'smem constant byte address 0x4 - core index']
  #allocation1 [shape = 'u32[144,128]{1,0:T(1,128)}', space=vmem, size = 0x12000, scoped, tag = 'internal scratch']
  %s0 = inlined_call_operand.vmem [shape: bf16[512,64], index: 0, kind: input, shape index: {}]
  %s1 = inlined_call_operand.vmem [shape: bf16[64,512], index: 1, kind: input, shape index: {}]
  %s2 = inlined_call_operand.vmem [shape: f32[512,1], index: 2, kind: input, shape index: {}]
  %s3 = inlined_call_operand.vmem [shape: f32[1,512], index: 3, kind: input, shape index: {}]
  %s4 = inlined_call_operand.vmem [shape: s32[512,1], index: 4, kind: input, shape index: {}]
  %s5 = inlined_call_operand.hbm [shape: f32[1,128], index: 5, kind: output, shape index: {0}]
  %s6 = inlined_call_operand.hbm [shape: f32[1,128], index: 6, kind: output, shape index: {1}]
  %7 = xla_tuple %s5, %s6
  %s8 = sld [smem:[#allocation0]]
  $region38: #{vector_quantiser_forward.3} parent=0
    _
  %s10 = ssub.s32 1, %s8
  %s11 = scalar_select 0, %s10, %s8
  $region1: #{vector_quantiser_forward.3} parent=0
    #allocation2 [shape = 'u8[512]{0}', space=vmem, size = 0x400, scoped, tag = 'output window, operand 0, single buffered']
    #allocation3 [shape = 's32[1]{0}', space=sflag, size = 0x4, scoped, tag = 'scoped memory for vector_quantiser_forward.3']
    #allocation4 [shape = 'u8[512]{0}', space=vmem, size = 0x400, scoped, tag = 'output window, operand 1, single buffered']
    #allocation5 [shape = 's32[1]{0}', space=sflag, size = 0x4, scoped, tag = 'scoped memory for vector_quantiser_forward.3']
    %12 = vsyncpa [#allocation3], 0
    %13 = vsyncpa [#allocation5], 0
    // Predicated region
    $region2: #{vector_quantiser_forward.3} parent=1 // pred_check
      _
    $region3: #{vector_quantiser_forward.3} parent=1 // pred_check_branch
      %15 = sbr.rel (0) target = $region5
    $region4: #{vector_quantiser_forward.3} parent=1 // pred_region
      _
    $region5: #{vector_quantiser_forward.3} parent=1 // pred_fallthru
      _
    // Predicated region
    $region6: #{vector_quantiser_forward.3} parent=1 // pred_check
      _
    $region7: #{vector_quantiser_forward.3} parent=1 // pred_check_branch
      %17 = sbr.rel (0) target = $region9
    $region8: #{vector_quantiser_forward.3} parent=1 // pred_region
      _
    $region9: #{vector_quantiser_forward.3} parent=1 // pred_fallthru
      _
    // Predicated region
    $region10: #{vector_quantiser_forward.3} parent=1 // pred_check
      _
    $region11: #{vector_quantiser_forward.3} parent=1 // pred_check_branch
      %19 = sbr.rel (0) target = $region13
    $region12: #{vector_quantiser_forward.3} parent=1 // pred_region
      _
    $region13: #{vector_quantiser_forward.3} parent=1 // pred_fallthru
      _
    // Predicated region
    $region14: #{vector_quantiser_forward.3} parent=1 // pred_check
      _
    $region15: #{vector_quantiser_forward.3} parent=1 // pred_check_branch
      %21 = sbr.rel (0) target = $region17
    $region16: #{vector_quantiser_forward.3} parent=1 // pred_region
      _
    $region17: #{vector_quantiser_forward.3} parent=1 // pred_fallthru
      _
    // Predicated region
    $region18: #{vector_quantiser_forward.3} parent=1 // pred_check
      _
    $region19: #{vector_quantiser_forward.3} parent=1 // pred_check_branch
      %23 = sbr.rel (0) target = $region21
    $region20: #{vector_quantiser_forward.3} parent=1 // pred_region
      _
    $region21: #{vector_quantiser_forward.3} parent=1 // pred_fallthru
      _
    %v25 = vld [vmem:[%s0] sm:$0xf]
    %v26 = vld [vmem:[%s0 + $0x4] sm:$0xf]
    %v27 = vld [vmem:[%s0 + $0x8] sm:$0xf]
    %v28 = vld [vmem:[%s0 + $0xc] sm:$0xf]
    %v29 = vld [vmem:[%s0 + $0x10] sm:$0xf]
    %v30 = vld [vmem:[%s0 + $0x14] sm:$0xf]
    %v31 = vld [vmem:[%s0 + $0x18] sm:$0xf]
    %v32 = vld [vmem:[%s0 + $0x1c] sm:$0xf]
    %v33 = vld [vmem:[%s0 + $0x20] sm:$0xf]
    %v34 = vld [vmem:[%s0 + $0x24] sm:$0xf]
    %v35 = vld [vmem:[%s0 + $0x28] sm:$0xf]
    %v36 = vld [vmem:[%s0 + $0x2c] sm:$0xf]
    %v37 = vld [vmem:[%s0 + $0x30] sm:$0xf]
    %v38 = vld [vmem:[%s0 + $0x34] sm:$0xf]
    %v39 = vld [vmem:[%s0 + $0x38] sm:$0xf]
    %v40 = vld [vmem:[%s0 + $0x3c] sm:$0xf]
    %v41 = vld [vmem:[%s0 + $0x40] sm:$0xf]
    %v42 = vld [vmem:[%s0 + $0x44] sm:$0xf]
    %v43 = vld [vmem:[%s0 + $0x48] sm:$0xf]
    %v44 = vld [vmem:[%s0 + $0x4c] sm:$0xf]
    %v45 = vld [vmem:[%s0 + $0x50] sm:$0xf]
    %v46 = vld [vmem:[%s0 + $0x54] sm:$0xf]
    %v47 = vld [vmem:[%s0 + $0x58] sm:$0xf]
    %v48 = vld [vmem:[%s0 + $0x5c] sm:$0xf]
    %v49 = vld [vmem:[%s0 + $0x60] sm:$0xf]
    %v50 = vld [vmem:[%s0 + $0x64] sm:$0xf]
    %v51 = vld [vmem:[%s0 + $0x68] sm:$0xf]
    %v52 = vld [vmem:[%s0 + $0x6c] sm:$0xf]
    %v53 = vld [vmem:[%s0 + $0x70] sm:$0xf]
    %v54 = vld [vmem:[%s0 + $0x74] sm:$0xf]
    %v55 = vld [vmem:[%s0 + $0x78] sm:$0xf]
    %v56 = vld [vmem:[%s0 + $0x7c] sm:$0xf]
    %v57 = vld [vmem:[%s0 + $0x80] sm:$0xf]
    %v58 = vld [vmem:[%s0 + $0x84] sm:$0xf]
    %v59 = vld [vmem:[%s0 + $0x88] sm:$0xf]
    %v60 = vld [vmem:[%s0 + $0x8c] sm:$0xf]
    %v61 = vld [vmem:[%s0 + $0x90] sm:$0xf]
    %v62 = vld [vmem:[%s0 + $0x94] sm:$0xf]
    %v63 = vld [vmem:[%s0 + $0x98] sm:$0xf]
    %v64 = vld [vmem:[%s0 + $0x9c] sm:$0xf]
    %v65 = vld [vmem:[%s0 + $0xa0] sm:$0xf]
    %v66 = vld [vmem:[%s0 + $0xa4] sm:$0xf]
    %v67 = vld [vmem:[%s0 + $0xa8] sm:$0xf]
    %v68 = vld [vmem:[%s0 + $0xac] sm:$0xf]
    %v69 = vld [vmem:[%s0 + $0xb0] sm:$0xf]
    %v70 = vld [vmem:[%s0 + $0xb4] sm:$0xf]
    %v71 = vld [vmem:[%s0 + $0xb8] sm:$0xf]
    %v72 = vld [vmem:[%s0 + $0xbc] sm:$0xf]
    %v73 = vld [vmem:[%s0 + $0xc0] sm:$0xf]
    %v74 = vld [vmem:[%s0 + $0xc4] sm:$0xf]
    %v75 = vld [vmem:[%s0 + $0xc8] sm:$0xf]
    %v76 = vld [vmem:[%s0 + $0xcc] sm:$0xf]
    %v77 = vld [vmem:[%s0 + $0xd0] sm:$0xf]
    %v78 = vld [vmem:[%s0 + $0xd4] sm:$0xf]
    %v79 = vld [vmem:[%s0 + $0xd8] sm:$0xf]
    %v80 = vld [vmem:[%s0 + $0xdc] sm:$0xf]
    %v81 = vld [vmem:[%s0 + $0xe0] sm:$0xf]
    %v82 = vld [vmem:[%s0 + $0xe4] sm:$0xf]
    %v83 = vld [vmem:[%s0 + $0xe8] sm:$0xf]
    %v84 = vld [vmem:[%s0 + $0xec] sm:$0xf]
    %v85 = vld [vmem:[%s0 + $0xf0] sm:$0xf]
    %v86 = vld [vmem:[%s0 + $0xf4] sm:$0xf]
    %v87 = vld [vmem:[%s0 + $0xf8] sm:$0xf]
    %v88 = vld [vmem:[%s0 + $0xfc] sm:$0xf]
    %v89 = vld [vmem:[%s1] sm:$0xff]
    %v90 = vld [vmem:[%s1 + $0x8] sm:$0xff]
    %v91 = vld [vmem:[%s1 + $0x10] sm:$0xff]
    %v92 = vld [vmem:[%s1 + $0x18] sm:$0xff]
    %v93 = vld [vmem:[%s1 + $0x20] sm:$0xff]
    %v94 = vld [vmem:[%s1 + $0x28] sm:$0xff]
    %v95 = vld [vmem:[%s1 + $0x30] sm:$0xff]
    %v96 = vld [vmem:[%s1 + $0x38] sm:$0xff]
    %v97 = vld [vmem:[%s1 + $0x40] sm:$0xff]
    %v98 = vld [vmem:[%s1 + $0x48] sm:$0xff]
    %v99 = vld [vmem:[%s1 + $0x50] sm:$0xff]
    %v100 = vld [vmem:[%s1 + $0x58] sm:$0xff]
    %v101 = vld [vmem:[%s1 + $0x60] sm:$0xff]
    %v102 = vld [vmem:[%s1 + $0x68] sm:$0xff]
    %v103 = vld [vmem:[%s1 + $0x70] sm:$0xff]
    %v104 = vld [vmem:[%s1 + $0x78] sm:$0xff]
    %v169 = vunpack.c.l.b16 %v25
    %v170 = vunpack.c.l.b16 %v26
    %v171 = vunpack.c.l.b16 %v27
    %v172 = vunpack.c.l.b16 %v28
    %v173 = vunpack.c.l.b16 %v29
    %v174 = vunpack.c.l.b16 %v30
    %v175 = vunpack.c.l.b16 %v31
    %v176 = vunpack.c.l.b16 %v32
    %v177 = vunpack.c.l.b16 %v33
    %v178 = vunpack.c.l.b16 %v34
    %v179 = vunpack.c.l.b16 %v35
    %v180 = vunpack.c.l.b16 %v36
    %v181 = vunpack.c.l.b16 %v37
    %v182 = vunpack.c.l.b16 %v38
    %v183 = vunpack.c.l.b16 %v39
    %v184 = vunpack.c.l.b16 %v40
    %v185 = vunpack.c.l.b16 %v41
    %v186 = vunpack.c.l.b16 %v42
    %v187 = vunpack.c.l.b16 %v43
    %v188 = vunpack.c.l.b16 %v44
    %v189 = vunpack.c.l.b16 %v45
    %v190 = vunpack.c.l.b16 %v46
    %v191 = vunpack.c.l.b16 %v47
    %v192 = vunpack.c.l.b16 %v48
    %v193 = vunpack.c.l.b16 %v49
    %v194 = vunpack.c.l.b16 %v50
    %v195 = vunpack.c.l.b16 %v51
    %v196 = vunpack.c.l.b16 %v52
    %v197 = vunpack.c.l.b16 %v53
    %v198 = vunpack.c.l.b16 %v54
    %v199 = vunpack.c.l.b16 %v55
    %v200 = vunpack.c.l.b16 %v56
    %v201 = vunpack.c.l.b16 %v57
    %v202 = vunpack.c.l.b16 %v58
    %v203 = vunpack.c.l.b16 %v59
    %v204 = vunpack.c.l.b16 %v60
    %v205 = vunpack.c.l.b16 %v61
    %v206 = vunpack.c.l.b16 %v62
    %v207 = vunpack.c.l.b16 %v63
    %v208 = vunpack.c.l.b16 %v64
    %v209 = vunpack.c.l.b16 %v65
    %v210 = vunpack.c.l.b16 %v66
    %v211 = vunpack.c.l.b16 %v67
    %v212 = vunpack.c.l.b16 %v68
    %v213 = vunpack.c.l.b16 %v69
    %v214 = vunpack.c.l.b16 %v70
    %v215 = vunpack.c.l.b16 %v71
    %v216 = vunpack.c.l.b16 %v72
    %v217 = vunpack.c.l.b16 %v73
    %v218 = vunpack.c.l.b16 %v74
    %v219 = vunpack.c.l.b16 %v75
    %v220 = vunpack.c.l.b16 %v76
    %v221 = vunpack.c.l.b16 %v77
    %v222 = vunpack.c.l.b16 %v78
    %v223 = vunpack.c.l.b16 %v79
    %v224 = vunpack.c.l.b16 %v80
    %v225 = vunpack.c.l.b16 %v81
    %v226 = vunpack.c.l.b16 %v82
    %v227 = vunpack.c.l.b16 %v83
    %v228 = vunpack.c.l.b16 %v84
    %v229 = vunpack.c.l.b16 %v85
    %v230 = vunpack.c.l.b16 %v86
    %v231 = vunpack.c.l.b16 %v87
    %v232 = vunpack.c.l.b16 %v88
    %v233 = vpack.c.b16 %v170, %v169
    %v234 = vpack.c.b16 %v172, %v171
    %v235 = vpack.c.b16 %v174, %v173
    %v236 = vpack.c.b16 %v176, %v175
    %v237 = vpack.c.b16 %v178, %v177
    %v238 = vpack.c.b16 %v180, %v179
    %v239 = vpack.c.b16 %v182, %v181
    %v240 = vpack.c.b16 %v184, %v183
    %v241 = vpack.c.b16 %v186, %v185
    %v242 = vpack.c.b16 %v188, %v187
    %v243 = vpack.c.b16 %v190, %v189
    %v244 = vpack.c.b16 %v192, %v191
    %v245 = vpack.c.b16 %v194, %v193
    %v246 = vpack.c.b16 %v196, %v195
    %v247 = vpack.c.b16 %v198, %v197
    %v248 = vpack.c.b16 %v200, %v199
    %v249 = vpack.c.b16 %v202, %v201
    %v250 = vpack.c.b16 %v204, %v203
    %v251 = vpack.c.b16 %v206, %v205
    %v252 = vpack.c.b16 %v208, %v207
    %v253 = vpack.c.b16 %v210, %v209
    %v254 = vpack.c.b16 %v212, %v211
    %v255 = vpack.c.b16 %v214, %v213
    %v256 = vpack.c.b16 %v216, %v215
    %v257 = vpack.c.b16 %v218, %v217
    %v258 = vpack.c.b16 %v220, %v219
    %v259 = vpack.c.b16 %v222, %v221
    %v260 = vpack.c.b16 %v224, %v223
    %v261 = vpack.c.b16 %v226, %v225
    %v262 = vpack.c.b16 %v228, %v227
    %v263 = vpack.c.b16 %v230, %v229
    %v264 = vpack.c.b16 %v232, %v231
    %v281 = vunpack.c.l.b16 %v89
    %v282 = vunpack.c.h.b16 %v89
    %v283 = vunpack.c.l.b16 %v90
    %v284 = vunpack.c.h.b16 %v90
    %v285 = vunpack.c.l.b16 %v91
    %v286 = vunpack.c.h.b16 %v91
    %v287 = vunpack.c.l.b16 %v92
    %v288 = vunpack.c.h.b16 %v92
    %v289 = vunpack.c.l.b16 %v93
    %v290 = vunpack.c.h.b16 %v93
    %v291 = vunpack.c.l.b16 %v94
    %v292 = vunpack.c.h.b16 %v94
    %v293 = vunpack.c.l.b16 %v95
    %v294 = vunpack.c.h.b16 %v95
    %v295 = vunpack.c.l.b16 %v96
    %v296 = vunpack.c.h.b16 %v96
    %v297 = vunpack.c.l.b16 %v97
    %v298 = vunpack.c.h.b16 %v97
    %v299 = vunpack.c.l.b16 %v98
    %v300 = vunpack.c.h.b16 %v98
    %v301 = vunpack.c.l.b16 %v99
    %v302 = vunpack.c.h.b16 %v99
    %v303 = vunpack.c.l.b16 %v100
    %v304 = vunpack.c.h.b16 %v100
    %v305 = vunpack.c.l.b16 %v101
    %v306 = vunpack.c.h.b16 %v101
    %v307 = vunpack.c.l.b16 %v102
    %v308 = vunpack.c.h.b16 %v102
    %v309 = vunpack.c.l.b16 %v103
    %v310 = vunpack.c.h.b16 %v103
    %v311 = vunpack.c.l.b16 %v104
    %v312 = vunpack.c.h.b16 %v104
    %v313 = vpack.c.b16 %v285, %v281
    %v314 = vpack.c.b16 %v286, %v282
    %v315 = vpack.c.b16 %v287, %v283
    %v316 = vpack.c.b16 %v288, %v284
    %v317 = vpack.c.b16 %v293, %v289
    %v318 = vpack.c.b16 %v294, %v290
    %v319 = vpack.c.b16 %v295, %v291
    %v320 = vpack.c.b16 %v296, %v292
    %v321 = vpack.c.b16 %v301, %v297
    %v322 = vpack.c.b16 %v302, %v298
    %v323 = vpack.c.b16 %v303, %v299
    %v324 = vpack.c.b16 %v304, %v300
    %v325 = vpack.c.b16 %v309, %v305
    %v326 = vpack.c.b16 %v310, %v306
    %v327 = vpack.c.b16 %v311, %v307
    %v328 = vpack.c.b16 %v312, %v308
    %vm345 = vcmask 523264
    %v347 = vsel %vm345, %v233, 0
    %v350 = vsel %vm345, %v234, 0
    %v353 = vsel %vm345, %v235, 0
    %v356 = vsel %vm345, %v236, 0
    %v359 = vsel %vm345, %v237, 0
    %v362 = vsel %vm345, %v238, 0
    %v365 = vsel %vm345, %v239, 0
    %v368 = vsel %vm345, %v240, 0
    %v371 = vsel %vm345, %v241, 0
    %v374 = vsel %vm345, %v242, 0
    %v377 = vsel %vm345, %v243, 0
    %v380 = vsel %vm345, %v244, 0
    %v383 = vsel %vm345, %v245, 0
    %v386 = vsel %vm345, %v246, 0
    %v389 = vsel %vm345, %v247, 0
    %v392 = vsel %vm345, %v248, 0
    %v395 = vsel %vm345, %v249, 0
    %v398 = vsel %vm345, %v250, 0
    %v401 = vsel %vm345, %v251, 0
    %v404 = vsel %vm345, %v252, 0
    %v407 = vsel %vm345, %v253, 0
    %v410 = vsel %vm345, %v254, 0
    %v413 = vsel %vm345, %v255, 0
    %v416 = vsel %vm345, %v256, 0
    %v419 = vsel %vm345, %v257, 0
    %v422 = vsel %vm345, %v258, 0
    %v425 = vsel %vm345, %v259, 0
    %v428 = vsel %vm345, %v260, 0
    %v431 = vsel %vm345, %v261, 0
    %v434 = vsel %vm345, %v262, 0
    %v437 = vsel %vm345, %v263, 0
    %v440 = vsel %vm345, %v264, 0
    %442 = vmatprep.subr.bf16.mxu0 %v314
    %443 = vmatpush1.bf16.msra.mxu0 %v313
    %444 = vmatprep.subr.bf16.mxu0 %v318
    %445 = vmatpush1.bf16.msra.mxu0 %v317
    %446 = vmatprep.subr.bf16.mxu0 %v322
    %447 = vmatpush1.bf16.msra.mxu0 %v321
    %448 = vmatprep.subr.bf16.mxu0 %v326
    %449 = vmatpush1.bf16.msra.mxu0 %v325
    %450 = vmatprep.subr.bf16.mxu0 0
    %451 = vmatpush1.bf16.msra.mxu0 0
    %452 = vmatprep.subr.bf16.mxu0 0
    %453 = vmatpush1.bf16.msra.mxu0 0
    %454 = vmatprep.subr.bf16.mxu0 0
    %455 = vmatpush1.bf16.msra.mxu0 0
    %456 = vmatprep.subr.bf16.mxu0 0
    %457 = vmatpush1.bf16.msra.mxu0 0
    %458 = vmatprep.subr.bf16.mxu0 0
    %459 = vmatpush1.bf16.msra.mxu0 0
    %460 = vmatprep.subr.bf16.mxu0 0
    %461 = vmatpush1.bf16.msra.mxu0 0
    %462 = vmatprep.subr.bf16.mxu0 0
    %463 = vmatpush1.bf16.msra.mxu0 0
    %464 = vmatprep.subr.bf16.mxu0 0
    %465 = vmatpush1.bf16.msra.mxu0 0
    %466 = vmatprep.subr.bf16.mxu0 0
    %467 = vmatpush1.bf16.msra.mxu0 0
    %468 = vmatprep.subr.bf16.mxu0 0
    %469 = vmatpush1.bf16.msra.mxu0 0
    %470 = vmatprep.subr.bf16.mxu0 0
    %471 = vmatpush1.bf16.msra.mxu0 0
    %472 = vmatprep.subr.bf16.mxu0 0
    %473 = vmatpush1.bf16.msra.mxu0 0
    %474 = vmatprep.mubr.bf16.mxu0 0
    %475 = vmatmul.mubr.bf16.gmra.mrb[0].mxu0 %v347
    %v476 = vpop.f32.mrb[0].mxu0
    %v477 = vadd.f32 0.0, %v476
    %v478 = vpop.f32.mrb[0].mxu0
    %v479 = vadd.f32 0.0, %v478
    %v480 = vpop.f32.mrb[0].mxu0
    %v481 = vadd.f32 0.0, %v480
    %v482 = vpop.f32.mrb[0].mxu0
    %v483 = vadd.f32 0.0, %v482
    %484 = vmatprep.mubr.bf16.mxu0 0
    %485 = vmatmul.mubr.bf16.gmra.mrb[0].mxu0 %v350
    %v486 = vpop.f32.mrb[0].mxu0
    %v487 = vadd.f32 0.0, %v486
    %v488 = vpop.f32.mrb[0].mxu0
    %v489 = vadd.f32 0.0, %v488
    %v490 = vpop.f32.mrb[0].mxu0
    %v491 = vadd.f32 0.0, %v490
    %v492 = vpop.f32.mrb[0].mxu0
    %v493 = vadd.f32 0.0, %v492
    %494 = vmatprep.mubr.bf16.mxu0 0
    %495 = vmatmul.mubr.bf16.gmra.mrb[0].mxu0 %v353
    %v496 = vpop.f32.mrb[0].mxu0
    %v497 = vadd.f32 0.0, %v496
    %v498 = vpop.f32.mrb[0].mxu0
    %v499 = vadd.f32 0.0, %v498
    %v500 = vpop.f32.mrb[0].mxu0
    %v501 = vadd.f32 0.0, %v500
    %v502 = vpop.f32.mrb[0].mxu0
    %v503 = vadd.f32 0.0, %v502
    %504 = vmatprep.mubr.bf16.mxu0 0
    %505 = vmatmul.mubr.bf16.gmra.mrb[0].mxu0 %v356
    %v506 = vpop.f32.mrb[0].mxu0
    %v507 = vadd.f32 0.0, %v506
    %v508 = vpop.f32.mrb[0].mxu0
    %v509 = vadd.f32 0.0, %v508
    %v510 = vpop.f32.mrb[0].mxu0
    %v511 = vadd.f32 0.0, %v510
    %v512 = vpop.f32.mrb[0].mxu0
    %v513 = vadd.f32 0.0, %v512
    %514 = vmatprep.mubr.bf16.mxu0 0
    %515 = vmatmul.mubr.bf16.gmra.mrb[0].mxu0 %v359
    %v516 = vpop.f32.mrb[0].mxu0
    %v517 = vadd.f32 0.0, %v516
    %v518 = vpop.f32.mrb[0].mxu0
    %v519 = vadd.f32 0.0, %v518
    %v520 = vpop.f32.mrb[0].mxu0
    %v521 = vadd.f32 0.0, %v520
    %v522 = vpop.f32.mrb[0].mxu0
    %v523 = vadd.f32 0.0, %v522
    %524 = vmatprep.mubr.bf16.mxu0 0
    %525 = vmatmul.mubr.bf16.gmra.mrb[0].mxu0 %v362
    %v526 = vpop.f32.mrb[0].mxu0
    %v527 = vadd.f32 0.0, %v526
    %v528 = vpop.f32.mrb[0].mxu0
    %v529 = vadd.f32 0.0, %v528
    %v530 = vpop.f32.mrb[0].mxu0
    %v531 = vadd.f32 0.0, %v530
    %v532 = vpop.f32.mrb[0].mxu0
    %v533 = vadd.f32 0.0, %v532
    %534 = vmatprep.mubr.bf16.mxu0 0
    %535 = vmatmul.mubr.bf16.gmra.mrb[0].mxu0 %v365
    %v536 = vpop.f32.mrb[0].mxu0
    %v537 = vadd.f32 0.0, %v536
    %v538 = vpop.f32.mrb[0].mxu0
    %v539 = vadd.f32 0.0, %v538
    %v540 = vpop.f32.mrb[0].mxu0
    %v541 = vadd.f32 0.0, %v540
    %v542 = vpop.f32.mrb[0].mxu0
    %v543 = vadd.f32 0.0, %v542
    %544 = vmatprep.mubr.bf16.mxu0 0
    %545 = vmatmul.mubr.bf16.gmra.mrb[0].mxu0 %v368
    %v546 = vpop.f32.mrb[0].mxu0
    %v547 = vadd.f32 0.0, %v546
    %v548 = vpop.f32.mrb[0].mxu0
    %v549 = vadd.f32 0.0, %v548
    %v550 = vpop.f32.mrb[0].mxu0
    %v551 = vadd.f32 0.0, %v550
    %v552 = vpop.f32.mrb[0].mxu0
    %v553 = vadd.f32 0.0, %v552
    %554 = vmatprep.mubr.bf16.mxu0 0
    %555 = vmatmul.mubr.bf16.gmra.mrb[0].mxu0 %v371
    %v556 = vpop.f32.mrb[0].mxu0
    %v557 = vadd.f32 0.0, %v556
    %v558 = vpop.f32.mrb[0].mxu0
    %v559 = vadd.f32 0.0, %v558
    %v560 = vpop.f32.mrb[0].mxu0
    %v561 = vadd.f32 0.0, %v560
    %v562 = vpop.f32.mrb[0].mxu0
    %v563 = vadd.f32 0.0, %v562
    %564 = vmatprep.mubr.bf16.mxu0 0
    %565 = vmatmul.mubr.bf16.gmra.mrb[0].mxu0 %v374
    %v566 = vpop.f32.mrb[0].mxu0
    %v567 = vadd.f32 0.0, %v566
    %v568 = vpop.f32.mrb[0].mxu0
    %v569 = vadd.f32 0.0, %v568
    %v570 = vpop.f32.mrb[0].mxu0
    %v571 = vadd.f32 0.0, %v570
    %v572 = vpop.f32.mrb[0].mxu0
    %v573 = vadd.f32 0.0, %v572
    %574 = vmatprep.mubr.bf16.mxu0 0
    %575 = vmatmul.mubr.bf16.gmra.mrb[0].mxu0 %v377
    %v576 = vpop.f32.mrb[0].mxu0
    %v577 = vadd.f32 0.0, %v576
    %v578 = vpop.f32.mrb[0].mxu0
    %v579 = vadd.f32 0.0, %v578
    %v580 = vpop.f32.mrb[0].mxu0
    %v581 = vadd.f32 0.0, %v580
    %v582 = vpop.f32.mrb[0].mxu0
    %v583 = vadd.f32 0.0, %v582
    %584 = vmatprep.mubr.bf16.mxu0 0
    %585 = vmatmul.mubr.bf16.gmra.mrb[0].mxu0 %v380
    %v586 = vpop.f32.mrb[0].mxu0
    %v587 = vadd.f32 0.0, %v586
    %v588 = vpop.f32.mrb[0].mxu0
    %v589 = vadd.f32 0.0, %v588
    %v590 = vpop.f32.mrb[0].mxu0
    %v591 = vadd.f32 0.0, %v590
    %v592 = vpop.f32.mrb[0].mxu0
    %v593 = vadd.f32 0.0, %v592
    %594 = vmatprep.mubr.bf16.mxu0 0
    %595 = vmatmul.mubr.bf16.gmra.mrb[0].mxu0 %v383
    %v596 = vpop.f32.mrb[0].mxu0
    %v597 = vadd.f32 0.0, %v596
    %v598 = vpop.f32.mrb[0].mxu0
    %v599 = vadd.f32 0.0, %v598
    %v600 = vpop.f32.mrb[0].mxu0
    %v601 = vadd.f32 0.0, %v600
    %v602 = vpop.f32.mrb[0].mxu0
    %v603 = vadd.f32 0.0, %v602
    %604 = vmatprep.mubr.bf16.mxu0 0
    %605 = vmatmul.mubr.bf16.gmra.mrb[0].mxu0 %v386
    %v606 = vpop.f32.mrb[0].mxu0
    %v607 = vadd.f32 0.0, %v606
    %v608 = vpop.f32.mrb[0].mxu0
    %v609 = vadd.f32 0.0, %v608
    %v610 = vpop.f32.mrb[0].mxu0
    %v611 = vadd.f32 0.0, %v610
    %v612 = vpop.f32.mrb[0].mxu0
    %v613 = vadd.f32 0.0, %v612
    %614 = vmatprep.mubr.bf16.mxu0 0
    %615 = vmatmul.mubr.bf16.gmra.mrb[0].mxu0 %v389
    %v616 = vpop.f32.mrb[0].mxu0
    %v617 = vadd.f32 0.0, %v616
    %v618 = vpop.f32.mrb[0].mxu0
    %v619 = vadd.f32 0.0, %v618
    %v620 = vpop.f32.mrb[0].mxu0
    %v621 = vadd.f32 0.0, %v620
    %v622 = vpop.f32.mrb[0].mxu0
    %v623 = vadd.f32 0.0, %v622
    %624 = vmatprep.mubr.bf16.mxu0 0
    %625 = vmatmul.mubr.bf16.gmra.mrb[0].mxu0 %v392
    %v626 = vpop.f32.mrb[0].mxu0
    %v627 = vadd.f32 0.0, %v626
    %v628 = vpop.f32.mrb[0].mxu0
    %v629 = vadd.f32 0.0, %v628
    %v630 = vpop.f32.mrb[0].mxu0
    %v631 = vadd.f32 0.0, %v630
    %v632 = vpop.f32.mrb[0].mxu0
    %v633 = vadd.f32 0.0, %v632
    %634 = vmatprep.mubr.bf16.mxu0 0
    %635 = vmatmul.mubr.bf16.gmra.mrb[0].mxu0 %v395
    %v636 = vpop.f32.mrb[0].mxu0
    %v637 = vadd.f32 0.0, %v636
    %v638 = vpop.f32.mrb[0].mxu0
    %v639 = vadd.f32 0.0, %v638
    %v640 = vpop.f32.mrb[0].mxu0
    %v641 = vadd.f32 0.0, %v640
    %v642 = vpop.f32.mrb[0].mxu0
    %v643 = vadd.f32 0.0, %v642
    %644 = vmatprep.mubr.bf16.mxu0 0
    %645 = vmatmul.mubr.bf16.gmra.mrb[0].mxu0 %v398
    %v646 = vpop.f32.mrb[0].mxu0
    %v647 = vadd.f32 0.0, %v646
    %v648 = vpop.f32.mrb[0].mxu0
    %v649 = vadd.f32 0.0, %v648
    %v650 = vpop.f32.mrb[0].mxu0
    %v651 = vadd.f32 0.0, %v650
    %v652 = vpop.f32.mrb[0].mxu0
    %v653 = vadd.f32 0.0, %v652
    %654 = vmatprep.mubr.bf16.mxu0 0
    %655 = vmatmul.mubr.bf16.gmra.mrb[0].mxu0 %v401
    %v656 = vpop.f32.mrb[0].mxu0
    %v657 = vadd.f32 0.0, %v656
    %v658 = vpop.f32.mrb[0].mxu0
    %v659 = vadd.f32 0.0, %v658
    %v660 = vpop.f32.mrb[0].mxu0
    %v661 = vadd.f32 0.0, %v660
    %v662 = vpop.f32.mrb[0].mxu0
    %v663 = vadd.f32 0.0, %v662
    %664 = vmatprep.mubr.bf16.mxu0 0
    %665 = vmatmul.mubr.bf16.gmra.mrb[0].mxu0 %v404
    %v666 = vpop.f32.mrb[0].mxu0
    %v667 = vadd.f32 0.0, %v666
    %v668 = vpop.f32.mrb[0].mxu0
    %v669 = vadd.f32 0.0, %v668
    %v670 = vpop.f32.mrb[0].mxu0
    %v671 = vadd.f32 0.0, %v670
    %v672 = vpop.f32.mrb[0].mxu0
    %v673 = vadd.f32 0.0, %v672
    %674 = vmatprep.mubr.bf16.mxu0 0
    %675 = vmatmul.mubr.bf16.gmra.mrb[0].mxu0 %v407
    %v676 = vpop.f32.mrb[0].mxu0
    %v677 = vadd.f32 0.0, %v676
    %v678 = vpop.f32.mrb[0].mxu0
    %v679 = vadd.f32 0.0, %v678
    %v680 = vpop.f32.mrb[0].mxu0
    %v681 = vadd.f32 0.0, %v680
    %v682 = vpop.f32.mrb[0].mxu0
    %v683 = vadd.f32 0.0, %v682
    %684 = vmatprep.mubr.bf16.mxu0 0
    %685 = vmatmul.mubr.bf16.gmra.mrb[0].mxu0 %v410
    %v686 = vpop.f32.mrb[0].mxu0
    %v687 = vadd.f32 0.0, %v686
    %v688 = vpop.f32.mrb[0].mxu0
    %v689 = vadd.f32 0.0, %v688
    %v690 = vpop.f32.mrb[0].mxu0
    %v691 = vadd.f32 0.0, %v690
    %v692 = vpop.f32.mrb[0].mxu0
    %v693 = vadd.f32 0.0, %v692
    %694 = vmatprep.mubr.bf16.mxu0 0
    %695 = vmatmul.mubr.bf16.gmra.mrb[0].mxu0 %v413
    %v696 = vpop.f32.mrb[0].mxu0
    %v697 = vadd.f32 0.0, %v696
    %v698 = vpop.f32.mrb[0].mxu0
    %v699 = vadd.f32 0.0, %v698
    %v700 = vpop.f32.mrb[0].mxu0
    %v701 = vadd.f32 0.0, %v700
    %v702 = vpop.f32.mrb[0].mxu0
    %v703 = vadd.f32 0.0, %v702
    %704 = vmatprep.mubr.bf16.mxu0 0
    %705 = vmatmul.mubr.bf16.gmra.mrb[0].mxu0 %v416
    %v706 = vpop.f32.mrb[0].mxu0
    %v707 = vadd.f32 0.0, %v706
    %v708 = vpop.f32.mrb[0].mxu0
    %v709 = vadd.f32 0.0, %v708
    %v710 = vpop.f32.mrb[0].mxu0
    %v711 = vadd.f32 0.0, %v710
    %v712 = vpop.f32.mrb[0].mxu0
    %v713 = vadd.f32 0.0, %v712
    %714 = vmatprep.mubr.bf16.mxu0 0
    %715 = vmatmul.mubr.bf16.gmra.mrb[0].mxu0 %v419
    %v716 = vpop.f32.mrb[0].mxu0
    %v717 = vadd.f32 0.0, %v716
    %v718 = vpop.f32.mrb[0].mxu0
    %v719 = vadd.f32 0.0, %v718
    %v720 = vpop.f32.mrb[0].mxu0
    %v721 = vadd.f32 0.0, %v720
    %v722 = vpop.f32.mrb[0].mxu0
    %v723 = vadd.f32 0.0, %v722
    %724 = vmatprep.mubr.bf16.mxu0 0
    %725 = vmatmul.mubr.bf16.gmra.mrb[0].mxu0 %v422
    %v726 = vpop.f32.mrb[0].mxu0
    %v727 = vadd.f32 0.0, %v726
    %v728 = vpop.f32.mrb[0].mxu0
    %v729 = vadd.f32 0.0, %v728
    %v730 = vpop.f32.mrb[0].mxu0
    %v731 = vadd.f32 0.0, %v730
    %v732 = vpop.f32.mrb[0].mxu0
    %v733 = vadd.f32 0.0, %v732
    %734 = vmatprep.mubr.bf16.mxu0 0
    %735 = vmatmul.mubr.bf16.gmra.mrb[0].mxu0 %v425
    %v736 = vpop.f32.mrb[0].mxu0
    %v737 = vadd.f32 0.0, %v736
    %v738 = vpop.f32.mrb[0].mxu0
    %v739 = vadd.f32 0.0, %v738
    %v740 = vpop.f32.mrb[0].mxu0
    %v741 = vadd.f32 0.0, %v740
    %v742 = vpop.f32.mrb[0].mxu0
    %v743 = vadd.f32 0.0, %v742
    %744 = vmatprep.mubr.bf16.mxu0 0
    %745 = vmatmul.mubr.bf16.gmra.mrb[0].mxu0 %v428
    %v746 = vpop.f32.mrb[0].mxu0
    %v747 = vadd.f32 0.0, %v746
    %v748 = vpop.f32.mrb[0].mxu0
    %v749 = vadd.f32 0.0, %v748
    %v750 = vpop.f32.mrb[0].mxu0
    %v751 = vadd.f32 0.0, %v750
    %v752 = vpop.f32.mrb[0].mxu0
    %v753 = vadd.f32 0.0, %v752
    %754 = vmatprep.mubr.bf16.mxu0 0
    %755 = vmatmul.mubr.bf16.gmra.mrb[0].mxu0 %v431
    %v756 = vpop.f32.mrb[0].mxu0
    %v757 = vadd.f32 0.0, %v756
    %v758 = vpop.f32.mrb[0].mxu0
    %v759 = vadd.f32 0.0, %v758
    %v760 = vpop.f32.mrb[0].mxu0
    %v761 = vadd.f32 0.0, %v760
    %v762 = vpop.f32.mrb[0].mxu0
    %v763 = vadd.f32 0.0, %v762
    %764 = vmatprep.mubr.bf16.mxu0 0
    %765 = vmatmul.mubr.bf16.gmra.mrb[0].mxu0 %v434
    %v766 = vpop.f32.mrb[0].mxu0
    %v767 = vadd.f32 0.0, %v766
    %v768 = vpop.f32.mrb[0].mxu0
    %v769 = vadd.f32 0.0, %v768
    %v770 = vpop.f32.mrb[0].mxu0
    %v771 = vadd.f32 0.0, %v770
    %v772 = vpop.f32.mrb[0].mxu0
    %v773 = vadd.f32 0.0, %v772
    %774 = vmatprep.mubr.bf16.mxu0 0
    %775 = vmatmul.mubr.bf16.gmra.mrb[0].mxu0 %v437
    %v776 = vpop.f32.mrb[0].mxu0
    %v777 = vadd.f32 0.0, %v776
    %v778 = vpop.f32.mrb[0].mxu0
    %v779 = vadd.f32 0.0, %v778
    %v780 = vpop.f32.mrb[0].mxu0
    %v781 = vadd.f32 0.0, %v780
    %v782 = vpop.f32.mrb[0].mxu0
    %v783 = vadd.f32 0.0, %v782
    %784 = vmatprep.mubr.bf16.mxu0 0
    %785 = vmatmul.mubr.bf16.gmra.mrb[0].mxu0 %v440
    %v786 = vpop.f32.mrb[0].mxu0
    %v787 = vadd.f32 0.0, %v786
    %v788 = vpop.f32.mrb[0].mxu0
    %v789 = vadd.f32 0.0, %v788
    %v790 = vpop.f32.mrb[0].mxu0
    %v791 = vadd.f32 0.0, %v790
    %v792 = vpop.f32.mrb[0].mxu0
    %v793 = vadd.f32 0.0, %v792
    %794 = vdwg.mxu0
    %795 = vmatprep.subr.bf16.mxu0 %v316
    %796 = vmatpush1.bf16.msra.mxu0 %v315
    %797 = vmatprep.subr.bf16.mxu0 %v320
    %798 = vmatpush1.bf16.msra.mxu0 %v319
    %799 = vmatprep.subr.bf16.mxu0 %v324
    %800 = vmatpush1.bf16.msra.mxu0 %v323
    %801 = vmatprep.subr.bf16.mxu0 %v328
    %802 = vmatpush1.bf16.msra.mxu0 %v327
    %803 = vmatprep.subr.bf16.mxu0 0
    %804 = vmatpush1.bf16.msra.mxu0 0
    %805 = vmatprep.subr.bf16.mxu0 0
    %806 = vmatpush1.bf16.msra.mxu0 0
    %807 = vmatprep.subr.bf16.mxu0 0
    %808 = vmatpush1.bf16.msra.mxu0 0
    %809 = vmatprep.subr.bf16.mxu0 0
    %810 = vmatpush1.bf16.msra.mxu0 0
    %811 = vmatprep.subr.bf16.mxu0 0
    %812 = vmatpush1.bf16.msra.mxu0 0
    %813 = vmatprep.subr.bf16.mxu0 0
    %814 = vmatpush1.bf16.msra.mxu0 0
    %815 = vmatprep.subr.bf16.mxu0 0
    %816 = vmatpush1.bf16.msra.mxu0 0
    %817 = vmatprep.subr.bf16.mxu0 0
    %818 = vmatpush1.bf16.msra.mxu0 0
    %819 = vmatprep.subr.bf16.mxu0 0
    %820 = vmatpush1.bf16.msra.mxu0 0
    %821 = vmatprep.subr.bf16.mxu0 0
    %822 = vmatpush1.bf16.msra.mxu0 0
    %823 = vmatprep.subr.bf16.mxu0 0
    %824 = vmatpush1.bf16.msra.mxu0 0
    %825 = vmatprep.subr.bf16.mxu0 0
    %826 = vmatpush1.bf16.msra.mxu0 0
    %827 = vmatprep.mubr.bf16.mxu0 0
    %828 = vmatmul.mubr.bf16.gmra.mrb[0].mxu0 %v347
    %v829 = vpop.f32.mrb[0].mxu0
    %v830 = vadd.f32 0.0, %v829
    %v831 = vpop.f32.mrb[0].mxu0
    %v832 = vadd.f32 0.0, %v831
    %v833 = vpop.f32.mrb[0].mxu0
    %v834 = vadd.f32 0.0, %v833
    %v835 = vpop.f32.mrb[0].mxu0
    %v836 = vadd.f32 0.0, %v835
    %837 = vmatprep.mubr.bf16.mxu0 0
    %838 = vmatmul.mubr.bf16.gmra.mrb[0].mxu0 %v350
    %v839 = vpop.f32.mrb[0].mxu0
    %v840 = vadd.f32 0.0, %v839
    %v841 = vpop.f32.mrb[0].mxu0
    %v842 = vadd.f32 0.0, %v841
    %v843 = vpop.f32.mrb[0].mxu0
    %v844 = vadd.f32 0.0, %v843
    %v845 = vpop.f32.mrb[0].mxu0
    %v846 = vadd.f32 0.0, %v845
    %847 = vmatprep.mubr.bf16.mxu0 0
    %848 = vmatmul.mubr.bf16.gmra.mrb[0].mxu0 %v353
    %v849 = vpop.f32.mrb[0].mxu0
    %v850 = vadd.f32 0.0, %v849
    %v851 = vpop.f32.mrb[0].mxu0
    %v852 = vadd.f32 0.0, %v851
    %v853 = vpop.f32.mrb[0].mxu0
    %v854 = vadd.f32 0.0, %v853
    %v855 = vpop.f32.mrb[0].mxu0
    %v856 = vadd.f32 0.0, %v855
    %857 = vmatprep.mubr.bf16.mxu0 0
    %858 = vmatmul.mubr.bf16.gmra.mrb[0].mxu0 %v356
    %v859 = vpop.f32.mrb[0].mxu0
    %v860 = vadd.f32 0.0, %v859
    %v861 = vpop.f32.mrb[0].mxu0
    %v862 = vadd.f32 0.0, %v861
    %v863 = vpop.f32.mrb[0].mxu0
    %v864 = vadd.f32 0.0, %v863
    %v865 = vpop.f32.mrb[0].mxu0
    %v866 = vadd.f32 0.0, %v865
    %867 = vmatprep.mubr.bf16.mxu0 0
    %868 = vmatmul.mubr.bf16.gmra.mrb[0].mxu0 %v359
    %v869 = vpop.f32.mrb[0].mxu0
    %v870 = vadd.f32 0.0, %v869
    %v871 = vpop.f32.mrb[0].mxu0
    %v872 = vadd.f32 0.0, %v871
    %v873 = vpop.f32.mrb[0].mxu0
    %v874 = vadd.f32 0.0, %v873
    %v875 = vpop.f32.mrb[0].mxu0
    %v876 = vadd.f32 0.0, %v875
    %877 = vmatprep.mubr.bf16.mxu0 0
    %878 = vmatmul.mubr.bf16.gmra.mrb[0].mxu0 %v362
    %v879 = vpop.f32.mrb[0].mxu0
    %v880 = vadd.f32 0.0, %v879
    %v881 = vpop.f32.mrb[0].mxu0
    %v882 = vadd.f32 0.0, %v881
    %v883 = vpop.f32.mrb[0].mxu0
    %v884 = vadd.f32 0.0, %v883
    %v885 = vpop.f32.mrb[0].mxu0
    %v886 = vadd.f32 0.0, %v885
    %887 = vmatprep.mubr.bf16.mxu0 0
    %888 = vmatmul.mubr.bf16.gmra.mrb[0].mxu0 %v365
    %v889 = vpop.f32.mrb[0].mxu0
    %v890 = vadd.f32 0.0, %v889
    %v891 = vpop.f32.mrb[0].mxu0
    %v892 = vadd.f32 0.0, %v891
    %v893 = vpop.f32.mrb[0].mxu0
    %v894 = vadd.f32 0.0, %v893
    %v895 = vpop.f32.mrb[0].mxu0
    %v896 = vadd.f32 0.0, %v895
    %897 = vmatprep.mubr.bf16.mxu0 0
    %898 = vmatmul.mubr.bf16.gmra.mrb[0].mxu0 %v368
    %v899 = vpop.f32.mrb[0].mxu0
    %v900 = vadd.f32 0.0, %v899
    %v901 = vpop.f32.mrb[0].mxu0
    %v902 = vadd.f32 0.0, %v901
    %v903 = vpop.f32.mrb[0].mxu0
    %v904 = vadd.f32 0.0, %v903
    %v905 = vpop.f32.mrb[0].mxu0
    %v906 = vadd.f32 0.0, %v905
    %907 = vmatprep.mubr.bf16.mxu0 0
    %908 = vmatmul.mubr.bf16.gmra.mrb[0].mxu0 %v371
    %v909 = vpop.f32.mrb[0].mxu0
    %v910 = vadd.f32 0.0, %v909
    %v911 = vpop.f32.mrb[0].mxu0
    %v912 = vadd.f32 0.0, %v911
    %v913 = vpop.f32.mrb[0].mxu0
    %v914 = vadd.f32 0.0, %v913
    %v915 = vpop.f32.mrb[0].mxu0
    %v916 = vadd.f32 0.0, %v915
    %917 = vmatprep.mubr.bf16.mxu0 0
    %918 = vmatmul.mubr.bf16.gmra.mrb[0].mxu0 %v374
    %v919 = vpop.f32.mrb[0].mxu0
    %v920 = vadd.f32 0.0, %v919
    %v921 = vpop.f32.mrb[0].mxu0
    %v922 = vadd.f32 0.0, %v921
    %v923 = vpop.f32.mrb[0].mxu0
    %v924 = vadd.f32 0.0, %v923
    %v925 = vpop.f32.mrb[0].mxu0
    %v926 = vadd.f32 0.0, %v925
    %927 = vmatprep.mubr.bf16.mxu0 0
    %928 = vmatmul.mubr.bf16.gmra.mrb[0].mxu0 %v377
    %v929 = vpop.f32.mrb[0].mxu0
    %v930 = vadd.f32 0.0, %v929
    %v931 = vpop.f32.mrb[0].mxu0
    %v932 = vadd.f32 0.0, %v931
    %v933 = vpop.f32.mrb[0].mxu0
    %v934 = vadd.f32 0.0, %v933
    %v935 = vpop.f32.mrb[0].mxu0
    %v936 = vadd.f32 0.0, %v935
    %937 = vmatprep.mubr.bf16.mxu0 0
    %938 = vmatmul.mubr.bf16.gmra.mrb[0].mxu0 %v380
    %v939 = vpop.f32.mrb[0].mxu0
    %v940 = vadd.f32 0.0, %v939
    %v941 = vpop.f32.mrb[0].mxu0
    %v942 = vadd.f32 0.0, %v941
    %v943 = vpop.f32.mrb[0].mxu0
    %v944 = vadd.f32 0.0, %v943
    %v945 = vpop.f32.mrb[0].mxu0
    %v946 = vadd.f32 0.0, %v945
    %947 = vmatprep.mubr.bf16.mxu0 0
    %948 = vmatmul.mubr.bf16.gmra.mrb[0].mxu0 %v383
    %v949 = vpop.f32.mrb[0].mxu0
    %v950 = vadd.f32 0.0, %v949
    %v951 = vpop.f32.mrb[0].mxu0
    %v952 = vadd.f32 0.0, %v951
    %v953 = vpop.f32.mrb[0].mxu0
    %v954 = vadd.f32 0.0, %v953
    %v955 = vpop.f32.mrb[0].mxu0
    %v956 = vadd.f32 0.0, %v955
    %957 = vmatprep.mubr.bf16.mxu0 0
    %958 = vmatmul.mubr.bf16.gmra.mrb[0].mxu0 %v386
    %v959 = vpop.f32.mrb[0].mxu0
    %v960 = vadd.f32 0.0, %v959
    %v961 = vpop.f32.mrb[0].mxu0
    %v962 = vadd.f32 0.0, %v961
    %v963 = vpop.f32.mrb[0].mxu0
    %v964 = vadd.f32 0.0, %v963
    %v965 = vpop.f32.mrb[0].mxu0
    %v966 = vadd.f32 0.0, %v965
    %967 = vmatprep.mubr.bf16.mxu0 0
    %968 = vmatmul.mubr.bf16.gmra.mrb[0].mxu0 %v389
    %v969 = vpop.f32.mrb[0].mxu0
    %v970 = vadd.f32 0.0, %v969
    %v971 = vpop.f32.mrb[0].mxu0
    %v972 = vadd.f32 0.0, %v971
    %v973 = vpop.f32.mrb[0].mxu0
    %v974 = vadd.f32 0.0, %v973
    %v975 = vpop.f32.mrb[0].mxu0
    %v976 = vadd.f32 0.0, %v975
    %977 = vmatprep.mubr.bf16.mxu0 0
    %978 = vmatmul.mubr.bf16.gmra.mrb[0].mxu0 %v392
    %v979 = vpop.f32.mrb[0].mxu0
    %v980 = vadd.f32 0.0, %v979
    %v981 = vpop.f32.mrb[0].mxu0
    %v982 = vadd.f32 0.0, %v981
    %v983 = vpop.f32.mrb[0].mxu0
    %v984 = vadd.f32 0.0, %v983
    %v985 = vpop.f32.mrb[0].mxu0
    %v986 = vadd.f32 0.0, %v985
    %987 = vmatprep.mubr.bf16.mxu0 0
    %988 = vmatmul.mubr.bf16.gmra.mrb[0].mxu0 %v395
    %v989 = vpop.f32.mrb[0].mxu0
    %v990 = vadd.f32 0.0, %v989
    %v991 = vpop.f32.mrb[0].mxu0
    %v992 = vadd.f32 0.0, %v991
    %v993 = vpop.f32.mrb[0].mxu0
    %v994 = vadd.f32 0.0, %v993
    %v995 = vpop.f32.mrb[0].mxu0
    %v996 = vadd.f32 0.0, %v995
    %997 = vmatprep.mubr.bf16.mxu0 0
    %998 = vmatmul.mubr.bf16.gmra.mrb[0].mxu0 %v398
    %v999 = vpop.f32.mrb[0].mxu0
    %v1000 = vadd.f32 0.0, %v999
    %v1001 = vpop.f32.mrb[0].mxu0
    %v1002 = vadd.f32 0.0, %v1001
    %v1003 = vpop.f32.mrb[0].mxu0
    %v1004 = vadd.f32 0.0, %v1003
    %v1005 = vpop.f32.mrb[0].mxu0
    %v1006 = vadd.f32 0.0, %v1005
    %1007 = vmatprep.mubr.bf16.mxu0 0
    %1008 = vmatmul.mubr.bf16.gmra.mrb[0].mxu0 %v401
    %v1009 = vpop.f32.mrb[0].mxu0
    %v1010 = vadd.f32 0.0, %v1009
    %v1011 = vpop.f32.mrb[0].mxu0
    %v1012 = vadd.f32 0.0, %v1011
    %v1013 = vpop.f32.mrb[0].mxu0
    %v1014 = vadd.f32 0.0, %v1013
    %v1015 = vpop.f32.mrb[0].mxu0
    %v1016 = vadd.f32 0.0, %v1015
    %1017 = vmatprep.mubr.bf16.mxu0 0
    %1018 = vmatmul.mubr.bf16.gmra.mrb[0].mxu0 %v404
    %v1019 = vpop.f32.mrb[0].mxu0
    %v1020 = vadd.f32 0.0, %v1019
    %v1021 = vpop.f32.mrb[0].mxu0
    %v1022 = vadd.f32 0.0, %v1021
    %v1023 = vpop.f32.mrb[0].mxu0
    %v1024 = vadd.f32 0.0, %v1023
    %v1025 = vpop.f32.mrb[0].mxu0
    %v1026 = vadd.f32 0.0, %v1025
    %1027 = vmatprep.mubr.bf16.mxu0 0
    %1028 = vmatmul.mubr.bf16.gmra.mrb[0].mxu0 %v407
    %v1029 = vpop.f32.mrb[0].mxu0
    %v1030 = vadd.f32 0.0, %v1029
    %v1031 = vpop.f32.mrb[0].mxu0
    %v1032 = vadd.f32 0.0, %v1031
    %v1033 = vpop.f32.mrb[0].mxu0
    %v1034 = vadd.f32 0.0, %v1033
    %v1035 = vpop.f32.mrb[0].mxu0
    %v1036 = vadd.f32 0.0, %v1035
    %1037 = vmatprep.mubr.bf16.mxu0 0
    %1038 = vmatmul.mubr.bf16.gmra.mrb[0].mxu0 %v410
    %v1039 = vpop.f32.mrb[0].mxu0
    %v1040 = vadd.f32 0.0, %v1039
    %v1041 = vpop.f32.mrb[0].mxu0
    %v1042 = vadd.f32 0.0, %v1041
    %v1043 = vpop.f32.mrb[0].mxu0
    %v1044 = vadd.f32 0.0, %v1043
    %v1045 = vpop.f32.mrb[0].mxu0
    %v1046 = vadd.f32 0.0, %v1045
    %1047 = vmatprep.mubr.bf16.mxu0 0
    %1048 = vmatmul.mubr.bf16.gmra.mrb[0].mxu0 %v413
    %v1049 = vpop.f32.mrb[0].mxu0
    %v1050 = vadd.f32 0.0, %v1049
    %v1051 = vpop.f32.mrb[0].mxu0
    %v1052 = vadd.f32 0.0, %v1051
    %v1053 = vpop.f32.mrb[0].mxu0
    %v1054 = vadd.f32 0.0, %v1053
    %v1055 = vpop.f32.mrb[0].mxu0
    %v1056 = vadd.f32 0.0, %v1055
    %1057 = vmatprep.mubr.bf16.mxu0 0
    %1058 = vmatmul.mubr.bf16.gmra.mrb[0].mxu0 %v416
    %v1059 = vpop.f32.mrb[0].mxu0
    %v1060 = vadd.f32 0.0, %v1059
    %v1061 = vpop.f32.mrb[0].mxu0
    %v1062 = vadd.f32 0.0, %v1061
    %v1063 = vpop.f32.mrb[0].mxu0
    %v1064 = vadd.f32 0.0, %v1063
    %v1065 = vpop.f32.mrb[0].mxu0
    %v1066 = vadd.f32 0.0, %v1065
    %1067 = vmatprep.mubr.bf16.mxu0 0
    %1068 = vmatmul.mubr.bf16.gmra.mrb[0].mxu0 %v419
    %v1069 = vpop.f32.mrb[0].mxu0
    %v1070 = vadd.f32 0.0, %v1069
    %v1071 = vpop.f32.mrb[0].mxu0
    %v1072 = vadd.f32 0.0, %v1071
    %v1073 = vpop.f32.mrb[0].mxu0
    %v1074 = vadd.f32 0.0, %v1073
    %v1075 = vpop.f32.mrb[0].mxu0
    %v1076 = vadd.f32 0.0, %v1075
    %1077 = vmatprep.mubr.bf16.mxu0 0
    %1078 = vmatmul.mubr.bf16.gmra.mrb[0].mxu0 %v422
    %v1079 = vpop.f32.mrb[0].mxu0
    %v1080 = vadd.f32 0.0, %v1079
    %v1081 = vpop.f32.mrb[0].mxu0
    %v1082 = vadd.f32 0.0, %v1081
    %v1083 = vpop.f32.mrb[0].mxu0
    %v1084 = vadd.f32 0.0, %v1083
    %v1085 = vpop.f32.mrb[0].mxu0
    %v1086 = vadd.f32 0.0, %v1085
    %1087 = vmatprep.mubr.bf16.mxu0 0
    %1088 = vmatmul.mubr.bf16.gmra.mrb[0].mxu0 %v425
    %v1089 = vpop.f32.mrb[0].mxu0
    %v1090 = vadd.f32 0.0, %v1089
    %v1091 = vpop.f32.mrb[0].mxu0
    %v1092 = vadd.f32 0.0, %v1091
    %v1093 = vpop.f32.mrb[0].mxu0
    %v1094 = vadd.f32 0.0, %v1093
    %v1095 = vpop.f32.mrb[0].mxu0
    %v1096 = vadd.f32 0.0, %v1095
    %1097 = vmatprep.mubr.bf16.mxu0 0
    %1098 = vmatmul.mubr.bf16.gmra.mrb[0].mxu0 %v428
    %v1099 = vpop.f32.mrb[0].mxu0
    %v1100 = vadd.f32 0.0, %v1099
    %v1101 = vpop.f32.mrb[0].mxu0
    %v1102 = vadd.f32 0.0, %v1101
    %v1103 = vpop.f32.mrb[0].mxu0
    %v1104 = vadd.f32 0.0, %v1103
    %v1105 = vpop.f32.mrb[0].mxu0
    %v1106 = vadd.f32 0.0, %v1105
    %1107 = vmatprep.mubr.bf16.mxu0 0
    %1108 = vmatmul.mubr.bf16.gmra.mrb[0].mxu0 %v431
    %v1109 = vpop.f32.mrb[0].mxu0
    %v1110 = vadd.f32 0.0, %v1109
    %v1111 = vpop.f32.mrb[0].mxu0
    %v1112 = vadd.f32 0.0, %v1111
    %v1113 = vpop.f32.mrb[0].mxu0
    %v1114 = vadd.f32 0.0, %v1113
    %v1115 = vpop.f32.mrb[0].mxu0
    %v1116 = vadd.f32 0.0, %v1115
    %1117 = vmatprep.mubr.bf16.mxu0 0
    %1118 = vmatmul.mubr.bf16.gmra.mrb[0].mxu0 %v434
    %v1119 = vpop.f32.mrb[0].mxu0
    %v1120 = vadd.f32 0.0, %v1119
    %v1121 = vpop.f32.mrb[0].mxu0
    %v1122 = vadd.f32 0.0, %v1121
    %v1123 = vpop.f32.mrb[0].mxu0
    %v1124 = vadd.f32 0.0, %v1123
    %v1125 = vpop.f32.mrb[0].mxu0
    %v1126 = vadd.f32 0.0, %v1125
    %1127 = vmatprep.mubr.bf16.mxu0 0
    %1128 = vmatmul.mubr.bf16.gmra.mrb[0].mxu0 %v437
    %v1129 = vpop.f32.mrb[0].mxu0
    %v1130 = vadd.f32 0.0, %v1129
    %v1131 = vpop.f32.mrb[0].mxu0
    %v1132 = vadd.f32 0.0, %v1131
    %v1133 = vpop.f32.mrb[0].mxu0
    %v1134 = vadd.f32 0.0, %v1133
    %v1135 = vpop.f32.mrb[0].mxu0
    %v1136 = vadd.f32 0.0, %v1135
    %1137 = vmatprep.mubr.bf16.mxu0 0
    %1138 = vmatmul.mubr.bf16.gmra.mrb[0].mxu0 %v440
    %v1139 = vpop.f32.mrb[0].mxu0
    %v1140 = vadd.f32 0.0, %v1139
    %v1141 = vpop.f32.mrb[0].mxu0
    %v1142 = vadd.f32 0.0, %v1141
    %v1143 = vpop.f32.mrb[0].mxu0
    %v1144 = vadd.f32 0.0, %v1143
    %v1145 = vpop.f32.mrb[0].mxu0
    %v1146 = vadd.f32 0.0, %v1145
    %1147 = vdwg.mxu0
    %v1148 = vld [vmem:[%s2] sm:$0xff]
    %v1149 = vld [vmem:[%s2 + $0x8] sm:$0xff]
    %v1150 = vld [vmem:[%s2 + $0x10] sm:$0xff]
    %v1151 = vld [vmem:[%s2 + $0x18] sm:$0xff]
    %v1152 = vld [vmem:[%s2 + $0x20] sm:$0xff]
    %v1153 = vld [vmem:[%s2 + $0x28] sm:$0xff]
    %v1154 = vld [vmem:[%s2 + $0x30] sm:$0xff]
    %v1155 = vld [vmem:[%s2 + $0x38] sm:$0xff]
    %v1156 = vld [vmem:[%s2 + $0x40] sm:$0xff]
    %v1157 = vld [vmem:[%s2 + $0x48] sm:$0xff]
    %v1158 = vld [vmem:[%s2 + $0x50] sm:$0xff]
    %v1159 = vld [vmem:[%s2 + $0x58] sm:$0xff]
    %v1160 = vld [vmem:[%s2 + $0x60] sm:$0xff]
    %v1161 = vld [vmem:[%s2 + $0x68] sm:$0xff]
    %v1162 = vld [vmem:[%s2 + $0x70] sm:$0xff]
    %v1163 = vld [vmem:[%s2 + $0x78] sm:$0xff]
    %v1164 = vld [vmem:[%s2 + $0x80] sm:$0xff]
    %v1165 = vld [vmem:[%s2 + $0x88] sm:$0xff]
    %v1166 = vld [vmem:[%s2 + $0x90] sm:$0xff]
    %v1167 = vld [vmem:[%s2 + $0x98] sm:$0xff]
    %v1168 = vld [vmem:[%s2 + $0xa0] sm:$0xff]
    %v1169 = vld [vmem:[%s2 + $0xa8] sm:$0xff]
    %v1170 = vld [vmem:[%s2 + $0xb0] sm:$0xff]
    %v1171 = vld [vmem:[%s2 + $0xb8] sm:$0xff]
    %v1172 = vld [vmem:[%s2 + $0xc0] sm:$0xff]
    %v1173 = vld [vmem:[%s2 + $0xc8] sm:$0xff]
    %v1174 = vld [vmem:[%s2 + $0xd0] sm:$0xff]
    %v1175 = vld [vmem:[%s2 + $0xd8] sm:$0xff]
    %v1176 = vld [vmem:[%s2 + $0xe0] sm:$0xff]
    %v1177 = vld [vmem:[%s2 + $0xe8] sm:$0xff]
    %v1178 = vld [vmem:[%s2 + $0xf0] sm:$0xff]
    %v1179 = vld [vmem:[%s2 + $0xf8] sm:$0xff]
    %v1180 = vld [vmem:[%s2 + $0x100] sm:$0xff]
    %v1181 = vld [vmem:[%s2 + $0x108] sm:$0xff]
    %v1182 = vld [vmem:[%s2 + $0x110] sm:$0xff]
    %v1183 = vld [vmem:[%s2 + $0x118] sm:$0xff]
    %v1184 = vld [vmem:[%s2 + $0x120] sm:$0xff]
    %v1185 = vld [vmem:[%s2 + $0x128] sm:$0xff]
    %v1186 = vld [vmem:[%s2 + $0x130] sm:$0xff]
    %v1187 = vld [vmem:[%s2 + $0x138] sm:$0xff]
    %v1188 = vld [vmem:[%s2 + $0x140] sm:$0xff]
    %v1189 = vld [vmem:[%s2 + $0x148] sm:$0xff]
    %v1190 = vld [vmem:[%s2 + $0x150] sm:$0xff]
    %v1191 = vld [vmem:[%s2 + $0x158] sm:$0xff]
    %v1192 = vld [vmem:[%s2 + $0x160] sm:$0xff]
    %v1193 = vld [vmem:[%s2 + $0x168] sm:$0xff]
    %v1194 = vld [vmem:[%s2 + $0x170] sm:$0xff]
    %v1195 = vld [vmem:[%s2 + $0x178] sm:$0xff]
    %v1196 = vld [vmem:[%s2 + $0x180] sm:$0xff]
    %v1197 = vld [vmem:[%s2 + $0x188] sm:$0xff]
    %v1198 = vld [vmem:[%s2 + $0x190] sm:$0xff]
    %v1199 = vld [vmem:[%s2 + $0x198] sm:$0xff]
    %v1200 = vld [vmem:[%s2 + $0x1a0] sm:$0xff]
    %v1201 = vld [vmem:[%s2 + $0x1a8] sm:$0xff]
    %v1202 = vld [vmem:[%s2 + $0x1b0] sm:$0xff]
    %v1203 = vld [vmem:[%s2 + $0x1b8] sm:$0xff]
    %v1204 = vld [vmem:[%s2 + $0x1c0] sm:$0xff]
    %v1205 = vld [vmem:[%s2 + $0x1c8] sm:$0xff]
    %v1206 = vld [vmem:[%s2 + $0x1d0] sm:$0xff]
    %v1207 = vld [vmem:[%s2 + $0x1d8] sm:$0xff]
    %v1208 = vld [vmem:[%s2 + $0x1e0] sm:$0xff]
    %v1209 = vld [vmem:[%s2 + $0x1e8] sm:$0xff]
    %v1210 = vld [vmem:[%s2 + $0x1f0] sm:$0xff]
    %v1211 = vld [vmem:[%s2 + $0x1f8] sm:$0xff]
    %v1212 = vld [vmem:[%s3] sm:$0xf]
    %1214 = vset.pattern.permute.xlu0 0
    %1215 = vperm.xlu0 %1214, %v1148
    %v1216 = vpop.permute.xlu0 %1215
    %1219 = vset.pattern.permute.xlu0 0
    %1220 = vperm.xlu0 %1219, %v1149
    %v1221 = vpop.permute.xlu0 %1220
    %1224 = vset.pattern.permute.xlu0 0
    %1225 = vperm.xlu0 %1224, %v1150
    %v1226 = vpop.permute.xlu0 %1225
    %1229 = vset.pattern.permute.xlu0 0
    %1230 = vperm.xlu0 %1229, %v1151
    %v1231 = vpop.permute.xlu0 %1230
    %1234 = vset.pattern.permute.xlu0 0
    %1235 = vperm.xlu0 %1234, %v1152
    %v1236 = vpop.permute.xlu0 %1235
    %1239 = vset.pattern.permute.xlu0 0
    %1240 = vperm.xlu0 %1239, %v1153
    %v1241 = vpop.permute.xlu0 %1240
    %1244 = vset.pattern.permute.xlu0 0
    %1245 = vperm.xlu0 %1244, %v1154
    %v1246 = vpop.permute.xlu0 %1245
    %1249 = vset.pattern.permute.xlu0 0
    %1250 = vperm.xlu0 %1249, %v1155
    %v1251 = vpop.permute.xlu0 %1250
    %1254 = vset.pattern.permute.xlu0 0
    %1255 = vperm.xlu0 %1254, %v1156
    %v1256 = vpop.permute.xlu0 %1255
    %1259 = vset.pattern.permute.xlu0 0
    %1260 = vperm.xlu0 %1259, %v1157
    %v1261 = vpop.permute.xlu0 %1260
    %1264 = vset.pattern.permute.xlu0 0
    %1265 = vperm.xlu0 %1264, %v1158
    %v1266 = vpop.permute.xlu0 %1265
    %1269 = vset.pattern.permute.xlu0 0
    %1270 = vperm.xlu0 %1269, %v1159
    %v1271 = vpop.permute.xlu0 %1270
    %1274 = vset.pattern.permute.xlu0 0
    %1275 = vperm.xlu0 %1274, %v1160
    %v1276 = vpop.permute.xlu0 %1275
    %1279 = vset.pattern.permute.xlu0 0
    %1280 = vperm.xlu0 %1279, %v1161
    %v1281 = vpop.permute.xlu0 %1280
    %1284 = vset.pattern.permute.xlu0 0
    %1285 = vperm.xlu0 %1284, %v1162
    %v1286 = vpop.permute.xlu0 %1285
    %1289 = vset.pattern.permute.xlu0 0
    %1290 = vperm.xlu0 %1289, %v1163
    %v1291 = vpop.permute.xlu0 %1290
    %1294 = vset.pattern.permute.xlu0 0
    %1295 = vperm.xlu0 %1294, %v1164
    %v1296 = vpop.permute.xlu0 %1295
    %1299 = vset.pattern.permute.xlu0 0
    %1300 = vperm.xlu0 %1299, %v1165
    %v1301 = vpop.permute.xlu0 %1300
    %1304 = vset.pattern.permute.xlu0 0
    %1305 = vperm.xlu0 %1304, %v1166
    %v1306 = vpop.permute.xlu0 %1305
    %1309 = vset.pattern.permute.xlu0 0
    %1310 = vperm.xlu0 %1309, %v1167
    %v1311 = vpop.permute.xlu0 %1310
    %1314 = vset.pattern.permute.xlu0 0
    %1315 = vperm.xlu0 %1314, %v1168
    %v1316 = vpop.permute.xlu0 %1315
    %1319 = vset.pattern.permute.xlu0 0
    %1320 = vperm.xlu0 %1319, %v1169
    %v1321 = vpop.permute.xlu0 %1320
    %1324 = vset.pattern.permute.xlu0 0
    %1325 = vperm.xlu0 %1324, %v1170
    %v1326 = vpop.permute.xlu0 %1325
    %1329 = vset.pattern.permute.xlu0 0
    %1330 = vperm.xlu0 %1329, %v1171
    %v1331 = vpop.permute.xlu0 %1330
    %1334 = vset.pattern.permute.xlu0 0
    %1335 = vperm.xlu0 %1334, %v1172
    %v1336 = vpop.permute.xlu0 %1335
    %1339 = vset.pattern.permute.xlu0 0
    %1340 = vperm.xlu0 %1339, %v1173
    %v1341 = vpop.permute.xlu0 %1340
    %1344 = vset.pattern.permute.xlu0 0
    %1345 = vperm.xlu0 %1344, %v1174
    %v1346 = vpop.permute.xlu0 %1345
    %1349 = vset.pattern.permute.xlu0 0
    %1350 = vperm.xlu0 %1349, %v1175
    %v1351 = vpop.permute.xlu0 %1350
    %1354 = vset.pattern.permute.xlu0 0
    %1355 = vperm.xlu0 %1354, %v1176
    %v1356 = vpop.permute.xlu0 %1355
    %1359 = vset.pattern.permute.xlu0 0
    %1360 = vperm.xlu0 %1359, %v1177
    %v1361 = vpop.permute.xlu0 %1360
    %1364 = vset.pattern.permute.xlu0 0
    %1365 = vperm.xlu0 %1364, %v1178
    %v1366 = vpop.permute.xlu0 %1365
    %1369 = vset.pattern.permute.xlu0 0
    %1370 = vperm.xlu0 %1369, %v1179
    %v1371 = vpop.permute.xlu0 %1370
    %1374 = vset.pattern.permute.xlu0 0
    %1375 = vperm.xlu0 %1374, %v1180
    %v1376 = vpop.permute.xlu0 %1375
    %1379 = vset.pattern.permute.xlu0 0
    %1380 = vperm.xlu0 %1379, %v1181
    %v1381 = vpop.permute.xlu0 %1380
    %1384 = vset.pattern.permute.xlu0 0
    %1385 = vperm.xlu0 %1384, %v1182
    %v1386 = vpop.permute.xlu0 %1385
    %1389 = vset.pattern.permute.xlu0 0
    %1390 = vperm.xlu0 %1389, %v1183
    %v1391 = vpop.permute.xlu0 %1390
    %1394 = vset.pattern.permute.xlu0 0
    %1395 = vperm.xlu0 %1394, %v1184
    %v1396 = vpop.permute.xlu0 %1395
    %1399 = vset.pattern.permute.xlu0 0
    %1400 = vperm.xlu0 %1399, %v1185
    %v1401 = vpop.permute.xlu0 %1400
    %1404 = vset.pattern.permute.xlu0 0
    %1405 = vperm.xlu0 %1404, %v1186
    %v1406 = vpop.permute.xlu0 %1405
    %1409 = vset.pattern.permute.xlu0 0
    %1410 = vperm.xlu0 %1409, %v1187
    %v1411 = vpop.permute.xlu0 %1410
    %1414 = vset.pattern.permute.xlu0 0
    %1415 = vperm.xlu0 %1414, %v1188
    %v1416 = vpop.permute.xlu0 %1415
    %1419 = vset.pattern.permute.xlu0 0
    %1420 = vperm.xlu0 %1419, %v1189
    %v1421 = vpop.permute.xlu0 %1420
    %1424 = vset.pattern.permute.xlu0 0
    %1425 = vperm.xlu0 %1424, %v1190
    %v1426 = vpop.permute.xlu0 %1425
    %1429 = vset.pattern.permute.xlu0 0
    %1430 = vperm.xlu0 %1429, %v1191
    %v1431 = vpop.permute.xlu0 %1430
    %1434 = vset.pattern.permute.xlu0 0
    %1435 = vperm.xlu0 %1434, %v1192
    %v1436 = vpop.permute.xlu0 %1435
    %1439 = vset.pattern.permute.xlu0 0
    %1440 = vperm.xlu0 %1439, %v1193
    %v1441 = vpop.permute.xlu0 %1440
    %1444 = vset.pattern.permute.xlu0 0
    %1445 = vperm.xlu0 %1444, %v1194
    %v1446 = vpop.permute.xlu0 %1445
    %1449 = vset.pattern.permute.xlu0 0
    %1450 = vperm.xlu0 %1449, %v1195
    %v1451 = vpop.permute.xlu0 %1450
    %1454 = vset.pattern.permute.xlu0 0
    %1455 = vperm.xlu0 %1454, %v1196
    %v1456 = vpop.permute.xlu0 %1455
    %1459 = vset.pattern.permute.xlu0 0
    %1460 = vperm.xlu0 %1459, %v1197
    %v1461 = vpop.permute.xlu0 %1460
    %1464 = vset.pattern.permute.xlu0 0
    %1465 = vperm.xlu0 %1464, %v1198
    %v1466 = vpop.permute.xlu0 %1465
    %1469 = vset.pattern.permute.xlu0 0
    %1470 = vperm.xlu0 %1469, %v1199
    %v1471 = vpop.permute.xlu0 %1470
    %1474 = vset.pattern.permute.xlu0 0
    %1475 = vperm.xlu0 %1474, %v1200
    %v1476 = vpop.permute.xlu0 %1475
    %1479 = vset.pattern.permute.xlu0 0
    %1480 = vperm.xlu0 %1479, %v1201
    %v1481 = vpop.permute.xlu0 %1480
    %1484 = vset.pattern.permute.xlu0 0
    %1485 = vperm.xlu0 %1484, %v1202
    %v1486 = vpop.permute.xlu0 %1485
    %1489 = vset.pattern.permute.xlu0 0
    %1490 = vperm.xlu0 %1489, %v1203
    %v1491 = vpop.permute.xlu0 %1490
    %1494 = vset.pattern.permute.xlu0 0
    %1495 = vperm.xlu0 %1494, %v1204
    %v1496 = vpop.permute.xlu0 %1495
    %1499 = vset.pattern.permute.xlu0 0
    %1500 = vperm.xlu0 %1499, %v1205
    %v1501 = vpop.permute.xlu0 %1500
    %1504 = vset.pattern.permute.xlu0 0
    %1505 = vperm.xlu0 %1504, %v1206
    %v1506 = vpop.permute.xlu0 %1505
    %1509 = vset.pattern.permute.xlu0 0
    %1510 = vperm.xlu0 %1509, %v1207
    %v1511 = vpop.permute.xlu0 %1510
    %1514 = vset.pattern.permute.xlu0 0
    %1515 = vperm.xlu0 %1514, %v1208
    %v1516 = vpop.permute.xlu0 %1515
    %1519 = vset.pattern.permute.xlu0 0
    %1520 = vperm.xlu0 %1519, %v1209
    %v1521 = vpop.permute.xlu0 %1520
    %1524 = vset.pattern.permute.xlu0 0
    %1525 = vperm.xlu0 %1524, %v1210
    %v1526 = vpop.permute.xlu0 %1525
    %1529 = vset.pattern.permute.xlu0 0
    %1530 = vperm.xlu0 %1529, %v1211
    %v1531 = vpop.permute.xlu0 %1530
    %v1534 = vlaneseq
    %v1535 = vshrl.u32 %v1534, 7
    %v1536 = vsub.s32 0, %v1535
    %v1537 = vrot.slane %v1212, %v1536
    %v1538 = vlaneseq
    %v1539 = vshrl.u32 %v1538, 7
    %v1540 = vsub.s32 1, %v1539
    %v1541 = vrot.slane %v1212, %v1540
    %v1542 = vlaneseq
    %v1543 = vshrl.u32 %v1542, 7
    %v1544 = vsub.s32 2, %v1543
    %v1545 = vrot.slane %v1212, %v1544
    %v1546 = vlaneseq
    %v1547 = vshrl.u32 %v1546, 7
    %v1548 = vsub.s32 3, %v1547
    %v1549 = vrot.slane %v1212, %v1548
    %v1554 = vadd.f32 %v1216, %v1537
    %v1555 = vadd.f32 %v1216, %v1541
    %v1556 = vadd.f32 %v1216, %v1545
    %v1557 = vadd.f32 %v1216, %v1549
    %v1558 = vadd.f32 %v1221, %v1537
    %v1559 = vadd.f32 %v1221, %v1541
    %v1560 = vadd.f32 %v1221, %v1545
    %v1561 = vadd.f32 %v1221, %v1549
    %v1562 = vadd.f32 %v1226, %v1537
    %v1563 = vadd.f32 %v1226, %v1541
    %v1564 = vadd.f32 %v1226, %v1545
    %v1565 = vadd.f32 %v1226, %v1549
    %v1566 = vadd.f32 %v1231, %v1537
    %v1567 = vadd.f32 %v1231, %v1541
    %v1568 = vadd.f32 %v1231, %v1545
    %v1569 = vadd.f32 %v1231, %v1549
    %v1570 = vadd.f32 %v1236, %v1537
    %v1571 = vadd.f32 %v1236, %v1541
    %v1572 = vadd.f32 %v1236, %v1545
    %v1573 = vadd.f32 %v1236, %v1549
    %v1574 = vadd.f32 %v1241, %v1537
    %v1575 = vadd.f32 %v1241, %v1541
    %v1576 = vadd.f32 %v1241, %v1545
    %v1577 = vadd.f32 %v1241, %v1549
    %v1578 = vadd.f32 %v1246, %v1537
    %v1579 = vadd.f32 %v1246, %v1541
    %v1580 = vadd.f32 %v1246, %v1545
    %v1581 = vadd.f32 %v1246, %v1549
    %v1582 = vadd.f32 %v1251, %v1537
    %v1583 = vadd.f32 %v1251, %v1541
    %v1584 = vadd.f32 %v1251, %v1545
    %v1585 = vadd.f32 %v1251, %v1549
    %v1586 = vadd.f32 %v1256, %v1537
    %v1587 = vadd.f32 %v1256, %v1541
    %v1588 = vadd.f32 %v1256, %v1545
    %v1589 = vadd.f32 %v1256, %v1549
    %v1590 = vadd.f32 %v1261, %v1537
    %v1591 = vadd.f32 %v1261, %v1541
    %v1592 = vadd.f32 %v1261, %v1545
    %v1593 = vadd.f32 %v1261, %v1549
    %v1594 = vadd.f32 %v1266, %v1537
    %v1595 = vadd.f32 %v1266, %v1541
    %v1596 = vadd.f32 %v1266, %v1545
    %v1597 = vadd.f32 %v1266, %v1549
    %v1598 = vadd.f32 %v1271, %v1537
    %v1599 = vadd.f32 %v1271, %v1541
    %v1600 = vadd.f32 %v1271, %v1545
    %v1601 = vadd.f32 %v1271, %v1549
    %v1602 = vadd.f32 %v1276, %v1537
    %v1603 = vadd.f32 %v1276, %v1541
    %v1604 = vadd.f32 %v1276, %v1545
    %v1605 = vadd.f32 %v1276, %v1549
    %v1606 = vadd.f32 %v1281, %v1537
    %v1607 = vadd.f32 %v1281, %v1541
    %v1608 = vadd.f32 %v1281, %v1545
    %v1609 = vadd.f32 %v1281, %v1549
    %v1610 = vadd.f32 %v1286, %v1537
    %v1611 = vadd.f32 %v1286, %v1541
    %v1612 = vadd.f32 %v1286, %v1545
    %v1613 = vadd.f32 %v1286, %v1549
    %v1614 = vadd.f32 %v1291, %v1537
    %v1615 = vadd.f32 %v1291, %v1541
    %v1616 = vadd.f32 %v1291, %v1545
    %v1617 = vadd.f32 %v1291, %v1549
    %v1618 = vadd.f32 %v1296, %v1537
    %v1619 = vadd.f32 %v1296, %v1541
    %v1620 = vadd.f32 %v1296, %v1545
    %v1621 = vadd.f32 %v1296, %v1549
    %v1622 = vadd.f32 %v1301, %v1537
    %v1623 = vadd.f32 %v1301, %v1541
    %v1624 = vadd.f32 %v1301, %v1545
    %v1625 = vadd.f32 %v1301, %v1549
    %v1626 = vadd.f32 %v1306, %v1537
    %v1627 = vadd.f32 %v1306, %v1541
    %v1628 = vadd.f32 %v1306, %v1545
    %v1629 = vadd.f32 %v1306, %v1549
    %v1630 = vadd.f32 %v1311, %v1537
    %v1631 = vadd.f32 %v1311, %v1541
    %v1632 = vadd.f32 %v1311, %v1545
    %v1633 = vadd.f32 %v1311, %v1549
    %v1634 = vadd.f32 %v1316, %v1537
    %v1635 = vadd.f32 %v1316, %v1541
    %v1636 = vadd.f32 %v1316, %v1545
    %v1637 = vadd.f32 %v1316, %v1549
    %v1638 = vadd.f32 %v1321, %v1537
    %v1639 = vadd.f32 %v1321, %v1541
    %v1640 = vadd.f32 %v1321, %v1545
    %v1641 = vadd.f32 %v1321, %v1549
    %v1642 = vadd.f32 %v1326, %v1537
    %v1643 = vadd.f32 %v1326, %v1541
    %v1644 = vadd.f32 %v1326, %v1545
    %v1645 = vadd.f32 %v1326, %v1549
    %v1646 = vadd.f32 %v1331, %v1537
    %v1647 = vadd.f32 %v1331, %v1541
    %v1648 = vadd.f32 %v1331, %v1545
    %v1649 = vadd.f32 %v1331, %v1549
    %v1650 = vadd.f32 %v1336, %v1537
    %v1651 = vadd.f32 %v1336, %v1541
    %v1652 = vadd.f32 %v1336, %v1545
    %v1653 = vadd.f32 %v1336, %v1549
    %v1654 = vadd.f32 %v1341, %v1537
    %v1655 = vadd.f32 %v1341, %v1541
    %v1656 = vadd.f32 %v1341, %v1545
    %v1657 = vadd.f32 %v1341, %v1549
    %v1658 = vadd.f32 %v1346, %v1537
    %v1659 = vadd.f32 %v1346, %v1541
    %v1660 = vadd.f32 %v1346, %v1545
    %v1661 = vadd.f32 %v1346, %v1549
    %v1662 = vadd.f32 %v1351, %v1537
    %v1663 = vadd.f32 %v1351, %v1541
    %v1664 = vadd.f32 %v1351, %v1545
    %v1665 = vadd.f32 %v1351, %v1549
    %v1666 = vadd.f32 %v1356, %v1537
    %v1667 = vadd.f32 %v1356, %v1541
    %v1668 = vadd.f32 %v1356, %v1545
    %v1669 = vadd.f32 %v1356, %v1549
    %v1670 = vadd.f32 %v1361, %v1537
    %v1671 = vadd.f32 %v1361, %v1541
    %v1672 = vadd.f32 %v1361, %v1545
    %v1673 = vadd.f32 %v1361, %v1549
    %v1674 = vadd.f32 %v1366, %v1537
    %v1675 = vadd.f32 %v1366, %v1541
    %v1676 = vadd.f32 %v1366, %v1545
    %v1677 = vadd.f32 %v1366, %v1549
    %v1678 = vadd.f32 %v1371, %v1537
    %v1679 = vadd.f32 %v1371, %v1541
    %v1680 = vadd.f32 %v1371, %v1545
    %v1681 = vadd.f32 %v1371, %v1549
    %v1682 = vadd.f32 %v1376, %v1537
    %v1683 = vadd.f32 %v1376, %v1541
    %v1684 = vadd.f32 %v1376, %v1545
    %v1685 = vadd.f32 %v1376, %v1549
    %v1686 = vadd.f32 %v1381, %v1537
    %v1687 = vadd.f32 %v1381, %v1541
    %v1688 = vadd.f32 %v1381, %v1545
    %v1689 = vadd.f32 %v1381, %v1549
    %v1690 = vadd.f32 %v1386, %v1537
    %v1691 = vadd.f32 %v1386, %v1541
    %v1692 = vadd.f32 %v1386, %v1545
    %v1693 = vadd.f32 %v1386, %v1549
    %v1694 = vadd.f32 %v1391, %v1537
    %v1695 = vadd.f32 %v1391, %v1541
    %v1696 = vadd.f32 %v1391, %v1545
    %v1697 = vadd.f32 %v1391, %v1549
    %v1698 = vadd.f32 %v1396, %v1537
    %v1699 = vadd.f32 %v1396, %v1541
    %v1700 = vadd.f32 %v1396, %v1545
    %v1701 = vadd.f32 %v1396, %v1549
    %v1702 = vadd.f32 %v1401, %v1537
    %v1703 = vadd.f32 %v1401, %v1541
    %v1704 = vadd.f32 %v1401, %v1545
    %v1705 = vadd.f32 %v1401, %v1549
    %v1706 = vadd.f32 %v1406, %v1537
    %v1707 = vadd.f32 %v1406, %v1541
    %v1708 = vadd.f32 %v1406, %v1545
    %v1709 = vadd.f32 %v1406, %v1549
    %v1710 = vadd.f32 %v1411, %v1537
    %v1711 = vadd.f32 %v1411, %v1541
    %v1712 = vadd.f32 %v1411, %v1545
    %v1713 = vadd.f32 %v1411, %v1549
    %v1714 = vadd.f32 %v1416, %v1537
    %v1715 = vadd.f32 %v1416, %v1541
    %v1716 = vadd.f32 %v1416, %v1545
    %v1717 = vadd.f32 %v1416, %v1549
    %v1718 = vadd.f32 %v1421, %v1537
    %v1719 = vadd.f32 %v1421, %v1541
    %v1720 = vadd.f32 %v1421, %v1545
    %v1721 = vadd.f32 %v1421, %v1549
    %v1722 = vadd.f32 %v1426, %v1537
    %v1723 = vadd.f32 %v1426, %v1541
    %v1724 = vadd.f32 %v1426, %v1545
    %v1725 = vadd.f32 %v1426, %v1549
    %v1726 = vadd.f32 %v1431, %v1537
    %v1727 = vadd.f32 %v1431, %v1541
    %v1728 = vadd.f32 %v1431, %v1545
    %v1729 = vadd.f32 %v1431, %v1549
    %v1730 = vadd.f32 %v1436, %v1537
    %v1731 = vadd.f32 %v1436, %v1541
    %v1732 = vadd.f32 %v1436, %v1545
    %v1733 = vadd.f32 %v1436, %v1549
    %v1734 = vadd.f32 %v1441, %v1537
    %v1735 = vadd.f32 %v1441, %v1541
    %v1736 = vadd.f32 %v1441, %v1545
    %v1737 = vadd.f32 %v1441, %v1549
    %v1738 = vadd.f32 %v1446, %v1537
    %v1739 = vadd.f32 %v1446, %v1541
    %v1740 = vadd.f32 %v1446, %v1545
    %v1741 = vadd.f32 %v1446, %v1549
    %v1742 = vadd.f32 %v1451, %v1537
    %v1743 = vadd.f32 %v1451, %v1541
    %v1744 = vadd.f32 %v1451, %v1545
    %v1745 = vadd.f32 %v1451, %v1549
    %v1746 = vadd.f32 %v1456, %v1537
    %v1747 = vadd.f32 %v1456, %v1541
    %v1748 = vadd.f32 %v1456, %v1545
    %v1749 = vadd.f32 %v1456, %v1549
    %v1750 = vadd.f32 %v1461, %v1537
    %v1751 = vadd.f32 %v1461, %v1541
    %v1752 = vadd.f32 %v1461, %v1545
    %v1753 = vadd.f32 %v1461, %v1549
    %v1754 = vadd.f32 %v1466, %v1537
    %v1755 = vadd.f32 %v1466, %v1541
    %v1756 = vadd.f32 %v1466, %v1545
    %v1757 = vadd.f32 %v1466, %v1549
    %v1758 = vadd.f32 %v1471, %v1537
    %v1759 = vadd.f32 %v1471, %v1541
    %v1760 = vadd.f32 %v1471, %v1545
    %v1761 = vadd.f32 %v1471, %v1549
    %v1762 = vadd.f32 %v1476, %v1537
    %v1763 = vadd.f32 %v1476, %v1541
    %v1764 = vadd.f32 %v1476, %v1545
    %v1765 = vadd.f32 %v1476, %v1549
    %v1766 = vadd.f32 %v1481, %v1537
    %v1767 = vadd.f32 %v1481, %v1541
    %v1768 = vadd.f32 %v1481, %v1545
    %v1769 = vadd.f32 %v1481, %v1549
    %v1770 = vadd.f32 %v1486, %v1537
    %v1771 = vadd.f32 %v1486, %v1541
    %v1772 = vadd.f32 %v1486, %v1545
    %v1773 = vadd.f32 %v1486, %v1549
    %v1774 = vadd.f32 %v1491, %v1537
    %v1775 = vadd.f32 %v1491, %v1541
    %v1776 = vadd.f32 %v1491, %v1545
    %v1777 = vadd.f32 %v1491, %v1549
    %v1778 = vadd.f32 %v1496, %v1537
    %v1779 = vadd.f32 %v1496, %v1541
    %v1780 = vadd.f32 %v1496, %v1545
    %v1781 = vadd.f32 %v1496, %v1549
    %v1782 = vadd.f32 %v1501, %v1537
    %v1783 = vadd.f32 %v1501, %v1541
    %v1784 = vadd.f32 %v1501, %v1545
    %v1785 = vadd.f32 %v1501, %v1549
    %v1786 = vadd.f32 %v1506, %v1537
    %v1787 = vadd.f32 %v1506, %v1541
    %v1788 = vadd.f32 %v1506, %v1545
    %v1789 = vadd.f32 %v1506, %v1549
    %v1790 = vadd.f32 %v1511, %v1537
    %v1791 = vadd.f32 %v1511, %v1541
    %v1792 = vadd.f32 %v1511, %v1545
    %v1793 = vadd.f32 %v1511, %v1549
    %v1794 = vadd.f32 %v1516, %v1537
    %v1795 = vadd.f32 %v1516, %v1541
    %v1796 = vadd.f32 %v1516, %v1545
    %v1797 = vadd.f32 %v1516, %v1549
    %v1798 = vadd.f32 %v1521, %v1537
    %v1799 = vadd.f32 %v1521, %v1541
    %v1800 = vadd.f32 %v1521, %v1545
    %v1801 = vadd.f32 %v1521, %v1549
    %v1802 = vadd.f32 %v1526, %v1537
    %v1803 = vadd.f32 %v1526, %v1541
    %v1804 = vadd.f32 %v1526, %v1545
    %v1805 = vadd.f32 %v1526, %v1549
    %v1806 = vadd.f32 %v1531, %v1537
    %v1807 = vadd.f32 %v1531, %v1541
    %v1808 = vadd.f32 %v1531, %v1545
    %v1809 = vadd.f32 %v1531, %v1549
    %v1810 = vmul.f32 %v477, 2.0
    %v1811 = vmul.f32 %v479, 2.0
    %v1812 = vmul.f32 %v830, 2.0
    %v1813 = vmul.f32 %v832, 2.0
    %v1814 = vmul.f32 %v481, 2.0
    %v1815 = vmul.f32 %v483, 2.0
    %v1816 = vmul.f32 %v834, 2.0
    %v1817 = vmul.f32 %v836, 2.0
    %v1818 = vmul.f32 %v487, 2.0
    %v1819 = vmul.f32 %v489, 2.0
    %v1820 = vmul.f32 %v840, 2.0
    %v1821 = vmul.f32 %v842, 2.0
    %v1822 = vmul.f32 %v491, 2.0
    %v1823 = vmul.f32 %v493, 2.0
    %v1824 = vmul.f32 %v844, 2.0
    %v1825 = vmul.f32 %v846, 2.0
    %v1826 = vmul.f32 %v497, 2.0
    %v1827 = vmul.f32 %v499, 2.0
    %v1828 = vmul.f32 %v850, 2.0
    %v1829 = vmul.f32 %v852, 2.0
    %v1830 = vmul.f32 %v501, 2.0
    %v1831 = vmul.f32 %v503, 2.0
    %v1832 = vmul.f32 %v854, 2.0
    %v1833 = vmul.f32 %v856, 2.0
    %v1834 = vmul.f32 %v507, 2.0
    %v1835 = vmul.f32 %v509, 2.0
    %v1836 = vmul.f32 %v860, 2.0
    %v1837 = vmul.f32 %v862, 2.0
    %v1838 = vmul.f32 %v511, 2.0
    %v1839 = vmul.f32 %v513, 2.0
    %v1840 = vmul.f32 %v864, 2.0
    %v1841 = vmul.f32 %v866, 2.0
    %v1842 = vmul.f32 %v517, 2.0
    %v1843 = vmul.f32 %v519, 2.0
    %v1844 = vmul.f32 %v870, 2.0
    %v1845 = vmul.f32 %v872, 2.0
    %v1846 = vmul.f32 %v521, 2.0
    %v1847 = vmul.f32 %v523, 2.0
    %v1848 = vmul.f32 %v874, 2.0
    %v1849 = vmul.f32 %v876, 2.0
    %v1850 = vmul.f32 %v527, 2.0
    %v1851 = vmul.f32 %v529, 2.0
    %v1852 = vmul.f32 %v880, 2.0
    %v1853 = vmul.f32 %v882, 2.0
    %v1854 = vmul.f32 %v531, 2.0
    %v1855 = vmul.f32 %v533, 2.0
    %v1856 = vmul.f32 %v884, 2.0
    %v1857 = vmul.f32 %v886, 2.0
    %v1858 = vmul.f32 %v537, 2.0
    %v1859 = vmul.f32 %v539, 2.0
    %v1860 = vmul.f32 %v890, 2.0
    %v1861 = vmul.f32 %v892, 2.0
    %v1862 = vmul.f32 %v541, 2.0
    %v1863 = vmul.f32 %v543, 2.0
    %v1864 = vmul.f32 %v894, 2.0
    %v1865 = vmul.f32 %v896, 2.0
    %v1866 = vmul.f32 %v547, 2.0
    %v1867 = vmul.f32 %v549, 2.0
    %v1868 = vmul.f32 %v900, 2.0
    %v1869 = vmul.f32 %v902, 2.0
    %v1870 = vmul.f32 %v551, 2.0
    %v1871 = vmul.f32 %v553, 2.0
    %v1872 = vmul.f32 %v904, 2.0
    %v1873 = vmul.f32 %v906, 2.0
    %v1874 = vmul.f32 %v557, 2.0
    %v1875 = vmul.f32 %v559, 2.0
    %v1876 = vmul.f32 %v910, 2.0
    %v1877 = vmul.f32 %v912, 2.0
    %v1878 = vmul.f32 %v561, 2.0
    %v1879 = vmul.f32 %v563, 2.0
    %v1880 = vmul.f32 %v914, 2.0
    %v1881 = vmul.f32 %v916, 2.0
    %v1882 = vmul.f32 %v567, 2.0
    %v1883 = vmul.f32 %v569, 2.0
    %v1884 = vmul.f32 %v920, 2.0
    %v1885 = vmul.f32 %v922, 2.0
    %v1886 = vmul.f32 %v571, 2.0
    %v1887 = vmul.f32 %v573, 2.0
    %v1888 = vmul.f32 %v924, 2.0
    %v1889 = vmul.f32 %v926, 2.0
    %v1890 = vmul.f32 %v577, 2.0
    %v1891 = vmul.f32 %v579, 2.0
    %v1892 = vmul.f32 %v930, 2.0
    %v1893 = vmul.f32 %v932, 2.0
    %v1894 = vmul.f32 %v581, 2.0
    %v1895 = vmul.f32 %v583, 2.0
    %v1896 = vmul.f32 %v934, 2.0
    %v1897 = vmul.f32 %v936, 2.0
    %v1898 = vmul.f32 %v587, 2.0
    %v1899 = vmul.f32 %v589, 2.0
    %v1900 = vmul.f32 %v940, 2.0
    %v1901 = vmul.f32 %v942, 2.0
    %v1902 = vmul.f32 %v591, 2.0
    %v1903 = vmul.f32 %v593, 2.0
    %v1904 = vmul.f32 %v944, 2.0
    %v1905 = vmul.f32 %v946, 2.0
    %v1906 = vmul.f32 %v597, 2.0
    %v1907 = vmul.f32 %v599, 2.0
    %v1908 = vmul.f32 %v950, 2.0
    %v1909 = vmul.f32 %v952, 2.0
    %v1910 = vmul.f32 %v601, 2.0
    %v1911 = vmul.f32 %v603, 2.0
    %v1912 = vmul.f32 %v954, 2.0
    %v1913 = vmul.f32 %v956, 2.0
    %v1914 = vmul.f32 %v607, 2.0
    %v1915 = vmul.f32 %v609, 2.0
    %v1916 = vmul.f32 %v960, 2.0
    %v1917 = vmul.f32 %v962, 2.0
    %v1918 = vmul.f32 %v611, 2.0
    %v1919 = vmul.f32 %v613, 2.0
    %v1920 = vmul.f32 %v964, 2.0
    %v1921 = vmul.f32 %v966, 2.0
    %v1922 = vmul.f32 %v617, 2.0
    %v1923 = vmul.f32 %v619, 2.0
    %v1924 = vmul.f32 %v970, 2.0
    %v1925 = vmul.f32 %v972, 2.0
    %v1926 = vmul.f32 %v621, 2.0
    %v1927 = vmul.f32 %v623, 2.0
    %v1928 = vmul.f32 %v974, 2.0
    %v1929 = vmul.f32 %v976, 2.0
    %v1930 = vmul.f32 %v627, 2.0
    %v1931 = vmul.f32 %v629, 2.0
    %v1932 = vmul.f32 %v980, 2.0
    %v1933 = vmul.f32 %v982, 2.0
    %v1934 = vmul.f32 %v631, 2.0
    %v1935 = vmul.f32 %v633, 2.0
    %v1936 = vmul.f32 %v984, 2.0
    %v1937 = vmul.f32 %v986, 2.0
    %v1938 = vmul.f32 %v637, 2.0
    %v1939 = vmul.f32 %v639, 2.0
    %v1940 = vmul.f32 %v990, 2.0
    %v1941 = vmul.f32 %v992, 2.0
    %v1942 = vmul.f32 %v641, 2.0
    %v1943 = vmul.f32 %v643, 2.0
    %v1944 = vmul.f32 %v994, 2.0
    %v1945 = vmul.f32 %v996, 2.0
    %v1946 = vmul.f32 %v647, 2.0
    %v1947 = vmul.f32 %v649, 2.0
    %v1948 = vmul.f32 %v1000, 2.0
    %v1949 = vmul.f32 %v1002, 2.0
    %v1950 = vmul.f32 %v651, 2.0
    %v1951 = vmul.f32 %v653, 2.0
    %v1952 = vmul.f32 %v1004, 2.0
    %v1953 = vmul.f32 %v1006, 2.0
    %v1954 = vmul.f32 %v657, 2.0
    %v1955 = vmul.f32 %v659, 2.0
    %v1956 = vmul.f32 %v1010, 2.0
    %v1957 = vmul.f32 %v1012, 2.0
    %v1958 = vmul.f32 %v661, 2.0
    %v1959 = vmul.f32 %v663, 2.0
    %v1960 = vmul.f32 %v1014, 2.0
    %v1961 = vmul.f32 %v1016, 2.0
    %v1962 = vmul.f32 %v667, 2.0
    %v1963 = vmul.f32 %v669, 2.0
    %v1964 = vmul.f32 %v1020, 2.0
    %v1965 = vmul.f32 %v1022, 2.0
    %v1966 = vmul.f32 %v671, 2.0
    %v1967 = vmul.f32 %v673, 2.0
    %v1968 = vmul.f32 %v1024, 2.0
    %v1969 = vmul.f32 %v1026, 2.0
    %v1970 = vmul.f32 %v677, 2.0
    %v1971 = vmul.f32 %v679, 2.0
    %v1972 = vmul.f32 %v1030, 2.0
    %v1973 = vmul.f32 %v1032, 2.0
    %v1974 = vmul.f32 %v681, 2.0
    %v1975 = vmul.f32 %v683, 2.0
    %v1976 = vmul.f32 %v1034, 2.0
    %v1977 = vmul.f32 %v1036, 2.0
    %v1978 = vmul.f32 %v687, 2.0
    %v1979 = vmul.f32 %v689, 2.0
    %v1980 = vmul.f32 %v1040, 2.0
    %v1981 = vmul.f32 %v1042, 2.0
    %v1982 = vmul.f32 %v691, 2.0
    %v1983 = vmul.f32 %v693, 2.0
    %v1984 = vmul.f32 %v1044, 2.0
    %v1985 = vmul.f32 %v1046, 2.0
    %v1986 = vmul.f32 %v697, 2.0
    %v1987 = vmul.f32 %v699, 2.0
    %v1988 = vmul.f32 %v1050, 2.0
    %v1989 = vmul.f32 %v1052, 2.0
    %v1990 = vmul.f32 %v701, 2.0
    %v1991 = vmul.f32 %v703, 2.0
    %v1992 = vmul.f32 %v1054, 2.0
    %v1993 = vmul.f32 %v1056, 2.0
    %v1994 = vmul.f32 %v707, 2.0
    %v1995 = vmul.f32 %v709, 2.0
    %v1996 = vmul.f32 %v1060, 2.0
    %v1997 = vmul.f32 %v1062, 2.0
    %v1998 = vmul.f32 %v711, 2.0
    %v1999 = vmul.f32 %v713, 2.0
    %v2000 = vmul.f32 %v1064, 2.0
    %v2001 = vmul.f32 %v1066, 2.0
    %v2002 = vmul.f32 %v717, 2.0
    %v2003 = vmul.f32 %v719, 2.0
    %v2004 = vmul.f32 %v1070, 2.0
    %v2005 = vmul.f32 %v1072, 2.0
    %v2006 = vmul.f32 %v721, 2.0
    %v2007 = vmul.f32 %v723, 2.0
    %v2008 = vmul.f32 %v1074, 2.0
    %v2009 = vmul.f32 %v1076, 2.0
    %v2010 = vmul.f32 %v727, 2.0
    %v2011 = vmul.f32 %v729, 2.0
    %v2012 = vmul.f32 %v1080, 2.0
    %v2013 = vmul.f32 %v1082, 2.0
    %v2014 = vmul.f32 %v731, 2.0
    %v2015 = vmul.f32 %v733, 2.0
    %v2016 = vmul.f32 %v1084, 2.0
    %v2017 = vmul.f32 %v1086, 2.0
    %v2018 = vmul.f32 %v737, 2.0
    %v2019 = vmul.f32 %v739, 2.0
    %v2020 = vmul.f32 %v1090, 2.0
    %v2021 = vmul.f32 %v1092, 2.0
    %v2022 = vmul.f32 %v741, 2.0
    %v2023 = vmul.f32 %v743, 2.0
    %v2024 = vmul.f32 %v1094, 2.0
    %v2025 = vmul.f32 %v1096, 2.0
    %v2026 = vmul.f32 %v747, 2.0
    %v2027 = vmul.f32 %v749, 2.0
    %v2028 = vmul.f32 %v1100, 2.0
    %v2029 = vmul.f32 %v1102, 2.0
    %v2030 = vmul.f32 %v751, 2.0
    %v2031 = vmul.f32 %v753, 2.0
    %v2032 = vmul.f32 %v1104, 2.0
    %v2033 = vmul.f32 %v1106, 2.0
    %v2034 = vmul.f32 %v757, 2.0
    %v2035 = vmul.f32 %v759, 2.0
    %v2036 = vmul.f32 %v1110, 2.0
    %v2037 = vmul.f32 %v1112, 2.0
    %v2038 = vmul.f32 %v761, 2.0
    %v2039 = vmul.f32 %v763, 2.0
    %v2040 = vmul.f32 %v1114, 2.0
    %v2041 = vmul.f32 %v1116, 2.0
    %v2042 = vmul.f32 %v767, 2.0
    %v2043 = vmul.f32 %v769, 2.0
    %v2044 = vmul.f32 %v1120, 2.0
    %v2045 = vmul.f32 %v1122, 2.0
    %v2046 = vmul.f32 %v771, 2.0
    %v2047 = vmul.f32 %v773, 2.0
    %v2048 = vmul.f32 %v1124, 2.0
    %v2049 = vmul.f32 %v1126, 2.0
    %v2050 = vmul.f32 %v777, 2.0
    %v2051 = vmul.f32 %v779, 2.0
    %v2052 = vmul.f32 %v1130, 2.0
    %v2053 = vmul.f32 %v1132, 2.0
    %v2054 = vmul.f32 %v781, 2.0
    %v2055 = vmul.f32 %v783, 2.0
    %v2056 = vmul.f32 %v1134, 2.0
    %v2057 = vmul.f32 %v1136, 2.0
    %v2058 = vmul.f32 %v787, 2.0
    %v2059 = vmul.f32 %v789, 2.0
    %v2060 = vmul.f32 %v1140, 2.0
    %v2061 = vmul.f32 %v1142, 2.0
    %v2062 = vmul.f32 %v791, 2.0
    %v2063 = vmul.f32 %v793, 2.0
    %v2064 = vmul.f32 %v1144, 2.0
    %v2065 = vmul.f32 %v1146, 2.0
    %v2066 = vsub.f32 %v1554, %v1810
    %v2067 = vsub.f32 %v1555, %v1811
    %v2068 = vsub.f32 %v1556, %v1812
    %v2069 = vsub.f32 %v1557, %v1813
    %v2070 = vsub.f32 %v1558, %v1814
    %v2071 = vsub.f32 %v1559, %v1815
    %v2072 = vsub.f32 %v1560, %v1816
    %v2073 = vsub.f32 %v1561, %v1817
    %v2074 = vsub.f32 %v1562, %v1818
    %v2075 = vsub.f32 %v1563, %v1819
    %v2076 = vsub.f32 %v1564, %v1820
    %v2077 = vsub.f32 %v1565, %v1821
    %v2078 = vsub.f32 %v1566, %v1822
    %v2079 = vsub.f32 %v1567, %v1823
    %v2080 = vsub.f32 %v1568, %v1824
    %v2081 = vsub.f32 %v1569, %v1825
    %v2082 = vsub.f32 %v1570, %v1826
    %v2083 = vsub.f32 %v1571, %v1827
    %v2084 = vsub.f32 %v1572, %v1828
    %v2085 = vsub.f32 %v1573, %v1829
    %v2086 = vsub.f32 %v1574, %v1830
    %v2087 = vsub.f32 %v1575, %v1831
    %v2088 = vsub.f32 %v1576, %v1832
    %v2089 = vsub.f32 %v1577, %v1833
    %v2090 = vsub.f32 %v1578, %v1834
    %v2091 = vsub.f32 %v1579, %v1835
    %v2092 = vsub.f32 %v1580, %v1836
    %v2093 = vsub.f32 %v1581, %v1837
    %v2094 = vsub.f32 %v1582, %v1838
    %v2095 = vsub.f32 %v1583, %v1839
    %v2096 = vsub.f32 %v1584, %v1840
    %v2097 = vsub.f32 %v1585, %v1841
    %v2098 = vsub.f32 %v1586, %v1842
    %v2099 = vsub.f32 %v1587, %v1843
    %v2100 = vsub.f32 %v1588, %v1844
    %v2101 = vsub.f32 %v1589, %v1845
    %v2102 = vsub.f32 %v1590, %v1846
    %v2103 = vsub.f32 %v1591, %v1847
    %v2104 = vsub.f32 %v1592, %v1848
    %v2105 = vsub.f32 %v1593, %v1849
    %v2106 = vsub.f32 %v1594, %v1850
    %v2107 = vsub.f32 %v1595, %v1851
    %v2108 = vsub.f32 %v1596, %v1852
    %v2109 = vsub.f32 %v1597, %v1853
    %v2110 = vsub.f32 %v1598, %v1854
    %v2111 = vsub.f32 %v1599, %v1855
    %v2112 = vsub.f32 %v1600, %v1856
    %v2113 = vsub.f32 %v1601, %v1857
    %v2114 = vsub.f32 %v1602, %v1858
    %v2115 = vsub.f32 %v1603, %v1859
    %v2116 = vsub.f32 %v1604, %v1860
    %v2117 = vsub.f32 %v1605, %v1861
    %v2118 = vsub.f32 %v1606, %v1862
    %v2119 = vsub.f32 %v1607, %v1863
    %v2120 = vsub.f32 %v1608, %v1864
    %v2121 = vsub.f32 %v1609, %v1865
    %v2122 = vsub.f32 %v1610, %v1866
    %v2123 = vsub.f32 %v1611, %v1867
    %v2124 = vsub.f32 %v1612, %v1868
    %v2125 = vsub.f32 %v1613, %v1869
    %v2126 = vsub.f32 %v1614, %v1870
    %v2127 = vsub.f32 %v1615, %v1871
    %v2128 = vsub.f32 %v1616, %v1872
    %v2129 = vsub.f32 %v1617, %v1873
    %v2130 = vsub.f32 %v1618, %v1874
    %v2131 = vsub.f32 %v1619, %v1875
    %v2132 = vsub.f32 %v1620, %v1876
    %v2133 = vsub.f32 %v1621, %v1877
    %v2134 = vsub.f32 %v1622, %v1878
    %v2135 = vsub.f32 %v1623, %v1879
    %v2136 = vsub.f32 %v1624, %v1880
    %v2137 = vsub.f32 %v1625, %v1881
    %v2138 = vsub.f32 %v1626, %v1882
    %v2139 = vsub.f32 %v1627, %v1883
    %v2140 = vsub.f32 %v1628, %v1884
    %v2141 = vsub.f32 %v1629, %v1885
    %v2142 = vsub.f32 %v1630, %v1886
    %v2143 = vsub.f32 %v1631, %v1887
    %v2144 = vsub.f32 %v1632, %v1888
    %v2145 = vsub.f32 %v1633, %v1889
    %v2146 = vsub.f32 %v1634, %v1890
    %v2147 = vsub.f32 %v1635, %v1891
    %v2148 = vsub.f32 %v1636, %v1892
    %v2149 = vsub.f32 %v1637, %v1893
    %v2150 = vsub.f32 %v1638, %v1894
    %v2151 = vsub.f32 %v1639, %v1895
    %v2152 = vsub.f32 %v1640, %v1896
    %v2153 = vsub.f32 %v1641, %v1897
    %v2154 = vsub.f32 %v1642, %v1898
    %v2155 = vsub.f32 %v1643, %v1899
    %v2156 = vsub.f32 %v1644, %v1900
    %v2157 = vsub.f32 %v1645, %v1901
    %v2158 = vsub.f32 %v1646, %v1902
    %v2159 = vsub.f32 %v1647, %v1903
    %v2160 = vsub.f32 %v1648, %v1904
    %v2161 = vsub.f32 %v1649, %v1905
    %v2162 = vsub.f32 %v1650, %v1906
    %v2163 = vsub.f32 %v1651, %v1907
    %v2164 = vsub.f32 %v1652, %v1908
    %v2165 = vsub.f32 %v1653, %v1909
    %v2166 = vsub.f32 %v1654, %v1910
    %v2167 = vsub.f32 %v1655, %v1911
    %v2168 = vsub.f32 %v1656, %v1912
    %v2169 = vsub.f32 %v1657, %v1913
    %v2170 = vsub.f32 %v1658, %v1914
    %v2171 = vsub.f32 %v1659, %v1915
    %v2172 = vsub.f32 %v1660, %v1916
    %v2173 = vsub.f32 %v1661, %v1917
    %v2174 = vsub.f32 %v1662, %v1918
    %v2175 = vsub.f32 %v1663, %v1919
    %v2176 = vsub.f32 %v1664, %v1920
    %v2177 = vsub.f32 %v1665, %v1921
    %v2178 = vsub.f32 %v1666, %v1922
    %v2179 = vsub.f32 %v1667, %v1923
    %v2180 = vsub.f32 %v1668, %v1924
    %v2181 = vsub.f32 %v1669, %v1925
    %v2182 = vsub.f32 %v1670, %v1926
    %v2183 = vsub.f32 %v1671, %v1927
    %v2184 = vsub.f32 %v1672, %v1928
    %v2185 = vsub.f32 %v1673, %v1929
    %v2186 = vsub.f32 %v1674, %v1930
    %v2187 = vsub.f32 %v1675, %v1931
    %v2188 = vsub.f32 %v1676, %v1932
    %v2189 = vsub.f32 %v1677, %v1933
    %v2190 = vsub.f32 %v1678, %v1934
    %v2191 = vsub.f32 %v1679, %v1935
    %v2192 = vsub.f32 %v1680, %v1936
    %v2193 = vsub.f32 %v1681, %v1937
    %v2194 = vsub.f32 %v1682, %v1938
    %v2195 = vsub.f32 %v1683, %v1939
    %v2196 = vsub.f32 %v1684, %v1940
    %v2197 = vsub.f32 %v1685, %v1941
    %v2198 = vsub.f32 %v1686, %v1942
    %v2199 = vsub.f32 %v1687, %v1943
    %v2200 = vsub.f32 %v1688, %v1944
    %v2201 = vsub.f32 %v1689, %v1945
    %v2202 = vsub.f32 %v1690, %v1946
    %v2203 = vsub.f32 %v1691, %v1947
    %v2204 = vsub.f32 %v1692, %v1948
    %v2205 = vsub.f32 %v1693, %v1949
    %v2206 = vsub.f32 %v1694, %v1950
    %v2207 = vsub.f32 %v1695, %v1951
    %v2208 = vsub.f32 %v1696, %v1952
    %v2209 = vsub.f32 %v1697, %v1953
    %v2210 = vsub.f32 %v1698, %v1954
    %v2211 = vsub.f32 %v1699, %v1955
    %v2212 = vsub.f32 %v1700, %v1956
    %v2213 = vsub.f32 %v1701, %v1957
    %v2214 = vsub.f32 %v1702, %v1958
    %v2215 = vsub.f32 %v1703, %v1959
    %v2216 = vsub.f32 %v1704, %v1960
    %v2217 = vsub.f32 %v1705, %v1961
    %v2218 = vsub.f32 %v1706, %v1962
    %v2219 = vsub.f32 %v1707, %v1963
    %v2220 = vsub.f32 %v1708, %v1964
    %v2221 = vsub.f32 %v1709, %v1965
    %v2222 = vsub.f32 %v1710, %v1966
    %v2223 = vsub.f32 %v1711, %v1967
    %v2224 = vsub.f32 %v1712, %v1968
    %v2225 = vsub.f32 %v1713, %v1969
    %v2226 = vsub.f32 %v1714, %v1970
    %v2227 = vsub.f32 %v1715, %v1971
    %v2228 = vsub.f32 %v1716, %v1972
    %v2229 = vsub.f32 %v1717, %v1973
    %v2230 = vsub.f32 %v1718, %v1974
    %v2231 = vsub.f32 %v1719, %v1975
    %v2232 = vsub.f32 %v1720, %v1976
    %v2233 = vsub.f32 %v1721, %v1977
    %v2234 = vsub.f32 %v1722, %v1978
    %v2235 = vsub.f32 %v1723, %v1979
    %v2236 = vsub.f32 %v1724, %v1980
    %v2237 = vsub.f32 %v1725, %v1981
    %v2238 = vsub.f32 %v1726, %v1982
    %v2239 = vsub.f32 %v1727, %v1983
    %v2240 = vsub.f32 %v1728, %v1984
    %v2241 = vsub.f32 %v1729, %v1985
    %v2242 = vsub.f32 %v1730, %v1986
    %v2243 = vsub.f32 %v1731, %v1987
    %v2244 = vsub.f32 %v1732, %v1988
    %v2245 = vsub.f32 %v1733, %v1989
    %v2246 = vsub.f32 %v1734, %v1990
    %v2247 = vsub.f32 %v1735, %v1991
    %v2248 = vsub.f32 %v1736, %v1992
    %v2249 = vsub.f32 %v1737, %v1993
    %v2250 = vsub.f32 %v1738, %v1994
    %v2251 = vsub.f32 %v1739, %v1995
    %v2252 = vsub.f32 %v1740, %v1996
    %v2253 = vsub.f32 %v1741, %v1997
    %v2254 = vsub.f32 %v1742, %v1998
    %v2255 = vsub.f32 %v1743, %v1999
    %v2256 = vsub.f32 %v1744, %v2000
    %v2257 = vsub.f32 %v1745, %v2001
    %v2258 = vsub.f32 %v1746, %v2002
    %v2259 = vsub.f32 %v1747, %v2003
    %v2260 = vsub.f32 %v1748, %v2004
    %v2261 = vsub.f32 %v1749, %v2005
    %v2262 = vsub.f32 %v1750, %v2006
    %v2263 = vsub.f32 %v1751, %v2007
    %v2264 = vsub.f32 %v1752, %v2008
    %v2265 = vsub.f32 %v1753, %v2009
    %v2266 = vsub.f32 %v1754, %v2010
    %v2267 = vsub.f32 %v1755, %v2011
    %v2268 = vsub.f32 %v1756, %v2012
    %v2269 = vsub.f32 %v1757, %v2013
    %v2270 = vsub.f32 %v1758, %v2014
    %v2271 = vsub.f32 %v1759, %v2015
    %v2272 = vsub.f32 %v1760, %v2016
    %v2273 = vsub.f32 %v1761, %v2017
    %v2274 = vsub.f32 %v1762, %v2018
    %v2275 = vsub.f32 %v1763, %v2019
    %v2276 = vsub.f32 %v1764, %v2020
    %v2277 = vsub.f32 %v1765, %v2021
    %v2278 = vsub.f32 %v1766, %v2022
    %v2279 = vsub.f32 %v1767, %v2023
    %v2280 = vsub.f32 %v1768, %v2024
    %v2281 = vsub.f32 %v1769, %v2025
    %v2282 = vsub.f32 %v1770, %v2026
    %v2283 = vsub.f32 %v1771, %v2027
    %v2284 = vsub.f32 %v1772, %v2028
    %v2285 = vsub.f32 %v1773, %v2029
    %v2286 = vsub.f32 %v1774, %v2030
    %v2287 = vsub.f32 %v1775, %v2031
    %v2288 = vsub.f32 %v1776, %v2032
    %v2289 = vsub.f32 %v1777, %v2033
    %v2290 = vsub.f32 %v1778, %v2034
    %v2291 = vsub.f32 %v1779, %v2035
    %v2292 = vsub.f32 %v1780, %v2036
    %v2293 = vsub.f32 %v1781, %v2037
    %v2294 = vsub.f32 %v1782, %v2038
    %v2295 = vsub.f32 %v1783, %v2039
    %v2296 = vsub.f32 %v1784, %v2040
    %v2297 = vsub.f32 %v1785, %v2041
    %v2298 = vsub.f32 %v1786, %v2042
    %v2299 = vsub.f32 %v1787, %v2043
    %v2300 = vsub.f32 %v1788, %v2044
    %v2301 = vsub.f32 %v1789, %v2045
    %v2302 = vsub.f32 %v1790, %v2046
    %v2303 = vsub.f32 %v1791, %v2047
    %v2304 = vsub.f32 %v1792, %v2048
    %v2305 = vsub.f32 %v1793, %v2049
    %v2306 = vsub.f32 %v1794, %v2050
    %v2307 = vsub.f32 %v1795, %v2051
    %v2308 = vsub.f32 %v1796, %v2052
    %v2309 = vsub.f32 %v1797, %v2053
    %v2310 = vsub.f32 %v1798, %v2054
    %v2311 = vsub.f32 %v1799, %v2055
    %v2312 = vsub.f32 %v1800, %v2056
    %v2313 = vsub.f32 %v1801, %v2057
    %v2314 = vsub.f32 %v1802, %v2058
    %v2315 = vsub.f32 %v1803, %v2059
    %v2316 = vsub.f32 %v1804, %v2060
    %v2317 = vsub.f32 %v1805, %v2061
    %v2318 = vsub.f32 %v1806, %v2062
    %v2319 = vsub.f32 %v1807, %v2063
    %v2320 = vsub.f32 %v1808, %v2064
    %v2321 = vsub.f32 %v1809, %v2065
    %v2322 = vld [vmem:[%s4] sm:$0xff]
    %v2323 = vld [vmem:[%s4 + $0x8] sm:$0xff]
    %v2324 = vld [vmem:[%s4 + $0x10] sm:$0xff]
    %v2325 = vld [vmem:[%s4 + $0x18] sm:$0xff]
    %v2326 = vld [vmem:[%s4 + $0x20] sm:$0xff]
    %v2327 = vld [vmem:[%s4 + $0x28] sm:$0xff]
    %v2328 = vld [vmem:[%s4 + $0x30] sm:$0xff]
    %v2329 = vld [vmem:[%s4 + $0x38] sm:$0xff]
    %v2330 = vld [vmem:[%s4 + $0x40] sm:$0xff]
    %v2331 = vld [vmem:[%s4 + $0x48] sm:$0xff]
    %v2332 = vld [vmem:[%s4 + $0x50] sm:$0xff]
    %v2333 = vld [vmem:[%s4 + $0x58] sm:$0xff]
    %v2334 = vld [vmem:[%s4 + $0x60] sm:$0xff]
    %v2335 = vld [vmem:[%s4 + $0x68] sm:$0xff]
    %v2336 = vld [vmem:[%s4 + $0x70] sm:$0xff]
    %v2337 = vld [vmem:[%s4 + $0x78] sm:$0xff]
    %v2338 = vld [vmem:[%s4 + $0x80] sm:$0xff]
    %v2339 = vld [vmem:[%s4 + $0x88] sm:$0xff]
    %v2340 = vld [vmem:[%s4 + $0x90] sm:$0xff]
    %v2341 = vld [vmem:[%s4 + $0x98] sm:$0xff]
    %v2342 = vld [vmem:[%s4 + $0xa0] sm:$0xff]
    %v2343 = vld [vmem:[%s4 + $0xa8] sm:$0xff]
    %v2344 = vld [vmem:[%s4 + $0xb0] sm:$0xff]
    %v2345 = vld [vmem:[%s4 + $0xb8] sm:$0xff]
    %v2346 = vld [vmem:[%s4 + $0xc0] sm:$0xff]
    %v2347 = vld [vmem:[%s4 + $0xc8] sm:$0xff]
    %v2348 = vld [vmem:[%s4 + $0xd0] sm:$0xff]
    %v2349 = vld [vmem:[%s4 + $0xd8] sm:$0xff]
    %v2350 = vld [vmem:[%s4 + $0xe0] sm:$0xff]
    %v2351 = vld [vmem:[%s4 + $0xe8] sm:$0xff]
    %v2352 = vld [vmem:[%s4 + $0xf0] sm:$0xff]
    %v2353 = vld [vmem:[%s4 + $0xf8] sm:$0xff]
    %v2354 = vld [vmem:[%s4 + $0x100] sm:$0xff]
    %v2355 = vld [vmem:[%s4 + $0x108] sm:$0xff]
    %v2356 = vld [vmem:[%s4 + $0x110] sm:$0xff]
    %v2357 = vld [vmem:[%s4 + $0x118] sm:$0xff]
    %v2358 = vld [vmem:[%s4 + $0x120] sm:$0xff]
    %v2359 = vld [vmem:[%s4 + $0x128] sm:$0xff]
    %v2360 = vld [vmem:[%s4 + $0x130] sm:$0xff]
    %v2361 = vld [vmem:[%s4 + $0x138] sm:$0xff]
    %v2362 = vld [vmem:[%s4 + $0x140] sm:$0xff]
    %v2363 = vld [vmem:[%s4 + $0x148] sm:$0xff]
    %v2364 = vld [vmem:[%s4 + $0x150] sm:$0xff]
    %v2365 = vld [vmem:[%s4 + $0x158] sm:$0xff]
    %v2366 = vld [vmem:[%s4 + $0x160] sm:$0xff]
    %v2367 = vld [vmem:[%s4 + $0x168] sm:$0xff]
    %v2368 = vld [vmem:[%s4 + $0x170] sm:$0xff]
    %v2369 = vld [vmem:[%s4 + $0x178] sm:$0xff]
    %v2370 = vld [vmem:[%s4 + $0x180] sm:$0xff]
    %v2371 = vld [vmem:[%s4 + $0x188] sm:$0xff]
    %v2372 = vld [vmem:[%s4 + $0x190] sm:$0xff]
    %v2373 = vld [vmem:[%s4 + $0x198] sm:$0xff]
    %v2374 = vld [vmem:[%s4 + $0x1a0] sm:$0xff]
    %v2375 = vld [vmem:[%s4 + $0x1a8] sm:$0xff]
    %v2376 = vld [vmem:[%s4 + $0x1b0] sm:$0xff]
    %v2377 = vld [vmem:[%s4 + $0x1b8] sm:$0xff]
    %v2378 = vld [vmem:[%s4 + $0x1c0] sm:$0xff]
    %v2379 = vld [vmem:[%s4 + $0x1c8] sm:$0xff]
    %v2380 = vld [vmem:[%s4 + $0x1d0] sm:$0xff]
    %v2381 = vld [vmem:[%s4 + $0x1d8] sm:$0xff]
    %v2382 = vld [vmem:[%s4 + $0x1e0] sm:$0xff]
    %v2383 = vld [vmem:[%s4 + $0x1e8] sm:$0xff]
    %v2384 = vld [vmem:[%s4 + $0x1f0] sm:$0xff]
    %v2385 = vld [vmem:[%s4 + $0x1f8] sm:$0xff]
    %v2386 = vmin.f32 %v2066, %v2070
    %v2387 = vmin.f32 %v2386, %v2074
    %v2388 = vmin.f32 %v2387, %v2078
    %v2389 = vmin.f32 %v2388, %v2082
    %v2390 = vmin.f32 %v2389, %v2086
    %v2391 = vmin.f32 %v2390, %v2090
    %v2392 = vmin.f32 %v2391, %v2094
    %v2393 = vmin.f32 %v2392, %v2098
    %v2394 = vmin.f32 %v2393, %v2102
    %v2395 = vmin.f32 %v2394, %v2106
    %v2396 = vmin.f32 %v2395, %v2110
    %v2397 = vmin.f32 %v2396, %v2114
    %v2398 = vmin.f32 %v2397, %v2118
    %v2399 = vmin.f32 %v2398, %v2122
    %v2400 = vmin.f32 %v2399, %v2126
    %v2401 = vmin.f32 %v2400, %v2130
    %v2402 = vmin.f32 %v2401, %v2134
    %v2403 = vmin.f32 %v2402, %v2138
    %v2404 = vmin.f32 %v2403, %v2142
    %v2405 = vmin.f32 %v2404, %v2146
    %v2406 = vmin.f32 %v2405, %v2150
    %v2407 = vmin.f32 %v2406, %v2154
    %v2408 = vmin.f32 %v2407, %v2158
    %v2409 = vmin.f32 %v2408, %v2162
    %v2410 = vmin.f32 %v2409, %v2166
    %v2411 = vmin.f32 %v2410, %v2170
    %v2412 = vmin.f32 %v2411, %v2174
    %v2413 = vmin.f32 %v2412, %v2178
    %v2414 = vmin.f32 %v2413, %v2182
    %v2415 = vmin.f32 %v2414, %v2186
    %v2416 = vmin.f32 %v2415, %v2190
    %v2417 = vmin.f32 %v2416, %v2194
    %v2418 = vmin.f32 %v2417, %v2198
    %v2419 = vmin.f32 %v2418, %v2202
    %v2420 = vmin.f32 %v2419, %v2206
    %v2421 = vmin.f32 %v2420, %v2210
    %v2422 = vmin.f32 %v2421, %v2214
    %v2423 = vmin.f32 %v2422, %v2218
    %v2424 = vmin.f32 %v2423, %v2222
    %v2425 = vmin.f32 %v2424, %v2226
    %v2426 = vmin.f32 %v2425, %v2230
    %v2427 = vmin.f32 %v2426, %v2234
    %v2428 = vmin.f32 %v2427, %v2238
    %v2429 = vmin.f32 %v2428, %v2242
    %v2430 = vmin.f32 %v2429, %v2246
    %v2431 = vmin.f32 %v2430, %v2250
    %v2432 = vmin.f32 %v2431, %v2254
    %v2433 = vmin.f32 %v2432, %v2258
    %v2434 = vmin.f32 %v2433, %v2262
    %v2435 = vmin.f32 %v2434, %v2266
    %v2436 = vmin.f32 %v2435, %v2270
    %v2437 = vmin.f32 %v2436, %v2274
    %v2438 = vmin.f32 %v2437, %v2278
    %v2439 = vmin.f32 %v2438, %v2282
    %v2440 = vmin.f32 %v2439, %v2286
    %v2441 = vmin.f32 %v2440, %v2290
    %v2442 = vmin.f32 %v2441, %v2294
    %v2443 = vmin.f32 %v2442, %v2298
    %v2444 = vmin.f32 %v2443, %v2302
    %v2445 = vmin.f32 %v2444, %v2306
    %v2446 = vmin.f32 %v2445, %v2310
    %v2447 = vmin.f32 %v2446, %v2314
    %v2448 = vmin.f32 %v2447, %v2318
    %v2449 = vrot.slane %v2448, 4
    %v2450 = vmin.f32 %v2448, %v2449
    %v2451 = vrot.slane %v2450, 2
    %v2452 = vmin.f32 %v2450, %v2451
    %v2453 = vrot.slane %v2452, 1
    %v2454 = vmin.f32 %v2452, %v2453
    %v2455 = vmin.f32 %v2067, %v2071
    %v2456 = vmin.f32 %v2455, %v2075
    %v2457 = vmin.f32 %v2456, %v2079
    %v2458 = vmin.f32 %v2457, %v2083
    %v2459 = vmin.f32 %v2458, %v2087
    %v2460 = vmin.f32 %v2459, %v2091
    %v2461 = vmin.f32 %v2460, %v2095
    %v2462 = vmin.f32 %v2461, %v2099
    %v2463 = vmin.f32 %v2462, %v2103
    %v2464 = vmin.f32 %v2463, %v2107
    %v2465 = vmin.f32 %v2464, %v2111
    %v2466 = vmin.f32 %v2465, %v2115
    %v2467 = vmin.f32 %v2466, %v2119
    %v2468 = vmin.f32 %v2467, %v2123
    %v2469 = vmin.f32 %v2468, %v2127
    %v2470 = vmin.f32 %v2469, %v2131
    %v2471 = vmin.f32 %v2470, %v2135
    %v2472 = vmin.f32 %v2471, %v2139
    %v2473 = vmin.f32 %v2472, %v2143
    %v2474 = vmin.f32 %v2473, %v2147
    %v2475 = vmin.f32 %v2474, %v2151
    %v2476 = vmin.f32 %v2475, %v2155
    %v2477 = vmin.f32 %v2476, %v2159
    %v2478 = vmin.f32 %v2477, %v2163
    %v2479 = vmin.f32 %v2478, %v2167
    %v2480 = vmin.f32 %v2479, %v2171
    %v2481 = vmin.f32 %v2480, %v2175
    %v2482 = vmin.f32 %v2481, %v2179
    %v2483 = vmin.f32 %v2482, %v2183
    %v2484 = vmin.f32 %v2483, %v2187
    %v2485 = vmin.f32 %v2484, %v2191
    %v2486 = vmin.f32 %v2485, %v2195
    %v2487 = vmin.f32 %v2486, %v2199
    %v2488 = vmin.f32 %v2487, %v2203
    %v2489 = vmin.f32 %v2488, %v2207
    %v2490 = vmin.f32 %v2489, %v2211
    %v2491 = vmin.f32 %v2490, %v2215
    %v2492 = vmin.f32 %v2491, %v2219
    %v2493 = vmin.f32 %v2492, %v2223
    %v2494 = vmin.f32 %v2493, %v2227
    %v2495 = vmin.f32 %v2494, %v2231
    %v2496 = vmin.f32 %v2495, %v2235
    %v2497 = vmin.f32 %v2496, %v2239
    %v2498 = vmin.f32 %v2497, %v2243
    %v2499 = vmin.f32 %v2498, %v2247
    %v2500 = vmin.f32 %v2499, %v2251
    %v2501 = vmin.f32 %v2500, %v2255
    %v2502 = vmin.f32 %v2501, %v2259
    %v2503 = vmin.f32 %v2502, %v2263
    %v2504 = vmin.f32 %v2503, %v2267
    %v2505 = vmin.f32 %v2504, %v2271
    %v2506 = vmin.f32 %v2505, %v2275
    %v2507 = vmin.f32 %v2506, %v2279
    %v2508 = vmin.f32 %v2507, %v2283
    %v2509 = vmin.f32 %v2508, %v2287
    %v2510 = vmin.f32 %v2509, %v2291
    %v2511 = vmin.f32 %v2510, %v2295
    %v2512 = vmin.f32 %v2511, %v2299
    %v2513 = vmin.f32 %v2512, %v2303
    %v2514 = vmin.f32 %v2513, %v2307
    %v2515 = vmin.f32 %v2514, %v2311
    %v2516 = vmin.f32 %v2515, %v2315
    %v2517 = vmin.f32 %v2516, %v2319
    %v2518 = vrot.slane %v2517, 4
    %v2519 = vmin.f32 %v2517, %v2518
    %v2520 = vrot.slane %v2519, 2
    %v2521 = vmin.f32 %v2519, %v2520
    %v2522 = vrot.slane %v2521, 1
    %v2523 = vmin.f32 %v2521, %v2522
    %v2524 = vmin.f32 %v2068, %v2072
    %v2525 = vmin.f32 %v2524, %v2076
    %v2526 = vmin.f32 %v2525, %v2080
    %v2527 = vmin.f32 %v2526, %v2084
    %v2528 = vmin.f32 %v2527, %v2088
    %v2529 = vmin.f32 %v2528, %v2092
    %v2530 = vmin.f32 %v2529, %v2096
    %v2531 = vmin.f32 %v2530, %v2100
    %v2532 = vmin.f32 %v2531, %v2104
    %v2533 = vmin.f32 %v2532, %v2108
    %v2534 = vmin.f32 %v2533, %v2112
    %v2535 = vmin.f32 %v2534, %v2116
    %v2536 = vmin.f32 %v2535, %v2120
    %v2537 = vmin.f32 %v2536, %v2124
    %v2538 = vmin.f32 %v2537, %v2128
    %v2539 = vmin.f32 %v2538, %v2132
    %v2540 = vmin.f32 %v2539, %v2136
    %v2541 = vmin.f32 %v2540, %v2140
    %v2542 = vmin.f32 %v2541, %v2144
    %v2543 = vmin.f32 %v2542, %v2148
    %v2544 = vmin.f32 %v2543, %v2152
    %v2545 = vmin.f32 %v2544, %v2156
    %v2546 = vmin.f32 %v2545, %v2160
    %v2547 = vmin.f32 %v2546, %v2164
    %v2548 = vmin.f32 %v2547, %v2168
    %v2549 = vmin.f32 %v2548, %v2172
    %v2550 = vmin.f32 %v2549, %v2176
    %v2551 = vmin.f32 %v2550, %v2180
    %v2552 = vmin.f32 %v2551, %v2184
    %v2553 = vmin.f32 %v2552, %v2188
    %v2554 = vmin.f32 %v2553, %v2192
    %v2555 = vmin.f32 %v2554, %v2196
    %v2556 = vmin.f32 %v2555, %v2200
    %v2557 = vmin.f32 %v2556, %v2204
    %v2558 = vmin.f32 %v2557, %v2208
    %v2559 = vmin.f32 %v2558, %v2212
    %v2560 = vmin.f32 %v2559, %v2216
    %v2561 = vmin.f32 %v2560, %v2220
    %v2562 = vmin.f32 %v2561, %v2224
    %v2563 = vmin.f32 %v2562, %v2228
    %v2564 = vmin.f32 %v2563, %v2232
    %v2565 = vmin.f32 %v2564, %v2236
    %v2566 = vmin.f32 %v2565, %v2240
    %v2567 = vmin.f32 %v2566, %v2244
    %v2568 = vmin.f32 %v2567, %v2248
    %v2569 = vmin.f32 %v2568, %v2252
    %v2570 = vmin.f32 %v2569, %v2256
    %v2571 = vmin.f32 %v2570, %v2260
    %v2572 = vmin.f32 %v2571, %v2264
    %v2573 = vmin.f32 %v2572, %v2268
    %v2574 = vmin.f32 %v2573, %v2272
    %v2575 = vmin.f32 %v2574, %v2276
    %v2576 = vmin.f32 %v2575, %v2280
    %v2577 = vmin.f32 %v2576, %v2284
    %v2578 = vmin.f32 %v2577, %v2288
    %v2579 = vmin.f32 %v2578, %v2292
    %v2580 = vmin.f32 %v2579, %v2296
    %v2581 = vmin.f32 %v2580, %v2300
    %v2582 = vmin.f32 %v2581, %v2304
    %v2583 = vmin.f32 %v2582, %v2308
    %v2584 = vmin.f32 %v2583, %v2312
    %v2585 = vmin.f32 %v2584, %v2316
    %v2586 = vmin.f32 %v2585, %v2320
    %v2587 = vrot.slane %v2586, 4
    %v2588 = vmin.f32 %v2586, %v2587
    %v2589 = vrot.slane %v2588, 2
    %v2590 = vmin.f32 %v2588, %v2589
    %v2591 = vrot.slane %v2590, 1
    %v2592 = vmin.f32 %v2590, %v2591
    %v2593 = vmin.f32 %v2069, %v2073
    %v2594 = vmin.f32 %v2593, %v2077
    %v2595 = vmin.f32 %v2594, %v2081
    %v2596 = vmin.f32 %v2595, %v2085
    %v2597 = vmin.f32 %v2596, %v2089
    %v2598 = vmin.f32 %v2597, %v2093
    %v2599 = vmin.f32 %v2598, %v2097
    %v2600 = vmin.f32 %v2599, %v2101
    %v2601 = vmin.f32 %v2600, %v2105
    %v2602 = vmin.f32 %v2601, %v2109
    %v2603 = vmin.f32 %v2602, %v2113
    %v2604 = vmin.f32 %v2603, %v2117
    %v2605 = vmin.f32 %v2604, %v2121
    %v2606 = vmin.f32 %v2605, %v2125
    %v2607 = vmin.f32 %v2606, %v2129
    %v2608 = vmin.f32 %v2607, %v2133
    %v2609 = vmin.f32 %v2608, %v2137
    %v2610 = vmin.f32 %v2609, %v2141
    %v2611 = vmin.f32 %v2610, %v2145
    %v2612 = vmin.f32 %v2611, %v2149
    %v2613 = vmin.f32 %v2612, %v2153
    %v2614 = vmin.f32 %v2613, %v2157
    %v2615 = vmin.f32 %v2614, %v2161
    %v2616 = vmin.f32 %v2615, %v2165
    %v2617 = vmin.f32 %v2616, %v2169
    %v2618 = vmin.f32 %v2617, %v2173
    %v2619 = vmin.f32 %v2618, %v2177
    %v2620 = vmin.f32 %v2619, %v2181
    %v2621 = vmin.f32 %v2620, %v2185
    %v2622 = vmin.f32 %v2621, %v2189
    %v2623 = vmin.f32 %v2622, %v2193
    %v2624 = vmin.f32 %v2623, %v2197
    %v2625 = vmin.f32 %v2624, %v2201
    %v2626 = vmin.f32 %v2625, %v2205
    %v2627 = vmin.f32 %v2626, %v2209
    %v2628 = vmin.f32 %v2627, %v2213
    %v2629 = vmin.f32 %v2628, %v2217
    %v2630 = vmin.f32 %v2629, %v2221
    %v2631 = vmin.f32 %v2630, %v2225
    %v2632 = vmin.f32 %v2631, %v2229
    %v2633 = vmin.f32 %v2632, %v2233
    %v2634 = vmin.f32 %v2633, %v2237
    %v2635 = vmin.f32 %v2634, %v2241
    %v2636 = vmin.f32 %v2635, %v2245
    %v2637 = vmin.f32 %v2636, %v2249
    %v2638 = vmin.f32 %v2637, %v2253
    %v2639 = vmin.f32 %v2638, %v2257
    %v2640 = vmin.f32 %v2639, %v2261
    %v2641 = vmin.f32 %v2640, %v2265
    %v2642 = vmin.f32 %v2641, %v2269
    %v2643 = vmin.f32 %v2642, %v2273
    %v2644 = vmin.f32 %v2643, %v2277
    %v2645 = vmin.f32 %v2644, %v2281
    %v2646 = vmin.f32 %v2645, %v2285
    %v2647 = vmin.f32 %v2646, %v2289
    %v2648 = vmin.f32 %v2647, %v2293
    %v2649 = vmin.f32 %v2648, %v2297
    %v2650 = vmin.f32 %v2649, %v2301
    %v2651 = vmin.f32 %v2650, %v2305
    %v2652 = vmin.f32 %v2651, %v2309
    %v2653 = vmin.f32 %v2652, %v2313
    %v2654 = vmin.f32 %v2653, %v2317
    %v2655 = vmin.f32 %v2654, %v2321
    %v2656 = vrot.slane %v2655, 4
    %v2657 = vmin.f32 %v2655, %v2656
    %v2658 = vrot.slane %v2657, 2
    %v2659 = vmin.f32 %v2657, %v2658
    %v2660 = vrot.slane %v2659, 1
    %v2661 = vmin.f32 %v2659, %v2660
    %vm2662 = vcmp.eq.f32.partialorder %v2066, %v2454
    %vm2663 = vcmp.eq.f32.partialorder %v2067, %v2523
    %vm2664 = vcmp.eq.f32.partialorder %v2068, %v2592
    %vm2665 = vcmp.eq.f32.partialorder %v2069, %v2661
    %vm2666 = vcmp.eq.f32.partialorder %v2070, %v2454
    %vm2667 = vcmp.eq.f32.partialorder %v2071, %v2523
    %vm2668 = vcmp.eq.f32.partialorder %v2072, %v2592
    %vm2669 = vcmp.eq.f32.partialorder %v2073, %v2661
    %vm2670 = vcmp.eq.f32.partialorder %v2074, %v2454
    %vm2671 = vcmp.eq.f32.partialorder %v2075, %v2523
    %vm2672 = vcmp.eq.f32.partialorder %v2076, %v2592
    %vm2673 = vcmp.eq.f32.partialorder %v2077, %v2661
    %vm2674 = vcmp.eq.f32.partialorder %v2078, %v2454
    %vm2675 = vcmp.eq.f32.partialorder %v2079, %v2523
    %vm2676 = vcmp.eq.f32.partialorder %v2080, %v2592
    %vm2677 = vcmp.eq.f32.partialorder %v2081, %v2661
    %vm2678 = vcmp.eq.f32.partialorder %v2082, %v2454
    %vm2679 = vcmp.eq.f32.partialorder %v2083, %v2523
    %vm2680 = vcmp.eq.f32.partialorder %v2084, %v2592
    %vm2681 = vcmp.eq.f32.partialorder %v2085, %v2661
    %vm2682 = vcmp.eq.f32.partialorder %v2086, %v2454
    %vm2683 = vcmp.eq.f32.partialorder %v2087, %v2523
    %vm2684 = vcmp.eq.f32.partialorder %v2088, %v2592
    %vm2685 = vcmp.eq.f32.partialorder %v2089, %v2661
    %vm2686 = vcmp.eq.f32.partialorder %v2090, %v2454
    %vm2687 = vcmp.eq.f32.partialorder %v2091, %v2523
    %vm2688 = vcmp.eq.f32.partialorder %v2092, %v2592
    %vm2689 = vcmp.eq.f32.partialorder %v2093, %v2661
    %vm2690 = vcmp.eq.f32.partialorder %v2094, %v2454
    %vm2691 = vcmp.eq.f32.partialorder %v2095, %v2523
    %vm2692 = vcmp.eq.f32.partialorder %v2096, %v2592
    %vm2693 = vcmp.eq.f32.partialorder %v2097, %v2661
    %vm2694 = vcmp.eq.f32.partialorder %v2098, %v2454
    %vm2695 = vcmp.eq.f32.partialorder %v2099, %v2523
    %vm2696 = vcmp.eq.f32.partialorder %v2100, %v2592
    %vm2697 = vcmp.eq.f32.partialorder %v2101, %v2661
    %vm2698 = vcmp.eq.f32.partialorder %v2102, %v2454
    %vm2699 = vcmp.eq.f32.partialorder %v2103, %v2523
    %vm2700 = vcmp.eq.f32.partialorder %v2104, %v2592
    %vm2701 = vcmp.eq.f32.partialorder %v2105, %v2661
    %vm2702 = vcmp.eq.f32.partialorder %v2106, %v2454
    %vm2703 = vcmp.eq.f32.partialorder %v2107, %v2523
    %vm2704 = vcmp.eq.f32.partialorder %v2108, %v2592
    %vm2705 = vcmp.eq.f32.partialorder %v2109, %v2661
    %vm2706 = vcmp.eq.f32.partialorder %v2110, %v2454
    %vm2707 = vcmp.eq.f32.partialorder %v2111, %v2523
    %vm2708 = vcmp.eq.f32.partialorder %v2112, %v2592
    %vm2709 = vcmp.eq.f32.partialorder %v2113, %v2661
    %vm2710 = vcmp.eq.f32.partialorder %v2114, %v2454
    %vm2711 = vcmp.eq.f32.partialorder %v2115, %v2523
    %vm2712 = vcmp.eq.f32.partialorder %v2116, %v2592
    %vm2713 = vcmp.eq.f32.partialorder %v2117, %v2661
    %vm2714 = vcmp.eq.f32.partialorder %v2118, %v2454
    %vm2715 = vcmp.eq.f32.partialorder %v2119, %v2523
    %vm2716 = vcmp.eq.f32.partialorder %v2120, %v2592
    %vm2717 = vcmp.eq.f32.partialorder %v2121, %v2661
    %vm2718 = vcmp.eq.f32.partialorder %v2122, %v2454
    %vm2719 = vcmp.eq.f32.partialorder %v2123, %v2523
    %vm2720 = vcmp.eq.f32.partialorder %v2124, %v2592
    %vm2721 = vcmp.eq.f32.partialorder %v2125, %v2661
    %vm2722 = vcmp.eq.f32.partialorder %v2126, %v2454
    %vm2723 = vcmp.eq.f32.partialorder %v2127, %v2523
    %vm2724 = vcmp.eq.f32.partialorder %v2128, %v2592
    %vm2725 = vcmp.eq.f32.partialorder %v2129, %v2661
    %vm2726 = vcmp.eq.f32.partialorder %v2130, %v2454
    %vm2727 = vcmp.eq.f32.partialorder %v2131, %v2523
    %vm2728 = vcmp.eq.f32.partialorder %v2132, %v2592
    %vm2729 = vcmp.eq.f32.partialorder %v2133, %v2661
    %vm2730 = vcmp.eq.f32.partialorder %v2134, %v2454
    %vm2731 = vcmp.eq.f32.partialorder %v2135, %v2523
    %vm2732 = vcmp.eq.f32.partialorder %v2136, %v2592
    %vm2733 = vcmp.eq.f32.partialorder %v2137, %v2661
    %vm2734 = vcmp.eq.f32.partialorder %v2138, %v2454
    %vm2735 = vcmp.eq.f32.partialorder %v2139, %v2523
    %vm2736 = vcmp.eq.f32.partialorder %v2140, %v2592
    %vm2737 = vcmp.eq.f32.partialorder %v2141, %v2661
    %vm2738 = vcmp.eq.f32.partialorder %v2142, %v2454
    %vm2739 = vcmp.eq.f32.partialorder %v2143, %v2523
    %vm2740 = vcmp.eq.f32.partialorder %v2144, %v2592
    %vm2741 = vcmp.eq.f32.partialorder %v2145, %v2661
    %vm2742 = vcmp.eq.f32.partialorder %v2146, %v2454
    %vm2743 = vcmp.eq.f32.partialorder %v2147, %v2523
    %vm2744 = vcmp.eq.f32.partialorder %v2148, %v2592
    %vm2745 = vcmp.eq.f32.partialorder %v2149, %v2661
    %vm2746 = vcmp.eq.f32.partialorder %v2150, %v2454
    %vm2747 = vcmp.eq.f32.partialorder %v2151, %v2523
    %vm2748 = vcmp.eq.f32.partialorder %v2152, %v2592
    %vm2749 = vcmp.eq.f32.partialorder %v2153, %v2661
    %vm2750 = vcmp.eq.f32.partialorder %v2154, %v2454
    %vm2751 = vcmp.eq.f32.partialorder %v2155, %v2523
    %vm2752 = vcmp.eq.f32.partialorder %v2156, %v2592
    %vm2753 = vcmp.eq.f32.partialorder %v2157, %v2661
    %vm2754 = vcmp.eq.f32.partialorder %v2158, %v2454
    %vm2755 = vcmp.eq.f32.partialorder %v2159, %v2523
    %vm2756 = vcmp.eq.f32.partialorder %v2160, %v2592
    %vm2757 = vcmp.eq.f32.partialorder %v2161, %v2661
    %vm2758 = vcmp.eq.f32.partialorder %v2162, %v2454
    %vm2759 = vcmp.eq.f32.partialorder %v2163, %v2523
    %vm2760 = vcmp.eq.f32.partialorder %v2164, %v2592
    %vm2761 = vcmp.eq.f32.partialorder %v2165, %v2661
    %vm2762 = vcmp.eq.f32.partialorder %v2166, %v2454
    %vm2763 = vcmp.eq.f32.partialorder %v2167, %v2523
    %vm2764 = vcmp.eq.f32.partialorder %v2168, %v2592
    %vm2765 = vcmp.eq.f32.partialorder %v2169, %v2661
    %vm2766 = vcmp.eq.f32.partialorder %v2170, %v2454
    %vm2767 = vcmp.eq.f32.partialorder %v2171, %v2523
    %vm2768 = vcmp.eq.f32.partialorder %v2172, %v2592
    %vm2769 = vcmp.eq.f32.partialorder %v2173, %v2661
    %vm2770 = vcmp.eq.f32.partialorder %v2174, %v2454
    %vm2771 = vcmp.eq.f32.partialorder %v2175, %v2523
    %vm2772 = vcmp.eq.f32.partialorder %v2176, %v2592
    %vm2773 = vcmp.eq.f32.partialorder %v2177, %v2661
    %vm2774 = vcmp.eq.f32.partialorder %v2178, %v2454
    %vm2775 = vcmp.eq.f32.partialorder %v2179, %v2523
    %vm2776 = vcmp.eq.f32.partialorder %v2180, %v2592
    %vm2777 = vcmp.eq.f32.partialorder %v2181, %v2661
    %vm2778 = vcmp.eq.f32.partialorder %v2182, %v2454
    %vm2779 = vcmp.eq.f32.partialorder %v2183, %v2523
    %vm2780 = vcmp.eq.f32.partialorder %v2184, %v2592
    %vm2781 = vcmp.eq.f32.partialorder %v2185, %v2661
    %vm2782 = vcmp.eq.f32.partialorder %v2186, %v2454
    %vm2783 = vcmp.eq.f32.partialorder %v2187, %v2523
    %vm2784 = vcmp.eq.f32.partialorder %v2188, %v2592
    %vm2785 = vcmp.eq.f32.partialorder %v2189, %v2661
    %vm2786 = vcmp.eq.f32.partialorder %v2190, %v2454
    %vm2787 = vcmp.eq.f32.partialorder %v2191, %v2523
    %vm2788 = vcmp.eq.f32.partialorder %v2192, %v2592
    %vm2789 = vcmp.eq.f32.partialorder %v2193, %v2661
    %vm2790 = vcmp.eq.f32.partialorder %v2194, %v2454
    %vm2791 = vcmp.eq.f32.partialorder %v2195, %v2523
    %vm2792 = vcmp.eq.f32.partialorder %v2196, %v2592
    %vm2793 = vcmp.eq.f32.partialorder %v2197, %v2661
    %vm2794 = vcmp.eq.f32.partialorder %v2198, %v2454
    %vm2795 = vcmp.eq.f32.partialorder %v2199, %v2523
    %vm2796 = vcmp.eq.f32.partialorder %v2200, %v2592
    %vm2797 = vcmp.eq.f32.partialorder %v2201, %v2661
    %vm2798 = vcmp.eq.f32.partialorder %v2202, %v2454
    %vm2799 = vcmp.eq.f32.partialorder %v2203, %v2523
    %vm2800 = vcmp.eq.f32.partialorder %v2204, %v2592
    %vm2801 = vcmp.eq.f32.partialorder %v2205, %v2661
    %vm2802 = vcmp.eq.f32.partialorder %v2206, %v2454
    %vm2803 = vcmp.eq.f32.partialorder %v2207, %v2523
    %vm2804 = vcmp.eq.f32.partialorder %v2208, %v2592
    %vm2805 = vcmp.eq.f32.partialorder %v2209, %v2661
    %vm2806 = vcmp.eq.f32.partialorder %v2210, %v2454
    %vm2807 = vcmp.eq.f32.partialorder %v2211, %v2523
    %vm2808 = vcmp.eq.f32.partialorder %v2212, %v2592
    %vm2809 = vcmp.eq.f32.partialorder %v2213, %v2661
    %vm2810 = vcmp.eq.f32.partialorder %v2214, %v2454
    %vm2811 = vcmp.eq.f32.partialorder %v2215, %v2523
    %vm2812 = vcmp.eq.f32.partialorder %v2216, %v2592
    %vm2813 = vcmp.eq.f32.partialorder %v2217, %v2661
    %vm2814 = vcmp.eq.f32.partialorder %v2218, %v2454
    %vm2815 = vcmp.eq.f32.partialorder %v2219, %v2523
    %vm2816 = vcmp.eq.f32.partialorder %v2220, %v2592
    %vm2817 = vcmp.eq.f32.partialorder %v2221, %v2661
    %vm2818 = vcmp.eq.f32.partialorder %v2222, %v2454
    %vm2819 = vcmp.eq.f32.partialorder %v2223, %v2523
    %vm2820 = vcmp.eq.f32.partialorder %v2224, %v2592
    %vm2821 = vcmp.eq.f32.partialorder %v2225, %v2661
    %vm2822 = vcmp.eq.f32.partialorder %v2226, %v2454
    %vm2823 = vcmp.eq.f32.partialorder %v2227, %v2523
    %vm2824 = vcmp.eq.f32.partialorder %v2228, %v2592
    %vm2825 = vcmp.eq.f32.partialorder %v2229, %v2661
    %vm2826 = vcmp.eq.f32.partialorder %v2230, %v2454
    %vm2827 = vcmp.eq.f32.partialorder %v2231, %v2523
    %vm2828 = vcmp.eq.f32.partialorder %v2232, %v2592
    %vm2829 = vcmp.eq.f32.partialorder %v2233, %v2661
    %vm2830 = vcmp.eq.f32.partialorder %v2234, %v2454
    %vm2831 = vcmp.eq.f32.partialorder %v2235, %v2523
    %vm2832 = vcmp.eq.f32.partialorder %v2236, %v2592
    %vm2833 = vcmp.eq.f32.partialorder %v2237, %v2661
    %vm2834 = vcmp.eq.f32.partialorder %v2238, %v2454
    %vm2835 = vcmp.eq.f32.partialorder %v2239, %v2523
    %vm2836 = vcmp.eq.f32.partialorder %v2240, %v2592
    %vm2837 = vcmp.eq.f32.partialorder %v2241, %v2661
    %vm2838 = vcmp.eq.f32.partialorder %v2242, %v2454
    %vm2839 = vcmp.eq.f32.partialorder %v2243, %v2523
    %vm2840 = vcmp.eq.f32.partialorder %v2244, %v2592
    %vm2841 = vcmp.eq.f32.partialorder %v2245, %v2661
    %vm2842 = vcmp.eq.f32.partialorder %v2246, %v2454
    %vm2843 = vcmp.eq.f32.partialorder %v2247, %v2523
    %vm2844 = vcmp.eq.f32.partialorder %v2248, %v2592
    %vm2845 = vcmp.eq.f32.partialorder %v2249, %v2661
    %vm2846 = vcmp.eq.f32.partialorder %v2250, %v2454
    %vm2847 = vcmp.eq.f32.partialorder %v2251, %v2523
    %vm2848 = vcmp.eq.f32.partialorder %v2252, %v2592
    %vm2849 = vcmp.eq.f32.partialorder %v2253, %v2661
    %vm2850 = vcmp.eq.f32.partialorder %v2254, %v2454
    %vm2851 = vcmp.eq.f32.partialorder %v2255, %v2523
    %vm2852 = vcmp.eq.f32.partialorder %v2256, %v2592
    %vm2853 = vcmp.eq.f32.partialorder %v2257, %v2661
    %vm2854 = vcmp.eq.f32.partialorder %v2258, %v2454
    %vm2855 = vcmp.eq.f32.partialorder %v2259, %v2523
    %vm2856 = vcmp.eq.f32.partialorder %v2260, %v2592
    %vm2857 = vcmp.eq.f32.partialorder %v2261, %v2661
    %vm2858 = vcmp.eq.f32.partialorder %v2262, %v2454
    %vm2859 = vcmp.eq.f32.partialorder %v2263, %v2523
    %vm2860 = vcmp.eq.f32.partialorder %v2264, %v2592
    %vm2861 = vcmp.eq.f32.partialorder %v2265, %v2661
    %vm2862 = vcmp.eq.f32.partialorder %v2266, %v2454
    %vm2863 = vcmp.eq.f32.partialorder %v2267, %v2523
    %vm2864 = vcmp.eq.f32.partialorder %v2268, %v2592
    %vm2865 = vcmp.eq.f32.partialorder %v2269, %v2661
    %vm2866 = vcmp.eq.f32.partialorder %v2270, %v2454
    %vm2867 = vcmp.eq.f32.partialorder %v2271, %v2523
    %vm2868 = vcmp.eq.f32.partialorder %v2272, %v2592
    %vm2869 = vcmp.eq.f32.partialorder %v2273, %v2661
    %vm2870 = vcmp.eq.f32.partialorder %v2274, %v2454
    %vm2871 = vcmp.eq.f32.partialorder %v2275, %v2523
    %vm2872 = vcmp.eq.f32.partialorder %v2276, %v2592
    %vm2873 = vcmp.eq.f32.partialorder %v2277, %v2661
    %vm2874 = vcmp.eq.f32.partialorder %v2278, %v2454
    %vm2875 = vcmp.eq.f32.partialorder %v2279, %v2523
    %vm2876 = vcmp.eq.f32.partialorder %v2280, %v2592
    %vm2877 = vcmp.eq.f32.partialorder %v2281, %v2661
    %vm2878 = vcmp.eq.f32.partialorder %v2282, %v2454
    %vm2879 = vcmp.eq.f32.partialorder %v2283, %v2523
    %vm2880 = vcmp.eq.f32.partialorder %v2284, %v2592
    %vm2881 = vcmp.eq.f32.partialorder %v2285, %v2661
    %vm2882 = vcmp.eq.f32.partialorder %v2286, %v2454
    %vm2883 = vcmp.eq.f32.partialorder %v2287, %v2523
    %vm2884 = vcmp.eq.f32.partialorder %v2288, %v2592
    %vm2885 = vcmp.eq.f32.partialorder %v2289, %v2661
    %vm2886 = vcmp.eq.f32.partialorder %v2290, %v2454
    %vm2887 = vcmp.eq.f32.partialorder %v2291, %v2523
    %vm2888 = vcmp.eq.f32.partialorder %v2292, %v2592
    %vm2889 = vcmp.eq.f32.partialorder %v2293, %v2661
    %vm2890 = vcmp.eq.f32.partialorder %v2294, %v2454
    %vm2891 = vcmp.eq.f32.partialorder %v2295, %v2523
    %vm2892 = vcmp.eq.f32.partialorder %v2296, %v2592
    %vm2893 = vcmp.eq.f32.partialorder %v2297, %v2661
    %vm2894 = vcmp.eq.f32.partialorder %v2298, %v2454
    %vm2895 = vcmp.eq.f32.partialorder %v2299, %v2523
    %vm2896 = vcmp.eq.f32.partialorder %v2300, %v2592
    %vm2897 = vcmp.eq.f32.partialorder %v2301, %v2661
    %vm2898 = vcmp.eq.f32.partialorder %v2302, %v2454
    %vm2899 = vcmp.eq.f32.partialorder %v2303, %v2523
    %vm2900 = vcmp.eq.f32.partialorder %v2304, %v2592
    %vm2901 = vcmp.eq.f32.partialorder %v2305, %v2661
    %vm2902 = vcmp.eq.f32.partialorder %v2306, %v2454
    %vm2903 = vcmp.eq.f32.partialorder %v2307, %v2523
    %vm2904 = vcmp.eq.f32.partialorder %v2308, %v2592
    %vm2905 = vcmp.eq.f32.partialorder %v2309, %v2661
    %vm2906 = vcmp.eq.f32.partialorder %v2310, %v2454
    %vm2907 = vcmp.eq.f32.partialorder %v2311, %v2523
    %vm2908 = vcmp.eq.f32.partialorder %v2312, %v2592
    %vm2909 = vcmp.eq.f32.partialorder %v2313, %v2661
    %vm2910 = vcmp.eq.f32.partialorder %v2314, %v2454
    %vm2911 = vcmp.eq.f32.partialorder %v2315, %v2523
    %vm2912 = vcmp.eq.f32.partialorder %v2316, %v2592
    %vm2913 = vcmp.eq.f32.partialorder %v2317, %v2661
    %vm2914 = vcmp.eq.f32.partialorder %v2318, %v2454
    %vm2915 = vcmp.eq.f32.partialorder %v2319, %v2523
    %vm2916 = vcmp.eq.f32.partialorder %v2320, %v2592
    %vm2917 = vcmp.eq.f32.partialorder %v2321, %v2661
    %2918 = vset.pattern.permute.xlu0 0
    %2919 = vperm.xlu0 %2918, %v2322
    %v2920 = vpop.permute.xlu0 %2919
    %2921 = vset.pattern.permute.xlu0 0
    %2922 = vperm.xlu0 %2921, %v2323
    %v2923 = vpop.permute.xlu0 %2922
    %2924 = vset.pattern.permute.xlu0 0
    %2925 = vperm.xlu0 %2924, %v2324
    %v2926 = vpop.permute.xlu0 %2925
    %2927 = vset.pattern.permute.xlu0 0
    %2928 = vperm.xlu0 %2927, %v2325
    %v2929 = vpop.permute.xlu0 %2928
    %2930 = vset.pattern.permute.xlu0 0
    %2931 = vperm.xlu0 %2930, %v2326
    %v2932 = vpop.permute.xlu0 %2931
    %2933 = vset.pattern.permute.xlu0 0
    %2934 = vperm.xlu0 %2933, %v2327
    %v2935 = vpop.permute.xlu0 %2934
    %2936 = vset.pattern.permute.xlu0 0
    %2937 = vperm.xlu0 %2936, %v2328
    %v2938 = vpop.permute.xlu0 %2937
    %2939 = vset.pattern.permute.xlu0 0
    %2940 = vperm.xlu0 %2939, %v2329
    %v2941 = vpop.permute.xlu0 %2940
    %2942 = vset.pattern.permute.xlu0 0
    %2943 = vperm.xlu0 %2942, %v2330
    %v2944 = vpop.permute.xlu0 %2943
    %2945 = vset.pattern.permute.xlu0 0
    %2946 = vperm.xlu0 %2945, %v2331
    %v2947 = vpop.permute.xlu0 %2946
    %2948 = vset.pattern.permute.xlu0 0
    %2949 = vperm.xlu0 %2948, %v2332
    %v2950 = vpop.permute.xlu0 %2949
    %2951 = vset.pattern.permute.xlu0 0
    %2952 = vperm.xlu0 %2951, %v2333
    %v2953 = vpop.permute.xlu0 %2952
    %2954 = vset.pattern.permute.xlu0 0
    %2955 = vperm.xlu0 %2954, %v2334
    %v2956 = vpop.permute.xlu0 %2955
    %2957 = vset.pattern.permute.xlu0 0
    %2958 = vperm.xlu0 %2957, %v2335
    %v2959 = vpop.permute.xlu0 %2958
    %2960 = vset.pattern.permute.xlu0 0
    %2961 = vperm.xlu0 %2960, %v2336
    %v2962 = vpop.permute.xlu0 %2961
    %2963 = vset.pattern.permute.xlu0 0
    %2964 = vperm.xlu0 %2963, %v2337
    %v2965 = vpop.permute.xlu0 %2964
    %2966 = vset.pattern.permute.xlu0 0
    %2967 = vperm.xlu0 %2966, %v2338
    %v2968 = vpop.permute.xlu0 %2967
    %2969 = vset.pattern.permute.xlu0 0
    %2970 = vperm.xlu0 %2969, %v2339
    %v2971 = vpop.permute.xlu0 %2970
    %2972 = vset.pattern.permute.xlu0 0
    %2973 = vperm.xlu0 %2972, %v2340
    %v2974 = vpop.permute.xlu0 %2973
    %2975 = vset.pattern.permute.xlu0 0
    %2976 = vperm.xlu0 %2975, %v2341
    %v2977 = vpop.permute.xlu0 %2976
    %2978 = vset.pattern.permute.xlu0 0
    %2979 = vperm.xlu0 %2978, %v2342
    %v2980 = vpop.permute.xlu0 %2979
    %2981 = vset.pattern.permute.xlu0 0
    %2982 = vperm.xlu0 %2981, %v2343
    %v2983 = vpop.permute.xlu0 %2982
    %2984 = vset.pattern.permute.xlu0 0
    %2985 = vperm.xlu0 %2984, %v2344
    %v2986 = vpop.permute.xlu0 %2985
    %2987 = vset.pattern.permute.xlu0 0
    %2988 = vperm.xlu0 %2987, %v2345
    %v2989 = vpop.permute.xlu0 %2988
    %2990 = vset.pattern.permute.xlu0 0
    %2991 = vperm.xlu0 %2990, %v2346
    %v2992 = vpop.permute.xlu0 %2991
    %2993 = vset.pattern.permute.xlu0 0
    %2994 = vperm.xlu0 %2993, %v2347
    %v2995 = vpop.permute.xlu0 %2994
    %2996 = vset.pattern.permute.xlu0 0
    %2997 = vperm.xlu0 %2996, %v2348
    %v2998 = vpop.permute.xlu0 %2997
    %2999 = vset.pattern.permute.xlu0 0
    %3000 = vperm.xlu0 %2999, %v2349
    %v3001 = vpop.permute.xlu0 %3000
    %3002 = vset.pattern.permute.xlu0 0
    %3003 = vperm.xlu0 %3002, %v2350
    %v3004 = vpop.permute.xlu0 %3003
    %3005 = vset.pattern.permute.xlu0 0
    %3006 = vperm.xlu0 %3005, %v2351
    %v3007 = vpop.permute.xlu0 %3006
    %3008 = vset.pattern.permute.xlu0 0
    %3009 = vperm.xlu0 %3008, %v2352
    %v3010 = vpop.permute.xlu0 %3009
    %3011 = vset.pattern.permute.xlu0 0
    %3012 = vperm.xlu0 %3011, %v2353
    %v3013 = vpop.permute.xlu0 %3012
    %3014 = vset.pattern.permute.xlu0 0
    %3015 = vperm.xlu0 %3014, %v2354
    %v3016 = vpop.permute.xlu0 %3015
    %3017 = vset.pattern.permute.xlu0 0
    %3018 = vperm.xlu0 %3017, %v2355
    %v3019 = vpop.permute.xlu0 %3018
    %3020 = vset.pattern.permute.xlu0 0
    %3021 = vperm.xlu0 %3020, %v2356
    %v3022 = vpop.permute.xlu0 %3021
    %3023 = vset.pattern.permute.xlu0 0
    %3024 = vperm.xlu0 %3023, %v2357
    %v3025 = vpop.permute.xlu0 %3024
    %3026 = vset.pattern.permute.xlu0 0
    %3027 = vperm.xlu0 %3026, %v2358
    %v3028 = vpop.permute.xlu0 %3027
    %3029 = vset.pattern.permute.xlu0 0
    %3030 = vperm.xlu0 %3029, %v2359
    %v3031 = vpop.permute.xlu0 %3030
    %3032 = vset.pattern.permute.xlu0 0
    %3033 = vperm.xlu0 %3032, %v2360
    %v3034 = vpop.permute.xlu0 %3033
    %3035 = vset.pattern.permute.xlu0 0
    %3036 = vperm.xlu0 %3035, %v2361
    %v3037 = vpop.permute.xlu0 %3036
    %3038 = vset.pattern.permute.xlu0 0
    %3039 = vperm.xlu0 %3038, %v2362
    %v3040 = vpop.permute.xlu0 %3039
    %3041 = vset.pattern.permute.xlu0 0
    %3042 = vperm.xlu0 %3041, %v2363
    %v3043 = vpop.permute.xlu0 %3042
    %3044 = vset.pattern.permute.xlu0 0
    %3045 = vperm.xlu0 %3044, %v2364
    %v3046 = vpop.permute.xlu0 %3045
    %3047 = vset.pattern.permute.xlu0 0
    %3048 = vperm.xlu0 %3047, %v2365
    %v3049 = vpop.permute.xlu0 %3048
    %3050 = vset.pattern.permute.xlu0 0
    %3051 = vperm.xlu0 %3050, %v2366
    %v3052 = vpop.permute.xlu0 %3051
    %3053 = vset.pattern.permute.xlu0 0
    %3054 = vperm.xlu0 %3053, %v2367
    %v3055 = vpop.permute.xlu0 %3054
    %3056 = vset.pattern.permute.xlu0 0
    %3057 = vperm.xlu0 %3056, %v2368
    %v3058 = vpop.permute.xlu0 %3057
    %3059 = vset.pattern.permute.xlu0 0
    %3060 = vperm.xlu0 %3059, %v2369
    %v3061 = vpop.permute.xlu0 %3060
    %3062 = vset.pattern.permute.xlu0 0
    %3063 = vperm.xlu0 %3062, %v2370
    %v3064 = vpop.permute.xlu0 %3063
    %3065 = vset.pattern.permute.xlu0 0
    %3066 = vperm.xlu0 %3065, %v2371
    %v3067 = vpop.permute.xlu0 %3066
    %3068 = vset.pattern.permute.xlu0 0
    %3069 = vperm.xlu0 %3068, %v2372
    %v3070 = vpop.permute.xlu0 %3069
    %3071 = vset.pattern.permute.xlu0 0
    %3072 = vperm.xlu0 %3071, %v2373
    %v3073 = vpop.permute.xlu0 %3072
    %3074 = vset.pattern.permute.xlu0 0
    %3075 = vperm.xlu0 %3074, %v2374
    %v3076 = vpop.permute.xlu0 %3075
    %3077 = vset.pattern.permute.xlu0 0
    %3078 = vperm.xlu0 %3077, %v2375
    %v3079 = vpop.permute.xlu0 %3078
    %3080 = vset.pattern.permute.xlu0 0
    %3081 = vperm.xlu0 %3080, %v2376
    %v3082 = vpop.permute.xlu0 %3081
    %3083 = vset.pattern.permute.xlu0 0
    %3084 = vperm.xlu0 %3083, %v2377
    %v3085 = vpop.permute.xlu0 %3084
    %3086 = vset.pattern.permute.xlu0 0
    %3087 = vperm.xlu0 %3086, %v2378
    %v3088 = vpop.permute.xlu0 %3087
    %3089 = vset.pattern.permute.xlu0 0
    %3090 = vperm.xlu0 %3089, %v2379
    %v3091 = vpop.permute.xlu0 %3090
    %3092 = vset.pattern.permute.xlu0 0
    %3093 = vperm.xlu0 %3092, %v2380
    %v3094 = vpop.permute.xlu0 %3093
    %3095 = vset.pattern.permute.xlu0 0
    %3096 = vperm.xlu0 %3095, %v2381
    %v3097 = vpop.permute.xlu0 %3096
    %3098 = vset.pattern.permute.xlu0 0
    %3099 = vperm.xlu0 %3098, %v2382
    %v3100 = vpop.permute.xlu0 %3099
    %3101 = vset.pattern.permute.xlu0 0
    %3102 = vperm.xlu0 %3101, %v2383
    %v3103 = vpop.permute.xlu0 %3102
    %3104 = vset.pattern.permute.xlu0 0
    %3105 = vperm.xlu0 %3104, %v2384
    %v3106 = vpop.permute.xlu0 %3105
    %3107 = vset.pattern.permute.xlu0 0
    %3108 = vperm.xlu0 %3107, %v2385
    %v3109 = vpop.permute.xlu0 %3108
    %v3110 = vsel %vm2662, %v2920, 512
    %v3111 = vsel %vm2663, %v2920, 512
    %v3112 = vsel %vm2664, %v2920, 512
    %v3113 = vsel %vm2665, %v2920, 512
    %v3114 = vsel %vm2666, %v2923, 512
    %v3115 = vsel %vm2667, %v2923, 512
    %v3116 = vsel %vm2668, %v2923, 512
    %v3117 = vsel %vm2669, %v2923, 512
    %v3118 = vsel %vm2670, %v2926, 512
    %v3119 = vsel %vm2671, %v2926, 512
    %v3120 = vsel %vm2672, %v2926, 512
    %v3121 = vsel %vm2673, %v2926, 512
    %v3122 = vsel %vm2674, %v2929, 512
    %v3123 = vsel %vm2675, %v2929, 512
    %v3124 = vsel %vm2676, %v2929, 512
    %v3125 = vsel %vm2677, %v2929, 512
    %v3126 = vsel %vm2678, %v2932, 512
    %v3127 = vsel %vm2679, %v2932, 512
    %v3128 = vsel %vm2680, %v2932, 512
    %v3129 = vsel %vm2681, %v2932, 512
    %v3130 = vsel %vm2682, %v2935, 512
    %v3131 = vsel %vm2683, %v2935, 512
    %v3132 = vsel %vm2684, %v2935, 512
    %v3133 = vsel %vm2685, %v2935, 512
    %v3134 = vsel %vm2686, %v2938, 512
    %v3135 = vsel %vm2687, %v2938, 512
    %v3136 = vsel %vm2688, %v2938, 512
    %v3137 = vsel %vm2689, %v2938, 512
    %v3138 = vsel %vm2690, %v2941, 512
    %v3139 = vsel %vm2691, %v2941, 512
    %v3140 = vsel %vm2692, %v2941, 512
    %v3141 = vsel %vm2693, %v2941, 512
    %v3142 = vsel %vm2694, %v2944, 512
    %v3143 = vsel %vm2695, %v2944, 512
    %v3144 = vsel %vm2696, %v2944, 512
    %v3145 = vsel %vm2697, %v2944, 512
    %v3146 = vsel %vm2698, %v2947, 512
    %v3147 = vsel %vm2699, %v2947, 512
    %v3148 = vsel %vm2700, %v2947, 512
    %v3149 = vsel %vm2701, %v2947, 512
    %v3150 = vsel %vm2702, %v2950, 512
    %v3151 = vsel %vm2703, %v2950, 512
    %v3152 = vsel %vm2704, %v2950, 512
    %v3153 = vsel %vm2705, %v2950, 512
    %v3154 = vsel %vm2706, %v2953, 512
    %v3155 = vsel %vm2707, %v2953, 512
    %v3156 = vsel %vm2708, %v2953, 512
    %v3157 = vsel %vm2709, %v2953, 512
    %v3158 = vsel %vm2710, %v2956, 512
    %v3159 = vsel %vm2711, %v2956, 512
    %v3160 = vsel %vm2712, %v2956, 512
    %v3161 = vsel %vm2713, %v2956, 512
    %v3162 = vsel %vm2714, %v2959, 512
    %v3163 = vsel %vm2715, %v2959, 512
    %v3164 = vsel %vm2716, %v2959, 512
    %v3165 = vsel %vm2717, %v2959, 512
    %v3166 = vsel %vm2718, %v2962, 512
    %v3167 = vsel %vm2719, %v2962, 512
    %v3168 = vsel %vm2720, %v2962, 512
    %v3169 = vsel %vm2721, %v2962, 512
    %v3170 = vsel %vm2722, %v2965, 512
    %v3171 = vsel %vm2723, %v2965, 512
    %v3172 = vsel %vm2724, %v2965, 512
    %v3173 = vsel %vm2725, %v2965, 512
    %v3174 = vsel %vm2726, %v2968, 512
    %v3175 = vsel %vm2727, %v2968, 512
    %v3176 = vsel %vm2728, %v2968, 512
    %v3177 = vsel %vm2729, %v2968, 512
    %v3178 = vsel %vm2730, %v2971, 512
    %v3179 = vsel %vm2731, %v2971, 512
    %v3180 = vsel %vm2732, %v2971, 512
    %v3181 = vsel %vm2733, %v2971, 512
    %v3182 = vsel %vm2734, %v2974, 512
    %v3183 = vsel %vm2735, %v2974, 512
    %v3184 = vsel %vm2736, %v2974, 512
    %v3185 = vsel %vm2737, %v2974, 512
    %v3186 = vsel %vm2738, %v2977, 512
    %v3187 = vsel %vm2739, %v2977, 512
    %v3188 = vsel %vm2740, %v2977, 512
    %v3189 = vsel %vm2741, %v2977, 512
    %v3190 = vsel %vm2742, %v2980, 512
    %v3191 = vsel %vm2743, %v2980, 512
    %v3192 = vsel %vm2744, %v2980, 512
    %v3193 = vsel %vm2745, %v2980, 512
    %v3194 = vsel %vm2746, %v2983, 512
    %v3195 = vsel %vm2747, %v2983, 512
    %v3196 = vsel %vm2748, %v2983, 512
    %v3197 = vsel %vm2749, %v2983, 512
    %v3198 = vsel %vm2750, %v2986, 512
    %v3199 = vsel %vm2751, %v2986, 512
    %v3200 = vsel %vm2752, %v2986, 512
    %v3201 = vsel %vm2753, %v2986, 512
    %v3202 = vsel %vm2754, %v2989, 512
    %v3203 = vsel %vm2755, %v2989, 512
    %v3204 = vsel %vm2756, %v2989, 512
    %v3205 = vsel %vm2757, %v2989, 512
    %v3206 = vsel %vm2758, %v2992, 512
    %v3207 = vsel %vm2759, %v2992, 512
    %v3208 = vsel %vm2760, %v2992, 512
    %v3209 = vsel %vm2761, %v2992, 512
    %v3210 = vsel %vm2762, %v2995, 512
    %v3211 = vsel %vm2763, %v2995, 512
    %v3212 = vsel %vm2764, %v2995, 512
    %v3213 = vsel %vm2765, %v2995, 512
    %v3214 = vsel %vm2766, %v2998, 512
    %v3215 = vsel %vm2767, %v2998, 512
    %v3216 = vsel %vm2768, %v2998, 512
    %v3217 = vsel %vm2769, %v2998, 512
    %v3218 = vsel %vm2770, %v3001, 512
    %v3219 = vsel %vm2771, %v3001, 512
    %v3220 = vsel %vm2772, %v3001, 512
    %v3221 = vsel %vm2773, %v3001, 512
    %v3222 = vsel %vm2774, %v3004, 512
    %v3223 = vsel %vm2775, %v3004, 512
    %v3224 = vsel %vm2776, %v3004, 512
    %v3225 = vsel %vm2777, %v3004, 512
    %v3226 = vsel %vm2778, %v3007, 512
    %v3227 = vsel %vm2779, %v3007, 512
    %v3228 = vsel %vm2780, %v3007, 512
    %v3229 = vsel %vm2781, %v3007, 512
    %v3230 = vsel %vm2782, %v3010, 512
    %v3231 = vsel %vm2783, %v3010, 512
    %v3232 = vsel %vm2784, %v3010, 512
    %v3233 = vsel %vm2785, %v3010, 512
    %v3234 = vsel %vm2786, %v3013, 512
    %v3235 = vsel %vm2787, %v3013, 512
    %v3236 = vsel %vm2788, %v3013, 512
    %v3237 = vsel %vm2789, %v3013, 512
    %v3238 = vsel %vm2790, %v3016, 512
    %v3239 = vsel %vm2791, %v3016, 512
    %v3240 = vsel %vm2792, %v3016, 512
    %v3241 = vsel %vm2793, %v3016, 512
    %v3242 = vsel %vm2794, %v3019, 512
    %v3243 = vsel %vm2795, %v3019, 512
    %v3244 = vsel %vm2796, %v3019, 512
    %v3245 = vsel %vm2797, %v3019, 512
    %v3246 = vsel %vm2798, %v3022, 512
    %v3247 = vsel %vm2799, %v3022, 512
    %v3248 = vsel %vm2800, %v3022, 512
    %v3249 = vsel %vm2801, %v3022, 512
    %v3250 = vsel %vm2802, %v3025, 512
    %v3251 = vsel %vm2803, %v3025, 512
    %v3252 = vsel %vm2804, %v3025, 512
    %v3253 = vsel %vm2805, %v3025, 512
    %v3254 = vsel %vm2806, %v3028, 512
    %v3255 = vsel %vm2807, %v3028, 512
    %v3256 = vsel %vm2808, %v3028, 512
    %v3257 = vsel %vm2809, %v3028, 512
    %v3258 = vsel %vm2810, %v3031, 512
    %v3259 = vsel %vm2811, %v3031, 512
    %v3260 = vsel %vm2812, %v3031, 512
    %v3261 = vsel %vm2813, %v3031, 512
    %v3262 = vsel %vm2814, %v3034, 512
    %v3263 = vsel %vm2815, %v3034, 512
    %v3264 = vsel %vm2816, %v3034, 512
    %v3265 = vsel %vm2817, %v3034, 512
    %v3266 = vsel %vm2818, %v3037, 512
    %v3267 = vsel %vm2819, %v3037, 512
    %v3268 = vsel %vm2820, %v3037, 512
    %v3269 = vsel %vm2821, %v3037, 512
    %v3270 = vsel %vm2822, %v3040, 512
    %v3271 = vsel %vm2823, %v3040, 512
    %v3272 = vsel %vm2824, %v3040, 512
    %v3273 = vsel %vm2825, %v3040, 512
    %v3274 = vsel %vm2826, %v3043, 512
    %v3275 = vsel %vm2827, %v3043, 512
    %v3276 = vsel %vm2828, %v3043, 512
    %v3277 = vsel %vm2829, %v3043, 512
    %v3278 = vsel %vm2830, %v3046, 512
    %v3279 = vsel %vm2831, %v3046, 512
    %v3280 = vsel %vm2832, %v3046, 512
    %v3281 = vsel %vm2833, %v3046, 512
    %v3282 = vsel %vm2834, %v3049, 512
    %v3283 = vsel %vm2835, %v3049, 512
    %v3284 = vsel %vm2836, %v3049, 512
    %v3285 = vsel %vm2837, %v3049, 512
    %v3286 = vsel %vm2838, %v3052, 512
    %v3287 = vsel %vm2839, %v3052, 512
    %v3288 = vsel %vm2840, %v3052, 512
    %v3289 = vsel %vm2841, %v3052, 512
    %v3290 = vsel %vm2842, %v3055, 512
    %v3291 = vsel %vm2843, %v3055, 512
    %v3292 = vsel %vm2844, %v3055, 512
    %v3293 = vsel %vm2845, %v3055, 512
    %v3294 = vsel %vm2846, %v3058, 512
    %v3295 = vsel %vm2847, %v3058, 512
    %v3296 = vsel %vm2848, %v3058, 512
    %v3297 = vsel %vm2849, %v3058, 512
    %v3298 = vsel %vm2850, %v3061, 512
    %v3299 = vsel %vm2851, %v3061, 512
    %v3300 = vsel %vm2852, %v3061, 512
    %v3301 = vsel %vm2853, %v3061, 512
    %v3302 = vsel %vm2854, %v3064, 512
    %v3303 = vsel %vm2855, %v3064, 512
    %v3304 = vsel %vm2856, %v3064, 512
    %v3305 = vsel %vm2857, %v3064, 512
    %v3306 = vsel %vm2858, %v3067, 512
    %v3307 = vsel %vm2859, %v3067, 512
    %v3308 = vsel %vm2860, %v3067, 512
    %v3309 = vsel %vm2861, %v3067, 512
    %v3310 = vsel %vm2862, %v3070, 512
    %v3311 = vsel %vm2863, %v3070, 512
    %v3312 = vsel %vm2864, %v3070, 512
    %v3313 = vsel %vm2865, %v3070, 512
    %v3314 = vsel %vm2866, %v3073, 512
    %v3315 = vsel %vm2867, %v3073, 512
    %v3316 = vsel %vm2868, %v3073, 512
    %v3317 = vsel %vm2869, %v3073, 512
    %v3318 = vsel %vm2870, %v3076, 512
    %v3319 = vsel %vm2871, %v3076, 512
    %v3320 = vsel %vm2872, %v3076, 512
    %v3321 = vsel %vm2873, %v3076, 512
    %v3322 = vsel %vm2874, %v3079, 512
    %v3323 = vsel %vm2875, %v3079, 512
    %v3324 = vsel %vm2876, %v3079, 512
    %v3325 = vsel %vm2877, %v3079, 512
    %v3326 = vsel %vm2878, %v3082, 512
    %v3327 = vsel %vm2879, %v3082, 512
    %v3328 = vsel %vm2880, %v3082, 512
    %v3329 = vsel %vm2881, %v3082, 512
    %v3330 = vsel %vm2882, %v3085, 512
    %v3331 = vsel %vm2883, %v3085, 512
    %v3332 = vsel %vm2884, %v3085, 512
    %v3333 = vsel %vm2885, %v3085, 512
    %v3334 = vsel %vm2886, %v3088, 512
    %v3335 = vsel %vm2887, %v3088, 512
    %v3336 = vsel %vm2888, %v3088, 512
    %v3337 = vsel %vm2889, %v3088, 512
    %v3338 = vsel %vm2890, %v3091, 512
    %v3339 = vsel %vm2891, %v3091, 512
    %v3340 = vsel %vm2892, %v3091, 512
    %v3341 = vsel %vm2893, %v3091, 512
    %v3342 = vsel %vm2894, %v3094, 512
    %v3343 = vsel %vm2895, %v3094, 512
    %v3344 = vsel %vm2896, %v3094, 512
    %v3345 = vsel %vm2897, %v3094, 512
    %v3346 = vsel %vm2898, %v3097, 512
    %v3347 = vsel %vm2899, %v3097, 512
    %v3348 = vsel %vm2900, %v3097, 512
    %v3349 = vsel %vm2901, %v3097, 512
    %v3350 = vsel %vm2902, %v3100, 512
    %v3351 = vsel %vm2903, %v3100, 512
    %v3352 = vsel %vm2904, %v3100, 512
    %v3353 = vsel %vm2905, %v3100, 512
    %v3354 = vsel %vm2906, %v3103, 512
    %v3355 = vsel %vm2907, %v3103, 512
    %v3356 = vsel %vm2908, %v3103, 512
    %v3357 = vsel %vm2909, %v3103, 512
    %v3358 = vsel %vm2910, %v3106, 512
    %v3359 = vsel %vm2911, %v3106, 512
    %v3360 = vsel %vm2912, %v3106, 512
    %v3361 = vsel %vm2913, %v3106, 512
    %v3362 = vsel %vm2914, %v3109, 512
    %v3363 = vsel %vm2915, %v3109, 512
    %v3364 = vsel %vm2916, %v3109, 512
    %v3365 = vsel %vm2917, %v3109, 512
    %vm3366 = vcmp.lt.s32.totalorder %v3110, %v3114
    %v3367 = vsel %vm3366, %v3110, %v3114
    %vm3368 = vcmp.lt.s32.totalorder %v3367, %v3118
    %v3369 = vsel %vm3368, %v3367, %v3118
    %vm3370 = vcmp.lt.s32.totalorder %v3369, %v3122
    %v3371 = vsel %vm3370, %v3369, %v3122
    %vm3372 = vcmp.lt.s32.totalorder %v3371, %v3126
    %v3373 = vsel %vm3372, %v3371, %v3126
    %vm3374 = vcmp.lt.s32.totalorder %v3373, %v3130
    %v3375 = vsel %vm3374, %v3373, %v3130
    %vm3376 = vcmp.lt.s32.totalorder %v3375, %v3134
    %v3377 = vsel %vm3376, %v3375, %v3134
    %vm3378 = vcmp.lt.s32.totalorder %v3377, %v3138
    %v3379 = vsel %vm3378, %v3377, %v3138
    %vm3380 = vcmp.lt.s32.totalorder %v3379, %v3142
    %v3381 = vsel %vm3380, %v3379, %v3142
    %vm3382 = vcmp.lt.s32.totalorder %v3381, %v3146
    %v3383 = vsel %vm3382, %v3381, %v3146
    %vm3384 = vcmp.lt.s32.totalorder %v3383, %v3150
    %v3385 = vsel %vm3384, %v3383, %v3150
    %vm3386 = vcmp.lt.s32.totalorder %v3385, %v3154
    %v3387 = vsel %vm3386, %v3385, %v3154
    %vm3388 = vcmp.lt.s32.totalorder %v3387, %v3158
    %v3389 = vsel %vm3388, %v3387, %v3158
    %vm3390 = vcmp.lt.s32.totalorder %v3389, %v3162
    %v3391 = vsel %vm3390, %v3389, %v3162
    %vm3392 = vcmp.lt.s32.totalorder %v3391, %v3166
    %v3393 = vsel %vm3392, %v3391, %v3166
    %vm3394 = vcmp.lt.s32.totalorder %v3393, %v3170
    %v3395 = vsel %vm3394, %v3393, %v3170
    %vm3396 = vcmp.lt.s32.totalorder %v3395, %v3174
    %v3397 = vsel %vm3396, %v3395, %v3174
    %vm3398 = vcmp.lt.s32.totalorder %v3397, %v3178
    %v3399 = vsel %vm3398, %v3397, %v3178
    %vm3400 = vcmp.lt.s32.totalorder %v3399, %v3182
    %v3401 = vsel %vm3400, %v3399, %v3182
    %vm3402 = vcmp.lt.s32.totalorder %v3401, %v3186
    %v3403 = vsel %vm3402, %v3401, %v3186
    %vm3404 = vcmp.lt.s32.totalorder %v3403, %v3190
    %v3405 = vsel %vm3404, %v3403, %v3190
    %vm3406 = vcmp.lt.s32.totalorder %v3405, %v3194
    %v3407 = vsel %vm3406, %v3405, %v3194
    %vm3408 = vcmp.lt.s32.totalorder %v3407, %v3198
    %v3409 = vsel %vm3408, %v3407, %v3198
    %vm3410 = vcmp.lt.s32.totalorder %v3409, %v3202
    %v3411 = vsel %vm3410, %v3409, %v3202
    %vm3412 = vcmp.lt.s32.totalorder %v3411, %v3206
    %v3413 = vsel %vm3412, %v3411, %v3206
    %vm3414 = vcmp.lt.s32.totalorder %v3413, %v3210
    %v3415 = vsel %vm3414, %v3413, %v3210
    %vm3416 = vcmp.lt.s32.totalorder %v3415, %v3214
    %v3417 = vsel %vm3416, %v3415, %v3214
    %vm3418 = vcmp.lt.s32.totalorder %v3417, %v3218
    %v3419 = vsel %vm3418, %v3417, %v3218
    %vm3420 = vcmp.lt.s32.totalorder %v3419, %v3222
    %v3421 = vsel %vm3420, %v3419, %v3222
    %vm3422 = vcmp.lt.s32.totalorder %v3421, %v3226
    %v3423 = vsel %vm3422, %v3421, %v3226
    %vm3424 = vcmp.lt.s32.totalorder %v3423, %v3230
    %v3425 = vsel %vm3424, %v3423, %v3230
    %vm3426 = vcmp.lt.s32.totalorder %v3425, %v3234
    %v3427 = vsel %vm3426, %v3425, %v3234
    %vm3428 = vcmp.lt.s32.totalorder %v3427, %v3238
    %v3429 = vsel %vm3428, %v3427, %v3238
    %vm3430 = vcmp.lt.s32.totalorder %v3429, %v3242
    %v3431 = vsel %vm3430, %v3429, %v3242
    %vm3432 = vcmp.lt.s32.totalorder %v3431, %v3246
    %v3433 = vsel %vm3432, %v3431, %v3246
    %vm3434 = vcmp.lt.s32.totalorder %v3433, %v3250
    %v3435 = vsel %vm3434, %v3433, %v3250
    %vm3436 = vcmp.lt.s32.totalorder %v3435, %v3254
    %v3437 = vsel %vm3436, %v3435, %v3254
    %vm3438 = vcmp.lt.s32.totalorder %v3437, %v3258
    %v3439 = vsel %vm3438, %v3437, %v3258
    %vm3440 = vcmp.lt.s32.totalorder %v3439, %v3262
    %v3441 = vsel %vm3440, %v3439, %v3262
    %vm3442 = vcmp.lt.s32.totalorder %v3441, %v3266
    %v3443 = vsel %vm3442, %v3441, %v3266
    %vm3444 = vcmp.lt.s32.totalorder %v3443, %v3270
    %v3445 = vsel %vm3444, %v3443, %v3270
    %vm3446 = vcmp.lt.s32.totalorder %v3445, %v3274
    %v3447 = vsel %vm3446, %v3445, %v3274
    %vm3448 = vcmp.lt.s32.totalorder %v3447, %v3278
    %v3449 = vsel %vm3448, %v3447, %v3278
    %vm3450 = vcmp.lt.s32.totalorder %v3449, %v3282
    %v3451 = vsel %vm3450, %v3449, %v3282
    %vm3452 = vcmp.lt.s32.totalorder %v3451, %v3286
    %v3453 = vsel %vm3452, %v3451, %v3286
    %vm3454 = vcmp.lt.s32.totalorder %v3453, %v3290
    %v3455 = vsel %vm3454, %v3453, %v3290
    %vm3456 = vcmp.lt.s32.totalorder %v3455, %v3294
    %v3457 = vsel %vm3456, %v3455, %v3294
    %vm3458 = vcmp.lt.s32.totalorder %v3457, %v3298
    %v3459 = vsel %vm3458, %v3457, %v3298
    %vm3460 = vcmp.lt.s32.totalorder %v3459, %v3302
    %v3461 = vsel %vm3460, %v3459, %v3302
    %vm3462 = vcmp.lt.s32.totalorder %v3461, %v3306
    %v3463 = vsel %vm3462, %v3461, %v3306
    %vm3464 = vcmp.lt.s32.totalorder %v3463, %v3310
    %v3465 = vsel %vm3464, %v3463, %v3310
    %vm3466 = vcmp.lt.s32.totalorder %v3465, %v3314
    %v3467 = vsel %vm3466, %v3465, %v3314
    %vm3468 = vcmp.lt.s32.totalorder %v3467, %v3318
    %v3469 = vsel %vm3468, %v3467, %v3318
    %vm3470 = vcmp.lt.s32.totalorder %v3469, %v3322
    %v3471 = vsel %vm3470, %v3469, %v3322
    %vm3472 = vcmp.lt.s32.totalorder %v3471, %v3326
    %v3473 = vsel %vm3472, %v3471, %v3326
    %vm3474 = vcmp.lt.s32.totalorder %v3473, %v3330
    %v3475 = vsel %vm3474, %v3473, %v3330
    %vm3476 = vcmp.lt.s32.totalorder %v3475, %v3334
    %v3477 = vsel %vm3476, %v3475, %v3334
    %vm3478 = vcmp.lt.s32.totalorder %v3477, %v3338
    %v3479 = vsel %vm3478, %v3477, %v3338
    %vm3480 = vcmp.lt.s32.totalorder %v3479, %v3342
    %v3481 = vsel %vm3480, %v3479, %v3342
    %vm3482 = vcmp.lt.s32.totalorder %v3481, %v3346
    %v3483 = vsel %vm3482, %v3481, %v3346
    %vm3484 = vcmp.lt.s32.totalorder %v3483, %v3350
    %v3485 = vsel %vm3484, %v3483, %v3350
    %vm3486 = vcmp.lt.s32.totalorder %v3485, %v3354
    %v3487 = vsel %vm3486, %v3485, %v3354
    %vm3488 = vcmp.lt.s32.totalorder %v3487, %v3358
    %v3489 = vsel %vm3488, %v3487, %v3358
    %vm3490 = vcmp.lt.s32.totalorder %v3489, %v3362
    %v3491 = vsel %vm3490, %v3489, %v3362
    %v3492 = vrot.slane %v3491, 4
    %vm3493 = vcmp.lt.s32.totalorder %v3491, %v3492
    %v3494 = vsel %vm3493, %v3491, %v3492
    %v3495 = vrot.slane %v3494, 2
    %vm3496 = vcmp.lt.s32.totalorder %v3494, %v3495
    %v3497 = vsel %vm3496, %v3494, %v3495
    %v3498 = vrot.slane %v3497, 1
    %vm3499 = vcmp.lt.s32.totalorder %v3497, %v3498
    %v3500 = vsel %vm3499, %v3497, %v3498
    %vm3501 = vcmp.lt.s32.totalorder %v3111, %v3115
    %v3502 = vsel %vm3501, %v3111, %v3115
    %vm3503 = vcmp.lt.s32.totalorder %v3502, %v3119
    %v3504 = vsel %vm3503, %v3502, %v3119
    %vm3505 = vcmp.lt.s32.totalorder %v3504, %v3123
    %v3506 = vsel %vm3505, %v3504, %v3123
    %vm3507 = vcmp.lt.s32.totalorder %v3506, %v3127
    %v3508 = vsel %vm3507, %v3506, %v3127
    %vm3509 = vcmp.lt.s32.totalorder %v3508, %v3131
    %v3510 = vsel %vm3509, %v3508, %v3131
    %vm3511 = vcmp.lt.s32.totalorder %v3510, %v3135
    %v3512 = vsel %vm3511, %v3510, %v3135
    %vm3513 = vcmp.lt.s32.totalorder %v3512, %v3139
    %v3514 = vsel %vm3513, %v3512, %v3139
    %vm3515 = vcmp.lt.s32.totalorder %v3514, %v3143
    %v3516 = vsel %vm3515, %v3514, %v3143
    %vm3517 = vcmp.lt.s32.totalorder %v3516, %v3147
    %v3518 = vsel %vm3517, %v3516, %v3147
    %vm3519 = vcmp.lt.s32.totalorder %v3518, %v3151
    %v3520 = vsel %vm3519, %v3518, %v3151
    %vm3521 = vcmp.lt.s32.totalorder %v3520, %v3155
    %v3522 = vsel %vm3521, %v3520, %v3155
    %vm3523 = vcmp.lt.s32.totalorder %v3522, %v3159
    %v3524 = vsel %vm3523, %v3522, %v3159
    %vm3525 = vcmp.lt.s32.totalorder %v3524, %v3163
    %v3526 = vsel %vm3525, %v3524, %v3163
    %vm3527 = vcmp.lt.s32.totalorder %v3526, %v3167
    %v3528 = vsel %vm3527, %v3526, %v3167
    %vm3529 = vcmp.lt.s32.totalorder %v3528, %v3171
    %v3530 = vsel %vm3529, %v3528, %v3171
    %vm3531 = vcmp.lt.s32.totalorder %v3530, %v3175
    %v3532 = vsel %vm3531, %v3530, %v3175
    %vm3533 = vcmp.lt.s32.totalorder %v3532, %v3179
    %v3534 = vsel %vm3533, %v3532, %v3179
    %vm3535 = vcmp.lt.s32.totalorder %v3534, %v3183
    %v3536 = vsel %vm3535, %v3534, %v3183
    %vm3537 = vcmp.lt.s32.totalorder %v3536, %v3187
    %v3538 = vsel %vm3537, %v3536, %v3187
    %vm3539 = vcmp.lt.s32.totalorder %v3538, %v3191
    %v3540 = vsel %vm3539, %v3538, %v3191
    %vm3541 = vcmp.lt.s32.totalorder %v3540, %v3195
    %v3542 = vsel %vm3541, %v3540, %v3195
    %vm3543 = vcmp.lt.s32.totalorder %v3542, %v3199
    %v3544 = vsel %vm3543, %v3542, %v3199
    %vm3545 = vcmp.lt.s32.totalorder %v3544, %v3203
    %v3546 = vsel %vm3545, %v3544, %v3203
    %vm3547 = vcmp.lt.s32.totalorder %v3546, %v3207
    %v3548 = vsel %vm3547, %v3546, %v3207
    %vm3549 = vcmp.lt.s32.totalorder %v3548, %v3211
    %v3550 = vsel %vm3549, %v3548, %v3211
    %vm3551 = vcmp.lt.s32.totalorder %v3550, %v3215
    %v3552 = vsel %vm3551, %v3550, %v3215
    %vm3553 = vcmp.lt.s32.totalorder %v3552, %v3219
    %v3554 = vsel %vm3553, %v3552, %v3219
    %vm3555 = vcmp.lt.s32.totalorder %v3554, %v3223
    %v3556 = vsel %vm3555, %v3554, %v3223
    %vm3557 = vcmp.lt.s32.totalorder %v3556, %v3227
    %v3558 = vsel %vm3557, %v3556, %v3227
    %vm3559 = vcmp.lt.s32.totalorder %v3558, %v3231
    %v3560 = vsel %vm3559, %v3558, %v3231
    %vm3561 = vcmp.lt.s32.totalorder %v3560, %v3235
    %v3562 = vsel %vm3561, %v3560, %v3235
    %vm3563 = vcmp.lt.s32.totalorder %v3562, %v3239
    %v3564 = vsel %vm3563, %v3562, %v3239
    %vm3565 = vcmp.lt.s32.totalorder %v3564, %v3243
    %v3566 = vsel %vm3565, %v3564, %v3243
    %vm3567 = vcmp.lt.s32.totalorder %v3566, %v3247
    %v3568 = vsel %vm3567, %v3566, %v3247
    %vm3569 = vcmp.lt.s32.totalorder %v3568, %v3251
    %v3570 = vsel %vm3569, %v3568, %v3251
    %vm3571 = vcmp.lt.s32.totalorder %v3570, %v3255
    %v3572 = vsel %vm3571, %v3570, %v3255
    %vm3573 = vcmp.lt.s32.totalorder %v3572, %v3259
    %v3574 = vsel %vm3573, %v3572, %v3259
    %vm3575 = vcmp.lt.s32.totalorder %v3574, %v3263
    %v3576 = vsel %vm3575, %v3574, %v3263
    %vm3577 = vcmp.lt.s32.totalorder %v3576, %v3267
    %v3578 = vsel %vm3577, %v3576, %v3267
    %vm3579 = vcmp.lt.s32.totalorder %v3578, %v3271
    %v3580 = vsel %vm3579, %v3578, %v3271
    %vm3581 = vcmp.lt.s32.totalorder %v3580, %v3275
    %v3582 = vsel %vm3581, %v3580, %v3275
    %vm3583 = vcmp.lt.s32.totalorder %v3582, %v3279
    %v3584 = vsel %vm3583, %v3582, %v3279
    %vm3585 = vcmp.lt.s32.totalorder %v3584, %v3283
    %v3586 = vsel %vm3585, %v3584, %v3283
    %vm3587 = vcmp.lt.s32.totalorder %v3586, %v3287
    %v3588 = vsel %vm3587, %v3586, %v3287
    %vm3589 = vcmp.lt.s32.totalorder %v3588, %v3291
    %v3590 = vsel %vm3589, %v3588, %v3291
    %vm3591 = vcmp.lt.s32.totalorder %v3590, %v3295
    %v3592 = vsel %vm3591, %v3590, %v3295
    %vm3593 = vcmp.lt.s32.totalorder %v3592, %v3299
    %v3594 = vsel %vm3593, %v3592, %v3299
    %vm3595 = vcmp.lt.s32.totalorder %v3594, %v3303
    %v3596 = vsel %vm3595, %v3594, %v3303
    %vm3597 = vcmp.lt.s32.totalorder %v3596, %v3307
    %v3598 = vsel %vm3597, %v3596, %v3307
    %vm3599 = vcmp.lt.s32.totalorder %v3598, %v3311
    %v3600 = vsel %vm3599, %v3598, %v3311
    %vm3601 = vcmp.lt.s32.totalorder %v3600, %v3315
    %v3602 = vsel %vm3601, %v3600, %v3315
    %vm3603 = vcmp.lt.s32.totalorder %v3602, %v3319
    %v3604 = vsel %vm3603, %v3602, %v3319
    %vm3605 = vcmp.lt.s32.totalorder %v3604, %v3323
    %v3606 = vsel %vm3605, %v3604, %v3323
    %vm3607 = vcmp.lt.s32.totalorder %v3606, %v3327
    %v3608 = vsel %vm3607, %v3606, %v3327
    %vm3609 = vcmp.lt.s32.totalorder %v3608, %v3331
    %v3610 = vsel %vm3609, %v3608, %v3331
    %vm3611 = vcmp.lt.s32.totalorder %v3610, %v3335
    %v3612 = vsel %vm3611, %v3610, %v3335
    %vm3613 = vcmp.lt.s32.totalorder %v3612, %v3339
    %v3614 = vsel %vm3613, %v3612, %v3339
    %vm3615 = vcmp.lt.s32.totalorder %v3614, %v3343
    %v3616 = vsel %vm3615, %v3614, %v3343
    %vm3617 = vcmp.lt.s32.totalorder %v3616, %v3347
    %v3618 = vsel %vm3617, %v3616, %v3347
    %vm3619 = vcmp.lt.s32.totalorder %v3618, %v3351
    %v3620 = vsel %vm3619, %v3618, %v3351
    %vm3621 = vcmp.lt.s32.totalorder %v3620, %v3355
    %v3622 = vsel %vm3621, %v3620, %v3355
    %vm3623 = vcmp.lt.s32.totalorder %v3622, %v3359
    %v3624 = vsel %vm3623, %v3622, %v3359
    %vm3625 = vcmp.lt.s32.totalorder %v3624, %v3363
    %v3626 = vsel %vm3625, %v3624, %v3363
    %v3627 = vrot.slane %v3626, 4
    %vm3628 = vcmp.lt.s32.totalorder %v3626, %v3627
    %v3629 = vsel %vm3628, %v3626, %v3627
    %v3630 = vrot.slane %v3629, 2
    %vm3631 = vcmp.lt.s32.totalorder %v3629, %v3630
    %v3632 = vsel %vm3631, %v3629, %v3630
    %v3633 = vrot.slane %v3632, 1
    %vm3634 = vcmp.lt.s32.totalorder %v3632, %v3633
    %v3635 = vsel %vm3634, %v3632, %v3633
    %vm3636 = vcmp.lt.s32.totalorder %v3112, %v3116
    %v3637 = vsel %vm3636, %v3112, %v3116
    %vm3638 = vcmp.lt.s32.totalorder %v3637, %v3120
    %v3639 = vsel %vm3638, %v3637, %v3120
    %vm3640 = vcmp.lt.s32.totalorder %v3639, %v3124
    %v3641 = vsel %vm3640, %v3639, %v3124
    %vm3642 = vcmp.lt.s32.totalorder %v3641, %v3128
    %v3643 = vsel %vm3642, %v3641, %v3128
    %vm3644 = vcmp.lt.s32.totalorder %v3643, %v3132
    %v3645 = vsel %vm3644, %v3643, %v3132
    %vm3646 = vcmp.lt.s32.totalorder %v3645, %v3136
    %v3647 = vsel %vm3646, %v3645, %v3136
    %vm3648 = vcmp.lt.s32.totalorder %v3647, %v3140
    %v3649 = vsel %vm3648, %v3647, %v3140
    %vm3650 = vcmp.lt.s32.totalorder %v3649, %v3144
    %v3651 = vsel %vm3650, %v3649, %v3144
    %vm3652 = vcmp.lt.s32.totalorder %v3651, %v3148
    %v3653 = vsel %vm3652, %v3651, %v3148
    %vm3654 = vcmp.lt.s32.totalorder %v3653, %v3152
    %v3655 = vsel %vm3654, %v3653, %v3152
    %vm3656 = vcmp.lt.s32.totalorder %v3655, %v3156
    %v3657 = vsel %vm3656, %v3655, %v3156
    %vm3658 = vcmp.lt.s32.totalorder %v3657, %v3160
    %v3659 = vsel %vm3658, %v3657, %v3160
    %vm3660 = vcmp.lt.s32.totalorder %v3659, %v3164
    %v3661 = vsel %vm3660, %v3659, %v3164
    %vm3662 = vcmp.lt.s32.totalorder %v3661, %v3168
    %v3663 = vsel %vm3662, %v3661, %v3168
    %vm3664 = vcmp.lt.s32.totalorder %v3663, %v3172
    %v3665 = vsel %vm3664, %v3663, %v3172
    %vm3666 = vcmp.lt.s32.totalorder %v3665, %v3176
    %v3667 = vsel %vm3666, %v3665, %v3176
    %vm3668 = vcmp.lt.s32.totalorder %v3667, %v3180
    %v3669 = vsel %vm3668, %v3667, %v3180
    %vm3670 = vcmp.lt.s32.totalorder %v3669, %v3184
    %v3671 = vsel %vm3670, %v3669, %v3184
    %vm3672 = vcmp.lt.s32.totalorder %v3671, %v3188
    %v3673 = vsel %vm3672, %v3671, %v3188
    %vm3674 = vcmp.lt.s32.totalorder %v3673, %v3192
    %v3675 = vsel %vm3674, %v3673, %v3192
    %vm3676 = vcmp.lt.s32.totalorder %v3675, %v3196
    %v3677 = vsel %vm3676, %v3675, %v3196
    %vm3678 = vcmp.lt.s32.totalorder %v3677, %v3200
    %v3679 = vsel %vm3678, %v3677, %v3200
    %vm3680 = vcmp.lt.s32.totalorder %v3679, %v3204
    %v3681 = vsel %vm3680, %v3679, %v3204
    %vm3682 = vcmp.lt.s32.totalorder %v3681, %v3208
    %v3683 = vsel %vm3682, %v3681, %v3208
    %vm3684 = vcmp.lt.s32.totalorder %v3683, %v3212
    %v3685 = vsel %vm3684, %v3683, %v3212
    %vm3686 = vcmp.lt.s32.totalorder %v3685, %v3216
    %v3687 = vsel %vm3686, %v3685, %v3216
    %vm3688 = vcmp.lt.s32.totalorder %v3687, %v3220
    %v3689 = vsel %vm3688, %v3687, %v3220
    %vm3690 = vcmp.lt.s32.totalorder %v3689, %v3224
    %v3691 = vsel %vm3690, %v3689, %v3224
    %vm3692 = vcmp.lt.s32.totalorder %v3691, %v3228
    %v3693 = vsel %vm3692, %v3691, %v3228
    %vm3694 = vcmp.lt.s32.totalorder %v3693, %v3232
    %v3695 = vsel %vm3694, %v3693, %v3232
    %vm3696 = vcmp.lt.s32.totalorder %v3695, %v3236
    %v3697 = vsel %vm3696, %v3695, %v3236
    %vm3698 = vcmp.lt.s32.totalorder %v3697, %v3240
    %v3699 = vsel %vm3698, %v3697, %v3240
    %vm3700 = vcmp.lt.s32.totalorder %v3699, %v3244
    %v3701 = vsel %vm3700, %v3699, %v3244
    %vm3702 = vcmp.lt.s32.totalorder %v3701, %v3248
    %v3703 = vsel %vm3702, %v3701, %v3248
    %vm3704 = vcmp.lt.s32.totalorder %v3703, %v3252
    %v3705 = vsel %vm3704, %v3703, %v3252
    %vm3706 = vcmp.lt.s32.totalorder %v3705, %v3256
    %v3707 = vsel %vm3706, %v3705, %v3256
    %vm3708 = vcmp.lt.s32.totalorder %v3707, %v3260
    %v3709 = vsel %vm3708, %v3707, %v3260
    %vm3710 = vcmp.lt.s32.totalorder %v3709, %v3264
    %v3711 = vsel %vm3710, %v3709, %v3264
    %vm3712 = vcmp.lt.s32.totalorder %v3711, %v3268
    %v3713 = vsel %vm3712, %v3711, %v3268
    %vm3714 = vcmp.lt.s32.totalorder %v3713, %v3272
    %v3715 = vsel %vm3714, %v3713, %v3272
    %vm3716 = vcmp.lt.s32.totalorder %v3715, %v3276
    %v3717 = vsel %vm3716, %v3715, %v3276
    %vm3718 = vcmp.lt.s32.totalorder %v3717, %v3280
    %v3719 = vsel %vm3718, %v3717, %v3280
    %vm3720 = vcmp.lt.s32.totalorder %v3719, %v3284
    %v3721 = vsel %vm3720, %v3719, %v3284
    %vm3722 = vcmp.lt.s32.totalorder %v3721, %v3288
    %v3723 = vsel %vm3722, %v3721, %v3288
    %vm3724 = vcmp.lt.s32.totalorder %v3723, %v3292
    %v3725 = vsel %vm3724, %v3723, %v3292
    %vm3726 = vcmp.lt.s32.totalorder %v3725, %v3296
    %v3727 = vsel %vm3726, %v3725, %v3296
    %vm3728 = vcmp.lt.s32.totalorder %v3727, %v3300
    %v3729 = vsel %vm3728, %v3727, %v3300
    %vm3730 = vcmp.lt.s32.totalorder %v3729, %v3304
    %v3731 = vsel %vm3730, %v3729, %v3304
    %vm3732 = vcmp.lt.s32.totalorder %v3731, %v3308
    %v3733 = vsel %vm3732, %v3731, %v3308
    %vm3734 = vcmp.lt.s32.totalorder %v3733, %v3312
    %v3735 = vsel %vm3734, %v3733, %v3312
    %vm3736 = vcmp.lt.s32.totalorder %v3735, %v3316
    %v3737 = vsel %vm3736, %v3735, %v3316
    %vm3738 = vcmp.lt.s32.totalorder %v3737, %v3320
    %v3739 = vsel %vm3738, %v3737, %v3320
    %vm3740 = vcmp.lt.s32.totalorder %v3739, %v3324
    %v3741 = vsel %vm3740, %v3739, %v3324
    %vm3742 = vcmp.lt.s32.totalorder %v3741, %v3328
    %v3743 = vsel %vm3742, %v3741, %v3328
    %vm3744 = vcmp.lt.s32.totalorder %v3743, %v3332
    %v3745 = vsel %vm3744, %v3743, %v3332
    %vm3746 = vcmp.lt.s32.totalorder %v3745, %v3336
    %v3747 = vsel %vm3746, %v3745, %v3336
    %vm3748 = vcmp.lt.s32.totalorder %v3747, %v3340
    %v3749 = vsel %vm3748, %v3747, %v3340
    %vm3750 = vcmp.lt.s32.totalorder %v3749, %v3344
    %v3751 = vsel %vm3750, %v3749, %v3344
    %vm3752 = vcmp.lt.s32.totalorder %v3751, %v3348
    %v3753 = vsel %vm3752, %v3751, %v3348
    %vm3754 = vcmp.lt.s32.totalorder %v3753, %v3352
    %v3755 = vsel %vm3754, %v3753, %v3352
    %vm3756 = vcmp.lt.s32.totalorder %v3755, %v3356
    %v3757 = vsel %vm3756, %v3755, %v3356
    %vm3758 = vcmp.lt.s32.totalorder %v3757, %v3360
    %v3759 = vsel %vm3758, %v3757, %v3360
    %vm3760 = vcmp.lt.s32.totalorder %v3759, %v3364
    %v3761 = vsel %vm3760, %v3759, %v3364
    %v3762 = vrot.slane %v3761, 4
    %vm3763 = vcmp.lt.s32.totalorder %v3761, %v3762
    %v3764 = vsel %vm3763, %v3761, %v3762
    %v3765 = vrot.slane %v3764, 2
    %vm3766 = vcmp.lt.s32.totalorder %v3764, %v3765
    %v3767 = vsel %vm3766, %v3764, %v3765
    %v3768 = vrot.slane %v3767, 1
    %vm3769 = vcmp.lt.s32.totalorder %v3767, %v3768
    %v3770 = vsel %vm3769, %v3767, %v3768
    %vm3771 = vcmp.lt.s32.totalorder %v3113, %v3117
    %v3772 = vsel %vm3771, %v3113, %v3117
    %vm3773 = vcmp.lt.s32.totalorder %v3772, %v3121
    %v3774 = vsel %vm3773, %v3772, %v3121
    %vm3775 = vcmp.lt.s32.totalorder %v3774, %v3125
    %v3776 = vsel %vm3775, %v3774, %v3125
    %vm3777 = vcmp.lt.s32.totalorder %v3776, %v3129
    %v3778 = vsel %vm3777, %v3776, %v3129
    %vm3779 = vcmp.lt.s32.totalorder %v3778, %v3133
    %v3780 = vsel %vm3779, %v3778, %v3133
    %vm3781 = vcmp.lt.s32.totalorder %v3780, %v3137
    %v3782 = vsel %vm3781, %v3780, %v3137
    %vm3783 = vcmp.lt.s32.totalorder %v3782, %v3141
    %v3784 = vsel %vm3783, %v3782, %v3141
    %vm3785 = vcmp.lt.s32.totalorder %v3784, %v3145
    %v3786 = vsel %vm3785, %v3784, %v3145
    %vm3787 = vcmp.lt.s32.totalorder %v3786, %v3149
    %v3788 = vsel %vm3787, %v3786, %v3149
    %vm3789 = vcmp.lt.s32.totalorder %v3788, %v3153
    %v3790 = vsel %vm3789, %v3788, %v3153
    %vm3791 = vcmp.lt.s32.totalorder %v3790, %v3157
    %v3792 = vsel %vm3791, %v3790, %v3157
    %vm3793 = vcmp.lt.s32.totalorder %v3792, %v3161
    %v3794 = vsel %vm3793, %v3792, %v3161
    %vm3795 = vcmp.lt.s32.totalorder %v3794, %v3165
    %v3796 = vsel %vm3795, %v3794, %v3165
    %vm3797 = vcmp.lt.s32.totalorder %v3796, %v3169
    %v3798 = vsel %vm3797, %v3796, %v3169
    %vm3799 = vcmp.lt.s32.totalorder %v3798, %v3173
    %v3800 = vsel %vm3799, %v3798, %v3173
    %vm3801 = vcmp.lt.s32.totalorder %v3800, %v3177
    %v3802 = vsel %vm3801, %v3800, %v3177
    %vm3803 = vcmp.lt.s32.totalorder %v3802, %v3181
    %v3804 = vsel %vm3803, %v3802, %v3181
    %vm3805 = vcmp.lt.s32.totalorder %v3804, %v3185
    %v3806 = vsel %vm3805, %v3804, %v3185
    %vm3807 = vcmp.lt.s32.totalorder %v3806, %v3189
    %v3808 = vsel %vm3807, %v3806, %v3189
    %vm3809 = vcmp.lt.s32.totalorder %v3808, %v3193
    %v3810 = vsel %vm3809, %v3808, %v3193
    %vm3811 = vcmp.lt.s32.totalorder %v3810, %v3197
    %v3812 = vsel %vm3811, %v3810, %v3197
    %vm3813 = vcmp.lt.s32.totalorder %v3812, %v3201
    %v3814 = vsel %vm3813, %v3812, %v3201
    %vm3815 = vcmp.lt.s32.totalorder %v3814, %v3205
    %v3816 = vsel %vm3815, %v3814, %v3205
    %vm3817 = vcmp.lt.s32.totalorder %v3816, %v3209
    %v3818 = vsel %vm3817, %v3816, %v3209
    %vm3819 = vcmp.lt.s32.totalorder %v3818, %v3213
    %v3820 = vsel %vm3819, %v3818, %v3213
    %vm3821 = vcmp.lt.s32.totalorder %v3820, %v3217
    %v3822 = vsel %vm3821, %v3820, %v3217
    %vm3823 = vcmp.lt.s32.totalorder %v3822, %v3221
    %v3824 = vsel %vm3823, %v3822, %v3221
    %vm3825 = vcmp.lt.s32.totalorder %v3824, %v3225
    %v3826 = vsel %vm3825, %v3824, %v3225
    %vm3827 = vcmp.lt.s32.totalorder %v3826, %v3229
    %v3828 = vsel %vm3827, %v3826, %v3229
    %vm3829 = vcmp.lt.s32.totalorder %v3828, %v3233
    %v3830 = vsel %vm3829, %v3828, %v3233
    %vm3831 = vcmp.lt.s32.totalorder %v3830, %v3237
    %v3832 = vsel %vm3831, %v3830, %v3237
    %vm3833 = vcmp.lt.s32.totalorder %v3832, %v3241
    %v3834 = vsel %vm3833, %v3832, %v3241
    %vm3835 = vcmp.lt.s32.totalorder %v3834, %v3245
    %v3836 = vsel %vm3835, %v3834, %v3245
    %vm3837 = vcmp.lt.s32.totalorder %v3836, %v3249
    %v3838 = vsel %vm3837, %v3836, %v3249
    %vm3839 = vcmp.lt.s32.totalorder %v3838, %v3253
    %v3840 = vsel %vm3839, %v3838, %v3253
    %vm3841 = vcmp.lt.s32.totalorder %v3840, %v3257
    %v3842 = vsel %vm3841, %v3840, %v3257
    %vm3843 = vcmp.lt.s32.totalorder %v3842, %v3261
    %v3844 = vsel %vm3843, %v3842, %v3261
    %vm3845 = vcmp.lt.s32.totalorder %v3844, %v3265
    %v3846 = vsel %vm3845, %v3844, %v3265
    %vm3847 = vcmp.lt.s32.totalorder %v3846, %v3269
    %v3848 = vsel %vm3847, %v3846, %v3269
    %vm3849 = vcmp.lt.s32.totalorder %v3848, %v3273
    %v3850 = vsel %vm3849, %v3848, %v3273
    %vm3851 = vcmp.lt.s32.totalorder %v3850, %v3277
    %v3852 = vsel %vm3851, %v3850, %v3277
    %vm3853 = vcmp.lt.s32.totalorder %v3852, %v3281
    %v3854 = vsel %vm3853, %v3852, %v3281
    %vm3855 = vcmp.lt.s32.totalorder %v3854, %v3285
    %v3856 = vsel %vm3855, %v3854, %v3285
    %vm3857 = vcmp.lt.s32.totalorder %v3856, %v3289
    %v3858 = vsel %vm3857, %v3856, %v3289
    %vm3859 = vcmp.lt.s32.totalorder %v3858, %v3293
    %v3860 = vsel %vm3859, %v3858, %v3293
    %vm3861 = vcmp.lt.s32.totalorder %v3860, %v3297
    %v3862 = vsel %vm3861, %v3860, %v3297
    %vm3863 = vcmp.lt.s32.totalorder %v3862, %v3301
    %v3864 = vsel %vm3863, %v3862, %v3301
    %vm3865 = vcmp.lt.s32.totalorder %v3864, %v3305
    %v3866 = vsel %vm3865, %v3864, %v3305
    %vm3867 = vcmp.lt.s32.totalorder %v3866, %v3309
    %v3868 = vsel %vm3867, %v3866, %v3309
    %vm3869 = vcmp.lt.s32.totalorder %v3868, %v3313
    %v3870 = vsel %vm3869, %v3868, %v3313
    %vm3871 = vcmp.lt.s32.totalorder %v3870, %v3317
    %v3872 = vsel %vm3871, %v3870, %v3317
    %vm3873 = vcmp.lt.s32.totalorder %v3872, %v3321
    %v3874 = vsel %vm3873, %v3872, %v3321
    %vm3875 = vcmp.lt.s32.totalorder %v3874, %v3325
    %v3876 = vsel %vm3875, %v3874, %v3325
    %vm3877 = vcmp.lt.s32.totalorder %v3876, %v3329
    %v3878 = vsel %vm3877, %v3876, %v3329
    %vm3879 = vcmp.lt.s32.totalorder %v3878, %v3333
    %v3880 = vsel %vm3879, %v3878, %v3333
    %vm3881 = vcmp.lt.s32.totalorder %v3880, %v3337
    %v3882 = vsel %vm3881, %v3880, %v3337
    %vm3883 = vcmp.lt.s32.totalorder %v3882, %v3341
    %v3884 = vsel %vm3883, %v3882, %v3341
    %vm3885 = vcmp.lt.s32.totalorder %v3884, %v3345
    %v3886 = vsel %vm3885, %v3884, %v3345
    %vm3887 = vcmp.lt.s32.totalorder %v3886, %v3349
    %v3888 = vsel %vm3887, %v3886, %v3349
    %vm3889 = vcmp.lt.s32.totalorder %v3888, %v3353
    %v3890 = vsel %vm3889, %v3888, %v3353
    %vm3891 = vcmp.lt.s32.totalorder %v3890, %v3357
    %v3892 = vsel %vm3891, %v3890, %v3357
    %vm3893 = vcmp.lt.s32.totalorder %v3892, %v3361
    %v3894 = vsel %vm3893, %v3892, %v3361
    %vm3895 = vcmp.lt.s32.totalorder %v3894, %v3365
    %v3896 = vsel %vm3895, %v3894, %v3365
    %v3897 = vrot.slane %v3896, 4
    %vm3898 = vcmp.lt.s32.totalorder %v3896, %v3897
    %v3899 = vsel %vm3898, %v3896, %v3897
    %v3900 = vrot.slane %v3899, 2
    %vm3901 = vcmp.lt.s32.totalorder %v3899, %v3900
    %v3902 = vsel %vm3901, %v3899, %v3900
    %v3903 = vrot.slane %v3902, 1
    %vm3904 = vcmp.lt.s32.totalorder %v3902, %v3903
    %v3905 = vsel %vm3904, %v3902, %v3903
    %vm3906 = vcmp.eq.s32.totalorder %v2920, %v3500
    %vm3907 = vcmp.eq.s32.totalorder %v2920, %v3635
    %vm3908 = vcmp.eq.s32.totalorder %v2920, %v3770
    %vm3909 = vcmp.eq.s32.totalorder %v2920, %v3905
    %vm3910 = vcmp.eq.s32.totalorder %v2923, %v3500
    %vm3911 = vcmp.eq.s32.totalorder %v2923, %v3635
    %vm3912 = vcmp.eq.s32.totalorder %v2923, %v3770
    %vm3913 = vcmp.eq.s32.totalorder %v2923, %v3905
    %vm3914 = vcmp.eq.s32.totalorder %v2926, %v3500
    %vm3915 = vcmp.eq.s32.totalorder %v2926, %v3635
    %vm3916 = vcmp.eq.s32.totalorder %v2926, %v3770
    %vm3917 = vcmp.eq.s32.totalorder %v2926, %v3905
    %vm3918 = vcmp.eq.s32.totalorder %v2929, %v3500
    %vm3919 = vcmp.eq.s32.totalorder %v2929, %v3635
    %vm3920 = vcmp.eq.s32.totalorder %v2929, %v3770
    %vm3921 = vcmp.eq.s32.totalorder %v2929, %v3905
    %vm3922 = vcmp.eq.s32.totalorder %v2932, %v3500
    %vm3923 = vcmp.eq.s32.totalorder %v2932, %v3635
    %vm3924 = vcmp.eq.s32.totalorder %v2932, %v3770
    %vm3925 = vcmp.eq.s32.totalorder %v2932, %v3905
    %vm3926 = vcmp.eq.s32.totalorder %v2935, %v3500
    %vm3927 = vcmp.eq.s32.totalorder %v2935, %v3635
    %vm3928 = vcmp.eq.s32.totalorder %v2935, %v3770
    %vm3929 = vcmp.eq.s32.totalorder %v2935, %v3905
    %vm3930 = vcmp.eq.s32.totalorder %v2938, %v3500
    %vm3931 = vcmp.eq.s32.totalorder %v2938, %v3635
    %vm3932 = vcmp.eq.s32.totalorder %v2938, %v3770
    %vm3933 = vcmp.eq.s32.totalorder %v2938, %v3905
    %vm3934 = vcmp.eq.s32.totalorder %v2941, %v3500
    %vm3935 = vcmp.eq.s32.totalorder %v2941, %v3635
    %vm3936 = vcmp.eq.s32.totalorder %v2941, %v3770
    %vm3937 = vcmp.eq.s32.totalorder %v2941, %v3905
    %vm3938 = vcmp.eq.s32.totalorder %v2944, %v3500
    %vm3939 = vcmp.eq.s32.totalorder %v2944, %v3635
    %vm3940 = vcmp.eq.s32.totalorder %v2944, %v3770
    %vm3941 = vcmp.eq.s32.totalorder %v2944, %v3905
    %vm3942 = vcmp.eq.s32.totalorder %v2947, %v3500
    %vm3943 = vcmp.eq.s32.totalorder %v2947, %v3635
    %vm3944 = vcmp.eq.s32.totalorder %v2947, %v3770
    %vm3945 = vcmp.eq.s32.totalorder %v2947, %v3905
    %vm3946 = vcmp.eq.s32.totalorder %v2950, %v3500
    %vm3947 = vcmp.eq.s32.totalorder %v2950, %v3635
    %vm3948 = vcmp.eq.s32.totalorder %v2950, %v3770
    %vm3949 = vcmp.eq.s32.totalorder %v2950, %v3905
    %vm3950 = vcmp.eq.s32.totalorder %v2953, %v3500
    %vm3951 = vcmp.eq.s32.totalorder %v2953, %v3635
    %vm3952 = vcmp.eq.s32.totalorder %v2953, %v3770
    %vm3953 = vcmp.eq.s32.totalorder %v2953, %v3905
    %vm3954 = vcmp.eq.s32.totalorder %v2956, %v3500
    %vm3955 = vcmp.eq.s32.totalorder %v2956, %v3635
    %vm3956 = vcmp.eq.s32.totalorder %v2956, %v3770
    %vm3957 = vcmp.eq.s32.totalorder %v2956, %v3905
    %vm3958 = vcmp.eq.s32.totalorder %v2959, %v3500
    %vm3959 = vcmp.eq.s32.totalorder %v2959, %v3635
    %vm3960 = vcmp.eq.s32.totalorder %v2959, %v3770
    %vm3961 = vcmp.eq.s32.totalorder %v2959, %v3905
    %vm3962 = vcmp.eq.s32.totalorder %v2962, %v3500
    %vm3963 = vcmp.eq.s32.totalorder %v2962, %v3635
    %vm3964 = vcmp.eq.s32.totalorder %v2962, %v3770
    %vm3965 = vcmp.eq.s32.totalorder %v2962, %v3905
    %vm3966 = vcmp.eq.s32.totalorder %v2965, %v3500
    %vm3967 = vcmp.eq.s32.totalorder %v2965, %v3635
    %vm3968 = vcmp.eq.s32.totalorder %v2965, %v3770
    %vm3969 = vcmp.eq.s32.totalorder %v2965, %v3905
    %vm3970 = vcmp.eq.s32.totalorder %v2968, %v3500
    %vm3971 = vcmp.eq.s32.totalorder %v2968, %v3635
    %vm3972 = vcmp.eq.s32.totalorder %v2968, %v3770
    %vm3973 = vcmp.eq.s32.totalorder %v2968, %v3905
    %vm3974 = vcmp.eq.s32.totalorder %v2971, %v3500
    %vm3975 = vcmp.eq.s32.totalorder %v2971, %v3635
    %vm3976 = vcmp.eq.s32.totalorder %v2971, %v3770
    %vm3977 = vcmp.eq.s32.totalorder %v2971, %v3905
    %vm3978 = vcmp.eq.s32.totalorder %v2974, %v3500
    %vm3979 = vcmp.eq.s32.totalorder %v2974, %v3635
    %vm3980 = vcmp.eq.s32.totalorder %v2974, %v3770
    %vm3981 = vcmp.eq.s32.totalorder %v2974, %v3905
    %vm3982 = vcmp.eq.s32.totalorder %v2977, %v3500
    %vm3983 = vcmp.eq.s32.totalorder %v2977, %v3635
    %vm3984 = vcmp.eq.s32.totalorder %v2977, %v3770
    %vm3985 = vcmp.eq.s32.totalorder %v2977, %v3905
    %vm3986 = vcmp.eq.s32.totalorder %v2980, %v3500
    %vm3987 = vcmp.eq.s32.totalorder %v2980, %v3635
    %vm3988 = vcmp.eq.s32.totalorder %v2980, %v3770
    %vm3989 = vcmp.eq.s32.totalorder %v2980, %v3905
    %vm3990 = vcmp.eq.s32.totalorder %v2983, %v3500
    %vm3991 = vcmp.eq.s32.totalorder %v2983, %v3635
    %vm3992 = vcmp.eq.s32.totalorder %v2983, %v3770
    %vm3993 = vcmp.eq.s32.totalorder %v2983, %v3905
    %vm3994 = vcmp.eq.s32.totalorder %v2986, %v3500
    %vm3995 = vcmp.eq.s32.totalorder %v2986, %v3635
    %vm3996 = vcmp.eq.s32.totalorder %v2986, %v3770
    %vm3997 = vcmp.eq.s32.totalorder %v2986, %v3905
    %vm3998 = vcmp.eq.s32.totalorder %v2989, %v3500
    %vm3999 = vcmp.eq.s32.totalorder %v2989, %v3635
    %vm4000 = vcmp.eq.s32.totalorder %v2989, %v3770
    %vm4001 = vcmp.eq.s32.totalorder %v2989, %v3905
    %vm4002 = vcmp.eq.s32.totalorder %v2992, %v3500
    %vm4003 = vcmp.eq.s32.totalorder %v2992, %v3635
    %vm4004 = vcmp.eq.s32.totalorder %v2992, %v3770
    %vm4005 = vcmp.eq.s32.totalorder %v2992, %v3905
    %vm4006 = vcmp.eq.s32.totalorder %v2995, %v3500
    %vm4007 = vcmp.eq.s32.totalorder %v2995, %v3635
    %vm4008 = vcmp.eq.s32.totalorder %v2995, %v3770
    %vm4009 = vcmp.eq.s32.totalorder %v2995, %v3905
    %vm4010 = vcmp.eq.s32.totalorder %v2998, %v3500
    %vm4011 = vcmp.eq.s32.totalorder %v2998, %v3635
    %vm4012 = vcmp.eq.s32.totalorder %v2998, %v3770
    %vm4013 = vcmp.eq.s32.totalorder %v2998, %v3905
    %vm4014 = vcmp.eq.s32.totalorder %v3001, %v3500
    %vm4015 = vcmp.eq.s32.totalorder %v3001, %v3635
    %vm4016 = vcmp.eq.s32.totalorder %v3001, %v3770
    %vm4017 = vcmp.eq.s32.totalorder %v3001, %v3905
    %vm4018 = vcmp.eq.s32.totalorder %v3004, %v3500
    %vm4019 = vcmp.eq.s32.totalorder %v3004, %v3635
    %vm4020 = vcmp.eq.s32.totalorder %v3004, %v3770
    %vm4021 = vcmp.eq.s32.totalorder %v3004, %v3905
    %vm4022 = vcmp.eq.s32.totalorder %v3007, %v3500
    %vm4023 = vcmp.eq.s32.totalorder %v3007, %v3635
    %vm4024 = vcmp.eq.s32.totalorder %v3007, %v3770
    %vm4025 = vcmp.eq.s32.totalorder %v3007, %v3905
    %vm4026 = vcmp.eq.s32.totalorder %v3010, %v3500
    %vm4027 = vcmp.eq.s32.totalorder %v3010, %v3635
    %vm4028 = vcmp.eq.s32.totalorder %v3010, %v3770
    %vm4029 = vcmp.eq.s32.totalorder %v3010, %v3905
    %vm4030 = vcmp.eq.s32.totalorder %v3013, %v3500
    %vm4031 = vcmp.eq.s32.totalorder %v3013, %v3635
    %vm4032 = vcmp.eq.s32.totalorder %v3013, %v3770
    %vm4033 = vcmp.eq.s32.totalorder %v3013, %v3905
    %vm4034 = vcmp.eq.s32.totalorder %v3016, %v3500
    %vm4035 = vcmp.eq.s32.totalorder %v3016, %v3635
    %vm4036 = vcmp.eq.s32.totalorder %v3016, %v3770
    %vm4037 = vcmp.eq.s32.totalorder %v3016, %v3905
    %vm4038 = vcmp.eq.s32.totalorder %v3019, %v3500
    %vm4039 = vcmp.eq.s32.totalorder %v3019, %v3635
    %vm4040 = vcmp.eq.s32.totalorder %v3019, %v3770
    %vm4041 = vcmp.eq.s32.totalorder %v3019, %v3905
    %vm4042 = vcmp.eq.s32.totalorder %v3022, %v3500
    %vm4043 = vcmp.eq.s32.totalorder %v3022, %v3635
    %vm4044 = vcmp.eq.s32.totalorder %v3022, %v3770
    %vm4045 = vcmp.eq.s32.totalorder %v3022, %v3905
    %vm4046 = vcmp.eq.s32.totalorder %v3025, %v3500
    %vm4047 = vcmp.eq.s32.totalorder %v3025, %v3635
    %vm4048 = vcmp.eq.s32.totalorder %v3025, %v3770
    %vm4049 = vcmp.eq.s32.totalorder %v3025, %v3905
    %vm4050 = vcmp.eq.s32.totalorder %v3028, %v3500
    %vm4051 = vcmp.eq.s32.totalorder %v3028, %v3635
    %vm4052 = vcmp.eq.s32.totalorder %v3028, %v3770
    %vm4053 = vcmp.eq.s32.totalorder %v3028, %v3905
    %vm4054 = vcmp.eq.s32.totalorder %v3031, %v3500
    %vm4055 = vcmp.eq.s32.totalorder %v3031, %v3635
    %vm4056 = vcmp.eq.s32.totalorder %v3031, %v3770
    %vm4057 = vcmp.eq.s32.totalorder %v3031, %v3905
    %vm4058 = vcmp.eq.s32.totalorder %v3034, %v3500
    %vm4059 = vcmp.eq.s32.totalorder %v3034, %v3635
    %vm4060 = vcmp.eq.s32.totalorder %v3034, %v3770
    %vm4061 = vcmp.eq.s32.totalorder %v3034, %v3905
    %vm4062 = vcmp.eq.s32.totalorder %v3037, %v3500
    %vm4063 = vcmp.eq.s32.totalorder %v3037, %v3635
    %vm4064 = vcmp.eq.s32.totalorder %v3037, %v3770
    %vm4065 = vcmp.eq.s32.totalorder %v3037, %v3905
    %vm4066 = vcmp.eq.s32.totalorder %v3040, %v3500
    %vm4067 = vcmp.eq.s32.totalorder %v3040, %v3635
    %vm4068 = vcmp.eq.s32.totalorder %v3040, %v3770
    %vm4069 = vcmp.eq.s32.totalorder %v3040, %v3905
    %vm4070 = vcmp.eq.s32.totalorder %v3043, %v3500
    %vm4071 = vcmp.eq.s32.totalorder %v3043, %v3635
    %vm4072 = vcmp.eq.s32.totalorder %v3043, %v3770
    %vm4073 = vcmp.eq.s32.totalorder %v3043, %v3905
    %vm4074 = vcmp.eq.s32.totalorder %v3046, %v3500
    %vm4075 = vcmp.eq.s32.totalorder %v3046, %v3635
    %vm4076 = vcmp.eq.s32.totalorder %v3046, %v3770
    %vm4077 = vcmp.eq.s32.totalorder %v3046, %v3905
    %vm4078 = vcmp.eq.s32.totalorder %v3049, %v3500
    %vm4079 = vcmp.eq.s32.totalorder %v3049, %v3635
    %vm4080 = vcmp.eq.s32.totalorder %v3049, %v3770
    %vm4081 = vcmp.eq.s32.totalorder %v3049, %v3905
    %vm4082 = vcmp.eq.s32.totalorder %v3052, %v3500
    %vm4083 = vcmp.eq.s32.totalorder %v3052, %v3635
    %vm4084 = vcmp.eq.s32.totalorder %v3052, %v3770
    %vm4085 = vcmp.eq.s32.totalorder %v3052, %v3905
    %vm4086 = vcmp.eq.s32.totalorder %v3055, %v3500
    %vm4087 = vcmp.eq.s32.totalorder %v3055, %v3635
    %vm4088 = vcmp.eq.s32.totalorder %v3055, %v3770
    %vm4089 = vcmp.eq.s32.totalorder %v3055, %v3905
    %vm4090 = vcmp.eq.s32.totalorder %v3058, %v3500
    %vm4091 = vcmp.eq.s32.totalorder %v3058, %v3635
    %vm4092 = vcmp.eq.s32.totalorder %v3058, %v3770
    %vm4093 = vcmp.eq.s32.totalorder %v3058, %v3905
    %vm4094 = vcmp.eq.s32.totalorder %v3061, %v3500
    %vm4095 = vcmp.eq.s32.totalorder %v3061, %v3635
    %vm4096 = vcmp.eq.s32.totalorder %v3061, %v3770
    %vm4097 = vcmp.eq.s32.totalorder %v3061, %v3905
    %vm4098 = vcmp.eq.s32.totalorder %v3064, %v3500
    %vm4099 = vcmp.eq.s32.totalorder %v3064, %v3635
    %vm4100 = vcmp.eq.s32.totalorder %v3064, %v3770
    %vm4101 = vcmp.eq.s32.totalorder %v3064, %v3905
    %vm4102 = vcmp.eq.s32.totalorder %v3067, %v3500
    %vm4103 = vcmp.eq.s32.totalorder %v3067, %v3635
    %vm4104 = vcmp.eq.s32.totalorder %v3067, %v3770
    %vm4105 = vcmp.eq.s32.totalorder %v3067, %v3905
    %vm4106 = vcmp.eq.s32.totalorder %v3070, %v3500
    %vm4107 = vcmp.eq.s32.totalorder %v3070, %v3635
    %vm4108 = vcmp.eq.s32.totalorder %v3070, %v3770
    %vm4109 = vcmp.eq.s32.totalorder %v3070, %v3905
    %vm4110 = vcmp.eq.s32.totalorder %v3073, %v3500
    %vm4111 = vcmp.eq.s32.totalorder %v3073, %v3635
    %vm4112 = vcmp.eq.s32.totalorder %v3073, %v3770
    %vm4113 = vcmp.eq.s32.totalorder %v3073, %v3905
    %vm4114 = vcmp.eq.s32.totalorder %v3076, %v3500
    %vm4115 = vcmp.eq.s32.totalorder %v3076, %v3635
    %vm4116 = vcmp.eq.s32.totalorder %v3076, %v3770
    %vm4117 = vcmp.eq.s32.totalorder %v3076, %v3905
    %vm4118 = vcmp.eq.s32.totalorder %v3079, %v3500
    %vm4119 = vcmp.eq.s32.totalorder %v3079, %v3635
    %vm4120 = vcmp.eq.s32.totalorder %v3079, %v3770
    %vm4121 = vcmp.eq.s32.totalorder %v3079, %v3905
    %vm4122 = vcmp.eq.s32.totalorder %v3082, %v3500
    %vm4123 = vcmp.eq.s32.totalorder %v3082, %v3635
    %vm4124 = vcmp.eq.s32.totalorder %v3082, %v3770
    %vm4125 = vcmp.eq.s32.totalorder %v3082, %v3905
    %vm4126 = vcmp.eq.s32.totalorder %v3085, %v3500
    %vm4127 = vcmp.eq.s32.totalorder %v3085, %v3635
    %vm4128 = vcmp.eq.s32.totalorder %v3085, %v3770
    %vm4129 = vcmp.eq.s32.totalorder %v3085, %v3905
    %vm4130 = vcmp.eq.s32.totalorder %v3088, %v3500
    %vm4131 = vcmp.eq.s32.totalorder %v3088, %v3635
    %vm4132 = vcmp.eq.s32.totalorder %v3088, %v3770
    %vm4133 = vcmp.eq.s32.totalorder %v3088, %v3905
    %vm4134 = vcmp.eq.s32.totalorder %v3091, %v3500
    %vm4135 = vcmp.eq.s32.totalorder %v3091, %v3635
    %vm4136 = vcmp.eq.s32.totalorder %v3091, %v3770
    %vm4137 = vcmp.eq.s32.totalorder %v3091, %v3905
    %vm4138 = vcmp.eq.s32.totalorder %v3094, %v3500
    %vm4139 = vcmp.eq.s32.totalorder %v3094, %v3635
    %vm4140 = vcmp.eq.s32.totalorder %v3094, %v3770
    %vm4141 = vcmp.eq.s32.totalorder %v3094, %v3905
    %vm4142 = vcmp.eq.s32.totalorder %v3097, %v3500
    %vm4143 = vcmp.eq.s32.totalorder %v3097, %v3635
    %vm4144 = vcmp.eq.s32.totalorder %v3097, %v3770
    %vm4145 = vcmp.eq.s32.totalorder %v3097, %v3905
    %vm4146 = vcmp.eq.s32.totalorder %v3100, %v3500
    %vm4147 = vcmp.eq.s32.totalorder %v3100, %v3635
    %vm4148 = vcmp.eq.s32.totalorder %v3100, %v3770
    %vm4149 = vcmp.eq.s32.totalorder %v3100, %v3905
    %vm4150 = vcmp.eq.s32.totalorder %v3103, %v3500
    %vm4151 = vcmp.eq.s32.totalorder %v3103, %v3635
    %vm4152 = vcmp.eq.s32.totalorder %v3103, %v3770
    %vm4153 = vcmp.eq.s32.totalorder %v3103, %v3905
    %vm4154 = vcmp.eq.s32.totalorder %v3106, %v3500
    %vm4155 = vcmp.eq.s32.totalorder %v3106, %v3635
    %vm4156 = vcmp.eq.s32.totalorder %v3106, %v3770
    %vm4157 = vcmp.eq.s32.totalorder %v3106, %v3905
    %vm4158 = vcmp.eq.s32.totalorder %v3109, %v3500
    %vm4159 = vcmp.eq.s32.totalorder %v3109, %v3635
    %vm4160 = vcmp.eq.s32.totalorder %v3109, %v3770
    %vm4161 = vcmp.eq.s32.totalorder %v3109, %v3905
    %v4162 = vsel %vm3906, inf, %v2066
    %v4163 = vsel %vm3907, inf, %v2067
    %v4164 = vsel %vm3908, inf, %v2068
    %v4165 = vsel %vm3909, inf, %v2069
    %v4166 = vsel %vm3910, inf, %v2070
    %v4167 = vsel %vm3911, inf, %v2071
    %v4168 = vsel %vm3912, inf, %v2072
    %v4169 = vsel %vm3913, inf, %v2073
    %v4170 = vsel %vm3914, inf, %v2074
    %v4171 = vsel %vm3915, inf, %v2075
    %v4172 = vsel %vm3916, inf, %v2076
    %v4173 = vsel %vm3917, inf, %v2077
    %v4174 = vsel %vm3918, inf, %v2078
    %v4175 = vsel %vm3919, inf, %v2079
    %v4176 = vsel %vm3920, inf, %v2080
    %v4177 = vsel %vm3921, inf, %v2081
    %v4178 = vsel %vm3922, inf, %v2082
    %v4179 = vsel %vm3923, inf, %v2083
    %v4180 = vsel %vm3924, inf, %v2084
    %v4181 = vsel %vm3925, inf, %v2085
    %v4182 = vsel %vm3926, inf, %v2086
    %v4183 = vsel %vm3927, inf, %v2087
    %v4184 = vsel %vm3928, inf, %v2088
    %v4185 = vsel %vm3929, inf, %v2089
    %v4186 = vsel %vm3930, inf, %v2090
    %v4187 = vsel %vm3931, inf, %v2091
    %v4188 = vsel %vm3932, inf, %v2092
    %v4189 = vsel %vm3933, inf, %v2093
    %v4190 = vsel %vm3934, inf, %v2094
    %v4191 = vsel %vm3935, inf, %v2095
    %v4192 = vsel %vm3936, inf, %v2096
    %v4193 = vsel %vm3937, inf, %v2097
    %v4194 = vsel %vm3938, inf, %v2098
    %v4195 = vsel %vm3939, inf, %v2099
    %v4196 = vsel %vm3940, inf, %v2100
    %v4197 = vsel %vm3941, inf, %v2101
    %v4198 = vsel %vm3942, inf, %v2102
    %v4199 = vsel %vm3943, inf, %v2103
    %v4200 = vsel %vm3944, inf, %v2104
    %v4201 = vsel %vm3945, inf, %v2105
    %v4202 = vsel %vm3946, inf, %v2106
    %v4203 = vsel %vm3947, inf, %v2107
    %v4204 = vsel %vm3948, inf, %v2108
    %v4205 = vsel %vm3949, inf, %v2109
    %v4206 = vsel %vm3950, inf, %v2110
    %v4207 = vsel %vm3951, inf, %v2111
    %v4208 = vsel %vm3952, inf, %v2112
    %v4209 = vsel %vm3953, inf, %v2113
    %v4210 = vsel %vm3954, inf, %v2114
    %v4211 = vsel %vm3955, inf, %v2115
    %v4212 = vsel %vm3956, inf, %v2116
    %v4213 = vsel %vm3957, inf, %v2117
    %v4214 = vsel %vm3958, inf, %v2118
    %v4215 = vsel %vm3959, inf, %v2119
    %v4216 = vsel %vm3960, inf, %v2120
    %v4217 = vsel %vm3961, inf, %v2121
    %v4218 = vsel %vm3962, inf, %v2122
    %v4219 = vsel %vm3963, inf, %v2123
    %v4220 = vsel %vm3964, inf, %v2124
    %v4221 = vsel %vm3965, inf, %v2125
    %v4222 = vsel %vm3966, inf, %v2126
    %v4223 = vsel %vm3967, inf, %v2127
    %v4224 = vsel %vm3968, inf, %v2128
    %v4225 = vsel %vm3969, inf, %v2129
    %v4226 = vsel %vm3970, inf, %v2130
    %v4227 = vsel %vm3971, inf, %v2131
    %v4228 = vsel %vm3972, inf, %v2132
    %v4229 = vsel %vm3973, inf, %v2133
    %v4230 = vsel %vm3974, inf, %v2134
    %v4231 = vsel %vm3975, inf, %v2135
    %v4232 = vsel %vm3976, inf, %v2136
    %v4233 = vsel %vm3977, inf, %v2137
    %v4234 = vsel %vm3978, inf, %v2138
    %v4235 = vsel %vm3979, inf, %v2139
    %v4236 = vsel %vm3980, inf, %v2140
    %v4237 = vsel %vm3981, inf, %v2141
    %v4238 = vsel %vm3982, inf, %v2142
    %v4239 = vsel %vm3983, inf, %v2143
    %v4240 = vsel %vm3984, inf, %v2144
    %v4241 = vsel %vm3985, inf, %v2145
    %v4242 = vsel %vm3986, inf, %v2146
    %v4243 = vsel %vm3987, inf, %v2147
    %v4244 = vsel %vm3988, inf, %v2148
    %v4245 = vsel %vm3989, inf, %v2149
    %v4246 = vsel %vm3990, inf, %v2150
    %v4247 = vsel %vm3991, inf, %v2151
    %v4248 = vsel %vm3992, inf, %v2152
    %v4249 = vsel %vm3993, inf, %v2153
    %v4250 = vsel %vm3994, inf, %v2154
    %v4251 = vsel %vm3995, inf, %v2155
    %v4252 = vsel %vm3996, inf, %v2156
    %v4253 = vsel %vm3997, inf, %v2157
    %v4254 = vsel %vm3998, inf, %v2158
    %v4255 = vsel %vm3999, inf, %v2159
    %v4256 = vsel %vm4000, inf, %v2160
    %v4257 = vsel %vm4001, inf, %v2161
    %v4258 = vsel %vm4002, inf, %v2162
    %v4259 = vsel %vm4003, inf, %v2163
    %v4260 = vsel %vm4004, inf, %v2164
    %v4261 = vsel %vm4005, inf, %v2165
    %v4262 = vsel %vm4006, inf, %v2166
    %v4263 = vsel %vm4007, inf, %v2167
    %v4264 = vsel %vm4008, inf, %v2168
    %v4265 = vsel %vm4009, inf, %v2169
    %v4266 = vsel %vm4010, inf, %v2170
    %v4267 = vsel %vm4011, inf, %v2171
    %v4268 = vsel %vm4012, inf, %v2172
    %v4269 = vsel %vm4013, inf, %v2173
    %v4270 = vsel %vm4014, inf, %v2174
    %v4271 = vsel %vm4015, inf, %v2175
    %v4272 = vsel %vm4016, inf, %v2176
    %v4273 = vsel %vm4017, inf, %v2177
    %v4274 = vsel %vm4018, inf, %v2178
    %v4275 = vsel %vm4019, inf, %v2179
    %v4276 = vsel %vm4020, inf, %v2180
    %v4277 = vsel %vm4021, inf, %v2181
    %v4278 = vsel %vm4022, inf, %v2182
    %v4279 = vsel %vm4023, inf, %v2183
    %v4280 = vsel %vm4024, inf, %v2184
    %v4281 = vsel %vm4025, inf, %v2185
    %v4282 = vsel %vm4026, inf, %v2186
    %v4283 = vsel %vm4027, inf, %v2187
    %v4284 = vsel %vm4028, inf, %v2188
    %v4285 = vsel %vm4029, inf, %v2189
    %v4286 = vsel %vm4030, inf, %v2190
    %v4287 = vsel %vm4031, inf, %v2191
    %v4288 = vsel %vm4032, inf, %v2192
    %v4289 = vsel %vm4033, inf, %v2193
    %v4290 = vsel %vm4034, inf, %v2194
    %v4291 = vsel %vm4035, inf, %v2195
    %v4292 = vsel %vm4036, inf, %v2196
    %v4293 = vsel %vm4037, inf, %v2197
    %v4294 = vsel %vm4038, inf, %v2198
    %v4295 = vsel %vm4039, inf, %v2199
    %v4296 = vsel %vm4040, inf, %v2200
    %v4297 = vsel %vm4041, inf, %v2201
    %v4298 = vsel %vm4042, inf, %v2202
    %v4299 = vsel %vm4043, inf, %v2203
    %v4300 = vsel %vm4044, inf, %v2204
    %v4301 = vsel %vm4045, inf, %v2205
    %v4302 = vsel %vm4046, inf, %v2206
    %v4303 = vsel %vm4047, inf, %v2207
    %v4304 = vsel %vm4048, inf, %v2208
    %v4305 = vsel %vm4049, inf, %v2209
    %v4306 = vsel %vm4050, inf, %v2210
    %v4307 = vsel %vm4051, inf, %v2211
    %v4308 = vsel %vm4052, inf, %v2212
    %v4309 = vsel %vm4053, inf, %v2213
    %v4310 = vsel %vm4054, inf, %v2214
    %v4311 = vsel %vm4055, inf, %v2215
    %v4312 = vsel %vm4056, inf, %v2216
    %v4313 = vsel %vm4057, inf, %v2217
    %v4314 = vsel %vm4058, inf, %v2218
    %v4315 = vsel %vm4059, inf, %v2219
    %v4316 = vsel %vm4060, inf, %v2220
    %v4317 = vsel %vm4061, inf, %v2221
    %v4318 = vsel %vm4062, inf, %v2222
    %v4319 = vsel %vm4063, inf, %v2223
    %v4320 = vsel %vm4064, inf, %v2224
    %v4321 = vsel %vm4065, inf, %v2225
    %v4322 = vsel %vm4066, inf, %v2226
    %v4323 = vsel %vm4067, inf, %v2227
    %v4324 = vsel %vm4068, inf, %v2228
    %v4325 = vsel %vm4069, inf, %v2229
    %v4326 = vsel %vm4070, inf, %v2230
    %v4327 = vsel %vm4071, inf, %v2231
    %v4328 = vsel %vm4072, inf, %v2232
    %v4329 = vsel %vm4073, inf, %v2233
    %v4330 = vsel %vm4074, inf, %v2234
    %v4331 = vsel %vm4075, inf, %v2235
    %v4332 = vsel %vm4076, inf, %v2236
    %v4333 = vsel %vm4077, inf, %v2237
    %v4334 = vsel %vm4078, inf, %v2238
    %v4335 = vsel %vm4079, inf, %v2239
    %v4336 = vsel %vm4080, inf, %v2240
    %v4337 = vsel %vm4081, inf, %v2241
    %v4338 = vsel %vm4082, inf, %v2242
    %v4339 = vsel %vm4083, inf, %v2243
    %v4340 = vsel %vm4084, inf, %v2244
    %v4341 = vsel %vm4085, inf, %v2245
    %v4342 = vsel %vm4086, inf, %v2246
    %v4343 = vsel %vm4087, inf, %v2247
    %v4344 = vsel %vm4088, inf, %v2248
    %v4345 = vsel %vm4089, inf, %v2249
    %v4346 = vsel %vm4090, inf, %v2250
    %v4347 = vsel %vm4091, inf, %v2251
    %v4348 = vsel %vm4092, inf, %v2252
    %v4349 = vsel %vm4093, inf, %v2253
    %v4350 = vsel %vm4094, inf, %v2254
    %v4351 = vsel %vm4095, inf, %v2255
    %v4352 = vsel %vm4096, inf, %v2256
    %v4353 = vsel %vm4097, inf, %v2257
    %v4354 = vsel %vm4098, inf, %v2258
    %v4355 = vsel %vm4099, inf, %v2259
    %v4356 = vsel %vm4100, inf, %v2260
    %v4357 = vsel %vm4101, inf, %v2261
    %v4358 = vsel %vm4102, inf, %v2262
    %v4359 = vsel %vm4103, inf, %v2263
    %v4360 = vsel %vm4104, inf, %v2264
    %v4361 = vsel %vm4105, inf, %v2265
    %v4362 = vsel %vm4106, inf, %v2266
    %v4363 = vsel %vm4107, inf, %v2267
    %v4364 = vsel %vm4108, inf, %v2268
    %v4365 = vsel %vm4109, inf, %v2269
    %v4366 = vsel %vm4110, inf, %v2270
    %v4367 = vsel %vm4111, inf, %v2271
    %v4368 = vsel %vm4112, inf, %v2272
    %v4369 = vsel %vm4113, inf, %v2273
    %v4370 = vsel %vm4114, inf, %v2274
    %v4371 = vsel %vm4115, inf, %v2275
    %v4372 = vsel %vm4116, inf, %v2276
    %v4373 = vsel %vm4117, inf, %v2277
    %v4374 = vsel %vm4118, inf, %v2278
    %v4375 = vsel %vm4119, inf, %v2279
    %v4376 = vsel %vm4120, inf, %v2280
    %v4377 = vsel %vm4121, inf, %v2281
    %v4378 = vsel %vm4122, inf, %v2282
    %v4379 = vsel %vm4123, inf, %v2283
    %v4380 = vsel %vm4124, inf, %v2284
    %v4381 = vsel %vm4125, inf, %v2285
    %v4382 = vsel %vm4126, inf, %v2286
    %v4383 = vsel %vm4127, inf, %v2287
    %v4384 = vsel %vm4128, inf, %v2288
    %v4385 = vsel %vm4129, inf, %v2289
    %v4386 = vsel %vm4130, inf, %v2290
    %v4387 = vsel %vm4131, inf, %v2291
    %v4388 = vsel %vm4132, inf, %v2292
    %v4389 = vsel %vm4133, inf, %v2293
    %v4390 = vsel %vm4134, inf, %v2294
    %v4391 = vsel %vm4135, inf, %v2295
    %v4392 = vsel %vm4136, inf, %v2296
    %v4393 = vsel %vm4137, inf, %v2297
    %v4394 = vsel %vm4138, inf, %v2298
    %v4395 = vsel %vm4139, inf, %v2299
    %v4396 = vsel %vm4140, inf, %v2300
    %v4397 = vsel %vm4141, inf, %v2301
    %v4398 = vsel %vm4142, inf, %v2302
    %v4399 = vsel %vm4143, inf, %v2303
    %v4400 = vsel %vm4144, inf, %v2304
    %v4401 = vsel %vm4145, inf, %v2305
    %v4402 = vsel %vm4146, inf, %v2306
    %v4403 = vsel %vm4147, inf, %v2307
    %v4404 = vsel %vm4148, inf, %v2308
    %v4405 = vsel %vm4149, inf, %v2309
    %v4406 = vsel %vm4150, inf, %v2310
    %v4407 = vsel %vm4151, inf, %v2311
    %v4408 = vsel %vm4152, inf, %v2312
    %v4409 = vsel %vm4153, inf, %v2313
    %v4410 = vsel %vm4154, inf, %v2314
    %v4411 = vsel %vm4155, inf, %v2315
    %v4412 = vsel %vm4156, inf, %v2316
    %v4413 = vsel %vm4157, inf, %v2317
    %v4414 = vsel %vm4158, inf, %v2318
    %v4415 = vsel %vm4159, inf, %v2319
    %v4416 = vsel %vm4160, inf, %v2320
    %v4417 = vsel %vm4161, inf, %v2321
    %v4418 = vmin.f32 %v4162, %v4166
    %v4419 = vmin.f32 %v4418, %v4170
    %v4420 = vmin.f32 %v4419, %v4174
    %v4421 = vmin.f32 %v4420, %v4178
    %v4422 = vmin.f32 %v4421, %v4182
    %v4423 = vmin.f32 %v4422, %v4186
    %v4424 = vmin.f32 %v4423, %v4190
    %v4425 = vmin.f32 %v4424, %v4194
    %v4426 = vmin.f32 %v4425, %v4198
    %v4427 = vmin.f32 %v4426, %v4202
    %v4428 = vmin.f32 %v4427, %v4206
    %v4429 = vmin.f32 %v4428, %v4210
    %v4430 = vmin.f32 %v4429, %v4214
    %v4431 = vmin.f32 %v4430, %v4218
    %v4432 = vmin.f32 %v4431, %v4222
    %v4433 = vmin.f32 %v4432, %v4226
    %v4434 = vmin.f32 %v4433, %v4230
    %v4435 = vmin.f32 %v4434, %v4234
    %v4436 = vmin.f32 %v4435, %v4238
    %v4437 = vmin.f32 %v4436, %v4242
    %v4438 = vmin.f32 %v4437, %v4246
    %v4439 = vmin.f32 %v4438, %v4250
    %v4440 = vmin.f32 %v4439, %v4254
    %v4441 = vmin.f32 %v4440, %v4258
    %v4442 = vmin.f32 %v4441, %v4262
    %v4443 = vmin.f32 %v4442, %v4266
    %v4444 = vmin.f32 %v4443, %v4270
    %v4445 = vmin.f32 %v4444, %v4274
    %v4446 = vmin.f32 %v4445, %v4278
    %v4447 = vmin.f32 %v4446, %v4282
    %v4448 = vmin.f32 %v4447, %v4286
    %v4449 = vmin.f32 %v4448, %v4290
    %v4450 = vmin.f32 %v4449, %v4294
    %v4451 = vmin.f32 %v4450, %v4298
    %v4452 = vmin.f32 %v4451, %v4302
    %v4453 = vmin.f32 %v4452, %v4306
    %v4454 = vmin.f32 %v4453, %v4310
    %v4455 = vmin.f32 %v4454, %v4314
    %v4456 = vmin.f32 %v4455, %v4318
    %v4457 = vmin.f32 %v4456, %v4322
    %v4458 = vmin.f32 %v4457, %v4326
    %v4459 = vmin.f32 %v4458, %v4330
    %v4460 = vmin.f32 %v4459, %v4334
    %v4461 = vmin.f32 %v4460, %v4338
    %v4462 = vmin.f32 %v4461, %v4342
    %v4463 = vmin.f32 %v4462, %v4346
    %v4464 = vmin.f32 %v4463, %v4350
    %v4465 = vmin.f32 %v4464, %v4354
    %v4466 = vmin.f32 %v4465, %v4358
    %v4467 = vmin.f32 %v4466, %v4362
    %v4468 = vmin.f32 %v4467, %v4366
    %v4469 = vmin.f32 %v4468, %v4370
    %v4470 = vmin.f32 %v4469, %v4374
    %v4471 = vmin.f32 %v4470, %v4378
    %v4472 = vmin.f32 %v4471, %v4382
    %v4473 = vmin.f32 %v4472, %v4386
    %v4474 = vmin.f32 %v4473, %v4390
    %v4475 = vmin.f32 %v4474, %v4394
    %v4476 = vmin.f32 %v4475, %v4398
    %v4477 = vmin.f32 %v4476, %v4402
    %v4478 = vmin.f32 %v4477, %v4406
    %v4479 = vmin.f32 %v4478, %v4410
    %v4480 = vmin.f32 %v4479, %v4414
    %v4481 = vrot.slane %v4480, 4
    %v4482 = vmin.f32 %v4480, %v4481
    %v4483 = vrot.slane %v4482, 2
    %v4484 = vmin.f32 %v4482, %v4483
    %v4485 = vrot.slane %v4484, 1
    %v4486 = vmin.f32 %v4484, %v4485
    %v4487 = vmin.f32 %v4163, %v4167
    %v4488 = vmin.f32 %v4487, %v4171
    %v4489 = vmin.f32 %v4488, %v4175
    %v4490 = vmin.f32 %v4489, %v4179
    %v4491 = vmin.f32 %v4490, %v4183
    %v4492 = vmin.f32 %v4491, %v4187
    %v4493 = vmin.f32 %v4492, %v4191
    %v4494 = vmin.f32 %v4493, %v4195
    %v4495 = vmin.f32 %v4494, %v4199
    %v4496 = vmin.f32 %v4495, %v4203
    %v4497 = vmin.f32 %v4496, %v4207
    %v4498 = vmin.f32 %v4497, %v4211
    %v4499 = vmin.f32 %v4498, %v4215
    %v4500 = vmin.f32 %v4499, %v4219
    %v4501 = vmin.f32 %v4500, %v4223
    %v4502 = vmin.f32 %v4501, %v4227
    %v4503 = vmin.f32 %v4502, %v4231
    %v4504 = vmin.f32 %v4503, %v4235
    %v4505 = vmin.f32 %v4504, %v4239
    %v4506 = vmin.f32 %v4505, %v4243
    %v4507 = vmin.f32 %v4506, %v4247
    %v4508 = vmin.f32 %v4507, %v4251
    %v4509 = vmin.f32 %v4508, %v4255
    %v4510 = vmin.f32 %v4509, %v4259
    %v4511 = vmin.f32 %v4510, %v4263
    %v4512 = vmin.f32 %v4511, %v4267
    %v4513 = vmin.f32 %v4512, %v4271
    %v4514 = vmin.f32 %v4513, %v4275
    %v4515 = vmin.f32 %v4514, %v4279
    %v4516 = vmin.f32 %v4515, %v4283
    %v4517 = vmin.f32 %v4516, %v4287
    %v4518 = vmin.f32 %v4517, %v4291
    %v4519 = vmin.f32 %v4518, %v4295
    %v4520 = vmin.f32 %v4519, %v4299
    %v4521 = vmin.f32 %v4520, %v4303
    %v4522 = vmin.f32 %v4521, %v4307
    %v4523 = vmin.f32 %v4522, %v4311
    %v4524 = vmin.f32 %v4523, %v4315
    %v4525 = vmin.f32 %v4524, %v4319
    %v4526 = vmin.f32 %v4525, %v4323
    %v4527 = vmin.f32 %v4526, %v4327
    %v4528 = vmin.f32 %v4527, %v4331
    %v4529 = vmin.f32 %v4528, %v4335
    %v4530 = vmin.f32 %v4529, %v4339
    %v4531 = vmin.f32 %v4530, %v4343
    %v4532 = vmin.f32 %v4531, %v4347
    %v4533 = vmin.f32 %v4532, %v4351
    %v4534 = vmin.f32 %v4533, %v4355
    %v4535 = vmin.f32 %v4534, %v4359
    %v4536 = vmin.f32 %v4535, %v4363
    %v4537 = vmin.f32 %v4536, %v4367
    %v4538 = vmin.f32 %v4537, %v4371
    %v4539 = vmin.f32 %v4538, %v4375
    %v4540 = vmin.f32 %v4539, %v4379
    %v4541 = vmin.f32 %v4540, %v4383
    %v4542 = vmin.f32 %v4541, %v4387
    %v4543 = vmin.f32 %v4542, %v4391
    %v4544 = vmin.f32 %v4543, %v4395
    %v4545 = vmin.f32 %v4544, %v4399
    %v4546 = vmin.f32 %v4545, %v4403
    %v4547 = vmin.f32 %v4546, %v4407
    %v4548 = vmin.f32 %v4547, %v4411
    %v4549 = vmin.f32 %v4548, %v4415
    %v4550 = vrot.slane %v4549, 4
    %v4551 = vmin.f32 %v4549, %v4550
    %v4552 = vrot.slane %v4551, 2
    %v4553 = vmin.f32 %v4551, %v4552
    %v4554 = vrot.slane %v4553, 1
    %v4555 = vmin.f32 %v4553, %v4554
    %v4556 = vmin.f32 %v4164, %v4168
    %v4557 = vmin.f32 %v4556, %v4172
    %v4558 = vmin.f32 %v4557, %v4176
    %v4559 = vmin.f32 %v4558, %v4180
    %v4560 = vmin.f32 %v4559, %v4184
    %v4561 = vmin.f32 %v4560, %v4188
    %v4562 = vmin.f32 %v4561, %v4192
    %v4563 = vmin.f32 %v4562, %v4196
    %v4564 = vmin.f32 %v4563, %v4200
    %v4565 = vmin.f32 %v4564, %v4204
    %v4566 = vmin.f32 %v4565, %v4208
    %v4567 = vmin.f32 %v4566, %v4212
    %v4568 = vmin.f32 %v4567, %v4216
    %v4569 = vmin.f32 %v4568, %v4220
    %v4570 = vmin.f32 %v4569, %v4224
    %v4571 = vmin.f32 %v4570, %v4228
    %v4572 = vmin.f32 %v4571, %v4232
    %v4573 = vmin.f32 %v4572, %v4236
    %v4574 = vmin.f32 %v4573, %v4240
    %v4575 = vmin.f32 %v4574, %v4244
    %v4576 = vmin.f32 %v4575, %v4248
    %v4577 = vmin.f32 %v4576, %v4252
    %v4578 = vmin.f32 %v4577, %v4256
    %v4579 = vmin.f32 %v4578, %v4260
    %v4580 = vmin.f32 %v4579, %v4264
    %v4581 = vmin.f32 %v4580, %v4268
    %v4582 = vmin.f32 %v4581, %v4272
    %v4583 = vmin.f32 %v4582, %v4276
    %v4584 = vmin.f32 %v4583, %v4280
    %v4585 = vmin.f32 %v4584, %v4284
    %v4586 = vmin.f32 %v4585, %v4288
    %v4587 = vmin.f32 %v4586, %v4292
    %v4588 = vmin.f32 %v4587, %v4296
    %v4589 = vmin.f32 %v4588, %v4300
    %v4590 = vmin.f32 %v4589, %v4304
    %v4591 = vmin.f32 %v4590, %v4308
    %v4592 = vmin.f32 %v4591, %v4312
    %v4593 = vmin.f32 %v4592, %v4316
    %v4594 = vmin.f32 %v4593, %v4320
    %v4595 = vmin.f32 %v4594, %v4324
    %v4596 = vmin.f32 %v4595, %v4328
    %v4597 = vmin.f32 %v4596, %v4332
    %v4598 = vmin.f32 %v4597, %v4336
    %v4599 = vmin.f32 %v4598, %v4340
    %v4600 = vmin.f32 %v4599, %v4344
    %v4601 = vmin.f32 %v4600, %v4348
    %v4602 = vmin.f32 %v4601, %v4352
    %v4603 = vmin.f32 %v4602, %v4356
    %v4604 = vmin.f32 %v4603, %v4360
    %v4605 = vmin.f32 %v4604, %v4364
    %v4606 = vmin.f32 %v4605, %v4368
    %v4607 = vmin.f32 %v4606, %v4372
    %v4608 = vmin.f32 %v4607, %v4376
    %v4609 = vmin.f32 %v4608, %v4380
    %v4610 = vmin.f32 %v4609, %v4384
    %v4611 = vmin.f32 %v4610, %v4388
    %v4612 = vmin.f32 %v4611, %v4392
    %v4613 = vmin.f32 %v4612, %v4396
    %v4614 = vmin.f32 %v4613, %v4400
    %v4615 = vmin.f32 %v4614, %v4404
    %v4616 = vmin.f32 %v4615, %v4408
    %v4617 = vmin.f32 %v4616, %v4412
    %v4618 = vmin.f32 %v4617, %v4416
    %v4619 = vrot.slane %v4618, 4
    %v4620 = vmin.f32 %v4618, %v4619
    %v4621 = vrot.slane %v4620, 2
    %v4622 = vmin.f32 %v4620, %v4621
    %v4623 = vrot.slane %v4622, 1
    %v4624 = vmin.f32 %v4622, %v4623
    %v4625 = vmin.f32 %v4165, %v4169
    %v4626 = vmin.f32 %v4625, %v4173
    %v4627 = vmin.f32 %v4626, %v4177
    %v4628 = vmin.f32 %v4627, %v4181
    %v4629 = vmin.f32 %v4628, %v4185
    %v4630 = vmin.f32 %v4629, %v4189
    %v4631 = vmin.f32 %v4630, %v4193
    %v4632 = vmin.f32 %v4631, %v4197
    %v4633 = vmin.f32 %v4632, %v4201
    %v4634 = vmin.f32 %v4633, %v4205
    %v4635 = vmin.f32 %v4634, %v4209
    %v4636 = vmin.f32 %v4635, %v4213
    %v4637 = vmin.f32 %v4636, %v4217
    %v4638 = vmin.f32 %v4637, %v4221
    %v4639 = vmin.f32 %v4638, %v4225
    %v4640 = vmin.f32 %v4639, %v4229
    %v4641 = vmin.f32 %v4640, %v4233
    %v4642 = vmin.f32 %v4641, %v4237
    %v4643 = vmin.f32 %v4642, %v4241
    %v4644 = vmin.f32 %v4643, %v4245
    %v4645 = vmin.f32 %v4644, %v4249
    %v4646 = vmin.f32 %v4645, %v4253
    %v4647 = vmin.f32 %v4646, %v4257
    %v4648 = vmin.f32 %v4647, %v4261
    %v4649 = vmin.f32 %v4648, %v4265
    %v4650 = vmin.f32 %v4649, %v4269
    %v4651 = vmin.f32 %v4650, %v4273
    %v4652 = vmin.f32 %v4651, %v4277
    %v4653 = vmin.f32 %v4652, %v4281
    %v4654 = vmin.f32 %v4653, %v4285
    %v4655 = vmin.f32 %v4654, %v4289
    %v4656 = vmin.f32 %v4655, %v4293
    %v4657 = vmin.f32 %v4656, %v4297
    %v4658 = vmin.f32 %v4657, %v4301
    %v4659 = vmin.f32 %v4658, %v4305
    %v4660 = vmin.f32 %v4659, %v4309
    %v4661 = vmin.f32 %v4660, %v4313
    %v4662 = vmin.f32 %v4661, %v4317
    %v4663 = vmin.f32 %v4662, %v4321
    %v4664 = vmin.f32 %v4663, %v4325
    %v4665 = vmin.f32 %v4664, %v4329
    %v4666 = vmin.f32 %v4665, %v4333
    %v4667 = vmin.f32 %v4666, %v4337
    %v4668 = vmin.f32 %v4667, %v4341
    %v4669 = vmin.f32 %v4668, %v4345
    %v4670 = vmin.f32 %v4669, %v4349
    %v4671 = vmin.f32 %v4670, %v4353
    %v4672 = vmin.f32 %v4671, %v4357
    %v4673 = vmin.f32 %v4672, %v4361
    %v4674 = vmin.f32 %v4673, %v4365
    %v4675 = vmin.f32 %v4674, %v4369
    %v4676 = vmin.f32 %v4675, %v4373
    %v4677 = vmin.f32 %v4676, %v4377
    %v4678 = vmin.f32 %v4677, %v4381
    %v4679 = vmin.f32 %v4678, %v4385
    %v4680 = vmin.f32 %v4679, %v4389
    %v4681 = vmin.f32 %v4680, %v4393
    %v4682 = vmin.f32 %v4681, %v4397
    %v4683 = vmin.f32 %v4682, %v4401
    %v4684 = vmin.f32 %v4683, %v4405
    %v4685 = vmin.f32 %v4684, %v4409
    %v4686 = vmin.f32 %v4685, %v4413
    %v4687 = vmin.f32 %v4686, %v4417
    %v4688 = vrot.slane %v4687, 4
    %v4689 = vmin.f32 %v4687, %v4688
    %v4690 = vrot.slane %v4689, 2
    %v4691 = vmin.f32 %v4689, %v4690
    %v4692 = vrot.slane %v4691, 1
    %v4693 = vmin.f32 %v4691, %v4692
    %vm4694 = vcmask 1040384
    %v4695 = vsel %vm4694, %v4486, 0.0
    %v4696 = vsel %vm4694, %v4555, 0.0
    %v4697 = vadd.f32 %v4695, %v4696
    %v4698 = vsel %vm4694, %v4624, 0.0
    %v4699 = vadd.f32 %v4697, %v4698
    %v4700 = vsel %vm4694, %v4693, 0.0
    %v4701 = vadd.f32 %v4699, %v4700
    %4702 = vadd.xlane.f32.xlu0 %v4701
    %v4703 = vpop.xlane.xlu0 %4702
    %v4704 = vrot.slane %v4703, 4
    %v4705 = vadd.f32 %v4703, %v4704
    %v4706 = vrot.slane %v4705, 2
    %v4707 = vadd.f32 %v4705, %v4706
    %v4708 = vrot.slane %v4707, 1
    %v4709 = vadd.f32 %v4707, %v4708
    %s4710 = vtos %v4709
    %v4711 = vrcp.pop 512.0
    %s4712 = vtos %v4711
    %s4713 = smul.f32 %s4710, %s4712
    %v4714 = vstv %s4713
    %4715 = vst [vmem:[#allocation2] sm:$0x1] %v4714
    %v4716 = vadd.f32 %v2066, %v2067
    %v4717 = vadd.f32 %v4716, %v2068
    %v4718 = vadd.f32 %v4717, %v2069
    %4719 = vadd.xlane.f32.xlu0 %v4718
    %v4720 = vpop.xlane.xlu0 %4719
    %v4721 = vadd.f32 %v2070, %v2071
    %v4722 = vadd.f32 %v4721, %v2072
    %v4723 = vadd.f32 %v4722, %v2073
    %4724 = vadd.xlane.f32.xlu0 %v4723
    %v4725 = vpop.xlane.xlu0 %4724
    %v4726 = vadd.f32 %v2074, %v2075
    %v4727 = vadd.f32 %v4726, %v2076
    %v4728 = vadd.f32 %v4727, %v2077
    %4729 = vadd.xlane.f32.xlu0 %v4728
    %v4730 = vpop.xlane.xlu0 %4729
    %v4731 = vadd.f32 %v2078, %v2079
    %v4732 = vadd.f32 %v4731, %v2080
    %v4733 = vadd.f32 %v4732, %v2081
    %4734 = vadd.xlane.f32.xlu0 %v4733
    %v4735 = vpop.xlane.xlu0 %4734
    %v4736 = vadd.f32 %v2082, %v2083
    %v4737 = vadd.f32 %v4736, %v2084
    %v4738 = vadd.f32 %v4737, %v2085
    %4739 = vadd.xlane.f32.xlu0 %v4738
    %v4740 = vpop.xlane.xlu0 %4739
    %v4741 = vadd.f32 %v2086, %v2087
    %v4742 = vadd.f32 %v4741, %v2088
    %v4743 = vadd.f32 %v4742, %v2089
    %4744 = vadd.xlane.f32.xlu0 %v4743
    %v4745 = vpop.xlane.xlu0 %4744
    %v4746 = vadd.f32 %v2090, %v2091
    %v4747 = vadd.f32 %v4746, %v2092
    %v4748 = vadd.f32 %v4747, %v2093
    %4749 = vadd.xlane.f32.xlu0 %v4748
    %v4750 = vpop.xlane.xlu0 %4749
    %v4751 = vadd.f32 %v2094, %v2095
    %v4752 = vadd.f32 %v4751, %v2096
    %v4753 = vadd.f32 %v4752, %v2097
    %4754 = vadd.xlane.f32.xlu0 %v4753
    %v4755 = vpop.xlane.xlu0 %4754
    %v4756 = vadd.f32 %v2098, %v2099
    %v4757 = vadd.f32 %v4756, %v2100
    %v4758 = vadd.f32 %v4757, %v2101
    %4759 = vadd.xlane.f32.xlu0 %v4758
    %v4760 = vpop.xlane.xlu0 %4759
    %v4761 = vadd.f32 %v2102, %v2103
    %v4762 = vadd.f32 %v4761, %v2104
    %v4763 = vadd.f32 %v4762, %v2105
    %4764 = vadd.xlane.f32.xlu0 %v4763
    %v4765 = vpop.xlane.xlu0 %4764
    %v4766 = vadd.f32 %v2106, %v2107
    %v4767 = vadd.f32 %v4766, %v2108
    %v4768 = vadd.f32 %v4767, %v2109
    %4769 = vadd.xlane.f32.xlu0 %v4768
    %v4770 = vpop.xlane.xlu0 %4769
    %v4771 = vadd.f32 %v2110, %v2111
    %v4772 = vadd.f32 %v4771, %v2112
    %v4773 = vadd.f32 %v4772, %v2113
    %4774 = vadd.xlane.f32.xlu0 %v4773
    %v4775 = vpop.xlane.xlu0 %4774
    %v4776 = vadd.f32 %v2114, %v2115
    %v4777 = vadd.f32 %v4776, %v2116
    %v4778 = vadd.f32 %v4777, %v2117
    %4779 = vadd.xlane.f32.xlu0 %v4778
    %v4780 = vpop.xlane.xlu0 %4779
    %v4781 = vadd.f32 %v2118, %v2119
    %v4782 = vadd.f32 %v4781, %v2120
    %v4783 = vadd.f32 %v4782, %v2121
    %4784 = vadd.xlane.f32.xlu0 %v4783
    %v4785 = vpop.xlane.xlu0 %4784
    %v4786 = vadd.f32 %v2122, %v2123
    %v4787 = vadd.f32 %v4786, %v2124
    %v4788 = vadd.f32 %v4787, %v2125
    %4789 = vadd.xlane.f32.xlu0 %v4788
    %v4790 = vpop.xlane.xlu0 %4789
    %v4791 = vadd.f32 %v2126, %v2127
    %v4792 = vadd.f32 %v4791, %v2128
    %v4793 = vadd.f32 %v4792, %v2129
    %4794 = vadd.xlane.f32.xlu0 %v4793
    %v4795 = vpop.xlane.xlu0 %4794
    %v4796 = vadd.f32 %v2130, %v2131
    %v4797 = vadd.f32 %v4796, %v2132
    %v4798 = vadd.f32 %v4797, %v2133
    %4799 = vadd.xlane.f32.xlu0 %v4798
    %v4800 = vpop.xlane.xlu0 %4799
    %v4801 = vadd.f32 %v2134, %v2135
    %v4802 = vadd.f32 %v4801, %v2136
    %v4803 = vadd.f32 %v4802, %v2137
    %4804 = vadd.xlane.f32.xlu0 %v4803
    %v4805 = vpop.xlane.xlu0 %4804
    %v4806 = vadd.f32 %v2138, %v2139
    %v4807 = vadd.f32 %v4806, %v2140
    %v4808 = vadd.f32 %v4807, %v2141
    %4809 = vadd.xlane.f32.xlu0 %v4808
    %v4810 = vpop.xlane.xlu0 %4809
    %v4811 = vadd.f32 %v2142, %v2143
    %v4812 = vadd.f32 %v4811, %v2144
    %v4813 = vadd.f32 %v4812, %v2145
    %4814 = vadd.xlane.f32.xlu0 %v4813
    %v4815 = vpop.xlane.xlu0 %4814
    %v4816 = vadd.f32 %v2146, %v2147
    %v4817 = vadd.f32 %v4816, %v2148
    %v4818 = vadd.f32 %v4817, %v2149
    %4819 = vadd.xlane.f32.xlu0 %v4818
    %v4820 = vpop.xlane.xlu0 %4819
    %v4821 = vadd.f32 %v2150, %v2151
    %v4822 = vadd.f32 %v4821, %v2152
    %v4823 = vadd.f32 %v4822, %v2153
    %4824 = vadd.xlane.f32.xlu0 %v4823
    %v4825 = vpop.xlane.xlu0 %4824
    %v4826 = vadd.f32 %v2154, %v2155
    %v4827 = vadd.f32 %v4826, %v2156
    %v4828 = vadd.f32 %v4827, %v2157
    %4829 = vadd.xlane.f32.xlu0 %v4828
    %v4830 = vpop.xlane.xlu0 %4829
    %v4831 = vadd.f32 %v2158, %v2159
    %v4832 = vadd.f32 %v4831, %v2160
    %v4833 = vadd.f32 %v4832, %v2161
    %4834 = vadd.xlane.f32.xlu0 %v4833
    %v4835 = vpop.xlane.xlu0 %4834
    %v4836 = vadd.f32 %v2162, %v2163
    %v4837 = vadd.f32 %v4836, %v2164
    %v4838 = vadd.f32 %v4837, %v2165
    %4839 = vadd.xlane.f32.xlu0 %v4838
    %v4840 = vpop.xlane.xlu0 %4839
    %v4841 = vadd.f32 %v2166, %v2167
    %v4842 = vadd.f32 %v4841, %v2168
    %v4843 = vadd.f32 %v4842, %v2169
    %4844 = vadd.xlane.f32.xlu0 %v4843
    %v4845 = vpop.xlane.xlu0 %4844
    %v4846 = vadd.f32 %v2170, %v2171
    %v4847 = vadd.f32 %v4846, %v2172
    %v4848 = vadd.f32 %v4847, %v2173
    %4849 = vadd.xlane.f32.xlu0 %v4848
    %v4850 = vpop.xlane.xlu0 %4849
    %v4851 = vadd.f32 %v2174, %v2175
    %v4852 = vadd.f32 %v4851, %v2176
    %v4853 = vadd.f32 %v4852, %v2177
    %4854 = vadd.xlane.f32.xlu0 %v4853
    %v4855 = vpop.xlane.xlu0 %4854
    %v4856 = vadd.f32 %v2178, %v2179
    %v4857 = vadd.f32 %v4856, %v2180
    %v4858 = vadd.f32 %v4857, %v2181
    %4859 = vadd.xlane.f32.xlu0 %v4858
    %v4860 = vpop.xlane.xlu0 %4859
    %v4861 = vadd.f32 %v2182, %v2183
    %v4862 = vadd.f32 %v4861, %v2184
    %v4863 = vadd.f32 %v4862, %v2185
    %4864 = vadd.xlane.f32.xlu0 %v4863
    %v4865 = vpop.xlane.xlu0 %4864
    %v4866 = vadd.f32 %v2186, %v2187
    %v4867 = vadd.f32 %v4866, %v2188
    %v4868 = vadd.f32 %v4867, %v2189
    %4869 = vadd.xlane.f32.xlu0 %v4868
    %v4870 = vpop.xlane.xlu0 %4869
    %v4871 = vadd.f32 %v2190, %v2191
    %v4872 = vadd.f32 %v4871, %v2192
    %v4873 = vadd.f32 %v4872, %v2193
    %4874 = vadd.xlane.f32.xlu0 %v4873
    %v4875 = vpop.xlane.xlu0 %4874
    %v4876 = vadd.f32 %v2194, %v2195
    %v4877 = vadd.f32 %v4876, %v2196
    %v4878 = vadd.f32 %v4877, %v2197
    %4879 = vadd.xlane.f32.xlu0 %v4878
    %v4880 = vpop.xlane.xlu0 %4879
    %v4881 = vadd.f32 %v2198, %v2199
    %v4882 = vadd.f32 %v4881, %v2200
    %v4883 = vadd.f32 %v4882, %v2201
    %4884 = vadd.xlane.f32.xlu0 %v4883
    %v4885 = vpop.xlane.xlu0 %4884
    %v4886 = vadd.f32 %v2202, %v2203
    %v4887 = vadd.f32 %v4886, %v2204
    %v4888 = vadd.f32 %v4887, %v2205
    %4889 = vadd.xlane.f32.xlu0 %v4888
    %v4890 = vpop.xlane.xlu0 %4889
    %v4891 = vadd.f32 %v2206, %v2207
    %v4892 = vadd.f32 %v4891, %v2208
    %v4893 = vadd.f32 %v4892, %v2209
    %4894 = vadd.xlane.f32.xlu0 %v4893
    %v4895 = vpop.xlane.xlu0 %4894
    %v4896 = vadd.f32 %v2210, %v2211
    %v4897 = vadd.f32 %v4896, %v2212
    %v4898 = vadd.f32 %v4897, %v2213
    %4899 = vadd.xlane.f32.xlu0 %v4898
    %v4900 = vpop.xlane.xlu0 %4899
    %v4901 = vadd.f32 %v2214, %v2215
    %v4902 = vadd.f32 %v4901, %v2216
    %v4903 = vadd.f32 %v4902, %v2217
    %4904 = vadd.xlane.f32.xlu0 %v4903
    %v4905 = vpop.xlane.xlu0 %4904
    %v4906 = vadd.f32 %v2218, %v2219
    %v4907 = vadd.f32 %v4906, %v2220
    %v4908 = vadd.f32 %v4907, %v2221
    %4909 = vadd.xlane.f32.xlu0 %v4908
    %v4910 = vpop.xlane.xlu0 %4909
    %v4911 = vadd.f32 %v2222, %v2223
    %v4912 = vadd.f32 %v4911, %v2224
    %v4913 = vadd.f32 %v4912, %v2225
    %4914 = vadd.xlane.f32.xlu0 %v4913
    %v4915 = vpop.xlane.xlu0 %4914
    %v4916 = vadd.f32 %v2226, %v2227
    %v4917 = vadd.f32 %v4916, %v2228
    %v4918 = vadd.f32 %v4917, %v2229
    %4919 = vadd.xlane.f32.xlu0 %v4918
    %v4920 = vpop.xlane.xlu0 %4919
    %v4921 = vadd.f32 %v2230, %v2231
    %v4922 = vadd.f32 %v4921, %v2232
    %v4923 = vadd.f32 %v4922, %v2233
    %4924 = vadd.xlane.f32.xlu0 %v4923
    %v4925 = vpop.xlane.xlu0 %4924
    %v4926 = vadd.f32 %v2234, %v2235
    %v4927 = vadd.f32 %v4926, %v2236
    %v4928 = vadd.f32 %v4927, %v2237
    %4929 = vadd.xlane.f32.xlu0 %v4928
    %v4930 = vpop.xlane.xlu0 %4929
    %v4931 = vadd.f32 %v2238, %v2239
    %v4932 = vadd.f32 %v4931, %v2240
    %v4933 = vadd.f32 %v4932, %v2241
    %4934 = vadd.xlane.f32.xlu0 %v4933
    %v4935 = vpop.xlane.xlu0 %4934
    %v4936 = vadd.f32 %v2242, %v2243
    %v4937 = vadd.f32 %v4936, %v2244
    %v4938 = vadd.f32 %v4937, %v2245
    %4939 = vadd.xlane.f32.xlu0 %v4938
    %v4940 = vpop.xlane.xlu0 %4939
    %v4941 = vadd.f32 %v2246, %v2247
    %v4942 = vadd.f32 %v4941, %v2248
    %v4943 = vadd.f32 %v4942, %v2249
    %4944 = vadd.xlane.f32.xlu0 %v4943
    %v4945 = vpop.xlane.xlu0 %4944
    %v4946 = vadd.f32 %v2250, %v2251
    %v4947 = vadd.f32 %v4946, %v2252
    %v4948 = vadd.f32 %v4947, %v2253
    %4949 = vadd.xlane.f32.xlu0 %v4948
    %v4950 = vpop.xlane.xlu0 %4949
    %v4951 = vadd.f32 %v2254, %v2255
    %v4952 = vadd.f32 %v4951, %v2256
    %v4953 = vadd.f32 %v4952, %v2257
    %4954 = vadd.xlane.f32.xlu0 %v4953
    %v4955 = vpop.xlane.xlu0 %4954
    %v4956 = vadd.f32 %v2258, %v2259
    %v4957 = vadd.f32 %v4956, %v2260
    %v4958 = vadd.f32 %v4957, %v2261
    %4959 = vadd.xlane.f32.xlu0 %v4958
    %v4960 = vpop.xlane.xlu0 %4959
    %v4961 = vadd.f32 %v2262, %v2263
    %v4962 = vadd.f32 %v4961, %v2264
    %v4963 = vadd.f32 %v4962, %v2265
    %4964 = vadd.xlane.f32.xlu0 %v4963
    %v4965 = vpop.xlane.xlu0 %4964
    %v4966 = vadd.f32 %v2266, %v2267
    %v4967 = vadd.f32 %v4966, %v2268
    %v4968 = vadd.f32 %v4967, %v2269
    %4969 = vadd.xlane.f32.xlu0 %v4968
    %v4970 = vpop.xlane.xlu0 %4969
    %v4971 = vadd.f32 %v2270, %v2271
    %v4972 = vadd.f32 %v4971, %v2272
    %v4973 = vadd.f32 %v4972, %v2273
    %4974 = vadd.xlane.f32.xlu0 %v4973
    %v4975 = vpop.xlane.xlu0 %4974
    %v4976 = vadd.f32 %v2274, %v2275
    %v4977 = vadd.f32 %v4976, %v2276
    %v4978 = vadd.f32 %v4977, %v2277
    %4979 = vadd.xlane.f32.xlu0 %v4978
    %v4980 = vpop.xlane.xlu0 %4979
    %v4981 = vadd.f32 %v2278, %v2279
    %v4982 = vadd.f32 %v4981, %v2280
    %v4983 = vadd.f32 %v4982, %v2281
    %4984 = vadd.xlane.f32.xlu0 %v4983
    %v4985 = vpop.xlane.xlu0 %4984
    %v4986 = vadd.f32 %v2282, %v2283
    %v4987 = vadd.f32 %v4986, %v2284
    %v4988 = vadd.f32 %v4987, %v2285
    %4989 = vadd.xlane.f32.xlu0 %v4988
    %v4990 = vpop.xlane.xlu0 %4989
    %v4991 = vadd.f32 %v2286, %v2287
    %v4992 = vadd.f32 %v4991, %v2288
    %v4993 = vadd.f32 %v4992, %v2289
    %4994 = vadd.xlane.f32.xlu0 %v4993
    %v4995 = vpop.xlane.xlu0 %4994
    %v4996 = vadd.f32 %v2290, %v2291
    %v4997 = vadd.f32 %v4996, %v2292
    %v4998 = vadd.f32 %v4997, %v2293
    %4999 = vadd.xlane.f32.xlu0 %v4998
    %v5000 = vpop.xlane.xlu0 %4999
    %v5001 = vadd.f32 %v2294, %v2295
    %v5002 = vadd.f32 %v5001, %v2296
    %v5003 = vadd.f32 %v5002, %v2297
    %5004 = vadd.xlane.f32.xlu0 %v5003
    %v5005 = vpop.xlane.xlu0 %5004
    %v5006 = vadd.f32 %v2298, %v2299
    %v5007 = vadd.f32 %v5006, %v2300
    %v5008 = vadd.f32 %v5007, %v2301
    %5009 = vadd.xlane.f32.xlu0 %v5008
    %v5010 = vpop.xlane.xlu0 %5009
    %v5011 = vadd.f32 %v2302, %v2303
    %v5012 = vadd.f32 %v5011, %v2304
    %v5013 = vadd.f32 %v5012, %v2305
    %5014 = vadd.xlane.f32.xlu0 %v5013
    %v5015 = vpop.xlane.xlu0 %5014
    %v5016 = vadd.f32 %v2306, %v2307
    %v5017 = vadd.f32 %v5016, %v2308
    %v5018 = vadd.f32 %v5017, %v2309
    %5019 = vadd.xlane.f32.xlu0 %v5018
    %v5020 = vpop.xlane.xlu0 %5019
    %v5021 = vadd.f32 %v2310, %v2311
    %v5022 = vadd.f32 %v5021, %v2312
    %v5023 = vadd.f32 %v5022, %v2313
    %5024 = vadd.xlane.f32.xlu0 %v5023
    %v5025 = vpop.xlane.xlu0 %5024
    %v5026 = vadd.f32 %v2314, %v2315
    %v5027 = vadd.f32 %v5026, %v2316
    %v5028 = vadd.f32 %v5027, %v2317
    %5029 = vadd.xlane.f32.xlu0 %v5028
    %v5030 = vpop.xlane.xlu0 %5029
    %v5031 = vadd.f32 %v2318, %v2319
    %v5032 = vadd.f32 %v5031, %v2320
    %v5033 = vadd.f32 %v5032, %v2321
    %5034 = vadd.xlane.f32.xlu0 %v5033
    %v5035 = vpop.xlane.xlu0 %5034
    %v5036 = vrcp.pop 512.0
    %v5037 = vmul.f32 %v4720, %v5036
    %v5038 = vmul.f32 %v4725, %v5036
    %v5039 = vmul.f32 %v4730, %v5036
    %v5040 = vmul.f32 %v4735, %v5036
    %v5041 = vmul.f32 %v4740, %v5036
    %v5042 = vmul.f32 %v4745, %v5036
    %v5043 = vmul.f32 %v4750, %v5036
    %v5044 = vmul.f32 %v4755, %v5036
    %v5045 = vmul.f32 %v4760, %v5036
    %v5046 = vmul.f32 %v4765, %v5036
    %v5047 = vmul.f32 %v4770, %v5036
    %v5048 = vmul.f32 %v4775, %v5036
    %v5049 = vmul.f32 %v4780, %v5036
    %v5050 = vmul.f32 %v4785, %v5036
    %v5051 = vmul.f32 %v4790, %v5036
    %v5052 = vmul.f32 %v4795, %v5036
    %v5053 = vmul.f32 %v4800, %v5036
    %v5054 = vmul.f32 %v4805, %v5036
    %v5055 = vmul.f32 %v4810, %v5036
    %v5056 = vmul.f32 %v4815, %v5036
    %v5057 = vmul.f32 %v4820, %v5036
    %v5058 = vmul.f32 %v4825, %v5036
    %v5059 = vmul.f32 %v4830, %v5036
    %v5060 = vmul.f32 %v4835, %v5036
    %v5061 = vmul.f32 %v4840, %v5036
    %v5062 = vmul.f32 %v4845, %v5036
    %v5063 = vmul.f32 %v4850, %v5036
    %v5064 = vmul.f32 %v4855, %v5036
    %v5065 = vmul.f32 %v4860, %v5036
    %v5066 = vmul.f32 %v4865, %v5036
    %v5067 = vmul.f32 %v4870, %v5036
    %v5068 = vmul.f32 %v4875, %v5036
    %v5069 = vmul.f32 %v4880, %v5036
    %v5070 = vmul.f32 %v4885, %v5036
    %v5071 = vmul.f32 %v4890, %v5036
    %v5072 = vmul.f32 %v4895, %v5036
    %v5073 = vmul.f32 %v4900, %v5036
    %v5074 = vmul.f32 %v4905, %v5036
    %v5075 = vmul.f32 %v4910, %v5036
    %v5076 = vmul.f32 %v4915, %v5036
    %v5077 = vmul.f32 %v4920, %v5036
    %v5078 = vmul.f32 %v4925, %v5036
    %v5079 = vmul.f32 %v4930, %v5036
    %v5080 = vmul.f32 %v4935, %v5036
    %v5081 = vmul.f32 %v4940, %v5036
    %v5082 = vmul.f32 %v4945, %v5036
    %v5083 = vmul.f32 %v4950, %v5036
    %v5084 = vmul.f32 %v4955, %v5036
    %v5085 = vmul.f32 %v4960, %v5036
    %v5086 = vmul.f32 %v4965, %v5036
    %v5087 = vmul.f32 %v4970, %v5036
    %v5088 = vmul.f32 %v4975, %v5036
    %v5089 = vmul.f32 %v4980, %v5036
    %v5090 = vmul.f32 %v4985, %v5036
    %v5091 = vmul.f32 %v4990, %v5036
    %v5092 = vmul.f32 %v4995, %v5036
    %v5093 = vmul.f32 %v5000, %v5036
    %v5094 = vmul.f32 %v5005, %v5036
    %v5095 = vmul.f32 %v5010, %v5036
    %v5096 = vmul.f32 %v5015, %v5036
    %v5097 = vmul.f32 %v5020, %v5036
    %v5098 = vmul.f32 %v5025, %v5036
    %v5099 = vmul.f32 %v5030, %v5036
    %v5100 = vmul.f32 %v5035, %v5036
    %v5101 = vsub.f32 %v2066, %v5037
    %v5102 = vsub.f32 %v2067, %v5037
    %v5103 = vsub.f32 %v2068, %v5037
    %v5104 = vsub.f32 %v2069, %v5037
    %v5105 = vsub.f32 %v2070, %v5038
    %v5106 = vsub.f32 %v2071, %v5038
    %v5107 = vsub.f32 %v2072, %v5038
    %v5108 = vsub.f32 %v2073, %v5038
    %v5109 = vsub.f32 %v2074, %v5039
    %v5110 = vsub.f32 %v2075, %v5039
    %v5111 = vsub.f32 %v2076, %v5039
    %v5112 = vsub.f32 %v2077, %v5039
    %v5113 = vsub.f32 %v2078, %v5040
    %v5114 = vsub.f32 %v2079, %v5040
    %v5115 = vsub.f32 %v2080, %v5040
    %v5116 = vsub.f32 %v2081, %v5040
    %v5117 = vsub.f32 %v2082, %v5041
    %v5118 = vsub.f32 %v2083, %v5041
    %v5119 = vsub.f32 %v2084, %v5041
    %v5120 = vsub.f32 %v2085, %v5041
    %v5121 = vsub.f32 %v2086, %v5042
    %v5122 = vsub.f32 %v2087, %v5042
    %v5123 = vsub.f32 %v2088, %v5042
    %v5124 = vsub.f32 %v2089, %v5042
    %v5125 = vsub.f32 %v2090, %v5043
    %v5126 = vsub.f32 %v2091, %v5043
    %v5127 = vsub.f32 %v2092, %v5043
    %v5128 = vsub.f32 %v2093, %v5043
    %v5129 = vsub.f32 %v2094, %v5044
    %v5130 = vsub.f32 %v2095, %v5044
    %v5131 = vsub.f32 %v2096, %v5044
    %v5132 = vsub.f32 %v2097, %v5044
    %v5133 = vsub.f32 %v2098, %v5045
    %v5134 = vsub.f32 %v2099, %v5045
    %v5135 = vsub.f32 %v2100, %v5045
    %v5136 = vsub.f32 %v2101, %v5045
    %v5137 = vsub.f32 %v2102, %v5046
    %v5138 = vsub.f32 %v2103, %v5046
    %v5139 = vsub.f32 %v2104, %v5046
    %v5140 = vsub.f32 %v2105, %v5046
    %v5141 = vsub.f32 %v2106, %v5047
    %v5142 = vsub.f32 %v2107, %v5047
    %v5143 = vsub.f32 %v2108, %v5047
    %v5144 = vsub.f32 %v2109, %v5047
    %v5145 = vsub.f32 %v2110, %v5048
    %v5146 = vsub.f32 %v2111, %v5048
    %v5147 = vsub.f32 %v2112, %v5048
    %v5148 = vsub.f32 %v2113, %v5048
    %v5149 = vsub.f32 %v2114, %v5049
    %v5150 = vsub.f32 %v2115, %v5049
    %v5151 = vsub.f32 %v2116, %v5049
    %v5152 = vsub.f32 %v2117, %v5049
    %v5153 = vsub.f32 %v2118, %v5050
    %v5154 = vsub.f32 %v2119, %v5050
    %v5155 = vsub.f32 %v2120, %v5050
    %v5156 = vsub.f32 %v2121, %v5050
    %v5157 = vsub.f32 %v2122, %v5051
    %v5158 = vsub.f32 %v2123, %v5051
    %v5159 = vsub.f32 %v2124, %v5051
    %v5160 = vsub.f32 %v2125, %v5051
    %v5161 = vsub.f32 %v2126, %v5052
    %v5162 = vsub.f32 %v2127, %v5052
    %v5163 = vsub.f32 %v2128, %v5052
    %v5164 = vsub.f32 %v2129, %v5052
    %v5165 = vsub.f32 %v2130, %v5053
    %v5166 = vsub.f32 %v2131, %v5053
    %v5167 = vsub.f32 %v2132, %v5053
    %v5168 = vsub.f32 %v2133, %v5053
    %v5169 = vsub.f32 %v2134, %v5054
    %v5170 = vsub.f32 %v2135, %v5054
    %v5171 = vsub.f32 %v2136, %v5054
    %v5172 = vsub.f32 %v2137, %v5054
    %v5173 = vsub.f32 %v2138, %v5055
    %v5174 = vsub.f32 %v2139, %v5055
    %v5175 = vsub.f32 %v2140, %v5055
    %v5176 = vsub.f32 %v2141, %v5055
    %v5177 = vsub.f32 %v2142, %v5056
    %v5178 = vsub.f32 %v2143, %v5056
    %v5179 = vsub.f32 %v2144, %v5056
    %v5180 = vsub.f32 %v2145, %v5056
    %v5181 = vsub.f32 %v2146, %v5057
    %v5182 = vsub.f32 %v2147, %v5057
    %v5183 = vsub.f32 %v2148, %v5057
    %v5184 = vsub.f32 %v2149, %v5057
    %v5185 = vsub.f32 %v2150, %v5058
    %v5186 = vsub.f32 %v2151, %v5058
    %v5187 = vsub.f32 %v2152, %v5058
    %v5188 = vsub.f32 %v2153, %v5058
    %v5189 = vsub.f32 %v2154, %v5059
    %v5190 = vsub.f32 %v2155, %v5059
    %v5191 = vsub.f32 %v2156, %v5059
    %v5192 = vsub.f32 %v2157, %v5059
    %v5193 = vsub.f32 %v2158, %v5060
    %v5194 = vsub.f32 %v2159, %v5060
    %v5195 = vsub.f32 %v2160, %v5060
    %v5196 = vsub.f32 %v2161, %v5060
    %v5197 = vsub.f32 %v2162, %v5061
    %v5198 = vsub.f32 %v2163, %v5061
    %v5199 = vsub.f32 %v2164, %v5061
    %v5200 = vsub.f32 %v2165, %v5061
    %v5201 = vsub.f32 %v2166, %v5062
    %v5202 = vsub.f32 %v2167, %v5062
    %v5203 = vsub.f32 %v2168, %v5062
    %v5204 = vsub.f32 %v2169, %v5062
    %v5205 = vsub.f32 %v2170, %v5063
    %v5206 = vsub.f32 %v2171, %v5063
    %v5207 = vsub.f32 %v2172, %v5063
    %v5208 = vsub.f32 %v2173, %v5063
    %v5209 = vsub.f32 %v2174, %v5064
    %v5210 = vsub.f32 %v2175, %v5064
    %v5211 = vsub.f32 %v2176, %v5064
    %v5212 = vsub.f32 %v2177, %v5064
    %v5213 = vsub.f32 %v2178, %v5065
    %v5214 = vsub.f32 %v2179, %v5065
    %v5215 = vsub.f32 %v2180, %v5065
    %v5216 = vsub.f32 %v2181, %v5065
    %v5217 = vsub.f32 %v2182, %v5066
    %v5218 = vsub.f32 %v2183, %v5066
    %v5219 = vsub.f32 %v2184, %v5066
    %v5220 = vsub.f32 %v2185, %v5066
    %v5221 = vsub.f32 %v2186, %v5067
    %v5222 = vsub.f32 %v2187, %v5067
    %v5223 = vsub.f32 %v2188, %v5067
    %v5224 = vsub.f32 %v2189, %v5067
    %v5225 = vsub.f32 %v2190, %v5068
    %v5226 = vsub.f32 %v2191, %v5068
    %v5227 = vsub.f32 %v2192, %v5068
    %v5228 = vsub.f32 %v2193, %v5068
    %v5229 = vsub.f32 %v2194, %v5069
    %v5230 = vsub.f32 %v2195, %v5069
    %v5231 = vsub.f32 %v2196, %v5069
    %v5232 = vsub.f32 %v2197, %v5069
    %v5233 = vsub.f32 %v2198, %v5070
    %v5234 = vsub.f32 %v2199, %v5070
    %v5235 = vsub.f32 %v2200, %v5070
    %v5236 = vsub.f32 %v2201, %v5070
    %v5237 = vsub.f32 %v2202, %v5071
    %v5238 = vsub.f32 %v2203, %v5071
    %v5239 = vsub.f32 %v2204, %v5071
    %v5240 = vsub.f32 %v2205, %v5071
    %v5241 = vsub.f32 %v2206, %v5072
    %v5242 = vsub.f32 %v2207, %v5072
    %v5243 = vsub.f32 %v2208, %v5072
    %v5244 = vsub.f32 %v2209, %v5072
    %v5245 = vsub.f32 %v2210, %v5073
    %v5246 = vsub.f32 %v2211, %v5073
    %v5247 = vsub.f32 %v2212, %v5073
    %v5248 = vsub.f32 %v2213, %v5073
    %v5249 = vsub.f32 %v2214, %v5074
    %v5250 = vsub.f32 %v2215, %v5074
    %v5251 = vsub.f32 %v2216, %v5074
    %v5252 = vsub.f32 %v2217, %v5074
    %v5253 = vsub.f32 %v2218, %v5075
    %v5254 = vsub.f32 %v2219, %v5075
    %v5255 = vsub.f32 %v2220, %v5075
    %v5256 = vsub.f32 %v2221, %v5075
    %v5257 = vsub.f32 %v2222, %v5076
    %v5258 = vsub.f32 %v2223, %v5076
    %v5259 = vsub.f32 %v2224, %v5076
    %v5260 = vsub.f32 %v2225, %v5076
    %v5261 = vsub.f32 %v2226, %v5077
    %v5262 = vsub.f32 %v2227, %v5077
    %v5263 = vsub.f32 %v2228, %v5077
    %v5264 = vsub.f32 %v2229, %v5077
    %v5265 = vsub.f32 %v2230, %v5078
    %v5266 = vsub.f32 %v2231, %v5078
    %v5267 = vsub.f32 %v2232, %v5078
    %v5268 = vsub.f32 %v2233, %v5078
    %v5269 = vsub.f32 %v2234, %v5079
    %v5270 = vsub.f32 %v2235, %v5079
    %v5271 = vsub.f32 %v2236, %v5079
    %v5272 = vsub.f32 %v2237, %v5079
    %v5273 = vsub.f32 %v2238, %v5080
    %v5274 = vsub.f32 %v2239, %v5080
    %v5275 = vsub.f32 %v2240, %v5080
    %v5276 = vsub.f32 %v2241, %v5080
    %v5277 = vsub.f32 %v2242, %v5081
    %v5278 = vsub.f32 %v2243, %v5081
    %v5279 = vsub.f32 %v2244, %v5081
    %v5280 = vsub.f32 %v2245, %v5081
    %v5281 = vsub.f32 %v2246, %v5082
    %v5282 = vsub.f32 %v2247, %v5082
    %v5283 = vsub.f32 %v2248, %v5082
    %v5284 = vsub.f32 %v2249, %v5082
    %v5285 = vsub.f32 %v2250, %v5083
    %v5286 = vsub.f32 %v2251, %v5083
    %v5287 = vsub.f32 %v2252, %v5083
    %v5288 = vsub.f32 %v2253, %v5083
    %v5289 = vsub.f32 %v2254, %v5084
    %v5290 = vsub.f32 %v2255, %v5084
    %v5291 = vsub.f32 %v2256, %v5084
    %v5292 = vsub.f32 %v2257, %v5084
    %v5293 = vsub.f32 %v2258, %v5085
    %v5294 = vsub.f32 %v2259, %v5085
    %v5295 = vsub.f32 %v2260, %v5085
    %v5296 = vsub.f32 %v2261, %v5085
    %v5297 = vsub.f32 %v2262, %v5086
    %v5298 = vsub.f32 %v2263, %v5086
    %v5299 = vsub.f32 %v2264, %v5086
    %v5300 = vsub.f32 %v2265, %v5086
    %v5301 = vsub.f32 %v2266, %v5087
    %v5302 = vsub.f32 %v2267, %v5087
    %v5303 = vsub.f32 %v2268, %v5087
    %v5304 = vsub.f32 %v2269, %v5087
    %v5305 = vsub.f32 %v2270, %v5088
    %v5306 = vsub.f32 %v2271, %v5088
    %v5307 = vsub.f32 %v2272, %v5088
    %v5308 = vsub.f32 %v2273, %v5088
    %v5309 = vsub.f32 %v2274, %v5089
    %v5310 = vsub.f32 %v2275, %v5089
    %v5311 = vsub.f32 %v2276, %v5089
    %v5312 = vsub.f32 %v2277, %v5089
    %v5313 = vsub.f32 %v2278, %v5090
    %v5314 = vsub.f32 %v2279, %v5090
    %v5315 = vsub.f32 %v2280, %v5090
    %v5316 = vsub.f32 %v2281, %v5090
    %v5317 = vsub.f32 %v2282, %v5091
    %v5318 = vsub.f32 %v2283, %v5091
    %v5319 = vsub.f32 %v2284, %v5091
    %v5320 = vsub.f32 %v2285, %v5091
    %v5321 = vsub.f32 %v2286, %v5092
    %v5322 = vsub.f32 %v2287, %v5092
    %v5323 = vsub.f32 %v2288, %v5092
    %v5324 = vsub.f32 %v2289, %v5092
    %v5325 = vsub.f32 %v2290, %v5093
    %v5326 = vsub.f32 %v2291, %v5093
    %v5327 = vsub.f32 %v2292, %v5093
    %v5328 = vsub.f32 %v2293, %v5093
    %v5329 = vsub.f32 %v2294, %v5094
    %v5330 = vsub.f32 %v2295, %v5094
    %v5331 = vsub.f32 %v2296, %v5094
    %v5332 = vsub.f32 %v2297, %v5094
    %v5333 = vsub.f32 %v2298, %v5095
    %v5334 = vsub.f32 %v2299, %v5095
    %v5335 = vsub.f32 %v2300, %v5095
    %v5336 = vsub.f32 %v2301, %v5095
    %v5337 = vsub.f32 %v2302, %v5096
    %v5338 = vsub.f32 %v2303, %v5096
    %v5339 = vsub.f32 %v2304, %v5096
    %v5340 = vsub.f32 %v2305, %v5096
    %v5341 = vsub.f32 %v2306, %v5097
    %v5342 = vsub.f32 %v2307, %v5097
    %v5343 = vsub.f32 %v2308, %v5097
    %v5344 = vsub.f32 %v2309, %v5097
    %v5345 = vsub.f32 %v2310, %v5098
    %v5346 = vsub.f32 %v2311, %v5098
    %v5347 = vsub.f32 %v2312, %v5098
    %v5348 = vsub.f32 %v2313, %v5098
    %v5349 = vsub.f32 %v2314, %v5099
    %v5350 = vsub.f32 %v2315, %v5099
    %v5351 = vsub.f32 %v2316, %v5099
    %v5352 = vsub.f32 %v2317, %v5099
    %v5353 = vsub.f32 %v2318, %v5100
    %v5354 = vsub.f32 %v2319, %v5100
    %v5355 = vsub.f32 %v2320, %v5100
    %v5356 = vsub.f32 %v2321, %v5100
    %v5357 = vmul.f32 %v5101, %v5101
    %v5358 = vmul.f32 %v5102, %v5102
    %v5359 = vmul.f32 %v5103, %v5103
    %v5360 = vmul.f32 %v5104, %v5104
    %v5361 = vmul.f32 %v5105, %v5105
    %v5362 = vmul.f32 %v5106, %v5106
    %v5363 = vmul.f32 %v5107, %v5107
    %v5364 = vmul.f32 %v5108, %v5108
    %v5365 = vmul.f32 %v5109, %v5109
    %v5366 = vmul.f32 %v5110, %v5110
    %v5367 = vmul.f32 %v5111, %v5111
    %v5368 = vmul.f32 %v5112, %v5112
    %v5369 = vmul.f32 %v5113, %v5113
    %v5370 = vmul.f32 %v5114, %v5114
    %v5371 = vmul.f32 %v5115, %v5115
    %v5372 = vmul.f32 %v5116, %v5116
    %v5373 = vmul.f32 %v5117, %v5117
    %v5374 = vmul.f32 %v5118, %v5118
    %v5375 = vmul.f32 %v5119, %v5119
    %v5376 = vmul.f32 %v5120, %v5120
    %v5377 = vmul.f32 %v5121, %v5121
    %v5378 = vmul.f32 %v5122, %v5122
    %v5379 = vmul.f32 %v5123, %v5123
    %v5380 = vmul.f32 %v5124, %v5124
    %v5381 = vmul.f32 %v5125, %v5125
    %v5382 = vmul.f32 %v5126, %v5126
    %v5383 = vmul.f32 %v5127, %v5127
    %v5384 = vmul.f32 %v5128, %v5128
    %v5385 = vmul.f32 %v5129, %v5129
    %v5386 = vmul.f32 %v5130, %v5130
    %v5387 = vmul.f32 %v5131, %v5131
    %v5388 = vmul.f32 %v5132, %v5132
    %v5389 = vmul.f32 %v5133, %v5133
    %v5390 = vmul.f32 %v5134, %v5134
    %v5391 = vmul.f32 %v5135, %v5135
    %v5392 = vmul.f32 %v5136, %v5136
    %v5393 = vmul.f32 %v5137, %v5137
    %v5394 = vmul.f32 %v5138, %v5138
    %v5395 = vmul.f32 %v5139, %v5139
    %v5396 = vmul.f32 %v5140, %v5140
    %v5397 = vmul.f32 %v5141, %v5141
    %v5398 = vmul.f32 %v5142, %v5142
    %v5399 = vmul.f32 %v5143, %v5143
    %v5400 = vmul.f32 %v5144, %v5144
    %v5401 = vmul.f32 %v5145, %v5145
    %v5402 = vmul.f32 %v5146, %v5146
    %v5403 = vmul.f32 %v5147, %v5147
    %v5404 = vmul.f32 %v5148, %v5148
    %v5405 = vmul.f32 %v5149, %v5149
    %v5406 = vmul.f32 %v5150, %v5150
    %v5407 = vmul.f32 %v5151, %v5151
    %v5408 = vmul.f32 %v5152, %v5152
    %v5409 = vmul.f32 %v5153, %v5153
    %v5410 = vmul.f32 %v5154, %v5154
    %v5411 = vmul.f32 %v5155, %v5155
    %v5412 = vmul.f32 %v5156, %v5156
    %v5413 = vmul.f32 %v5157, %v5157
    %v5414 = vmul.f32 %v5158, %v5158
    %v5415 = vmul.f32 %v5159, %v5159
    %v5416 = vmul.f32 %v5160, %v5160
    %v5417 = vmul.f32 %v5161, %v5161
    %v5418 = vmul.f32 %v5162, %v5162
    %v5419 = vmul.f32 %v5163, %v5163
    %v5420 = vmul.f32 %v5164, %v5164
    %v5421 = vmul.f32 %v5165, %v5165
    %v5422 = vmul.f32 %v5166, %v5166
    %v5423 = vmul.f32 %v5167, %v5167
    %v5424 = vmul.f32 %v5168, %v5168
    %v5425 = vmul.f32 %v5169, %v5169
    %v5426 = vmul.f32 %v5170, %v5170
    %v5427 = vmul.f32 %v5171, %v5171
    %v5428 = vmul.f32 %v5172, %v5172
    %v5429 = vmul.f32 %v5173, %v5173
    %v5430 = vmul.f32 %v5174, %v5174
    %v5431 = vmul.f32 %v5175, %v5175
    %v5432 = vmul.f32 %v5176, %v5176
    %v5433 = vmul.f32 %v5177, %v5177
    %v5434 = vmul.f32 %v5178, %v5178
    %v5435 = vmul.f32 %v5179, %v5179
    %v5436 = vmul.f32 %v5180, %v5180
    %v5437 = vmul.f32 %v5181, %v5181
    %v5438 = vmul.f32 %v5182, %v5182
    %v5439 = vmul.f32 %v5183, %v5183
    %v5440 = vmul.f32 %v5184, %v5184
    %v5441 = vmul.f32 %v5185, %v5185
    %v5442 = vmul.f32 %v5186, %v5186
    %v5443 = vmul.f32 %v5187, %v5187
    %v5444 = vmul.f32 %v5188, %v5188
    %v5445 = vmul.f32 %v5189, %v5189
    %v5446 = vmul.f32 %v5190, %v5190
    %v5447 = vmul.f32 %v5191, %v5191
    %v5448 = vmul.f32 %v5192, %v5192
    %v5449 = vmul.f32 %v5193, %v5193
    %v5450 = vmul.f32 %v5194, %v5194
    %v5451 = vmul.f32 %v5195, %v5195
    %v5452 = vmul.f32 %v5196, %v5196
    %v5453 = vmul.f32 %v5197, %v5197
    %v5454 = vmul.f32 %v5198, %v5198
    %v5455 = vmul.f32 %v5199, %v5199
    %v5456 = vmul.f32 %v5200, %v5200
    %v5457 = vmul.f32 %v5201, %v5201
    %v5458 = vmul.f32 %v5202, %v5202
    %v5459 = vmul.f32 %v5203, %v5203
    %v5460 = vmul.f32 %v5204, %v5204
    %v5461 = vmul.f32 %v5205, %v5205
    %v5462 = vmul.f32 %v5206, %v5206
    %v5463 = vmul.f32 %v5207, %v5207
    %v5464 = vmul.f32 %v5208, %v5208
    %v5465 = vmul.f32 %v5209, %v5209
    %v5466 = vmul.f32 %v5210, %v5210
    %v5467 = vmul.f32 %v5211, %v5211
    %v5468 = vmul.f32 %v5212, %v5212
    %v5469 = vmul.f32 %v5213, %v5213
    %v5470 = vmul.f32 %v5214, %v5214
    %v5471 = vmul.f32 %v5215, %v5215
    %v5472 = vmul.f32 %v5216, %v5216
    %v5473 = vmul.f32 %v5217, %v5217
    %v5474 = vmul.f32 %v5218, %v5218
    %v5475 = vmul.f32 %v5219, %v5219
    %v5476 = vmul.f32 %v5220, %v5220
    %v5477 = vmul.f32 %v5221, %v5221
    %v5478 = vmul.f32 %v5222, %v5222
    %v5479 = vmul.f32 %v5223, %v5223
    %v5480 = vmul.f32 %v5224, %v5224
    %v5481 = vmul.f32 %v5225, %v5225
    %v5482 = vmul.f32 %v5226, %v5226
    %v5483 = vmul.f32 %v5227, %v5227
    %v5484 = vmul.f32 %v5228, %v5228
    %v5485 = vmul.f32 %v5229, %v5229
    %v5486 = vmul.f32 %v5230, %v5230
    %v5487 = vmul.f32 %v5231, %v5231
    %v5488 = vmul.f32 %v5232, %v5232
    %v5489 = vmul.f32 %v5233, %v5233
    %v5490 = vmul.f32 %v5234, %v5234
    %v5491 = vmul.f32 %v5235, %v5235
    %v5492 = vmul.f32 %v5236, %v5236
    %v5493 = vmul.f32 %v5237, %v5237
    %v5494 = vmul.f32 %v5238, %v5238
    %v5495 = vmul.f32 %v5239, %v5239
    %v5496 = vmul.f32 %v5240, %v5240
    %v5497 = vmul.f32 %v5241, %v5241
    %v5498 = vmul.f32 %v5242, %v5242
    %v5499 = vmul.f32 %v5243, %v5243
    %v5500 = vmul.f32 %v5244, %v5244
    %v5501 = vmul.f32 %v5245, %v5245
    %v5502 = vmul.f32 %v5246, %v5246
    %v5503 = vmul.f32 %v5247, %v5247
    %v5504 = vmul.f32 %v5248, %v5248
    %v5505 = vmul.f32 %v5249, %v5249
    %v5506 = vmul.f32 %v5250, %v5250
    %v5507 = vmul.f32 %v5251, %v5251
    %v5508 = vmul.f32 %v5252, %v5252
    %v5509 = vmul.f32 %v5253, %v5253
    %v5510 = vmul.f32 %v5254, %v5254
    %v5511 = vmul.f32 %v5255, %v5255
    %v5512 = vmul.f32 %v5256, %v5256
    %v5513 = vmul.f32 %v5257, %v5257
    %v5514 = vmul.f32 %v5258, %v5258
    %v5515 = vmul.f32 %v5259, %v5259
    %v5516 = vmul.f32 %v5260, %v5260
    %v5517 = vmul.f32 %v5261, %v5261
    %v5518 = vmul.f32 %v5262, %v5262
    %v5519 = vmul.f32 %v5263, %v5263
    %v5520 = vmul.f32 %v5264, %v5264
    %v5521 = vmul.f32 %v5265, %v5265
    %v5522 = vmul.f32 %v5266, %v5266
    %v5523 = vmul.f32 %v5267, %v5267
    %v5524 = vmul.f32 %v5268, %v5268
    %v5525 = vmul.f32 %v5269, %v5269
    %v5526 = vmul.f32 %v5270, %v5270
    %v5527 = vmul.f32 %v5271, %v5271
    %v5528 = vmul.f32 %v5272, %v5272
    %v5529 = vmul.f32 %v5273, %v5273
    %v5530 = vmul.f32 %v5274, %v5274
    %v5531 = vmul.f32 %v5275, %v5275
    %v5532 = vmul.f32 %v5276, %v5276
    %v5533 = vmul.f32 %v5277, %v5277
    %v5534 = vmul.f32 %v5278, %v5278
    %v5535 = vmul.f32 %v5279, %v5279
    %v5536 = vmul.f32 %v5280, %v5280
    %v5537 = vmul.f32 %v5281, %v5281
    %v5538 = vmul.f32 %v5282, %v5282
    %v5539 = vmul.f32 %v5283, %v5283
    %v5540 = vmul.f32 %v5284, %v5284
    %v5541 = vmul.f32 %v5285, %v5285
    %v5542 = vmul.f32 %v5286, %v5286
    %v5543 = vmul.f32 %v5287, %v5287
    %v5544 = vmul.f32 %v5288, %v5288
    %v5545 = vmul.f32 %v5289, %v5289
    %v5546 = vmul.f32 %v5290, %v5290
    %v5547 = vmul.f32 %v5291, %v5291
    %v5548 = vmul.f32 %v5292, %v5292
    %v5549 = vmul.f32 %v5293, %v5293
    %v5550 = vmul.f32 %v5294, %v5294
    %v5551 = vmul.f32 %v5295, %v5295
    %v5552 = vmul.f32 %v5296, %v5296
    %v5553 = vmul.f32 %v5297, %v5297
    %v5554 = vmul.f32 %v5298, %v5298
    %v5555 = vmul.f32 %v5299, %v5299
    %v5556 = vmul.f32 %v5300, %v5300
    %v5557 = vmul.f32 %v5301, %v5301
    %v5558 = vmul.f32 %v5302, %v5302
    %v5559 = vmul.f32 %v5303, %v5303
    %v5560 = vmul.f32 %v5304, %v5304
    %v5561 = vmul.f32 %v5305, %v5305
    %v5562 = vmul.f32 %v5306, %v5306
    %v5563 = vmul.f32 %v5307, %v5307
    %v5564 = vmul.f32 %v5308, %v5308
    %v5565 = vmul.f32 %v5309, %v5309
    %v5566 = vmul.f32 %v5310, %v5310
    %v5567 = vmul.f32 %v5311, %v5311
    %v5568 = vmul.f32 %v5312, %v5312
    %v5569 = vmul.f32 %v5313, %v5313
    %v5570 = vmul.f32 %v5314, %v5314
    %v5571 = vmul.f32 %v5315, %v5315
    %v5572 = vmul.f32 %v5316, %v5316
    %v5573 = vmul.f32 %v5317, %v5317
    %v5574 = vmul.f32 %v5318, %v5318
    %v5575 = vmul.f32 %v5319, %v5319
    %v5576 = vmul.f32 %v5320, %v5320
    %v5577 = vmul.f32 %v5321, %v5321
    %v5578 = vmul.f32 %v5322, %v5322
    %v5579 = vmul.f32 %v5323, %v5323
    %v5580 = vmul.f32 %v5324, %v5324
    %v5581 = vmul.f32 %v5325, %v5325
    %v5582 = vmul.f32 %v5326, %v5326
    %v5583 = vmul.f32 %v5327, %v5327
    %v5584 = vmul.f32 %v5328, %v5328
    %v5585 = vmul.f32 %v5329, %v5329
    %v5586 = vmul.f32 %v5330, %v5330
    %v5587 = vmul.f32 %v5331, %v5331
    %v5588 = vmul.f32 %v5332, %v5332
    %v5589 = vmul.f32 %v5333, %v5333
    %v5590 = vmul.f32 %v5334, %v5334
    %v5591 = vmul.f32 %v5335, %v5335
    %v5592 = vmul.f32 %v5336, %v5336
    %v5593 = vmul.f32 %v5337, %v5337
    %v5594 = vmul.f32 %v5338, %v5338
    %v5595 = vmul.f32 %v5339, %v5339
    %v5596 = vmul.f32 %v5340, %v5340
    %v5597 = vmul.f32 %v5341, %v5341
    %v5598 = vmul.f32 %v5342, %v5342
    %v5599 = vmul.f32 %v5343, %v5343
    %v5600 = vmul.f32 %v5344, %v5344
    %v5601 = vmul.f32 %v5345, %v5345
    %v5602 = vmul.f32 %v5346, %v5346
    %v5603 = vmul.f32 %v5347, %v5347
    %v5604 = vmul.f32 %v5348, %v5348
    %v5605 = vmul.f32 %v5349, %v5349
    %v5606 = vmul.f32 %v5350, %v5350
    %v5607 = vmul.f32 %v5351, %v5351
    %v5608 = vmul.f32 %v5352, %v5352
    %v5609 = vmul.f32 %v5353, %v5353
    %v5610 = vmul.f32 %v5354, %v5354
    %v5611 = vmul.f32 %v5355, %v5355
    %v5612 = vmul.f32 %v5356, %v5356
    %v5613 = vadd.f32 %v5357, %v5358
    %v5614 = vadd.f32 %v5613, %v5359
    %v5615 = vadd.f32 %v5614, %v5360
    %5616 = vadd.xlane.f32.xlu0 %v5615
    %v5617 = vpop.xlane.xlu0 %5616
    %v5618 = vadd.f32 %v5361, %v5362
    %v5619 = vadd.f32 %v5618, %v5363
    %v5620 = vadd.f32 %v5619, %v5364
    %5621 = vadd.xlane.f32.xlu0 %v5620
    %v5622 = vpop.xlane.xlu0 %5621
    %v5623 = vadd.f32 %v5365, %v5366
    %v5624 = vadd.f32 %v5623, %v5367
    %v5625 = vadd.f32 %v5624, %v5368
    %5626 = vadd.xlane.f32.xlu0 %v5625
    %v5627 = vpop.xlane.xlu0 %5626
    %v5628 = vadd.f32 %v5369, %v5370
    %v5629 = vadd.f32 %v5628, %v5371
    %v5630 = vadd.f32 %v5629, %v5372
    %5631 = vadd.xlane.f32.xlu0 %v5630
    %v5632 = vpop.xlane.xlu0 %5631
    %v5633 = vadd.f32 %v5373, %v5374
    %v5634 = vadd.f32 %v5633, %v5375
    %v5635 = vadd.f32 %v5634, %v5376
    %5636 = vadd.xlane.f32.xlu0 %v5635
    %v5637 = vpop.xlane.xlu0 %5636
    %v5638 = vadd.f32 %v5377, %v5378
    %v5639 = vadd.f32 %v5638, %v5379
    %v5640 = vadd.f32 %v5639, %v5380
    %5641 = vadd.xlane.f32.xlu0 %v5640
    %v5642 = vpop.xlane.xlu0 %5641
    %v5643 = vadd.f32 %v5381, %v5382
    %v5644 = vadd.f32 %v5643, %v5383
    %v5645 = vadd.f32 %v5644, %v5384
    %5646 = vadd.xlane.f32.xlu0 %v5645
    %v5647 = vpop.xlane.xlu0 %5646
    %v5648 = vadd.f32 %v5385, %v5386
    %v5649 = vadd.f32 %v5648, %v5387
    %v5650 = vadd.f32 %v5649, %v5388
    %5651 = vadd.xlane.f32.xlu0 %v5650
    %v5652 = vpop.xlane.xlu0 %5651
    %v5653 = vadd.f32 %v5389, %v5390
    %v5654 = vadd.f32 %v5653, %v5391
    %v5655 = vadd.f32 %v5654, %v5392
    %5656 = vadd.xlane.f32.xlu0 %v5655
    %v5657 = vpop.xlane.xlu0 %5656
    %v5658 = vadd.f32 %v5393, %v5394
    %v5659 = vadd.f32 %v5658, %v5395
    %v5660 = vadd.f32 %v5659, %v5396
    %5661 = vadd.xlane.f32.xlu0 %v5660
    %v5662 = vpop.xlane.xlu0 %5661
    %v5663 = vadd.f32 %v5397, %v5398
    %v5664 = vadd.f32 %v5663, %v5399
    %v5665 = vadd.f32 %v5664, %v5400
    %5666 = vadd.xlane.f32.xlu0 %v5665
    %v5667 = vpop.xlane.xlu0 %5666
    %v5668 = vadd.f32 %v5401, %v5402
    %v5669 = vadd.f32 %v5668, %v5403
    %v5670 = vadd.f32 %v5669, %v5404
    %5671 = vadd.xlane.f32.xlu0 %v5670
    %v5672 = vpop.xlane.xlu0 %5671
    %v5673 = vadd.f32 %v5405, %v5406
    %v5674 = vadd.f32 %v5673, %v5407
    %v5675 = vadd.f32 %v5674, %v5408
    %5676 = vadd.xlane.f32.xlu0 %v5675
    %v5677 = vpop.xlane.xlu0 %5676
    %v5678 = vadd.f32 %v5409, %v5410
    %v5679 = vadd.f32 %v5678, %v5411
    %v5680 = vadd.f32 %v5679, %v5412
    %5681 = vadd.xlane.f32.xlu0 %v5680
    %v5682 = vpop.xlane.xlu0 %5681
    %v5683 = vadd.f32 %v5413, %v5414
    %v5684 = vadd.f32 %v5683, %v5415
    %v5685 = vadd.f32 %v5684, %v5416
    %5686 = vadd.xlane.f32.xlu0 %v5685
    %v5687 = vpop.xlane.xlu0 %5686
    %v5688 = vadd.f32 %v5417, %v5418
    %v5689 = vadd.f32 %v5688, %v5419
    %v5690 = vadd.f32 %v5689, %v5420
    %5691 = vadd.xlane.f32.xlu0 %v5690
    %v5692 = vpop.xlane.xlu0 %5691
    %v5693 = vadd.f32 %v5421, %v5422
    %v5694 = vadd.f32 %v5693, %v5423
    %v5695 = vadd.f32 %v5694, %v5424
    %5696 = vadd.xlane.f32.xlu0 %v5695
    %v5697 = vpop.xlane.xlu0 %5696
    %v5698 = vadd.f32 %v5425, %v5426
    %v5699 = vadd.f32 %v5698, %v5427
    %v5700 = vadd.f32 %v5699, %v5428
    %5701 = vadd.xlane.f32.xlu0 %v5700
    %v5702 = vpop.xlane.xlu0 %5701
    %v5703 = vadd.f32 %v5429, %v5430
    %v5704 = vadd.f32 %v5703, %v5431
    %v5705 = vadd.f32 %v5704, %v5432
    %5706 = vadd.xlane.f32.xlu0 %v5705
    %v5707 = vpop.xlane.xlu0 %5706
    %v5708 = vadd.f32 %v5433, %v5434
    %v5709 = vadd.f32 %v5708, %v5435
    %v5710 = vadd.f32 %v5709, %v5436
    %5711 = vadd.xlane.f32.xlu0 %v5710
    %v5712 = vpop.xlane.xlu0 %5711
    %v5713 = vadd.f32 %v5437, %v5438
    %v5714 = vadd.f32 %v5713, %v5439
    %v5715 = vadd.f32 %v5714, %v5440
    %5716 = vadd.xlane.f32.xlu0 %v5715
    %v5717 = vpop.xlane.xlu0 %5716
    %v5718 = vadd.f32 %v5441, %v5442
    %v5719 = vadd.f32 %v5718, %v5443
    %v5720 = vadd.f32 %v5719, %v5444
    %5721 = vadd.xlane.f32.xlu0 %v5720
    %v5722 = vpop.xlane.xlu0 %5721
    %v5723 = vadd.f32 %v5445, %v5446
    %v5724 = vadd.f32 %v5723, %v5447
    %v5725 = vadd.f32 %v5724, %v5448
    %5726 = vadd.xlane.f32.xlu0 %v5725
    %v5727 = vpop.xlane.xlu0 %5726
    %v5728 = vadd.f32 %v5449, %v5450
    %v5729 = vadd.f32 %v5728, %v5451
    %v5730 = vadd.f32 %v5729, %v5452
    %5731 = vadd.xlane.f32.xlu0 %v5730
    %v5732 = vpop.xlane.xlu0 %5731
    %v5733 = vadd.f32 %v5453, %v5454
    %v5734 = vadd.f32 %v5733, %v5455
    %v5735 = vadd.f32 %v5734, %v5456
    %5736 = vadd.xlane.f32.xlu0 %v5735
    %v5737 = vpop.xlane.xlu0 %5736
    %v5738 = vadd.f32 %v5457, %v5458
    %v5739 = vadd.f32 %v5738, %v5459
    %v5740 = vadd.f32 %v5739, %v5460
    %5741 = vadd.xlane.f32.xlu0 %v5740
    %v5742 = vpop.xlane.xlu0 %5741
    %v5743 = vadd.f32 %v5461, %v5462
    %v5744 = vadd.f32 %v5743, %v5463
    %v5745 = vadd.f32 %v5744, %v5464
    %5746 = vadd.xlane.f32.xlu0 %v5745
    %v5747 = vpop.xlane.xlu0 %5746
    %v5748 = vadd.f32 %v5465, %v5466
    %v5749 = vadd.f32 %v5748, %v5467
    %v5750 = vadd.f32 %v5749, %v5468
    %5751 = vadd.xlane.f32.xlu0 %v5750
    %v5752 = vpop.xlane.xlu0 %5751
    %v5753 = vadd.f32 %v5469, %v5470
    %v5754 = vadd.f32 %v5753, %v5471
    %v5755 = vadd.f32 %v5754, %v5472
    %5756 = vadd.xlane.f32.xlu0 %v5755
    %v5757 = vpop.xlane.xlu0 %5756
    %v5758 = vadd.f32 %v5473, %v5474
    %v5759 = vadd.f32 %v5758, %v5475
    %v5760 = vadd.f32 %v5759, %v5476
    %5761 = vadd.xlane.f32.xlu0 %v5760
    %v5762 = vpop.xlane.xlu0 %5761
    %v5763 = vadd.f32 %v5477, %v5478
    %v5764 = vadd.f32 %v5763, %v5479
    %v5765 = vadd.f32 %v5764, %v5480
    %5766 = vadd.xlane.f32.xlu0 %v5765
    %v5767 = vpop.xlane.xlu0 %5766
    %v5768 = vadd.f32 %v5481, %v5482
    %v5769 = vadd.f32 %v5768, %v5483
    %v5770 = vadd.f32 %v5769, %v5484
    %5771 = vadd.xlane.f32.xlu0 %v5770
    %v5772 = vpop.xlane.xlu0 %5771
    %v5773 = vadd.f32 %v5485, %v5486
    %v5774 = vadd.f32 %v5773, %v5487
    %v5775 = vadd.f32 %v5774, %v5488
    %5776 = vadd.xlane.f32.xlu0 %v5775
    %v5777 = vpop.xlane.xlu0 %5776
    %v5778 = vadd.f32 %v5489, %v5490
    %v5779 = vadd.f32 %v5778, %v5491
    %v5780 = vadd.f32 %v5779, %v5492
    %5781 = vadd.xlane.f32.xlu0 %v5780
    %v5782 = vpop.xlane.xlu0 %5781
    %v5783 = vadd.f32 %v5493, %v5494
    %v5784 = vadd.f32 %v5783, %v5495
    %v5785 = vadd.f32 %v5784, %v5496
    %5786 = vadd.xlane.f32.xlu0 %v5785
    %v5787 = vpop.xlane.xlu0 %5786
    %v5788 = vadd.f32 %v5497, %v5498
    %v5789 = vadd.f32 %v5788, %v5499
    %v5790 = vadd.f32 %v5789, %v5500
    %5791 = vadd.xlane.f32.xlu0 %v5790
    %v5792 = vpop.xlane.xlu0 %5791
    %v5793 = vadd.f32 %v5501, %v5502
    %v5794 = vadd.f32 %v5793, %v5503
    %v5795 = vadd.f32 %v5794, %v5504
    %5796 = vadd.xlane.f32.xlu0 %v5795
    %v5797 = vpop.xlane.xlu0 %5796
    %v5798 = vadd.f32 %v5505, %v5506
    %v5799 = vadd.f32 %v5798, %v5507
    %v5800 = vadd.f32 %v5799, %v5508
    %5801 = vadd.xlane.f32.xlu0 %v5800
    %v5802 = vpop.xlane.xlu0 %5801
    %v5803 = vadd.f32 %v5509, %v5510
    %v5804 = vadd.f32 %v5803, %v5511
    %v5805 = vadd.f32 %v5804, %v5512
    %5806 = vadd.xlane.f32.xlu0 %v5805
    %v5807 = vpop.xlane.xlu0 %5806
    %v5808 = vadd.f32 %v5513, %v5514
    %v5809 = vadd.f32 %v5808, %v5515
    %v5810 = vadd.f32 %v5809, %v5516
    %5811 = vadd.xlane.f32.xlu0 %v5810
    %v5812 = vpop.xlane.xlu0 %5811
    %v5813 = vadd.f32 %v5517, %v5518
    %v5814 = vadd.f32 %v5813, %v5519
    %v5815 = vadd.f32 %v5814, %v5520
    %5816 = vadd.xlane.f32.xlu0 %v5815
    %v5817 = vpop.xlane.xlu0 %5816
    %v5818 = vadd.f32 %v5521, %v5522
    %v5819 = vadd.f32 %v5818, %v5523
    %v5820 = vadd.f32 %v5819, %v5524
    %5821 = vadd.xlane.f32.xlu0 %v5820
    %v5822 = vpop.xlane.xlu0 %5821
    %v5823 = vadd.f32 %v5525, %v5526
    %v5824 = vadd.f32 %v5823, %v5527
    %v5825 = vadd.f32 %v5824, %v5528
    %5826 = vadd.xlane.f32.xlu0 %v5825
    %v5827 = vpop.xlane.xlu0 %5826
    %v5828 = vadd.f32 %v5529, %v5530
    %v5829 = vadd.f32 %v5828, %v5531
    %v5830 = vadd.f32 %v5829, %v5532
    %5831 = vadd.xlane.f32.xlu0 %v5830
    %v5832 = vpop.xlane.xlu0 %5831
    %v5833 = vadd.f32 %v5533, %v5534
    %v5834 = vadd.f32 %v5833, %v5535
    %v5835 = vadd.f32 %v5834, %v5536
    %5836 = vadd.xlane.f32.xlu0 %v5835
    %v5837 = vpop.xlane.xlu0 %5836
    %v5838 = vadd.f32 %v5537, %v5538
    %v5839 = vadd.f32 %v5838, %v5539
    %v5840 = vadd.f32 %v5839, %v5540
    %5841 = vadd.xlane.f32.xlu0 %v5840
    %v5842 = vpop.xlane.xlu0 %5841
    %v5843 = vadd.f32 %v5541, %v5542
    %v5844 = vadd.f32 %v5843, %v5543
    %v5845 = vadd.f32 %v5844, %v5544
    %5846 = vadd.xlane.f32.xlu0 %v5845
    %v5847 = vpop.xlane.xlu0 %5846
    %v5848 = vadd.f32 %v5545, %v5546
    %v5849 = vadd.f32 %v5848, %v5547
    %v5850 = vadd.f32 %v5849, %v5548
    %5851 = vadd.xlane.f32.xlu0 %v5850
    %v5852 = vpop.xlane.xlu0 %5851
    %v5853 = vadd.f32 %v5549, %v5550
    %v5854 = vadd.f32 %v5853, %v5551
    %v5855 = vadd.f32 %v5854, %v5552
    %5856 = vadd.xlane.f32.xlu0 %v5855
    %v5857 = vpop.xlane.xlu0 %5856
    %v5858 = vadd.f32 %v5553, %v5554
    %v5859 = vadd.f32 %v5858, %v5555
    %v5860 = vadd.f32 %v5859, %v5556
    %5861 = vadd.xlane.f32.xlu0 %v5860
    %v5862 = vpop.xlane.xlu0 %5861
    %v5863 = vadd.f32 %v5557, %v5558
    %v5864 = vadd.f32 %v5863, %v5559
    %v5865 = vadd.f32 %v5864, %v5560
    %5866 = vadd.xlane.f32.xlu0 %v5865
    %v5867 = vpop.xlane.xlu0 %5866
    %v5868 = vadd.f32 %v5561, %v5562
    %v5869 = vadd.f32 %v5868, %v5563
    %v5870 = vadd.f32 %v5869, %v5564
    %5871 = vadd.xlane.f32.xlu0 %v5870
    %v5872 = vpop.xlane.xlu0 %5871
    %v5873 = vadd.f32 %v5565, %v5566
    %v5874 = vadd.f32 %v5873, %v5567
    %v5875 = vadd.f32 %v5874, %v5568
    %5876 = vadd.xlane.f32.xlu0 %v5875
    %v5877 = vpop.xlane.xlu0 %5876
    %v5878 = vadd.f32 %v5569, %v5570
    %v5879 = vadd.f32 %v5878, %v5571
    %v5880 = vadd.f32 %v5879, %v5572
    %5881 = vadd.xlane.f32.xlu0 %v5880
    %v5882 = vpop.xlane.xlu0 %5881
    %v5883 = vadd.f32 %v5573, %v5574
    %v5884 = vadd.f32 %v5883, %v5575
    %v5885 = vadd.f32 %v5884, %v5576
    %5886 = vadd.xlane.f32.xlu0 %v5885
    %v5887 = vpop.xlane.xlu0 %5886
    %v5888 = vadd.f32 %v5577, %v5578
    %v5889 = vadd.f32 %v5888, %v5579
    %v5890 = vadd.f32 %v5889, %v5580
    %5891 = vadd.xlane.f32.xlu0 %v5890
    %v5892 = vpop.xlane.xlu0 %5891
    %v5893 = vadd.f32 %v5581, %v5582
    %v5894 = vadd.f32 %v5893, %v5583
    %v5895 = vadd.f32 %v5894, %v5584
    %5896 = vadd.xlane.f32.xlu0 %v5895
    %v5897 = vpop.xlane.xlu0 %5896
    %v5898 = vadd.f32 %v5585, %v5586
    %v5899 = vadd.f32 %v5898, %v5587
    %v5900 = vadd.f32 %v5899, %v5588
    %5901 = vadd.xlane.f32.xlu0 %v5900
    %v5902 = vpop.xlane.xlu0 %5901
    %v5903 = vadd.f32 %v5589, %v5590
    %v5904 = vadd.f32 %v5903, %v5591
    %v5905 = vadd.f32 %v5904, %v5592
    %5906 = vadd.xlane.f32.xlu0 %v5905
    %v5907 = vpop.xlane.xlu0 %5906
    %v5908 = vadd.f32 %v5593, %v5594
    %v5909 = vadd.f32 %v5908, %v5595
    %v5910 = vadd.f32 %v5909, %v5596
    %5911 = vadd.xlane.f32.xlu0 %v5910
    %v5912 = vpop.xlane.xlu0 %5911
    %v5913 = vadd.f32 %v5597, %v5598
    %v5914 = vadd.f32 %v5913, %v5599
    %v5915 = vadd.f32 %v5914, %v5600
    %5916 = vadd.xlane.f32.xlu0 %v5915
    %v5917 = vpop.xlane.xlu0 %5916
    %v5918 = vadd.f32 %v5601, %v5602
    %v5919 = vadd.f32 %v5918, %v5603
    %v5920 = vadd.f32 %v5919, %v5604
    %5921 = vadd.xlane.f32.xlu0 %v5920
    %v5922 = vpop.xlane.xlu0 %5921
    %v5923 = vadd.f32 %v5605, %v5606
    %v5924 = vadd.f32 %v5923, %v5607
    %v5925 = vadd.f32 %v5924, %v5608
    %5926 = vadd.xlane.f32.xlu0 %v5925
    %v5927 = vpop.xlane.xlu0 %5926
    %v5928 = vadd.f32 %v5609, %v5610
    %v5929 = vadd.f32 %v5928, %v5611
    %v5930 = vadd.f32 %v5929, %v5612
    %5931 = vadd.xlane.f32.xlu0 %v5930
    %v5932 = vpop.xlane.xlu0 %5931
    %v5933 = vrcp.pop 511.0
    %v5934 = vmul.f32 %v5617, %v5933
    %v5935 = vmul.f32 %v5622, %v5933
    %v5936 = vmul.f32 %v5627, %v5933
    %v5937 = vmul.f32 %v5632, %v5933
    %v5938 = vmul.f32 %v5637, %v5933
    %v5939 = vmul.f32 %v5642, %v5933
    %v5940 = vmul.f32 %v5647, %v5933
    %v5941 = vmul.f32 %v5652, %v5933
    %v5942 = vmul.f32 %v5657, %v5933
    %v5943 = vmul.f32 %v5662, %v5933
    %v5944 = vmul.f32 %v5667, %v5933
    %v5945 = vmul.f32 %v5672, %v5933
    %v5946 = vmul.f32 %v5677, %v5933
    %v5947 = vmul.f32 %v5682, %v5933
    %v5948 = vmul.f32 %v5687, %v5933
    %v5949 = vmul.f32 %v5692, %v5933
    %v5950 = vmul.f32 %v5697, %v5933
    %v5951 = vmul.f32 %v5702, %v5933
    %v5952 = vmul.f32 %v5707, %v5933
    %v5953 = vmul.f32 %v5712, %v5933
    %v5954 = vmul.f32 %v5717, %v5933
    %v5955 = vmul.f32 %v5722, %v5933
    %v5956 = vmul.f32 %v5727, %v5933
    %v5957 = vmul.f32 %v5732, %v5933
    %v5958 = vmul.f32 %v5737, %v5933
    %v5959 = vmul.f32 %v5742, %v5933
    %v5960 = vmul.f32 %v5747, %v5933
    %v5961 = vmul.f32 %v5752, %v5933
    %v5962 = vmul.f32 %v5757, %v5933
    %v5963 = vmul.f32 %v5762, %v5933
    %v5964 = vmul.f32 %v5767, %v5933
    %v5965 = vmul.f32 %v5772, %v5933
    %v5966 = vmul.f32 %v5777, %v5933
    %v5967 = vmul.f32 %v5782, %v5933
    %v5968 = vmul.f32 %v5787, %v5933
    %v5969 = vmul.f32 %v5792, %v5933
    %v5970 = vmul.f32 %v5797, %v5933
    %v5971 = vmul.f32 %v5802, %v5933
    %v5972 = vmul.f32 %v5807, %v5933
    %v5973 = vmul.f32 %v5812, %v5933
    %v5974 = vmul.f32 %v5817, %v5933
    %v5975 = vmul.f32 %v5822, %v5933
    %v5976 = vmul.f32 %v5827, %v5933
    %v5977 = vmul.f32 %v5832, %v5933
    %v5978 = vmul.f32 %v5837, %v5933
    %v5979 = vmul.f32 %v5842, %v5933
    %v5980 = vmul.f32 %v5847, %v5933
    %v5981 = vmul.f32 %v5852, %v5933
    %v5982 = vmul.f32 %v5857, %v5933
    %v5983 = vmul.f32 %v5862, %v5933
    %v5984 = vmul.f32 %v5867, %v5933
    %v5985 = vmul.f32 %v5872, %v5933
    %v5986 = vmul.f32 %v5877, %v5933
    %v5987 = vmul.f32 %v5882, %v5933
    %v5988 = vmul.f32 %v5887, %v5933
    %v5989 = vmul.f32 %v5892, %v5933
    %v5990 = vmul.f32 %v5897, %v5933
    %v5991 = vmul.f32 %v5902, %v5933
    %v5992 = vmul.f32 %v5907, %v5933
    %v5993 = vmul.f32 %v5912, %v5933
    %v5994 = vmul.f32 %v5917, %v5933
    %v5995 = vmul.f32 %v5922, %v5933
    %v5996 = vmul.f32 %v5927, %v5933
    %v5997 = vmul.f32 %v5932, %v5933
    %vm5998 = vcmask 7168
    %v5999 = vsel %vm5998, %v5934, 0.0
    %v6000 = vsel %vm5998, %v5935, 0.0
    %v6001 = vadd.f32 %v5999, %v6000
    %v6002 = vsel %vm5998, %v5936, 0.0
    %v6003 = vadd.f32 %v6001, %v6002
    %v6004 = vsel %vm5998, %v5937, 0.0
    %v6005 = vadd.f32 %v6003, %v6004
    %v6006 = vsel %vm5998, %v5938, 0.0
    %v6007 = vadd.f32 %v6005, %v6006
    %v6008 = vsel %vm5998, %v5939, 0.0
    %v6009 = vadd.f32 %v6007, %v6008
    %v6010 = vsel %vm5998, %v5940, 0.0
    %v6011 = vadd.f32 %v6009, %v6010
    %v6012 = vsel %vm5998, %v5941, 0.0
    %v6013 = vadd.f32 %v6011, %v6012
    %v6014 = vsel %vm5998, %v5942, 0.0
    %v6015 = vadd.f32 %v6013, %v6014
    %v6016 = vsel %vm5998, %v5943, 0.0
    %v6017 = vadd.f32 %v6015, %v6016
    %v6018 = vsel %vm5998, %v5944, 0.0
    %v6019 = vadd.f32 %v6017, %v6018
    %v6020 = vsel %vm5998, %v5945, 0.0
    %v6021 = vadd.f32 %v6019, %v6020
    %v6022 = vsel %vm5998, %v5946, 0.0
    %v6023 = vadd.f32 %v6021, %v6022
    %v6024 = vsel %vm5998, %v5947, 0.0
    %v6025 = vadd.f32 %v6023, %v6024
    %v6026 = vsel %vm5998, %v5948, 0.0
    %v6027 = vadd.f32 %v6025, %v6026
    %v6028 = vsel %vm5998, %v5949, 0.0
    %v6029 = vadd.f32 %v6027, %v6028
    %v6030 = vsel %vm5998, %v5950, 0.0
    %v6031 = vadd.f32 %v6029, %v6030
    %v6032 = vsel %vm5998, %v5951, 0.0
    %v6033 = vadd.f32 %v6031, %v6032
    %v6034 = vsel %vm5998, %v5952, 0.0
    %v6035 = vadd.f32 %v6033, %v6034
    %v6036 = vsel %vm5998, %v5953, 0.0
    %v6037 = vadd.f32 %v6035, %v6036
    %v6038 = vsel %vm5998, %v5954, 0.0
    %v6039 = vadd.f32 %v6037, %v6038
    %v6040 = vsel %vm5998, %v5955, 0.0
    %v6041 = vadd.f32 %v6039, %v6040
    %v6042 = vsel %vm5998, %v5956, 0.0
    %v6043 = vadd.f32 %v6041, %v6042
    %v6044 = vsel %vm5998, %v5957, 0.0
    %v6045 = vadd.f32 %v6043, %v6044
    %v6046 = vsel %vm5998, %v5958, 0.0
    %v6047 = vadd.f32 %v6045, %v6046
    %v6048 = vsel %vm5998, %v5959, 0.0
    %v6049 = vadd.f32 %v6047, %v6048
    %v6050 = vsel %vm5998, %v5960, 0.0
    %v6051 = vadd.f32 %v6049, %v6050
    %v6052 = vsel %vm5998, %v5961, 0.0
    %v6053 = vadd.f32 %v6051, %v6052
    %v6054 = vsel %vm5998, %v5962, 0.0
    %v6055 = vadd.f32 %v6053, %v6054
    %v6056 = vsel %vm5998, %v5963, 0.0
    %v6057 = vadd.f32 %v6055, %v6056
    %v6058 = vsel %vm5998, %v5964, 0.0
    %v6059 = vadd.f32 %v6057, %v6058
    %v6060 = vsel %vm5998, %v5965, 0.0
    %v6061 = vadd.f32 %v6059, %v6060
    %v6062 = vsel %vm5998, %v5966, 0.0
    %v6063 = vadd.f32 %v6061, %v6062
    %v6064 = vsel %vm5998, %v5967, 0.0
    %v6065 = vadd.f32 %v6063, %v6064
    %v6066 = vsel %vm5998, %v5968, 0.0
    %v6067 = vadd.f32 %v6065, %v6066
    %v6068 = vsel %vm5998, %v5969, 0.0
    %v6069 = vadd.f32 %v6067, %v6068
    %v6070 = vsel %vm5998, %v5970, 0.0
    %v6071 = vadd.f32 %v6069, %v6070
    %v6072 = vsel %vm5998, %v5971, 0.0
    %v6073 = vadd.f32 %v6071, %v6072
    %v6074 = vsel %vm5998, %v5972, 0.0
    %v6075 = vadd.f32 %v6073, %v6074
    %v6076 = vsel %vm5998, %v5973, 0.0
    %v6077 = vadd.f32 %v6075, %v6076
    %v6078 = vsel %vm5998, %v5974, 0.0
    %v6079 = vadd.f32 %v6077, %v6078
    %v6080 = vsel %vm5998, %v5975, 0.0
    %v6081 = vadd.f32 %v6079, %v6080
    %v6082 = vsel %vm5998, %v5976, 0.0
    %v6083 = vadd.f32 %v6081, %v6082
    %v6084 = vsel %vm5998, %v5977, 0.0
    %v6085 = vadd.f32 %v6083, %v6084
    %v6086 = vsel %vm5998, %v5978, 0.0
    %v6087 = vadd.f32 %v6085, %v6086
    %v6088 = vsel %vm5998, %v5979, 0.0
    %v6089 = vadd.f32 %v6087, %v6088
    %v6090 = vsel %vm5998, %v5980, 0.0
    %v6091 = vadd.f32 %v6089, %v6090
    %v6092 = vsel %vm5998, %v5981, 0.0
    %v6093 = vadd.f32 %v6091, %v6092
    %v6094 = vsel %vm5998, %v5982, 0.0
    %v6095 = vadd.f32 %v6093, %v6094
    %v6096 = vsel %vm5998, %v5983, 0.0
    %v6097 = vadd.f32 %v6095, %v6096
    %v6098 = vsel %vm5998, %v5984, 0.0
    %v6099 = vadd.f32 %v6097, %v6098
    %v6100 = vsel %vm5998, %v5985, 0.0
    %v6101 = vadd.f32 %v6099, %v6100
    %v6102 = vsel %vm5998, %v5986, 0.0
    %v6103 = vadd.f32 %v6101, %v6102
    %v6104 = vsel %vm5998, %v5987, 0.0
    %v6105 = vadd.f32 %v6103, %v6104
    %v6106 = vsel %vm5998, %v5988, 0.0
    %v6107 = vadd.f32 %v6105, %v6106
    %v6108 = vsel %vm5998, %v5989, 0.0
    %v6109 = vadd.f32 %v6107, %v6108
    %v6110 = vsel %vm5998, %v5990, 0.0
    %v6111 = vadd.f32 %v6109, %v6110
    %v6112 = vsel %vm5998, %v5991, 0.0
    %v6113 = vadd.f32 %v6111, %v6112
    %v6114 = vsel %vm5998, %v5992, 0.0
    %v6115 = vadd.f32 %v6113, %v6114
    %v6116 = vsel %vm5998, %v5993, 0.0
    %v6117 = vadd.f32 %v6115, %v6116
    %v6118 = vsel %vm5998, %v5994, 0.0
    %v6119 = vadd.f32 %v6117, %v6118
    %v6120 = vsel %vm5998, %v5995, 0.0
    %v6121 = vadd.f32 %v6119, %v6120
    %v6122 = vsel %vm5998, %v5996, 0.0
    %v6123 = vadd.f32 %v6121, %v6122
    %v6124 = vsel %vm5998, %v5997, 0.0
    %v6125 = vadd.f32 %v6123, %v6124
    %6126 = vadd.xlane.f32.xlu0 %v6125
    %v6127 = vpop.xlane.xlu0 %6126
    %v6128 = vrot.slane %v6127, 4
    %v6129 = vadd.f32 %v6127, %v6128
    %v6130 = vrot.slane %v6129, 2
    %v6131 = vadd.f32 %v6129, %v6130
    %v6132 = vrot.slane %v6131, 1
    %v6133 = vadd.f32 %v6131, %v6132
    %s6134 = vtos %v6133
    %v6135 = vrcp.pop 512.0
    %s6136 = vtos %v6135
    %s6137 = smul.f32 %s6134, %s6136
    %v6138 = vstv %s6137
    %6139 = vst [vmem:[#allocation4] sm:$0x1] %v6138
    // Predicated region
    $region22: #{vector_quantiser_forward.3} parent=1 // pred_check
      _
    $region23: #{vector_quantiser_forward.3} parent=1 // pred_check_branch
      %6141 = sbr.rel (0) target = $region25
    $region24: #{vector_quantiser_forward.3} parent=1 // pred_region
      %s6143 = ssub.s32 16, 16
      %6144 = vsyncadd [#allocation3], %s6143
      %s6146 = sshll.u32 [#allocation2], 4
      %s6147 = int_to_ptr.vmem [resolvable:$true] %s6146
      %6149 = dma.vmem_to_hbm [thread:$0]  %s6147, 16, %s5, [#allocation3]
    $region25: #{vector_quantiser_forward.3} parent=1 // pred_fallthru
      _
    // Predicated region
    $region26: #{vector_quantiser_forward.3} parent=1 // pred_check
      _
    $region27: #{vector_quantiser_forward.3} parent=1 // pred_check_branch
      %6151 = sbr.rel (0) target = $region29
    $region28: #{vector_quantiser_forward.3} parent=1 // pred_region
      %s6153 = ssub.s32 16, 16
      %6154 = vsyncadd [#allocation5], %s6153
      %s6156 = sshll.u32 [#allocation4], 4
      %s6157 = int_to_ptr.vmem [resolvable:$true] %s6156
      %6159 = dma.vmem_to_hbm [thread:$0]  %s6157, 16, %s6, [#allocation5]
    $region29: #{vector_quantiser_forward.3} parent=1 // pred_fallthru
      _
    // Predicated region
    $region30: #{vector_quantiser_forward.3} parent=1 // pred_check
      _
    $region31: #{vector_quantiser_forward.3} parent=1 // pred_check_branch
      %6161 = sbr.rel (0) target = $region33
    $region32: #{vector_quantiser_forward.3} parent=1 // pred_region
      %6162 = dma.done [#allocation3], 16
    $region33: #{vector_quantiser_forward.3} parent=1 // pred_fallthru
      _
    // Predicated region
    $region34: #{vector_quantiser_forward.3} parent=1 // pred_check
      _
    $region35: #{vector_quantiser_forward.3} parent=1 // pred_check_branch
      %6164 = sbr.rel (0) target = $region37
    $region36: #{vector_quantiser_forward.3} parent=1 // pred_region
      %6165 = dma.done [#allocation5], 16
    $region37: #{vector_quantiser_forward.3} parent=1 // pred_fallthru
      _
    %6166 = vsyncpa [#allocation3], 1
    %6167 = vsyncpa [#allocation5], 1

</llo_original>
